<compile_context>
chip_gen: v5e
topology: v5e:2x2
jax: 0.10.0
libtpu: 0.0.40
codegen_flags: <defaults>
</compile_context>

<pallas_src>
import functools

import numpy as np

import jax
import jax.numpy as jnp
from jax.experimental import pallas as pl
from jax.experimental.pallas import tpu as pltpu

EPS = 1e-5


def _round_up(x, m):
    return (x + m - 1) // m * m


# ----------------------------------------------------------------------------
# Static layout planning (host side, shape-only).
#
# Layout A (stride-1 consumer): zero-padded image flattened row-major,
#   rows = Hp*Wp, channels in lanes.  Tap (di,dj) is the contiguous row-window
#   starting at di*Wp+dj of length l=(OH-1)*Wp+OW; output pixel (i,j) sits at
#   window row i*Wp+j (other rows are wrap-around filler and get dropped).
# Layout B (stride-2 consumer): the two column-parity planes of the padded
#   image stacked vertically (rows = 2*Lp).  Tap (di,dj) starts at
#   (dj%2)*Lp + di*Wq + dj//2, length l=(OH-1)*2*Wq+OW; output (i,j) at
#   window row i*2*Wq+j.
# A host-built 0/1 gather matrix G maps one layer's window-layout output to the
# next layer's input layout (drops filler, re-strides, inserts zero padding
# and, for Layout B, de-interleaves columns) with a single MXU matmul.
# ----------------------------------------------------------------------------
def _layout_a(h, w, k, pad):
    hp, wp = h + 2 * pad, w + 2 * pad
    oh, ow = hp - k + 1, wp - k + 1
    l = (oh - 1) * wp + ow
    starts = [di * wp + dj for di in range(k) for dj in range(k)]
    assert max(starts) + l <= hp * wp          # window never leaves the buffer
    return dict(rows=hp * wp, starts=starts, l=l, oh=oh, ow=ow,
                in_row=lambda i, j: (i + pad) * wp + (j + pad),
                out_row=lambda i, j: i * wp + j)


def _layout_b(h, w, k, pad):
    hp, wp = h + 2 * pad, w + 2 * pad
    oh, ow = (hp - k) // 2 + 1, (wp - k) // 2 + 1
    wq = (wp + 1) // 2
    l = (oh - 1) * 2 * wq + ow
    lp = max(hp * wq, (k - 1) * wq + (k - 1) // 2 + l)   # extra filler rows
    starts = [(dj % 2) * lp + di * wq + dj // 2
              for di in range(k) for dj in range(k)]
    assert max(starts) + l <= 2 * lp
    return dict(rows=2 * lp, starts=starts, l=l, oh=oh, ow=ow,
                in_row=lambda i, j: ((j + pad) % 2) * lp
                                    + (i + pad) * wq + (j + pad) // 2,
                out_row=lambda i, j: i * 2 * wq + j)


def _build_plan(h, w):
    oh1 = (h + 2 * 3 - 7) // 2 + 1
    ow1 = (w + 2 * 3 - 7) // 2 + 1
    assert oh1 >= 1 and ow1 >= 1
    stem = dict(l=oh1 * ow1, oh=oh1, ow=ow1, out_row=lambda i, j: i * ow1 + j)
    mp = _layout_b(oh1, ow1, 3, 1)                    # maxpool 3x3/s2/p1
    l10 = _layout_a(mp['oh'], mp['ow'], 3, 1)
    l11 = _layout_a(l10['oh'], l10['ow'], 3, 1)
    l20 = _layout_b(l11['oh'], l11['ow'], 3, 1)       # stride 2
    l21 = _layout_a(l20['oh'], l20['ow'], 3, 1)
    l30 = _layout_b(l21['oh'], l21['ow'], 3, 1)       # stride 2
    l31 = _layout_a(l30['oh'], l30['ow'], 3, 1)
    assert l31['oh'] >= 1 and l31['ow'] >= 1
    fin = dict(rows=l31['oh'] * l31['ow'],
               in_row=lambda i, j: i * l31['ow'] + j)
    return dict(stem=stem, mp=mp, l10=l10, l11=l11, l20=l20, l21=l21,
                l30=l30, l31=l31, fin=fin)


def _gather_matrix(prod, cons):
    g = np.zeros((cons['rows'], prod['l']), np.float32)
    for i in range(prod['oh']):
        for j in range(prod['ow']):
            g[cons['in_row'](i, j), prod['out_row'](i, j)] = 1.0
    return jnp.asarray(g)


# ----------------------------------------------------------------------------
# Fused kernel: stem conv + maxpool + 6 conv/BN/ReLU layers, one image / step.
# ----------------------------------------------------------------------------
def _make_fused_kernel(plan):
    mp, l10, l11, l20, l21, l30, l31 = (plan[k] for k in
                                        ('mp', 'l10', 'l11', 'l20', 'l21',
                                         'l30', 'l31'))

    def mm(a, b):
        return jnp.dot(a, b, preferred_element_type=jnp.float32)

    def conv3(x_ref, lay, w_ref, b_ref):
        # Direct 3x3 conv: one MXU matmul per tap over a contiguous window.
        starts, l = lay['starts'], lay['l']
        acc = mm(x_ref[starts[0]:starts[0] + l, :], w_ref[0])
        for t in range(1, len(starts)):
            s0 = starts[t]
            acc = acc + mm(x_ref[s0:s0 + l, :], w_ref[t])
        return jnp.maximum(acc + b_ref[...], 0.0)     # folded BN + ReLU

    def pool3(x_ref, lay):
        # Running max over the 9 tap windows (input is post-ReLU; zero pad is safe).
        starts, l = lay['starts'], lay['l']
        m = x_ref[starts[0]:starts[0] + l, :]
        for s0 in starts[1:]:
            m = jnp.maximum(m, x_ref[s0:s0 + l, :])
        return m

    def kernel(patches_ref, w1_ref, b1_ref,
               w10_ref, b10_ref, w11_ref, b11_ref,
               w20_ref, b20_ref, w21_ref, b21_ref,
               w30_ref, b30_ref, w31_ref, b31_ref,
               g1_ref, gmp_ref, g10_ref, g11_ref,
               g20_ref, g21_ref, g30_ref, g31_ref,
               out_ref,
               x_mp, x_10, x_11, x_20, x_21, x_30, x_31):
        # conv1 (stem): all 49 taps folded into K -> one matmul; BN + ReLU fused.
        y = jnp.maximum(mm(patches_ref[...], w1_ref[...]) + b1_ref[...], 0.0)
        x_mp[...] = mm(g1_ref[...], y)                 # -> maxpool phase planes
        y = pool3(x_mp, mp)                            # maxpool 3x3/s2/p1
        x_10[...] = mm(gmp_ref[...], y)
        y = conv3(x_10, l10, w10_ref, b10_ref)         # layer1.0
        x_11[...] = mm(g10_ref[...], y)
        y = conv3(x_11, l11, w11_ref, b11_ref)         # layer1.1
        x_20[...] = mm(g11_ref[...], y)
        y = conv3(x_20, l20, w20_ref, b20_ref)         # layer2.0 (stride 2)
        x_21[...] = mm(g20_ref[...], y)
        y = conv3(x_21, l21, w21_ref, b21_ref)         # layer2.1
        x_30[...] = mm(g21_ref[...], y)
        y = conv3(x_30, l30, w30_ref, b30_ref)         # layer3.0 (stride 2)
        x_31[...] = mm(g30_ref[...], y)
        y = conv3(x_31, l31, w31_ref, b31_ref)         # layer3.1
        out_ref[...] = mm(g31_ref[...], y)             # drop filler -> (OH*OW, C)

    return kernel


# ----------------------------------------------------------------------------
# Parameter preparation (BN folding) + wrapper.
# ----------------------------------------------------------------------------
def _fold_bn(p):
    w, b, gamma, beta, mean, var = p
    s = gamma * jax.lax.rsqrt(var + EPS)
    bias = ((b - mean) * s + beta).reshape(1, -1).astype(jnp.float32)
    return s, bias


def _stem_weights(p, k_pad):
    w = p[0]
    s, bias = _fold_bn(p)
    cout, cin, kh, kw = w.shape
    wmat = jnp.transpose(w, (2, 3, 1, 0)).reshape(kh * kw * cin, cout) * s[None, :]
    wmat = jnp.pad(wmat, ((0, k_pad - kh * kw * cin), (0, 0)))
    return wmat.astype(jnp.float32), bias


def _tap_weights(p):
    w = p[0]
    s, bias = _fold_bn(p)
    cout, cin, kh, kw = w.shape
    wt = jnp.transpose(w, (2, 3, 1, 0)).reshape(kh * kw, cin, cout)
    return (wt * s[None, None, :]).astype(jnp.float32), bias


def _stem_patches(x_nhwc, oh, ow, k_pad):
    # One-off im2col of the tiny 3-channel input (wrapper glue for the stem).
    n, _, _, cin = x_nhwc.shape
    xp = jnp.pad(x_nhwc, ((0, 0), (3, 3), (3, 3), (0, 0)))
    cols = [xp[:, di:di + 2 * oh - 1:2, dj:dj + 2 * ow - 1:2, :]
            for di in range(7) for dj in range(7)]
    pat = jnp.concatenate(cols, axis=-1).reshape(n, oh * ow, 49 * cin)
    return jnp.pad(pat, ((0, 0), (0, 0), (0, k_pad - 49 * cin))).astype(jnp.float32)


def canvas_feature_extractor(x_nchw, all_params):
    n, cin, h, w = x_nchw.shape
    plan = _build_plan(h, w)
    k_pad = _round_up(49 * cin, 128)

    w1, b1 = _stem_weights(all_params[0][0], k_pad)
    taps = [_tap_weights(p) for (p, _, _) in all_params[1:]]
    gs = [_gather_matrix(plan['stem'], plan['mp']),
          _gather_matrix(plan['mp'], plan['l10']),
          _gather_matrix(plan['l10'], plan['l11']),
          _gather_matrix(plan['l11'], plan['l20']),
          _gather_matrix(plan['l20'], plan['l21']),
          _gather_matrix(plan['l21'], plan['l30']),
          _gather_matrix(plan['l30'], plan['l31']),
          _gather_matrix(plan['l31'], plan['fin'])]

    x_nhwc = jnp.transpose(x_nchw, (0, 2, 3, 1)).astype(jnp.float32)
    patches = _stem_patches(x_nhwc, plan['stem']['oh'], plan['stem']['ow'], k_pad)

    couts = [p[0].shape[0] for (p, _, _) in all_params]
    scratch_keys = ['mp', 'l10', 'l11', 'l20', 'l21', 'l30', 'l31']
    scratch_ch = [couts[0], couts[0], couts[1], couts[2], couts[3], couts[4], couts[5]]
    scratch_shapes = [pltpu.VMEM((plan[k]['rows'], c), jnp.float32)
                      for k, c in zip(scratch_keys, scratch_ch)]

    inputs = [patches, w1, b1]
    for wt, bb in taps:
        inputs += [wt, bb]
    inputs += gs

    in_specs = [pl.BlockSpec((None,) + patches.shape[1:], lambda b: (b, 0, 0))]
    for a in inputs[1:]:
        if a.ndim == 2:
            in_specs.append(pl.BlockSpec(a.shape, lambda b: (0, 0)))
        else:
            in_specs.append(pl.BlockSpec(a.shape, lambda b: (0, 0, 0)))

    oh_f, ow_f, c_f = plan['l31']['oh'], plan['l31']['ow'], couts[-1]
    out_rows = oh_f * ow_f
    out_specs = pl.BlockSpec((None, out_rows, c_f), lambda b: (b, 0, 0))

    # Advisory cost estimate for the XLA scheduler.
    flops = 2 * plan['stem']['l'] * k_pad * couts[0]
    for (p, _, _), key in zip(all_params[1:], scratch_keys[1:]):
        co, ci, kh, kw = p[0].shape
        flops += 2 * plan[key]['l'] * kh * kw * ci * co
    g_chans = [couts[0], couts[0]] + couts[1:]
    for g, c in zip(gs, g_chans):
        flops += 2 * g.shape[0] * g.shape[1] * c
    flops *= n
    bytes_accessed = sum(int(a.size) * a.dtype.itemsize for a in inputs)
    bytes_accessed += n * out_rows * c_f * 4

    out = pl.pallas_call(
        _make_fused_kernel(plan),
        out_shape=jax.ShapeDtypeStruct((n, out_rows, c_f), jnp.float32),
        grid_spec=pltpu.PrefetchScalarGridSpec(
            num_scalar_prefetch=0,
            grid=(n,),
            in_specs=in_specs,
            out_specs=out_specs,
            scratch_shapes=scratch_shapes),
        compiler_params=pltpu.CompilerParams(
            dimension_semantics=("parallel",),
            vmem_limit_bytes=40 * 1024 * 1024),
        cost_estimate=pl.CostEstimate(flops=int(flops), transcendentals=0,
                                      bytes_accessed=int(bytes_accessed)),
    )(*inputs)

    out = out.reshape(n, oh_f, ow_f, c_f)
    return jnp.transpose(out, (0, 3, 1, 2))            # -> NCHW


# ----------------------------------------------------------------------------
# Deterministic synthetic parameters + pure-JAX reference (for the check).
# ----------------------------------------------------------------------------
def make_conv_bn_params(key, cin, cout, k):
    kw_, kb_, kg_, kbe_, km_, kv_ = jax.random.split(key, 6)
    fan_in = cin * k * k
    w = jax.random.normal(kw_, (cout, cin, k, k), jnp.float32) * jnp.sqrt(2.0 / fan_in)
    b = jax.random.normal(kb_, (cout,), jnp.float32) * 0.01
    gamma = 1.0 + 0.1 * jax.random.normal(kg_, (cout,), jnp.float32)
    beta = 0.1 * jax.random.normal(kbe_, (cout,), jnp.float32)
    mean = 0.1 * jax.random.normal(km_, (cout,), jnp.float32)
    var = 1.0 + 0.1 * jax.random.uniform(kv_, (cout,), jnp.float32)
    return (w, b, gamma, beta, mean, var)


def make_all_params(key):
    ks = jax.random.split(key, 7)
    return [
        (make_conv_bn_params(ks[0], 3, 64, 7), 2, 3),     # conv1 + bn1
        (make_conv_bn_params(ks[1], 64, 64, 3), 1, 1),    # layer1.0
        (make_conv_bn_params(ks[2], 64, 64, 3), 1, 1),    # layer1.1
        (make_conv_bn_params(ks[3], 64, 128, 3), 2, 1),   # layer2.0
        (make_conv_bn_params(ks[4], 128, 128, 3), 1, 1),  # layer2.1
        (make_conv_bn_params(ks[5], 128, 256, 3), 2, 1),  # layer3.0
        (make_conv_bn_params(ks[6], 256, 256, 3), 1, 1),  # layer3.1
    ]


def reference_forward(x, all_params):
    def cbr(y, p, stride, pad):
        w, b, gamma, beta, mean, var = p
        y = jax.lax.conv_general_dilated(
            y, w, (stride, stride), ((pad, pad), (pad, pad)),
            dimension_numbers=('NCHW', 'OIHW', 'NCHW'),
            precision=jax.lax.Precision.HIGHEST)
        y = y + b[None, :, None, None]
        y = (y - mean[None, :, None, None]) * (
            gamma[None, :, None, None] / jnp.sqrt(var[None, :, None, None] + EPS))
        y = y + beta[None, :, None, None]
        return jnp.maximum(y, 0.0)

    p0, s0, pd0 = all_params[0]
    y = cbr(x, p0, s0, pd0)
    y = jax.lax.reduce_window(y, -jnp.inf, jax.lax.max,
                              (1, 1, 3, 3), (1, 1, 2, 2),
                              ((0, 0), (0, 0), (1, 1), (1, 1)))
    for p, s, pd in all_params[1:]:
        y = cbr(y, p, s, pd)
    return y


# ----------------------------------------------------------------------------
if __name__ == "__main__":
    key = jax.random.PRNGKey(0)
    k_x, k_p = jax.random.split(key)

    x = jax.random.normal(k_x, (2, 3, 32, 32), jnp.float32)   # NCHW, 3 channels
    params = make_all_params(k_p)

    fwd = jax.jit(functools.partial(canvas_feature_extractor, all_params=params))
    out = jax.block_until_ready(fwd(x))

    # 32 -> conv1/s2 -> 16 -> maxpool/s2 -> 8 -> layer1 -> 8
    #    -> layer2/s2 -> 4 -> layer3/s2 -> 2 ; channels 256
    assert out.shape == (2, 256, 2, 2), out.shape
    assert bool(jnp.all(jnp.isfinite(out)))

    ref = jax.block_until_ready(reference_forward(x, params))
    rel = float(jnp.linalg.norm(out - ref) / (jnp.linalg.norm(ref) + 1e-9))
    mad = float(jnp.max(jnp.abs(out - ref)))
    assert rel < 5e-2 and mad < 2.5e-1, (rel, mad)

    print("KERNEL_OK")
</pallas_src>

<mosaic_0001>
module attributes {stable_mosaic.version = 11 : i64} {
  func.func @kernel(%arg0: i32, %arg1: memref<1x256x256xf32, #tpu.memory_space<vmem>>, %arg2: memref<256x64xf32, #tpu.memory_space<vmem>>, %arg3: memref<1x64xf32, #tpu.memory_space<vmem>>, %arg4: memref<9x64x64xf32, #tpu.memory_space<vmem>>, %arg5: memref<1x64xf32, #tpu.memory_space<vmem>>, %arg6: memref<9x64x64xf32, #tpu.memory_space<vmem>>, %arg7: memref<1x64xf32, #tpu.memory_space<vmem>>, %arg8: memref<9x64x128xf32, #tpu.memory_space<vmem>>, %arg9: memref<1x128xf32, #tpu.memory_space<vmem>>, %arg10: memref<9x128x128xf32, #tpu.memory_space<vmem>>, %arg11: memref<1x128xf32, #tpu.memory_space<vmem>>, %arg12: memref<9x128x256xf32, #tpu.memory_space<vmem>>, %arg13: memref<1x256xf32, #tpu.memory_space<vmem>>, %arg14: memref<9x256x256xf32, #tpu.memory_space<vmem>>, %arg15: memref<1x256xf32, #tpu.memory_space<vmem>>, %arg16: memref<324x256xf32, #tpu.memory_space<vmem>>, %arg17: memref<100x134xf32, #tpu.memory_space<vmem>>, %arg18: memref<100x78xf32, #tpu.memory_space<vmem>>, %arg19: memref<100x78xf32, #tpu.memory_space<vmem>>, %arg20: memref<36x34xf32, #tpu.memory_space<vmem>>, %arg21: memref<36x22xf32, #tpu.memory_space<vmem>>, %arg22: memref<16x8xf32, #tpu.memory_space<vmem>>, %arg23: memref<4x6xf32, #tpu.memory_space<vmem>>, %arg24: memref<1x4x256xf32, #tpu.memory_space<vmem>>, %arg25: memref<324x64xf32, #tpu.memory_space<vmem>>, %arg26: memref<100x64xf32, #tpu.memory_space<vmem>>, %arg27: memref<100x64xf32, #tpu.memory_space<vmem>>, %arg28: memref<100x64xf32, #tpu.memory_space<vmem>>, %arg29: memref<36x128xf32, #tpu.memory_space<vmem>>, %arg30: memref<36x128xf32, #tpu.memory_space<vmem>>, %arg31: memref<16x256xf32, #tpu.memory_space<vmem>>) attributes {dimension_semantics = [#tpu.dimension_semantics<parallel>], iteration_bounds = array<i64: 2>, scalar_prefetch = 0 : i64, scratch_operands = 7 : i64, tpu.core_type = #tpu.core_type<tc>, window_params = [{transform_indices = @transform_0, window_bounds = array<i64: 1, 256, 256>}, {pipeline_mode = #tpu.pipeline_mode<synchronous>, transform_indices = @transform_1, window_bounds = array<i64: 256, 64>}, {pipeline_mode = #tpu.pipeline_mode<synchronous>, transform_indices = @transform_2, window_bounds = array<i64: 1, 64>}, {pipeline_mode = #tpu.pipeline_mode<synchronous>, transform_indices = @transform_3, window_bounds = array<i64: 9, 64, 64>}, {pipeline_mode = #tpu.pipeline_mode<synchronous>, transform_indices = @transform_4, window_bounds = array<i64: 1, 64>}, {pipeline_mode = #tpu.pipeline_mode<synchronous>, transform_indices = @transform_5, window_bounds = array<i64: 9, 64, 64>}, {pipeline_mode = #tpu.pipeline_mode<synchronous>, transform_indices = @transform_6, window_bounds = array<i64: 1, 64>}, {pipeline_mode = #tpu.pipeline_mode<synchronous>, transform_indices = @transform_7, window_bounds = array<i64: 9, 64, 128>}, {pipeline_mode = #tpu.pipeline_mode<synchronous>, transform_indices = @transform_8, window_bounds = array<i64: 1, 128>}, {pipeline_mode = #tpu.pipeline_mode<synchronous>, transform_indices = @transform_9, window_bounds = array<i64: 9, 128, 128>}, {pipeline_mode = #tpu.pipeline_mode<synchronous>, transform_indices = @transform_10, window_bounds = array<i64: 1, 128>}, {pipeline_mode = #tpu.pipeline_mode<synchronous>, transform_indices = @transform_11, window_bounds = array<i64: 9, 128, 256>}, {pipeline_mode = #tpu.pipeline_mode<synchronous>, transform_indices = @transform_12, window_bounds = array<i64: 1, 256>}, {pipeline_mode = #tpu.pipeline_mode<synchronous>, transform_indices = @transform_13, window_bounds = array<i64: 9, 256, 256>}, {pipeline_mode = #tpu.pipeline_mode<synchronous>, transform_indices = @transform_14, window_bounds = array<i64: 1, 256>}, {pipeline_mode = #tpu.pipeline_mode<synchronous>, transform_indices = @transform_15, window_bounds = array<i64: 324, 256>}, {pipeline_mode = #tpu.pipeline_mode<synchronous>, transform_indices = @transform_16, window_bounds = array<i64: 100, 134>}, {pipeline_mode = #tpu.pipeline_mode<synchronous>, transform_indices = @transform_17, window_bounds = array<i64: 100, 78>}, {pipeline_mode = #tpu.pipeline_mode<synchronous>, transform_indices = @transform_18, window_bounds = array<i64: 100, 78>}, {pipeline_mode = #tpu.pipeline_mode<synchronous>, transform_indices = @transform_19, window_bounds = array<i64: 36, 34>}, {pipeline_mode = #tpu.pipeline_mode<synchronous>, transform_indices = @transform_20, window_bounds = array<i64: 36, 22>}, {pipeline_mode = #tpu.pipeline_mode<synchronous>, transform_indices = @transform_21, window_bounds = array<i64: 16, 8>}, {pipeline_mode = #tpu.pipeline_mode<synchronous>, transform_indices = @transform_22, window_bounds = array<i64: 4, 6>}, {transform_indices = @transform_23, window_bounds = array<i64: 1, 4, 256>}]} {
    %c0 = arith.constant 0 : index
    %c0_0 = arith.constant 0 : index
    %c0_1 = arith.constant 0 : index
    %0 = vector.load %arg1[%c0, %c0_0, %c0_1] : memref<1x256x256xf32, #tpu.memory_space<vmem>>, vector<1x256x256xf32>
    %1 = vector.shape_cast %0 : vector<1x256x256xf32> to vector<256x256xf32>
    %c0_2 = arith.constant 0 : index
    %c0_3 = arith.constant 0 : index
    %2 = vector.load %arg2[%c0_2, %c0_3] : memref<256x64xf32, #tpu.memory_space<vmem>>, vector<256x64xf32>
    %cst = arith.constant dense<0.000000e+00> : vector<256x64xf32>
    %3 = tpu.matmul %1, %2, %cst {dimension_numbers = #tpu.dot_dimension_numbers<[1], [0], [0], [1], [0, 0, 1, 1], [], []>} : vector<256x256xf32>, vector<256x64xf32>, vector<256x64xf32> -> vector<256x64xf32>
    %c0_4 = arith.constant 0 : index
    %c0_5 = arith.constant 0 : index
    %4 = vector.load %arg3[%c0_4, %c0_5] : memref<1x64xf32, #tpu.memory_space<vmem>>, vector<1x64xf32>
    %5 = vector.broadcast %4 : vector<1x64xf32> to vector<256x64xf32>
    %6 = arith.addf %3, %5 : vector<256x64xf32>
    %cst_6 = arith.constant 0.000000e+00 : f32
    %7 = vector.broadcast %cst_6 : f32 to vector<256x64xf32>
    %8 = arith.maximumf %6, %7 : vector<256x64xf32>
    %c0_7 = arith.constant 0 : index
    %c0_8 = arith.constant 0 : index
    %9 = vector.load %arg16[%c0_7, %c0_8] : memref<324x256xf32, #tpu.memory_space<vmem>>, vector<324x256xf32>
    %cst_9 = arith.constant dense<0.000000e+00> : vector<324x64xf32>
    %10 = tpu.matmul %9, %8, %cst_9 {dimension_numbers = #tpu.dot_dimension_numbers<[1], [0], [0], [1], [0, 0, 1, 1], [], []>} : vector<324x256xf32>, vector<256x64xf32>, vector<324x64xf32> -> vector<324x64xf32>
    %c0_10 = arith.constant 0 : index
    %c0_11 = arith.constant 0 : index
    %11 = vector.load %arg25[%c0_10, %c0_11] : memref<324x64xf32, #tpu.memory_space<vmem>>, vector<324x64xf32>
    tpu.vector_store %arg25[%c0_10, %c0_11], %10 {strides = array<i32>} : memref<324x64xf32, #tpu.memory_space<vmem>>, vector<324x64xf32>,
    %c0_12 = arith.constant 0 : index
    %c0_13 = arith.constant 0 : index
    %12 = vector.load %arg25[%c0_12, %c0_13] : memref<324x64xf32, #tpu.memory_space<vmem>>, vector<134x64xf32>
    %c162 = arith.constant 162 : index
    %c0_14 = arith.constant 0 : index
    %13 = vector.load %arg25[%c162, %c0_14] : memref<324x64xf32, #tpu.memory_space<vmem>>, vector<134x64xf32>
    %14 = arith.maximumf %12, %13 : vector<134x64xf32>
    %c1 = arith.constant 1 : index
    %c0_15 = arith.constant 0 : index
    %15 = vector.load %arg25[%c1, %c0_15] : memref<324x64xf32, #tpu.memory_space<vmem>>, vector<134x64xf32>
    %16 = arith.maximumf %14, %15 : vector<134x64xf32>
    %c9 = arith.constant 9 : index
    %c0_16 = arith.constant 0 : index
    %17 = vector.load %arg25[%c9, %c0_16] : memref<324x64xf32, #tpu.memory_space<vmem>>, vector<134x64xf32>
    %18 = arith.maximumf %16, %17 : vector<134x64xf32>
    %c171 = arith.constant 171 : index
    %c0_17 = arith.constant 0 : index
    %19 = vector.load %arg25[%c171, %c0_17] : memref<324x64xf32, #tpu.memory_space<vmem>>, vector<134x64xf32>
    %20 = arith.maximumf %18, %19 : vector<134x64xf32>
    %c10 = arith.constant 10 : index
    %c0_18 = arith.constant 0 : index
    %21 = vector.load %arg25[%c10, %c0_18] : memref<324x64xf32, #tpu.memory_space<vmem>>, vector<134x64xf32>
    %22 = arith.maximumf %20, %21 : vector<134x64xf32>
    %c18 = arith.constant 18 : index
    %c0_19 = arith.constant 0 : index
    %23 = vector.load %arg25[%c18, %c0_19] : memref<324x64xf32, #tpu.memory_space<vmem>>, vector<134x64xf32>
    %24 = arith.maximumf %22, %23 : vector<134x64xf32>
    %c180 = arith.constant 180 : index
    %c0_20 = arith.constant 0 : index
    %25 = vector.load %arg25[%c180, %c0_20] : memref<324x64xf32, #tpu.memory_space<vmem>>, vector<134x64xf32>
    %26 = arith.maximumf %24, %25 : vector<134x64xf32>
    %c19 = arith.constant 19 : index
    %c0_21 = arith.constant 0 : index
    %27 = vector.load %arg25[%c19, %c0_21] : memref<324x64xf32, #tpu.memory_space<vmem>>, vector<134x64xf32>
    %28 = arith.maximumf %26, %27 : vector<134x64xf32>
    %c0_22 = arith.constant 0 : index
    %c0_23 = arith.constant 0 : index
    %29 = vector.load %arg17[%c0_22, %c0_23] : memref<100x134xf32, #tpu.memory_space<vmem>>, vector<100x134xf32>
    %cst_24 = arith.constant dense<0.000000e+00> : vector<100x64xf32>
    %30 = tpu.matmul %29, %28, %cst_24 {dimension_numbers = #tpu.dot_dimension_numbers<[1], [0], [0], [1], [0, 0, 1, 1], [], []>} : vector<100x134xf32>, vector<134x64xf32>, vector<100x64xf32> -> vector<100x64xf32>
    %c0_25 = arith.constant 0 : index
    %c0_26 = arith.constant 0 : index
    %31 = vector.load %arg26[%c0_25, %c0_26] : memref<100x64xf32, #tpu.memory_space<vmem>>, vector<100x64xf32>
    tpu.vector_store %arg26[%c0_25, %c0_26], %30 {strides = array<i32>} : memref<100x64xf32, #tpu.memory_space<vmem>>, vector<100x64xf32>,
    %c0_27 = arith.constant 0 : index
    %c0_28 = arith.constant 0 : index
    %32 = vector.load %arg26[%c0_27, %c0_28] : memref<100x64xf32, #tpu.memory_space<vmem>>, vector<78x64xf32>
    %c0_29 = arith.constant 0 : index
    %c0_30 = arith.constant 0 : index
    %c0_31 = arith.constant 0 : index
    %33 = vector.load %arg4[%c0_29, %c0_30, %c0_31] : memref<9x64x64xf32, #tpu.memory_space<vmem>>, vector<1x64x64xf32>
    %34 = vector.shape_cast %33 : vector<1x64x64xf32> to vector<64x64xf32>
    %cst_32 = arith.constant dense<0.000000e+00> : vector<78x64xf32>
    %35 = tpu.matmul %32, %34, %cst_32 {dimension_numbers = #tpu.dot_dimension_numbers<[1], [0], [0], [1], [0, 0, 1, 1], [], []>} : vector<78x64xf32>, vector<64x64xf32>, vector<78x64xf32> -> vector<78x64xf32>
    %c1_33 = arith.constant 1 : index
    %c0_34 = arith.constant 0 : index
    %36 = vector.load %arg26[%c1_33, %c0_34] : memref<100x64xf32, #tpu.memory_space<vmem>>, vector<78x64xf32>
    %c1_35 = arith.constant 1 : index
    %c0_36 = arith.constant 0 : index
    %c0_37 = arith.constant 0 : index
    %37 = vector.load %arg4[%c1_35, %c0_36, %c0_37] : memref<9x64x64xf32, #tpu.memory_space<vmem>>, vector<1x64x64xf32>
    %38 = vector.shape_cast %37 : vector<1x64x64xf32> to vector<64x64xf32>
    %cst_38 = arith.constant dense<0.000000e+00> : vector<78x64xf32>
    %39 = tpu.matmul %36, %38, %cst_38 {dimension_numbers = #tpu.dot_dimension_numbers<[1], [0], [0], [1], [0, 0, 1, 1], [], []>} : vector<78x64xf32>, vector<64x64xf32>, vector<78x64xf32> -> vector<78x64xf32>
    %40 = arith.addf %35, %39 : vector<78x64xf32>
    %c2 = arith.constant 2 : index
    %c0_39 = arith.constant 0 : index
    %41 = vector.load %arg26[%c2, %c0_39] : memref<100x64xf32, #tpu.memory_space<vmem>>, vector<78x64xf32>
    %c2_40 = arith.constant 2 : index
    %c0_41 = arith.constant 0 : index
    %c0_42 = arith.constant 0 : index
    %42 = vector.load %arg4[%c2_40, %c0_41, %c0_42] : memref<9x64x64xf32, #tpu.memory_space<vmem>>, vector<1x64x64xf32>
    %43 = vector.shape_cast %42 : vector<1x64x64xf32> to vector<64x64xf32>
    %cst_43 = arith.constant dense<0.000000e+00> : vector<78x64xf32>
    %44 = tpu.matmul %41, %43, %cst_43 {dimension_numbers = #tpu.dot_dimension_numbers<[1], [0], [0], [1], [0, 0, 1, 1], [], []>} : vector<78x64xf32>, vector<64x64xf32>, vector<78x64xf32> -> vector<78x64xf32>
    %45 = arith.addf %40, %44 : vector<78x64xf32>
    %c10_44 = arith.constant 10 : index
    %c0_45 = arith.constant 0 : index
    %46 = vector.load %arg26[%c10_44, %c0_45] : memref<100x64xf32, #tpu.memory_space<vmem>>, vector<78x64xf32>
    %c3 = arith.constant 3 : index
    %c0_46 = arith.constant 0 : index
    %c0_47 = arith.constant 0 : index
    %47 = vector.load %arg4[%c3, %c0_46, %c0_47] : memref<9x64x64xf32, #tpu.memory_space<vmem>>, vector<1x64x64xf32>
    %48 = vector.shape_cast %47 : vector<1x64x64xf32> to vector<64x64xf32>
    %cst_48 = arith.constant dense<0.000000e+00> : vector<78x64xf32>
    %49 = tpu.matmul %46, %48, %cst_48 {dimension_numbers = #tpu.dot_dimension_numbers<[1], [0], [0], [1], [0, 0, 1, 1], [], []>} : vector<78x64xf32>, vector<64x64xf32>, vector<78x64xf32> -> vector<78x64xf32>
    %50 = arith.addf %45, %49 : vector<78x64xf32>
    %c11 = arith.constant 11 : index
    %c0_49 = arith.constant 0 : index
    %51 = vector.load %arg26[%c11, %c0_49] : memref<100x64xf32, #tpu.memory_space<vmem>>, vector<78x64xf32>
    %c4 = arith.constant 4 : index
    %c0_50 = arith.constant 0 : index
    %c0_51 = arith.constant 0 : index
    %52 = vector.load %arg4[%c4, %c0_50, %c0_51] : memref<9x64x64xf32, #tpu.memory_space<vmem>>, vector<1x64x64xf32>
    %53 = vector.shape_cast %52 : vector<1x64x64xf32> to vector<64x64xf32>
    %cst_52 = arith.constant dense<0.000000e+00> : vector<78x64xf32>
    %54 = tpu.matmul %51, %53, %cst_52 {dimension_numbers = #tpu.dot_dimension_numbers<[1], [0], [0], [1], [0, 0, 1, 1], [], []>} : vector<78x64xf32>, vector<64x64xf32>, vector<78x64xf32> -> vector<78x64xf32>
    %55 = arith.addf %50, %54 : vector<78x64xf32>
    %c12 = arith.constant 12 : index
    %c0_53 = arith.constant 0 : index
    %56 = vector.load %arg26[%c12, %c0_53] : memref<100x64xf32, #tpu.memory_space<vmem>>, vector<78x64xf32>
    %c5 = arith.constant 5 : index
    %c0_54 = arith.constant 0 : index
    %c0_55 = arith.constant 0 : index
    %57 = vector.load %arg4[%c5, %c0_54, %c0_55] : memref<9x64x64xf32, #tpu.memory_space<vmem>>, vector<1x64x64xf32>
    %58 = vector.shape_cast %57 : vector<1x64x64xf32> to vector<64x64xf32>
    %cst_56 = arith.constant dense<0.000000e+00> : vector<78x64xf32>
    %59 = tpu.matmul %56, %58, %cst_56 {dimension_numbers = #tpu.dot_dimension_numbers<[1], [0], [0], [1], [0, 0, 1, 1], [], []>} : vector<78x64xf32>, vector<64x64xf32>, vector<78x64xf32> -> vector<78x64xf32>
    %60 = arith.addf %55, %59 : vector<78x64xf32>
    %c20 = arith.constant 20 : index
    %c0_57 = arith.constant 0 : index
    %61 = vector.load %arg26[%c20, %c0_57] : memref<100x64xf32, #tpu.memory_space<vmem>>, vector<78x64xf32>
    %c6 = arith.constant 6 : index
    %c0_58 = arith.constant 0 : index
    %c0_59 = arith.constant 0 : index
    %62 = vector.load %arg4[%c6, %c0_58, %c0_59] : memref<9x64x64xf32, #tpu.memory_space<vmem>>, vector<1x64x64xf32>
    %63 = vector.shape_cast %62 : vector<1x64x64xf32> to vector<64x64xf32>
    %cst_60 = arith.constant dense<0.000000e+00> : vector<78x64xf32>
    %64 = tpu.matmul %61, %63, %cst_60 {dimension_numbers = #tpu.dot_dimension_numbers<[1], [0], [0], [1], [0, 0, 1, 1], [], []>} : vector<78x64xf32>, vector<64x64xf32>, vector<78x64xf32> -> vector<78x64xf32>
    %65 = arith.addf %60, %64 : vector<78x64xf32>
    %c21 = arith.constant 21 : index
    %c0_61 = arith.constant 0 : index
    %66 = vector.load %arg26[%c21, %c0_61] : memref<100x64xf32, #tpu.memory_space<vmem>>, vector<78x64xf32>
    %c7 = arith.constant 7 : index
    %c0_62 = arith.constant 0 : index
    %c0_63 = arith.constant 0 : index
    %67 = vector.load %arg4[%c7, %c0_62, %c0_63] : memref<9x64x64xf32, #tpu.memory_space<vmem>>, vector<1x64x64xf32>
    %68 = vector.shape_cast %67 : vector<1x64x64xf32> to vector<64x64xf32>
    %cst_64 = arith.constant dense<0.000000e+00> : vector<78x64xf32>
    %69 = tpu.matmul %66, %68, %cst_64 {dimension_numbers = #tpu.dot_dimension_numbers<[1], [0], [0], [1], [0, 0, 1, 1], [], []>} : vector<78x64xf32>, vector<64x64xf32>, vector<78x64xf32> -> vector<78x64xf32>
    %70 = arith.addf %65, %69 : vector<78x64xf32>
    %c22 = arith.constant 22 : index
    %c0_65 = arith.constant 0 : index
    %71 = vector.load %arg26[%c22, %c0_65] : memref<100x64xf32, #tpu.memory_space<vmem>>, vector<78x64xf32>
    %c8 = arith.constant 8 : index
    %c0_66 = arith.constant 0 : index
    %c0_67 = arith.constant 0 : index
    %72 = vector.load %arg4[%c8, %c0_66, %c0_67] : memref<9x64x64xf32, #tpu.memory_space<vmem>>, vector<1x64x64xf32>
    %73 = vector.shape_cast %72 : vector<1x64x64xf32> to vector<64x64xf32>
    %cst_68 = arith.constant dense<0.000000e+00> : vector<78x64xf32>
    %74 = tpu.matmul %71, %73, %cst_68 {dimension_numbers = #tpu.dot_dimension_numbers<[1], [0], [0], [1], [0, 0, 1, 1], [], []>} : vector<78x64xf32>, vector<64x64xf32>, vector<78x64xf32> -> vector<78x64xf32>
    %75 = arith.addf %70, %74 : vector<78x64xf32>
    %c0_69 = arith.constant 0 : index
    %c0_70 = arith.constant 0 : index
    %76 = vector.load %arg5[%c0_69, %c0_70] : memref<1x64xf32, #tpu.memory_space<vmem>>, vector<1x64xf32>
    %77 = vector.broadcast %76 : vector<1x64xf32> to vector<78x64xf32>
    %78 = arith.addf %75, %77 : vector<78x64xf32>
    %cst_71 = arith.constant 0.000000e+00 : f32
    %79 = vector.broadcast %cst_71 : f32 to vector<78x64xf32>
    %80 = arith.maximumf %78, %79 : vector<78x64xf32>
    %c0_72 = arith.constant 0 : index
    %c0_73 = arith.constant 0 : index
    %81 = vector.load %arg18[%c0_72, %c0_73] : memref<100x78xf32, #tpu.memory_space<vmem>>, vector<100x78xf32>
    %cst_74 = arith.constant dense<0.000000e+00> : vector<100x64xf32>
    %82 = tpu.matmul %81, %80, %cst_74 {dimension_numbers = #tpu.dot_dimension_numbers<[1], [0], [0], [1], [0, 0, 1, 1], [], []>} : vector<100x78xf32>, vector<78x64xf32>, vector<100x64xf32> -> vector<100x64xf32>
    %c0_75 = arith.constant 0 : index
    %c0_76 = arith.constant 0 : index
    %83 = vector.load %arg27[%c0_75, %c0_76] : memref<100x64xf32, #tpu.memory_space<vmem>>, vector<100x64xf32>
    tpu.vector_store %arg27[%c0_75, %c0_76], %82 {strides = array<i32>} : memref<100x64xf32, #tpu.memory_space<vmem>>, vector<100x64xf32>,
    %c0_77 = arith.constant 0 : index
    %c0_78 = arith.constant 0 : index
    %84 = vector.load %arg27[%c0_77, %c0_78] : memref<100x64xf32, #tpu.memory_space<vmem>>, vector<78x64xf32>
    %c0_79 = arith.constant 0 : index
    %c0_80 = arith.constant 0 : index
    %c0_81 = arith.constant 0 : index
    %85 = vector.load %arg6[%c0_79, %c0_80, %c0_81] : memref<9x64x64xf32, #tpu.memory_space<vmem>>, vector<1x64x64xf32>
    %86 = vector.shape_cast %85 : vector<1x64x64xf32> to vector<64x64xf32>
    %cst_82 = arith.constant dense<0.000000e+00> : vector<78x64xf32>
    %87 = tpu.matmul %84, %86, %cst_82 {dimension_numbers = #tpu.dot_dimension_numbers<[1], [0], [0], [1], [0, 0, 1, 1], [], []>} : vector<78x64xf32>, vector<64x64xf32>, vector<78x64xf32> -> vector<78x64xf32>
    %c1_83 = arith.constant 1 : index
    %c0_84 = arith.constant 0 : index
    %88 = vector.load %arg27[%c1_83, %c0_84] : memref<100x64xf32, #tpu.memory_space<vmem>>, vector<78x64xf32>
    %c1_85 = arith.constant 1 : index
    %c0_86 = arith.constant 0 : index
    %c0_87 = arith.constant 0 : index
    %89 = vector.load %arg6[%c1_85, %c0_86, %c0_87] : memref<9x64x64xf32, #tpu.memory_space<vmem>>, vector<1x64x64xf32>
    %90 = vector.shape_cast %89 : vector<1x64x64xf32> to vector<64x64xf32>
    %cst_88 = arith.constant dense<0.000000e+00> : vector<78x64xf32>
    %91 = tpu.matmul %88, %90, %cst_88 {dimension_numbers = #tpu.dot_dimension_numbers<[1], [0], [0], [1], [0, 0, 1, 1], [], []>} : vector<78x64xf32>, vector<64x64xf32>, vector<78x64xf32> -> vector<78x64xf32>
    %92 = arith.addf %87, %91 : vector<78x64xf32>
    %c2_89 = arith.constant 2 : index
    %c0_90 = arith.constant 0 : index
    %93 = vector.load %arg27[%c2_89, %c0_90] : memref<100x64xf32, #tpu.memory_space<vmem>>, vector<78x64xf32>
    %c2_91 = arith.constant 2 : index
    %c0_92 = arith.constant 0 : index
    %c0_93 = arith.constant 0 : index
    %94 = vector.load %arg6[%c2_91, %c0_92, %c0_93] : memref<9x64x64xf32, #tpu.memory_space<vmem>>, vector<1x64x64xf32>
    %95 = vector.shape_cast %94 : vector<1x64x64xf32> to vector<64x64xf32>
    %cst_94 = arith.constant dense<0.000000e+00> : vector<78x64xf32>
    %96 = tpu.matmul %93, %95, %cst_94 {dimension_numbers = #tpu.dot_dimension_numbers<[1], [0], [0], [1], [0, 0, 1, 1], [], []>} : vector<78x64xf32>, vector<64x64xf32>, vector<78x64xf32> -> vector<78x64xf32>
    %97 = arith.addf %92, %96 : vector<78x64xf32>
    %c10_95 = arith.constant 10 : index
    %c0_96 = arith.constant 0 : index
    %98 = vector.load %arg27[%c10_95, %c0_96] : memref<100x64xf32, #tpu.memory_space<vmem>>, vector<78x64xf32>
    %c3_97 = arith.constant 3 : index
    %c0_98 = arith.constant 0 : index
    %c0_99 = arith.constant 0 : index
    %99 = vector.load %arg6[%c3_97, %c0_98, %c0_99] : memref<9x64x64xf32, #tpu.memory_space<vmem>>, vector<1x64x64xf32>
    %100 = vector.shape_cast %99 : vector<1x64x64xf32> to vector<64x64xf32>
    %cst_100 = arith.constant dense<0.000000e+00> : vector<78x64xf32>
    %101 = tpu.matmul %98, %100, %cst_100 {dimension_numbers = #tpu.dot_dimension_numbers<[1], [0], [0], [1], [0, 0, 1, 1], [], []>} : vector<78x64xf32>, vector<64x64xf32>, vector<78x64xf32> -> vector<78x64xf32>
    %102 = arith.addf %97, %101 : vector<78x64xf32>
    %c11_101 = arith.constant 11 : index
    %c0_102 = arith.constant 0 : index
    %103 = vector.load %arg27[%c11_101, %c0_102] : memref<100x64xf32, #tpu.memory_space<vmem>>, vector<78x64xf32>
    %c4_103 = arith.constant 4 : index
    %c0_104 = arith.constant 0 : index
    %c0_105 = arith.constant 0 : index
    %104 = vector.load %arg6[%c4_103, %c0_104, %c0_105] : memref<9x64x64xf32, #tpu.memory_space<vmem>>, vector<1x64x64xf32>
    %105 = vector.shape_cast %104 : vector<1x64x64xf32> to vector<64x64xf32>
    %cst_106 = arith.constant dense<0.000000e+00> : vector<78x64xf32>
    %106 = tpu.matmul %103, %105, %cst_106 {dimension_numbers = #tpu.dot_dimension_numbers<[1], [0], [0], [1], [0, 0, 1, 1], [], []>} : vector<78x64xf32>, vector<64x64xf32>, vector<78x64xf32> -> vector<78x64xf32>
    %107 = arith.addf %102, %106 : vector<78x64xf32>
    %c12_107 = arith.constant 12 : index
    %c0_108 = arith.constant 0 : index
    %108 = vector.load %arg27[%c12_107, %c0_108] : memref<100x64xf32, #tpu.memory_space<vmem>>, vector<78x64xf32>
    %c5_109 = arith.constant 5 : index
    %c0_110 = arith.constant 0 : index
    %c0_111 = arith.constant 0 : index
    %109 = vector.load %arg6[%c5_109, %c0_110, %c0_111] : memref<9x64x64xf32, #tpu.memory_space<vmem>>, vector<1x64x64xf32>
    %110 = vector.shape_cast %109 : vector<1x64x64xf32> to vector<64x64xf32>
    %cst_112 = arith.constant dense<0.000000e+00> : vector<78x64xf32>
    %111 = tpu.matmul %108, %110, %cst_112 {dimension_numbers = #tpu.dot_dimension_numbers<[1], [0], [0], [1], [0, 0, 1, 1], [], []>} : vector<78x64xf32>, vector<64x64xf32>, vector<78x64xf32> -> vector<78x64xf32>
    %112 = arith.addf %107, %111 : vector<78x64xf32>
    %c20_113 = arith.constant 20 : index
    %c0_114 = arith.constant 0 : index
    %113 = vector.load %arg27[%c20_113, %c0_114] : memref<100x64xf32, #tpu.memory_space<vmem>>, vector<78x64xf32>
    %c6_115 = arith.constant 6 : index
    %c0_116 = arith.constant 0 : index
    %c0_117 = arith.constant 0 : index
    %114 = vector.load %arg6[%c6_115, %c0_116, %c0_117] : memref<9x64x64xf32, #tpu.memory_space<vmem>>, vector<1x64x64xf32>
    %115 = vector.shape_cast %114 : vector<1x64x64xf32> to vector<64x64xf32>
    %cst_118 = arith.constant dense<0.000000e+00> : vector<78x64xf32>
    %116 = tpu.matmul %113, %115, %cst_118 {dimension_numbers = #tpu.dot_dimension_numbers<[1], [0], [0], [1], [0, 0, 1, 1], [], []>} : vector<78x64xf32>, vector<64x64xf32>, vector<78x64xf32> -> vector<78x64xf32>
    %117 = arith.addf %112, %116 : vector<78x64xf32>
    %c21_119 = arith.constant 21 : index
    %c0_120 = arith.constant 0 : index
    %118 = vector.load %arg27[%c21_119, %c0_120] : memref<100x64xf32, #tpu.memory_space<vmem>>, vector<78x64xf32>
    %c7_121 = arith.constant 7 : index
    %c0_122 = arith.constant 0 : index
    %c0_123 = arith.constant 0 : index
    %119 = vector.load %arg6[%c7_121, %c0_122, %c0_123] : memref<9x64x64xf32, #tpu.memory_space<vmem>>, vector<1x64x64xf32>
    %120 = vector.shape_cast %119 : vector<1x64x64xf32> to vector<64x64xf32>
    %cst_124 = arith.constant dense<0.000000e+00> : vector<78x64xf32>
    %121 = tpu.matmul %118, %120, %cst_124 {dimension_numbers = #tpu.dot_dimension_numbers<[1], [0], [0], [1], [0, 0, 1, 1], [], []>} : vector<78x64xf32>, vector<64x64xf32>, vector<78x64xf32> -> vector<78x64xf32>
    %122 = arith.addf %117, %121 : vector<78x64xf32>
    %c22_125 = arith.constant 22 : index
    %c0_126 = arith.constant 0 : index
    %123 = vector.load %arg27[%c22_125, %c0_126] : memref<100x64xf32, #tpu.memory_space<vmem>>, vector<78x64xf32>
    %c8_127 = arith.constant 8 : index
    %c0_128 = arith.constant 0 : index
    %c0_129 = arith.constant 0 : index
    %124 = vector.load %arg6[%c8_127, %c0_128, %c0_129] : memref<9x64x64xf32, #tpu.memory_space<vmem>>, vector<1x64x64xf32>
    %125 = vector.shape_cast %124 : vector<1x64x64xf32> to vector<64x64xf32>
    %cst_130 = arith.constant dense<0.000000e+00> : vector<78x64xf32>
    %126 = tpu.matmul %123, %125, %cst_130 {dimension_numbers = #tpu.dot_dimension_numbers<[1], [0], [0], [1], [0, 0, 1, 1], [], []>} : vector<78x64xf32>, vector<64x64xf32>, vector<78x64xf32> -> vector<78x64xf32>
    %127 = arith.addf %122, %126 : vector<78x64xf32>
    %c0_131 = arith.constant 0 : index
    %c0_132 = arith.constant 0 : index
    %128 = vector.load %arg7[%c0_131, %c0_132] : memref<1x64xf32, #tpu.memory_space<vmem>>, vector<1x64xf32>
    %129 = vector.broadcast %128 : vector<1x64xf32> to vector<78x64xf32>
    %130 = arith.addf %127, %129 : vector<78x64xf32>
    %cst_133 = arith.constant 0.000000e+00 : f32
    %131 = vector.broadcast %cst_133 : f32 to vector<78x64xf32>
    %132 = arith.maximumf %130, %131 : vector<78x64xf32>
    %c0_134 = arith.constant 0 : index
    %c0_135 = arith.constant 0 : index
    %133 = vector.load %arg19[%c0_134, %c0_135] : memref<100x78xf32, #tpu.memory_space<vmem>>, vector<100x78xf32>
    %cst_136 = arith.constant dense<0.000000e+00> : vector<100x64xf32>
    %134 = tpu.matmul %133, %132, %cst_136 {dimension_numbers = #tpu.dot_dimension_numbers<[1], [0], [0], [1], [0, 0, 1, 1], [], []>} : vector<100x78xf32>, vector<78x64xf32>, vector<100x64xf32> -> vector<100x64xf32>
    %c0_137 = arith.constant 0 : index
    %c0_138 = arith.constant 0 : index
    %135 = vector.load %arg28[%c0_137, %c0_138] : memref<100x64xf32, #tpu.memory_space<vmem>>, vector<100x64xf32>
    tpu.vector_store %arg28[%c0_137, %c0_138], %134 {strides = array<i32>} : memref<100x64xf32, #tpu.memory_space<vmem>>, vector<100x64xf32>,
    %c0_139 = arith.constant 0 : index
    %c0_140 = arith.constant 0 : index
    %136 = vector.load %arg28[%c0_139, %c0_140] : memref<100x64xf32, #tpu.memory_space<vmem>>, vector<34x64xf32>
    %c0_141 = arith.constant 0 : index
    %c0_142 = arith.constant 0 : index
    %c0_143 = arith.constant 0 : index
    %137 = vector.load %arg8[%c0_141, %c0_142, %c0_143] : memref<9x64x128xf32, #tpu.memory_space<vmem>>, vector<1x64x128xf32>
    %138 = vector.shape_cast %137 : vector<1x64x128xf32> to vector<64x128xf32>
    %cst_144 = arith.constant dense<0.000000e+00> : vector<34x128xf32>
    %139 = tpu.matmul %136, %138, %cst_144 {dimension_numbers = #tpu.dot_dimension_numbers<[1], [0], [0], [1], [0, 0, 1, 1], [], []>} : vector<34x64xf32>, vector<64x128xf32>, vector<34x128xf32> -> vector<34x128xf32>
    %c50 = arith.constant 50 : index
    %c0_145 = arith.constant 0 : index
    %140 = vector.load %arg28[%c50, %c0_145] : memref<100x64xf32, #tpu.memory_space<vmem>>, vector<34x64xf32>
    %c1_146 = arith.constant 1 : index
    %c0_147 = arith.constant 0 : index
    %c0_148 = arith.constant 0 : index
    %141 = vector.load %arg8[%c1_146, %c0_147, %c0_148] : memref<9x64x128xf32, #tpu.memory_space<vmem>>, vector<1x64x128xf32>
    %142 = vector.shape_cast %141 : vector<1x64x128xf32> to vector<64x128xf32>
    %cst_149 = arith.constant dense<0.000000e+00> : vector<34x128xf32>
    %143 = tpu.matmul %140, %142, %cst_149 {dimension_numbers = #tpu.dot_dimension_numbers<[1], [0], [0], [1], [0, 0, 1, 1], [], []>} : vector<34x64xf32>, vector<64x128xf32>, vector<34x128xf32> -> vector<34x128xf32>
    %144 = arith.addf %139, %143 : vector<34x128xf32>
    %c1_150 = arith.constant 1 : index
    %c0_151 = arith.constant 0 : index
    %145 = vector.load %arg28[%c1_150, %c0_151] : memref<100x64xf32, #tpu.memory_space<vmem>>, vector<34x64xf32>
    %c2_152 = arith.constant 2 : index
    %c0_153 = arith.constant 0 : index
    %c0_154 = arith.constant 0 : index
    %146 = vector.load %arg8[%c2_152, %c0_153, %c0_154] : memref<9x64x128xf32, #tpu.memory_space<vmem>>, vector<1x64x128xf32>
    %147 = vector.shape_cast %146 : vector<1x64x128xf32> to vector<64x128xf32>
    %cst_155 = arith.constant dense<0.000000e+00> : vector<34x128xf32>
    %148 = tpu.matmul %145, %147, %cst_155 {dimension_numbers = #tpu.dot_dimension_numbers<[1], [0], [0], [1], [0, 0, 1, 1], [], []>} : vector<34x64xf32>, vector<64x128xf32>, vector<34x128xf32> -> vector<34x128xf32>
    %149 = arith.addf %144, %148 : vector<34x128xf32>
    %c5_156 = arith.constant 5 : index
    %c0_157 = arith.constant 0 : index
    %150 = vector.load %arg28[%c5_156, %c0_157] : memref<100x64xf32, #tpu.memory_space<vmem>>, vector<34x64xf32>
    %c3_158 = arith.constant 3 : index
    %c0_159 = arith.constant 0 : index
    %c0_160 = arith.constant 0 : index
    %151 = vector.load %arg8[%c3_158, %c0_159, %c0_160] : memref<9x64x128xf32, #tpu.memory_space<vmem>>, vector<1x64x128xf32>
    %152 = vector.shape_cast %151 : vector<1x64x128xf32> to vector<64x128xf32>
    %cst_161 = arith.constant dense<0.000000e+00> : vector<34x128xf32>
    %153 = tpu.matmul %150, %152, %cst_161 {dimension_numbers = #tpu.dot_dimension_numbers<[1], [0], [0], [1], [0, 0, 1, 1], [], []>} : vector<34x64xf32>, vector<64x128xf32>, vector<34x128xf32> -> vector<34x128xf32>
    %154 = arith.addf %149, %153 : vector<34x128xf32>
    %c55 = arith.constant 55 : index
    %c0_162 = arith.constant 0 : index
    %155 = vector.load %arg28[%c55, %c0_162] : memref<100x64xf32, #tpu.memory_space<vmem>>, vector<34x64xf32>
    %c4_163 = arith.constant 4 : index
    %c0_164 = arith.constant 0 : index
    %c0_165 = arith.constant 0 : index
    %156 = vector.load %arg8[%c4_163, %c0_164, %c0_165] : memref<9x64x128xf32, #tpu.memory_space<vmem>>, vector<1x64x128xf32>
    %157 = vector.shape_cast %156 : vector<1x64x128xf32> to vector<64x128xf32>
    %cst_166 = arith.constant dense<0.000000e+00> : vector<34x128xf32>
    %158 = tpu.matmul %155, %157, %cst_166 {dimension_numbers = #tpu.dot_dimension_numbers<[1], [0], [0], [1], [0, 0, 1, 1], [], []>} : vector<34x64xf32>, vector<64x128xf32>, vector<34x128xf32> -> vector<34x128xf32>
    %159 = arith.addf %154, %158 : vector<34x128xf32>
    %c6_167 = arith.constant 6 : index
    %c0_168 = arith.constant 0 : index
    %160 = vector.load %arg28[%c6_167, %c0_168] : memref<100x64xf32, #tpu.memory_space<vmem>>, vector<34x64xf32>
    %c5_169 = arith.constant 5 : index
    %c0_170 = arith.constant 0 : index
    %c0_171 = arith.constant 0 : index
    %161 = vector.load %arg8[%c5_169, %c0_170, %c0_171] : memref<9x64x128xf32, #tpu.memory_space<vmem>>, vector<1x64x128xf32>
    %162 = vector.shape_cast %161 : vector<1x64x128xf32> to vector<64x128xf32>
    %cst_172 = arith.constant dense<0.000000e+00> : vector<34x128xf32>
    %163 = tpu.matmul %160, %162, %cst_172 {dimension_numbers = #tpu.dot_dimension_numbers<[1], [0], [0], [1], [0, 0, 1, 1], [], []>} : vector<34x64xf32>, vector<64x128xf32>, vector<34x128xf32> -> vector<34x128xf32>
    %164 = arith.addf %159, %163 : vector<34x128xf32>
    %c10_173 = arith.constant 10 : index
    %c0_174 = arith.constant 0 : index
    %165 = vector.load %arg28[%c10_173, %c0_174] : memref<100x64xf32, #tpu.memory_space<vmem>>, vector<34x64xf32>
    %c6_175 = arith.constant 6 : index
    %c0_176 = arith.constant 0 : index
    %c0_177 = arith.constant 0 : index
    %166 = vector.load %arg8[%c6_175, %c0_176, %c0_177] : memref<9x64x128xf32, #tpu.memory_space<vmem>>, vector<1x64x128xf32>
    %167 = vector.shape_cast %166 : vector<1x64x128xf32> to vector<64x128xf32>
    %cst_178 = arith.constant dense<0.000000e+00> : vector<34x128xf32>
    %168 = tpu.matmul %165, %167, %cst_178 {dimension_numbers = #tpu.dot_dimension_numbers<[1], [0], [0], [1], [0, 0, 1, 1], [], []>} : vector<34x64xf32>, vector<64x128xf32>, vector<34x128xf32> -> vector<34x128xf32>
    %169 = arith.addf %164, %168 : vector<34x128xf32>
    %c60 = arith.constant 60 : index
    %c0_179 = arith.constant 0 : index
    %170 = vector.load %arg28[%c60, %c0_179] : memref<100x64xf32, #tpu.memory_space<vmem>>, vector<34x64xf32>
    %c7_180 = arith.constant 7 : index
    %c0_181 = arith.constant 0 : index
    %c0_182 = arith.constant 0 : index
    %171 = vector.load %arg8[%c7_180, %c0_181, %c0_182] : memref<9x64x128xf32, #tpu.memory_space<vmem>>, vector<1x64x128xf32>
    %172 = vector.shape_cast %171 : vector<1x64x128xf32> to vector<64x128xf32>
    %cst_183 = arith.constant dense<0.000000e+00> : vector<34x128xf32>
    %173 = tpu.matmul %170, %172, %cst_183 {dimension_numbers = #tpu.dot_dimension_numbers<[1], [0], [0], [1], [0, 0, 1, 1], [], []>} : vector<34x64xf32>, vector<64x128xf32>, vector<34x128xf32> -> vector<34x128xf32>
    %174 = arith.addf %169, %173 : vector<34x128xf32>
    %c11_184 = arith.constant 11 : index
    %c0_185 = arith.constant 0 : index
    %175 = vector.load %arg28[%c11_184, %c0_185] : memref<100x64xf32, #tpu.memory_space<vmem>>, vector<34x64xf32>
    %c8_186 = arith.constant 8 : index
    %c0_187 = arith.constant 0 : index
    %c0_188 = arith.constant 0 : index
    %176 = vector.load %arg8[%c8_186, %c0_187, %c0_188] : memref<9x64x128xf32, #tpu.memory_space<vmem>>, vector<1x64x128xf32>
    %177 = vector.shape_cast %176 : vector<1x64x128xf32> to vector<64x128xf32>
    %cst_189 = arith.constant dense<0.000000e+00> : vector<34x128xf32>
    %178 = tpu.matmul %175, %177, %cst_189 {dimension_numbers = #tpu.dot_dimension_numbers<[1], [0], [0], [1], [0, 0, 1, 1], [], []>} : vector<34x64xf32>, vector<64x128xf32>, vector<34x128xf32> -> vector<34x128xf32>
    %179 = arith.addf %174, %178 : vector<34x128xf32>
    %c0_190 = arith.constant 0 : index
    %c0_191 = arith.constant 0 : index
    %180 = vector.load %arg9[%c0_190, %c0_191] : memref<1x128xf32, #tpu.memory_space<vmem>>, vector<1x128xf32>
    %181 = vector.broadcast %180 : vector<1x128xf32> to vector<34x128xf32>
    %182 = arith.addf %179, %181 : vector<34x128xf32>
    %cst_192 = arith.constant 0.000000e+00 : f32
    %183 = vector.broadcast %cst_192 : f32 to vector<34x128xf32>
    %184 = arith.maximumf %182, %183 : vector<34x128xf32>
    %c0_193 = arith.constant 0 : index
    %c0_194 = arith.constant 0 : index
    %185 = vector.load %arg20[%c0_193, %c0_194] : memref<36x34xf32, #tpu.memory_space<vmem>>, vector<36x34xf32>
    %cst_195 = arith.constant dense<0.000000e+00> : vector<36x128xf32>
    %186 = tpu.matmul %185, %184, %cst_195 {dimension_numbers = #tpu.dot_dimension_numbers<[1], [0], [0], [1], [0, 0, 1, 1], [], []>} : vector<36x34xf32>, vector<34x128xf32>, vector<36x128xf32> -> vector<36x128xf32>
    %c0_196 = arith.constant 0 : index
    %c0_197 = arith.constant 0 : index
    %187 = vector.load %arg29[%c0_196, %c0_197] : memref<36x128xf32, #tpu.memory_space<vmem>>, vector<36x128xf32>
    tpu.vector_store %arg29[%c0_196, %c0_197], %186 {strides = array<i32>} : memref<36x128xf32, #tpu.memory_space<vmem>>, vector<36x128xf32>,
    %c0_198 = arith.constant 0 : index
    %c0_199 = arith.constant 0 : index
    %188 = vector.load %arg29[%c0_198, %c0_199] : memref<36x128xf32, #tpu.memory_space<vmem>>, vector<22x128xf32>
    %c0_200 = arith.constant 0 : index
    %c0_201 = arith.constant 0 : index
    %c0_202 = arith.constant 0 : index
    %189 = vector.load %arg10[%c0_200, %c0_201, %c0_202] : memref<9x128x128xf32, #tpu.memory_space<vmem>>, vector<1x128x128xf32>
    %190 = vector.shape_cast %189 : vector<1x128x128xf32> to vector<128x128xf32>
    %cst_203 = arith.constant dense<0.000000e+00> : vector<22x128xf32>
    %191 = tpu.matmul %188, %190, %cst_203 {dimension_numbers = #tpu.dot_dimension_numbers<[1], [0], [0], [1], [0, 0, 1, 1], [], []>} : vector<22x128xf32>, vector<128x128xf32>, vector<22x128xf32> -> vector<22x128xf32>
    %c1_204 = arith.constant 1 : index
    %c0_205 = arith.constant 0 : index
    %192 = vector.load %arg29[%c1_204, %c0_205] : memref<36x128xf32, #tpu.memory_space<vmem>>, vector<22x128xf32>
    %c1_206 = arith.constant 1 : index
    %c0_207 = arith.constant 0 : index
    %c0_208 = arith.constant 0 : index
    %193 = vector.load %arg10[%c1_206, %c0_207, %c0_208] : memref<9x128x128xf32, #tpu.memory_space<vmem>>, vector<1x128x128xf32>
    %194 = vector.shape_cast %193 : vector<1x128x128xf32> to vector<128x128xf32>
    %cst_209 = arith.constant dense<0.000000e+00> : vector<22x128xf32>
    %195 = tpu.matmul %192, %194, %cst_209 {dimension_numbers = #tpu.dot_dimension_numbers<[1], [0], [0], [1], [0, 0, 1, 1], [], []>} : vector<22x128xf32>, vector<128x128xf32>, vector<22x128xf32> -> vector<22x128xf32>
    %196 = arith.addf %191, %195 : vector<22x128xf32>
    %c2_210 = arith.constant 2 : index
    %c0_211 = arith.constant 0 : index
    %197 = vector.load %arg29[%c2_210, %c0_211] : memref<36x128xf32, #tpu.memory_space<vmem>>, vector<22x128xf32>
    %c2_212 = arith.constant 2 : index
    %c0_213 = arith.constant 0 : index
    %c0_214 = arith.constant 0 : index
    %198 = vector.load %arg10[%c2_212, %c0_213, %c0_214] : memref<9x128x128xf32, #tpu.memory_space<vmem>>, vector<1x128x128xf32>
    %199 = vector.shape_cast %198 : vector<1x128x128xf32> to vector<128x128xf32>
    %cst_215 = arith.constant dense<0.000000e+00> : vector<22x128xf32>
    %200 = tpu.matmul %197, %199, %cst_215 {dimension_numbers = #tpu.dot_dimension_numbers<[1], [0], [0], [1], [0, 0, 1, 1], [], []>} : vector<22x128xf32>, vector<128x128xf32>, vector<22x128xf32> -> vector<22x128xf32>
    %201 = arith.addf %196, %200 : vector<22x128xf32>
    %c6_216 = arith.constant 6 : index
    %c0_217 = arith.constant 0 : index
    %202 = vector.load %arg29[%c6_216, %c0_217] : memref<36x128xf32, #tpu.memory_space<vmem>>, vector<22x128xf32>
    %c3_218 = arith.constant 3 : index
    %c0_219 = arith.constant 0 : index
    %c0_220 = arith.constant 0 : index
    %203 = vector.load %arg10[%c3_218, %c0_219, %c0_220] : memref<9x128x128xf32, #tpu.memory_space<vmem>>, vector<1x128x128xf32>
    %204 = vector.shape_cast %203 : vector<1x128x128xf32> to vector<128x128xf32>
    %cst_221 = arith.constant dense<0.000000e+00> : vector<22x128xf32>
    %205 = tpu.matmul %202, %204, %cst_221 {dimension_numbers = #tpu.dot_dimension_numbers<[1], [0], [0], [1], [0, 0, 1, 1], [], []>} : vector<22x128xf32>, vector<128x128xf32>, vector<22x128xf32> -> vector<22x128xf32>
    %206 = arith.addf %201, %205 : vector<22x128xf32>
    %c7_222 = arith.constant 7 : index
    %c0_223 = arith.constant 0 : index
    %207 = vector.load %arg29[%c7_222, %c0_223] : memref<36x128xf32, #tpu.memory_space<vmem>>, vector<22x128xf32>
    %c4_224 = arith.constant 4 : index
    %c0_225 = arith.constant 0 : index
    %c0_226 = arith.constant 0 : index
    %208 = vector.load %arg10[%c4_224, %c0_225, %c0_226] : memref<9x128x128xf32, #tpu.memory_space<vmem>>, vector<1x128x128xf32>
    %209 = vector.shape_cast %208 : vector<1x128x128xf32> to vector<128x128xf32>
    %cst_227 = arith.constant dense<0.000000e+00> : vector<22x128xf32>
    %210 = tpu.matmul %207, %209, %cst_227 {dimension_numbers = #tpu.dot_dimension_numbers<[1], [0], [0], [1], [0, 0, 1, 1], [], []>} : vector<22x128xf32>, vector<128x128xf32>, vector<22x128xf32> -> vector<22x128xf32>
    %211 = arith.addf %206, %210 : vector<22x128xf32>
    %c8_228 = arith.constant 8 : index
    %c0_229 = arith.constant 0 : index
    %212 = vector.load %arg29[%c8_228, %c0_229] : memref<36x128xf32, #tpu.memory_space<vmem>>, vector<22x128xf32>
    %c5_230 = arith.constant 5 : index
    %c0_231 = arith.constant 0 : index
    %c0_232 = arith.constant 0 : index
    %213 = vector.load %arg10[%c5_230, %c0_231, %c0_232] : memref<9x128x128xf32, #tpu.memory_space<vmem>>, vector<1x128x128xf32>
    %214 = vector.shape_cast %213 : vector<1x128x128xf32> to vector<128x128xf32>
    %cst_233 = arith.constant dense<0.000000e+00> : vector<22x128xf32>
    %215 = tpu.matmul %212, %214, %cst_233 {dimension_numbers = #tpu.dot_dimension_numbers<[1], [0], [0], [1], [0, 0, 1, 1], [], []>} : vector<22x128xf32>, vector<128x128xf32>, vector<22x128xf32> -> vector<22x128xf32>
    %216 = arith.addf %211, %215 : vector<22x128xf32>
    %c12_234 = arith.constant 12 : index
    %c0_235 = arith.constant 0 : index
    %217 = vector.load %arg29[%c12_234, %c0_235] : memref<36x128xf32, #tpu.memory_space<vmem>>, vector<22x128xf32>
    %c6_236 = arith.constant 6 : index
    %c0_237 = arith.constant 0 : index
    %c0_238 = arith.constant 0 : index
    %218 = vector.load %arg10[%c6_236, %c0_237, %c0_238] : memref<9x128x128xf32, #tpu.memory_space<vmem>>, vector<1x128x128xf32>
    %219 = vector.shape_cast %218 : vector<1x128x128xf32> to vector<128x128xf32>
    %cst_239 = arith.constant dense<0.000000e+00> : vector<22x128xf32>
    %220 = tpu.matmul %217, %219, %cst_239 {dimension_numbers = #tpu.dot_dimension_numbers<[1], [0], [0], [1], [0, 0, 1, 1], [], []>} : vector<22x128xf32>, vector<128x128xf32>, vector<22x128xf32> -> vector<22x128xf32>
    %221 = arith.addf %216, %220 : vector<22x128xf32>
    %c13 = arith.constant 13 : index
    %c0_240 = arith.constant 0 : index
    %222 = vector.load %arg29[%c13, %c0_240] : memref<36x128xf32, #tpu.memory_space<vmem>>, vector<22x128xf32>
    %c7_241 = arith.constant 7 : index
    %c0_242 = arith.constant 0 : index
    %c0_243 = arith.constant 0 : index
    %223 = vector.load %arg10[%c7_241, %c0_242, %c0_243] : memref<9x128x128xf32, #tpu.memory_space<vmem>>, vector<1x128x128xf32>
    %224 = vector.shape_cast %223 : vector<1x128x128xf32> to vector<128x128xf32>
    %cst_244 = arith.constant dense<0.000000e+00> : vector<22x128xf32>
    %225 = tpu.matmul %222, %224, %cst_244 {dimension_numbers = #tpu.dot_dimension_numbers<[1], [0], [0], [1], [0, 0, 1, 1], [], []>} : vector<22x128xf32>, vector<128x128xf32>, vector<22x128xf32> -> vector<22x128xf32>
    %226 = arith.addf %221, %225 : vector<22x128xf32>
    %c14 = arith.constant 14 : index
    %c0_245 = arith.constant 0 : index
    %227 = vector.load %arg29[%c14, %c0_245] : memref<36x128xf32, #tpu.memory_space<vmem>>, vector<22x128xf32>
    %c8_246 = arith.constant 8 : index
    %c0_247 = arith.constant 0 : index
    %c0_248 = arith.constant 0 : index
    %228 = vector.load %arg10[%c8_246, %c0_247, %c0_248] : memref<9x128x128xf32, #tpu.memory_space<vmem>>, vector<1x128x128xf32>
    %229 = vector.shape_cast %228 : vector<1x128x128xf32> to vector<128x128xf32>
    %cst_249 = arith.constant dense<0.000000e+00> : vector<22x128xf32>
    %230 = tpu.matmul %227, %229, %cst_249 {dimension_numbers = #tpu.dot_dimension_numbers<[1], [0], [0], [1], [0, 0, 1, 1], [], []>} : vector<22x128xf32>, vector<128x128xf32>, vector<22x128xf32> -> vector<22x128xf32>
    %231 = arith.addf %226, %230 : vector<22x128xf32>
    %c0_250 = arith.constant 0 : index
    %c0_251 = arith.constant 0 : index
    %232 = vector.load %arg11[%c0_250, %c0_251] : memref<1x128xf32, #tpu.memory_space<vmem>>, vector<1x128xf32>
    %233 = vector.broadcast %232 : vector<1x128xf32> to vector<22x128xf32>
    %234 = arith.addf %231, %233 : vector<22x128xf32>
    %cst_252 = arith.constant 0.000000e+00 : f32
    %235 = vector.broadcast %cst_252 : f32 to vector<22x128xf32>
    %236 = arith.maximumf %234, %235 : vector<22x128xf32>
    %c0_253 = arith.constant 0 : index
    %c0_254 = arith.constant 0 : index
    %237 = vector.load %arg21[%c0_253, %c0_254] : memref<36x22xf32, #tpu.memory_space<vmem>>, vector<36x22xf32>
    %cst_255 = arith.constant dense<0.000000e+00> : vector<36x128xf32>
    %238 = tpu.matmul %237, %236, %cst_255 {dimension_numbers = #tpu.dot_dimension_numbers<[1], [0], [0], [1], [0, 0, 1, 1], [], []>} : vector<36x22xf32>, vector<22x128xf32>, vector<36x128xf32> -> vector<36x128xf32>
    %c0_256 = arith.constant 0 : index
    %c0_257 = arith.constant 0 : index
    %239 = vector.load %arg30[%c0_256, %c0_257] : memref<36x128xf32, #tpu.memory_space<vmem>>, vector<36x128xf32>
    tpu.vector_store %arg30[%c0_256, %c0_257], %238 {strides = array<i32>} : memref<36x128xf32, #tpu.memory_space<vmem>>, vector<36x128xf32>,
    %c0_258 = arith.constant 0 : index
    %c0_259 = arith.constant 0 : index
    %240 = vector.load %arg30[%c0_258, %c0_259] : memref<36x128xf32, #tpu.memory_space<vmem>>, vector<8x128xf32>
    %c0_260 = arith.constant 0 : index
    %c0_261 = arith.constant 0 : index
    %c0_262 = arith.constant 0 : index
    %241 = vector.load %arg12[%c0_260, %c0_261, %c0_262] : memref<9x128x256xf32, #tpu.memory_space<vmem>>, vector<1x128x256xf32>
    %242 = vector.shape_cast %241 : vector<1x128x256xf32> to vector<128x256xf32>
    %cst_263 = arith.constant dense<0.000000e+00> : vector<8x256xf32>
    %243 = tpu.matmul %240, %242, %cst_263 {dimension_numbers = #tpu.dot_dimension_numbers<[1], [0], [0], [1], [0, 0, 1, 1], [], []>} : vector<8x128xf32>, vector<128x256xf32>, vector<8x256xf32> -> vector<8x256xf32>
    %c18_264 = arith.constant 18 : index
    %c0_265 = arith.constant 0 : index
    %244 = vector.load %arg30[%c18_264, %c0_265] : memref<36x128xf32, #tpu.memory_space<vmem>>, vector<8x128xf32>
    %c1_266 = arith.constant 1 : index
    %c0_267 = arith.constant 0 : index
    %c0_268 = arith.constant 0 : index
    %245 = vector.load %arg12[%c1_266, %c0_267, %c0_268] : memref<9x128x256xf32, #tpu.memory_space<vmem>>, vector<1x128x256xf32>
    %246 = vector.shape_cast %245 : vector<1x128x256xf32> to vector<128x256xf32>
    %cst_269 = arith.constant dense<0.000000e+00> : vector<8x256xf32>
    %247 = tpu.matmul %244, %246, %cst_269 {dimension_numbers = #tpu.dot_dimension_numbers<[1], [0], [0], [1], [0, 0, 1, 1], [], []>} : vector<8x128xf32>, vector<128x256xf32>, vector<8x256xf32> -> vector<8x256xf32>
    %248 = arith.addf %243, %247 : vector<8x256xf32>
    %c1_270 = arith.constant 1 : index
    %c0_271 = arith.constant 0 : index
    %249 = vector.load %arg30[%c1_270, %c0_271] : memref<36x128xf32, #tpu.memory_space<vmem>>, vector<8x128xf32>
    %c2_272 = arith.constant 2 : index
    %c0_273 = arith.constant 0 : index
    %c0_274 = arith.constant 0 : index
    %250 = vector.load %arg12[%c2_272, %c0_273, %c0_274] : memref<9x128x256xf32, #tpu.memory_space<vmem>>, vector<1x128x256xf32>
    %251 = vector.shape_cast %250 : vector<1x128x256xf32> to vector<128x256xf32>
    %cst_275 = arith.constant dense<0.000000e+00> : vector<8x256xf32>
    %252 = tpu.matmul %249, %251, %cst_275 {dimension_numbers = #tpu.dot_dimension_numbers<[1], [0], [0], [1], [0, 0, 1, 1], [], []>} : vector<8x128xf32>, vector<128x256xf32>, vector<8x256xf32> -> vector<8x256xf32>
    %253 = arith.addf %248, %252 : vector<8x256xf32>
    %c3_276 = arith.constant 3 : index
    %c0_277 = arith.constant 0 : index
    %254 = vector.load %arg30[%c3_276, %c0_277] : memref<36x128xf32, #tpu.memory_space<vmem>>, vector<8x128xf32>
    %c3_278 = arith.constant 3 : index
    %c0_279 = arith.constant 0 : index
    %c0_280 = arith.constant 0 : index
    %255 = vector.load %arg12[%c3_278, %c0_279, %c0_280] : memref<9x128x256xf32, #tpu.memory_space<vmem>>, vector<1x128x256xf32>
    %256 = vector.shape_cast %255 : vector<1x128x256xf32> to vector<128x256xf32>
    %cst_281 = arith.constant dense<0.000000e+00> : vector<8x256xf32>
    %257 = tpu.matmul %254, %256, %cst_281 {dimension_numbers = #tpu.dot_dimension_numbers<[1], [0], [0], [1], [0, 0, 1, 1], [], []>} : vector<8x128xf32>, vector<128x256xf32>, vector<8x256xf32> -> vector<8x256xf32>
    %258 = arith.addf %253, %257 : vector<8x256xf32>
    %c21_282 = arith.constant 21 : index
    %c0_283 = arith.constant 0 : index
    %259 = vector.load %arg30[%c21_282, %c0_283] : memref<36x128xf32, #tpu.memory_space<vmem>>, vector<8x128xf32>
    %c4_284 = arith.constant 4 : index
    %c0_285 = arith.constant 0 : index
    %c0_286 = arith.constant 0 : index
    %260 = vector.load %arg12[%c4_284, %c0_285, %c0_286] : memref<9x128x256xf32, #tpu.memory_space<vmem>>, vector<1x128x256xf32>
    %261 = vector.shape_cast %260 : vector<1x128x256xf32> to vector<128x256xf32>
    %cst_287 = arith.constant dense<0.000000e+00> : vector<8x256xf32>
    %262 = tpu.matmul %259, %261, %cst_287 {dimension_numbers = #tpu.dot_dimension_numbers<[1], [0], [0], [1], [0, 0, 1, 1], [], []>} : vector<8x128xf32>, vector<128x256xf32>, vector<8x256xf32> -> vector<8x256xf32>
    %263 = arith.addf %258, %262 : vector<8x256xf32>
    %c4_288 = arith.constant 4 : index
    %c0_289 = arith.constant 0 : index
    %264 = vector.load %arg30[%c4_288, %c0_289] : memref<36x128xf32, #tpu.memory_space<vmem>>, vector<8x128xf32>
    %c5_290 = arith.constant 5 : index
    %c0_291 = arith.constant 0 : index
    %c0_292 = arith.constant 0 : index
    %265 = vector.load %arg12[%c5_290, %c0_291, %c0_292] : memref<9x128x256xf32, #tpu.memory_space<vmem>>, vector<1x128x256xf32>
    %266 = vector.shape_cast %265 : vector<1x128x256xf32> to vector<128x256xf32>
    %cst_293 = arith.constant dense<0.000000e+00> : vector<8x256xf32>
    %267 = tpu.matmul %264, %266, %cst_293 {dimension_numbers = #tpu.dot_dimension_numbers<[1], [0], [0], [1], [0, 0, 1, 1], [], []>} : vector<8x128xf32>, vector<128x256xf32>, vector<8x256xf32> -> vector<8x256xf32>
    %268 = arith.addf %263, %267 : vector<8x256xf32>
    %c6_294 = arith.constant 6 : index
    %c0_295 = arith.constant 0 : index
    %269 = vector.load %arg30[%c6_294, %c0_295] : memref<36x128xf32, #tpu.memory_space<vmem>>, vector<8x128xf32>
    %c6_296 = arith.constant 6 : index
    %c0_297 = arith.constant 0 : index
    %c0_298 = arith.constant 0 : index
    %270 = vector.load %arg12[%c6_296, %c0_297, %c0_298] : memref<9x128x256xf32, #tpu.memory_space<vmem>>, vector<1x128x256xf32>
    %271 = vector.shape_cast %270 : vector<1x128x256xf32> to vector<128x256xf32>
    %cst_299 = arith.constant dense<0.000000e+00> : vector<8x256xf32>
    %272 = tpu.matmul %269, %271, %cst_299 {dimension_numbers = #tpu.dot_dimension_numbers<[1], [0], [0], [1], [0, 0, 1, 1], [], []>} : vector<8x128xf32>, vector<128x256xf32>, vector<8x256xf32> -> vector<8x256xf32>
    %273 = arith.addf %268, %272 : vector<8x256xf32>
    %c24 = arith.constant 24 : index
    %c0_300 = arith.constant 0 : index
    %274 = vector.load %arg30[%c24, %c0_300] : memref<36x128xf32, #tpu.memory_space<vmem>>, vector<8x128xf32>
    %c7_301 = arith.constant 7 : index
    %c0_302 = arith.constant 0 : index
    %c0_303 = arith.constant 0 : index
    %275 = vector.load %arg12[%c7_301, %c0_302, %c0_303] : memref<9x128x256xf32, #tpu.memory_space<vmem>>, vector<1x128x256xf32>
    %276 = vector.shape_cast %275 : vector<1x128x256xf32> to vector<128x256xf32>
    %cst_304 = arith.constant dense<0.000000e+00> : vector<8x256xf32>
    %277 = tpu.matmul %274, %276, %cst_304 {dimension_numbers = #tpu.dot_dimension_numbers<[1], [0], [0], [1], [0, 0, 1, 1], [], []>} : vector<8x128xf32>, vector<128x256xf32>, vector<8x256xf32> -> vector<8x256xf32>
    %278 = arith.addf %273, %277 : vector<8x256xf32>
    %c7_305 = arith.constant 7 : index
    %c0_306 = arith.constant 0 : index
    %279 = vector.load %arg30[%c7_305, %c0_306] : memref<36x128xf32, #tpu.memory_space<vmem>>, vector<8x128xf32>
    %c8_307 = arith.constant 8 : index
    %c0_308 = arith.constant 0 : index
    %c0_309 = arith.constant 0 : index
    %280 = vector.load %arg12[%c8_307, %c0_308, %c0_309] : memref<9x128x256xf32, #tpu.memory_space<vmem>>, vector<1x128x256xf32>
    %281 = vector.shape_cast %280 : vector<1x128x256xf32> to vector<128x256xf32>
    %cst_310 = arith.constant dense<0.000000e+00> : vector<8x256xf32>
    %282 = tpu.matmul %279, %281, %cst_310 {dimension_numbers = #tpu.dot_dimension_numbers<[1], [0], [0], [1], [0, 0, 1, 1], [], []>} : vector<8x128xf32>, vector<128x256xf32>, vector<8x256xf32> -> vector<8x256xf32>
    %283 = arith.addf %278, %282 : vector<8x256xf32>
    %c0_311 = arith.constant 0 : index
    %c0_312 = arith.constant 0 : index
    %284 = vector.load %arg13[%c0_311, %c0_312] : memref<1x256xf32, #tpu.memory_space<vmem>>, vector<1x256xf32>
    %285 = vector.broadcast %284 : vector<1x256xf32> to vector<8x256xf32>
    %286 = arith.addf %283, %285 : vector<8x256xf32>
    %cst_313 = arith.constant 0.000000e+00 : f32
    %287 = vector.broadcast %cst_313 : f32 to vector<8x256xf32>
    %288 = arith.maximumf %286, %287 : vector<8x256xf32>
    %c0_314 = arith.constant 0 : index
    %c0_315 = arith.constant 0 : index
    %289 = vector.load %arg22[%c0_314, %c0_315] : memref<16x8xf32, #tpu.memory_space<vmem>>, vector<16x8xf32>
    %cst_316 = arith.constant dense<0.000000e+00> : vector<16x256xf32>
    %290 = tpu.matmul %289, %288, %cst_316 {dimension_numbers = #tpu.dot_dimension_numbers<[1], [0], [0], [1], [0, 0, 1, 1], [], []>} : vector<16x8xf32>, vector<8x256xf32>, vector<16x256xf32> -> vector<16x256xf32>
    %c0_317 = arith.constant 0 : index
    %c0_318 = arith.constant 0 : index
    %291 = vector.load %arg31[%c0_317, %c0_318] : memref<16x256xf32, #tpu.memory_space<vmem>>, vector<16x256xf32>
    tpu.vector_store %arg31[%c0_317, %c0_318], %290 {strides = array<i32>} : memref<16x256xf32, #tpu.memory_space<vmem>>, vector<16x256xf32>,
    %c0_319 = arith.constant 0 : index
    %c0_320 = arith.constant 0 : index
    %292 = vector.load %arg31[%c0_319, %c0_320] : memref<16x256xf32, #tpu.memory_space<vmem>>, vector<6x256xf32>
    %c0_321 = arith.constant 0 : index
    %c0_322 = arith.constant 0 : index
    %c0_323 = arith.constant 0 : index
    %293 = vector.load %arg14[%c0_321, %c0_322, %c0_323] : memref<9x256x256xf32, #tpu.memory_space<vmem>>, vector<1x256x256xf32>
    %294 = vector.shape_cast %293 : vector<1x256x256xf32> to vector<256x256xf32>
    %cst_324 = arith.constant dense<0.000000e+00> : vector<6x256xf32>
    %295 = tpu.matmul %292, %294, %cst_324 {dimension_numbers = #tpu.dot_dimension_numbers<[1], [0], [0], [1], [0, 0, 1, 1], [], []>} : vector<6x256xf32>, vector<256x256xf32>, vector<6x256xf32> -> vector<6x256xf32>
    %c1_325 = arith.constant 1 : index
    %c0_326 = arith.constant 0 : index
    %296 = vector.load %arg31[%c1_325, %c0_326] : memref<16x256xf32, #tpu.memory_space<vmem>>, vector<6x256xf32>
    %c1_327 = arith.constant 1 : index
    %c0_328 = arith.constant 0 : index
    %c0_329 = arith.constant 0 : index
    %297 = vector.load %arg14[%c1_327, %c0_328, %c0_329] : memref<9x256x256xf32, #tpu.memory_space<vmem>>, vector<1x256x256xf32>
    %298 = vector.shape_cast %297 : vector<1x256x256xf32> to vector<256x256xf32>
    %cst_330 = arith.constant dense<0.000000e+00> : vector<6x256xf32>
    %299 = tpu.matmul %296, %298, %cst_330 {dimension_numbers = #tpu.dot_dimension_numbers<[1], [0], [0], [1], [0, 0, 1, 1], [], []>} : vector<6x256xf32>, vector<256x256xf32>, vector<6x256xf32> -> vector<6x256xf32>
    %300 = arith.addf %295, %299 : vector<6x256xf32>
    %c2_331 = arith.constant 2 : index
    %c0_332 = arith.constant 0 : index
    %301 = vector.load %arg31[%c2_331, %c0_332] : memref<16x256xf32, #tpu.memory_space<vmem>>, vector<6x256xf32>
    %c2_333 = arith.constant 2 : index
    %c0_334 = arith.constant 0 : index
    %c0_335 = arith.constant 0 : index
    %302 = vector.load %arg14[%c2_333, %c0_334, %c0_335] : memref<9x256x256xf32, #tpu.memory_space<vmem>>, vector<1x256x256xf32>
    %303 = vector.shape_cast %302 : vector<1x256x256xf32> to vector<256x256xf32>
    %cst_336 = arith.constant dense<0.000000e+00> : vector<6x256xf32>
    %304 = tpu.matmul %301, %303, %cst_336 {dimension_numbers = #tpu.dot_dimension_numbers<[1], [0], [0], [1], [0, 0, 1, 1], [], []>} : vector<6x256xf32>, vector<256x256xf32>, vector<6x256xf32> -> vector<6x256xf32>
    %305 = arith.addf %300, %304 : vector<6x256xf32>
    %c4_337 = arith.constant 4 : index
    %c0_338 = arith.constant 0 : index
    %306 = vector.load %arg31[%c4_337, %c0_338] : memref<16x256xf32, #tpu.memory_space<vmem>>, vector<6x256xf32>
    %c3_339 = arith.constant 3 : index
    %c0_340 = arith.constant 0 : index
    %c0_341 = arith.constant 0 : index
    %307 = vector.load %arg14[%c3_339, %c0_340, %c0_341] : memref<9x256x256xf32, #tpu.memory_space<vmem>>, vector<1x256x256xf32>
    %308 = vector.shape_cast %307 : vector<1x256x256xf32> to vector<256x256xf32>
    %cst_342 = arith.constant dense<0.000000e+00> : vector<6x256xf32>
    %309 = tpu.matmul %306, %308, %cst_342 {dimension_numbers = #tpu.dot_dimension_numbers<[1], [0], [0], [1], [0, 0, 1, 1], [], []>} : vector<6x256xf32>, vector<256x256xf32>, vector<6x256xf32> -> vector<6x256xf32>
    %310 = arith.addf %305, %309 : vector<6x256xf32>
    %c5_343 = arith.constant 5 : index
    %c0_344 = arith.constant 0 : index
    %311 = vector.load %arg31[%c5_343, %c0_344] : memref<16x256xf32, #tpu.memory_space<vmem>>, vector<6x256xf32>
    %c4_345 = arith.constant 4 : index
    %c0_346 = arith.constant 0 : index
    %c0_347 = arith.constant 0 : index
    %312 = vector.load %arg14[%c4_345, %c0_346, %c0_347] : memref<9x256x256xf32, #tpu.memory_space<vmem>>, vector<1x256x256xf32>
    %313 = vector.shape_cast %312 : vector<1x256x256xf32> to vector<256x256xf32>
    %cst_348 = arith.constant dense<0.000000e+00> : vector<6x256xf32>
    %314 = tpu.matmul %311, %313, %cst_348 {dimension_numbers = #tpu.dot_dimension_numbers<[1], [0], [0], [1], [0, 0, 1, 1], [], []>} : vector<6x256xf32>, vector<256x256xf32>, vector<6x256xf32> -> vector<6x256xf32>
    %315 = arith.addf %310, %314 : vector<6x256xf32>
    %c6_349 = arith.constant 6 : index
    %c0_350 = arith.constant 0 : index
    %316 = vector.load %arg31[%c6_349, %c0_350] : memref<16x256xf32, #tpu.memory_space<vmem>>, vector<6x256xf32>
    %c5_351 = arith.constant 5 : index
    %c0_352 = arith.constant 0 : index
    %c0_353 = arith.constant 0 : index
    %317 = vector.load %arg14[%c5_351, %c0_352, %c0_353] : memref<9x256x256xf32, #tpu.memory_space<vmem>>, vector<1x256x256xf32>
    %318 = vector.shape_cast %317 : vector<1x256x256xf32> to vector<256x256xf32>
    %cst_354 = arith.constant dense<0.000000e+00> : vector<6x256xf32>
    %319 = tpu.matmul %316, %318, %cst_354 {dimension_numbers = #tpu.dot_dimension_numbers<[1], [0], [0], [1], [0, 0, 1, 1], [], []>} : vector<6x256xf32>, vector<256x256xf32>, vector<6x256xf32> -> vector<6x256xf32>
    %320 = arith.addf %315, %319 : vector<6x256xf32>
    %c8_355 = arith.constant 8 : index
    %c0_356 = arith.constant 0 : index
    %321 = vector.load %arg31[%c8_355, %c0_356] : memref<16x256xf32, #tpu.memory_space<vmem>>, vector<6x256xf32>
    %c6_357 = arith.constant 6 : index
    %c0_358 = arith.constant 0 : index
    %c0_359 = arith.constant 0 : index
    %322 = vector.load %arg14[%c6_357, %c0_358, %c0_359] : memref<9x256x256xf32, #tpu.memory_space<vmem>>, vector<1x256x256xf32>
    %323 = vector.shape_cast %322 : vector<1x256x256xf32> to vector<256x256xf32>
    %cst_360 = arith.constant dense<0.000000e+00> : vector<6x256xf32>
    %324 = tpu.matmul %321, %323, %cst_360 {dimension_numbers = #tpu.dot_dimension_numbers<[1], [0], [0], [1], [0, 0, 1, 1], [], []>} : vector<6x256xf32>, vector<256x256xf32>, vector<6x256xf32> -> vector<6x256xf32>
    %325 = arith.addf %320, %324 : vector<6x256xf32>
    %c9_361 = arith.constant 9 : index
    %c0_362 = arith.constant 0 : index
    %326 = vector.load %arg31[%c9_361, %c0_362] : memref<16x256xf32, #tpu.memory_space<vmem>>, vector<6x256xf32>
    %c7_363 = arith.constant 7 : index
    %c0_364 = arith.constant 0 : index
    %c0_365 = arith.constant 0 : index
    %327 = vector.load %arg14[%c7_363, %c0_364, %c0_365] : memref<9x256x256xf32, #tpu.memory_space<vmem>>, vector<1x256x256xf32>
    %328 = vector.shape_cast %327 : vector<1x256x256xf32> to vector<256x256xf32>
    %cst_366 = arith.constant dense<0.000000e+00> : vector<6x256xf32>
    %329 = tpu.matmul %326, %328, %cst_366 {dimension_numbers = #tpu.dot_dimension_numbers<[1], [0], [0], [1], [0, 0, 1, 1], [], []>} : vector<6x256xf32>, vector<256x256xf32>, vector<6x256xf32> -> vector<6x256xf32>
    %330 = arith.addf %325, %329 : vector<6x256xf32>
    %c10_367 = arith.constant 10 : index
    %c0_368 = arith.constant 0 : index
    %331 = vector.load %arg31[%c10_367, %c0_368] : memref<16x256xf32, #tpu.memory_space<vmem>>, vector<6x256xf32>
    %c8_369 = arith.constant 8 : index
    %c0_370 = arith.constant 0 : index
    %c0_371 = arith.constant 0 : index
    %332 = vector.load %arg14[%c8_369, %c0_370, %c0_371] : memref<9x256x256xf32, #tpu.memory_space<vmem>>, vector<1x256x256xf32>
    %333 = vector.shape_cast %332 : vector<1x256x256xf32> to vector<256x256xf32>
    %cst_372 = arith.constant dense<0.000000e+00> : vector<6x256xf32>
    %334 = tpu.matmul %331, %333, %cst_372 {dimension_numbers = #tpu.dot_dimension_numbers<[1], [0], [0], [1], [0, 0, 1, 1], [], []>} : vector<6x256xf32>, vector<256x256xf32>, vector<6x256xf32> -> vector<6x256xf32>
    %335 = arith.addf %330, %334 : vector<6x256xf32>
    %c0_373 = arith.constant 0 : index
    %c0_374 = arith.constant 0 : index
    %336 = vector.load %arg15[%c0_373, %c0_374] : memref<1x256xf32, #tpu.memory_space<vmem>>, vector<1x256xf32>
    %337 = vector.broadcast %336 : vector<1x256xf32> to vector<6x256xf32>
    %338 = arith.addf %335, %337 : vector<6x256xf32>
    %cst_375 = arith.constant 0.000000e+00 : f32
    %339 = vector.broadcast %cst_375 : f32 to vector<6x256xf32>
    %340 = arith.maximumf %338, %339 : vector<6x256xf32>
    %c0_376 = arith.constant 0 : index
    %c0_377 = arith.constant 0 : index
    %341 = vector.load %arg23[%c0_376, %c0_377] : memref<4x6xf32, #tpu.memory_space<vmem>>, vector<4x6xf32>
    %cst_378 = arith.constant dense<0.000000e+00> : vector<4x256xf32>
    %342 = tpu.matmul %341, %340, %cst_378 {dimension_numbers = #tpu.dot_dimension_numbers<[1], [0], [0], [1], [0, 0, 1, 1], [], []>} : vector<4x6xf32>, vector<6x256xf32>, vector<4x256xf32> -> vector<4x256xf32>
    %c0_379 = arith.constant 0 : index
    %c0_380 = arith.constant 0 : index
    %c0_381 = arith.constant 0 : index
    %343 = vector.load %arg24[%c0_379, %c0_380, %c0_381] : memref<1x4x256xf32, #tpu.memory_space<vmem>>, vector<1x4x256xf32>
    %344 = vector.shape_cast %343 : vector<1x4x256xf32> to vector<4x256xf32>
    %345 = vector.shape_cast %342 : vector<4x256xf32> to vector<1x4x256xf32>
    tpu.vector_store %arg24[%c0_379, %c0_380, %c0_381], %345 {strides = array<i32>} : memref<1x4x256xf32, #tpu.memory_space<vmem>>, vector<1x4x256xf32>,
    return
  }
  func.func @transform_0(%arg0: i32) -> (i32, i32, i32) {
    %c0_i32 = arith.constant 0 : i32
    %c0_i32_0 = arith.constant 0 : i32
    %c0_i32_1 = arith.constant 0 : i32
    return %arg0, %c0_i32, %c0_i32_0 : i32, i32, i32
  }
  func.func @transform_1(%arg0: i32) -> (i32, i32) {
    %c0_i32 = arith.constant 0 : i32
    %c0_i32_0 = arith.constant 0 : i32
    %c0_i32_1 = arith.constant 0 : i32
    return %c0_i32, %c0_i32_0 : i32, i32
  }
  func.func @transform_2(%arg0: i32) -> (i32, i32) {
    %c0_i32 = arith.constant 0 : i32
    %c0_i32_0 = arith.constant 0 : i32
    %c0_i32_1 = arith.constant 0 : i32
    return %c0_i32, %c0_i32_0 : i32, i32
  }
  func.func @transform_3(%arg0: i32) -> (i32, i32, i32) {
    %c0_i32 = arith.constant 0 : i32
    %c0_i32_0 = arith.constant 0 : i32
    %c0_i32_1 = arith.constant 0 : i32
    %c0_i32_2 = arith.constant 0 : i32
    return %c0_i32, %c0_i32_0, %c0_i32_1 : i32, i32, i32
  }
  func.func @transform_4(%arg0: i32) -> (i32, i32) {
    %c0_i32 = arith.constant 0 : i32
    %c0_i32_0 = arith.constant 0 : i32
    %c0_i32_1 = arith.constant 0 : i32
    return %c0_i32, %c0_i32_0 : i32, i32
  }
  func.func @transform_5(%arg0: i32) -> (i32, i32, i32) {
    %c0_i32 = arith.constant 0 : i32
    %c0_i32_0 = arith.constant 0 : i32
    %c0_i32_1 = arith.constant 0 : i32
    %c0_i32_2 = arith.constant 0 : i32
    return %c0_i32, %c0_i32_0, %c0_i32_1 : i32, i32, i32
  }
  func.func @transform_6(%arg0: i32) -> (i32, i32) {
    %c0_i32 = arith.constant 0 : i32
    %c0_i32_0 = arith.constant 0 : i32
    %c0_i32_1 = arith.constant 0 : i32
    return %c0_i32, %c0_i32_0 : i32, i32
  }
  func.func @transform_7(%arg0: i32) -> (i32, i32, i32) {
    %c0_i32 = arith.constant 0 : i32
    %c0_i32_0 = arith.constant 0 : i32
    %c0_i32_1 = arith.constant 0 : i32
    %c0_i32_2 = arith.constant 0 : i32
    return %c0_i32, %c0_i32_0, %c0_i32_1 : i32, i32, i32
  }
  func.func @transform_8(%arg0: i32) -> (i32, i32) {
    %c0_i32 = arith.constant 0 : i32
    %c0_i32_0 = arith.constant 0 : i32
    %c0_i32_1 = arith.constant 0 : i32
    return %c0_i32, %c0_i32_0 : i32, i32
  }
  func.func @transform_9(%arg0: i32) -> (i32, i32, i32) {
    %c0_i32 = arith.constant 0 : i32
    %c0_i32_0 = arith.constant 0 : i32
    %c0_i32_1 = arith.constant 0 : i32
    %c0_i32_2 = arith.constant 0 : i32
    return %c0_i32, %c0_i32_0, %c0_i32_1 : i32, i32, i32
  }
  func.func @transform_10(%arg0: i32) -> (i32, i32) {
    %c0_i32 = arith.constant 0 : i32
    %c0_i32_0 = arith.constant 0 : i32
    %c0_i32_1 = arith.constant 0 : i32
    return %c0_i32, %c0_i32_0 : i32, i32
  }
  func.func @transform_11(%arg0: i32) -> (i32, i32, i32) {
    %c0_i32 = arith.constant 0 : i32
    %c0_i32_0 = arith.constant 0 : i32
    %c0_i32_1 = arith.constant 0 : i32
    %c0_i32_2 = arith.constant 0 : i32
    return %c0_i32, %c0_i32_0, %c0_i32_1 : i32, i32, i32
  }
  func.func @transform_12(%arg0: i32) -> (i32, i32) {
    %c0_i32 = arith.constant 0 : i32
    %c0_i32_0 = arith.constant 0 : i32
    %c0_i32_1 = arith.constant 0 : i32
    return %c0_i32, %c0_i32_0 : i32, i32
  }
  func.func @transform_13(%arg0: i32) -> (i32, i32, i32) {
    %c0_i32 = arith.constant 0 : i32
    %c0_i32_0 = arith.constant 0 : i32
    %c0_i32_1 = arith.constant 0 : i32
    %c0_i32_2 = arith.constant 0 : i32
    return %c0_i32, %c0_i32_0, %c0_i32_1 : i32, i32, i32
  }
  func.func @transform_14(%arg0: i32) -> (i32, i32) {
    %c0_i32 = arith.constant 0 : i32
    %c0_i32_0 = arith.constant 0 : i32
    %c0_i32_1 = arith.constant 0 : i32
    return %c0_i32, %c0_i32_0 : i32, i32
  }
  func.func @transform_15(%arg0: i32) -> (i32, i32) {
    %c0_i32 = arith.constant 0 : i32
    %c0_i32_0 = arith.constant 0 : i32
    %c0_i32_1 = arith.constant 0 : i32
    return %c0_i32, %c0_i32_0 : i32, i32
  }
  func.func @transform_16(%arg0: i32) -> (i32, i32) {
    %c0_i32 = arith.constant 0 : i32
    %c0_i32_0 = arith.constant 0 : i32
    %c0_i32_1 = arith.constant 0 : i32
    return %c0_i32, %c0_i32_0 : i32, i32
  }
  func.func @transform_17(%arg0: i32) -> (i32, i32) {
    %c0_i32 = arith.constant 0 : i32
    %c0_i32_0 = arith.constant 0 : i32
    %c0_i32_1 = arith.constant 0 : i32
    return %c0_i32, %c0_i32_0 : i32, i32
  }
  func.func @transform_18(%arg0: i32) -> (i32, i32) {
    %c0_i32 = arith.constant 0 : i32
    %c0_i32_0 = arith.constant 0 : i32
    %c0_i32_1 = arith.constant 0 : i32
    return %c0_i32, %c0_i32_0 : i32, i32
  }
  func.func @transform_19(%arg0: i32) -> (i32, i32) {
    %c0_i32 = arith.constant 0 : i32
    %c0_i32_0 = arith.constant 0 : i32
    %c0_i32_1 = arith.constant 0 : i32
    return %c0_i32, %c0_i32_0 : i32, i32
  }
  func.func @transform_20(%arg0: i32) -> (i32, i32) {
    %c0_i32 = arith.constant 0 : i32
    %c0_i32_0 = arith.constant 0 : i32
    %c0_i32_1 = arith.constant 0 : i32
    return %c0_i32, %c0_i32_0 : i32, i32
  }
  func.func @transform_21(%arg0: i32) -> (i32, i32) {
    %c0_i32 = arith.constant 0 : i32
    %c0_i32_0 = arith.constant 0 : i32
    %c0_i32_1 = arith.constant 0 : i32
    return %c0_i32, %c0_i32_0 : i32, i32
  }
  func.func @transform_22(%arg0: i32) -> (i32, i32) {
    %c0_i32 = arith.constant 0 : i32
    %c0_i32_0 = arith.constant 0 : i32
    %c0_i32_1 = arith.constant 0 : i32
    return %c0_i32, %c0_i32_0 : i32, i32
  }
  func.func @transform_23(%arg0: i32) -> (i32, i32, i32) {
    %c0_i32 = arith.constant 0 : i32
    %c0_i32_0 = arith.constant 0 : i32
    %c0_i32_1 = arith.constant 0 : i32
    return %arg0, %c0_i32, %c0_i32_0 : i32, i32, i32
  }
}

</mosaic_0001>

<llo_original>
// kernel: canvas_feature_extractor.1
$region0: #{canvas_feature_extractor.1}
  #allocation0 [shape = 'u32[]', space=smem, size = 0x4, offset = 0x4, fixed_abs, tag = 'smem constant byte address 0x4 - core index']
  #allocation1 [shape = 'u32[72,128]{1,0:T(1,128)}', space=vmem, size = 0x9000, scoped, tag = 'internal scratch']
  #allocation2 [shape = 'f32[324,64]{1,0:T(8,128)}', space=vmem, size = 0x29000, scoped, tag = 'scratch operand']
  #allocation3 [shape = 'f32[100,64]{1,0:T(8,128)}', space=vmem, size = 0xd000, scoped, tag = 'scratch operand']
  #allocation4 [shape = 'f32[100,64]{1,0:T(8,128)}', space=vmem, size = 0xd000, scoped, tag = 'scratch operand']
  #allocation5 [shape = 'f32[100,64]{1,0:T(8,128)}', space=vmem, size = 0xd000, scoped, tag = 'scratch operand']
  #allocation6 [shape = 'f32[36,128]{1,0:T(8,128)}', space=vmem, size = 0x5000, scoped, tag = 'scratch operand']
  #allocation7 [shape = 'f32[36,128]{1,0:T(8,128)}', space=vmem, size = 0x5000, scoped, tag = 'scratch operand']
  #allocation8 [shape = 'f32[16,256]{1,0:T(8,128)}', space=vmem, size = 0x4000, scoped, tag = 'scratch operand']
  %s0 = inlined_call_operand.vmem [shape: f32[2,256,256], index: 0, kind: input, shape index: {}]
  %s1 = inlined_call_operand.vmem [shape: f32[256,64], index: 1, kind: input, shape index: {}]
  %s2 = inlined_call_operand.vmem [shape: f32[1,64], index: 2, kind: input, shape index: {}]
  %s3 = inlined_call_operand.vmem [shape: f32[9,64,64], index: 3, kind: input, shape index: {}]
  %s4 = inlined_call_operand.vmem [shape: f32[1,64], index: 4, kind: input, shape index: {}]
  %s5 = inlined_call_operand.vmem [shape: f32[9,64,64], index: 5, kind: input, shape index: {}]
  %s6 = inlined_call_operand.vmem [shape: f32[1,64], index: 6, kind: input, shape index: {}]
  %s7 = inlined_call_operand.vmem [shape: f32[9,64,128], index: 7, kind: input, shape index: {}]
  %s8 = inlined_call_operand.vmem [shape: f32[1,128], index: 8, kind: input, shape index: {}]
  %s9 = inlined_call_operand.vmem [shape: f32[9,128,128], index: 9, kind: input, shape index: {}]
  %s10 = inlined_call_operand.vmem [shape: f32[1,128], index: 10, kind: input, shape index: {}]
  %s11 = inlined_call_operand.vmem [shape: f32[9,128,256], index: 11, kind: input, shape index: {}]
  %s12 = inlined_call_operand.vmem [shape: f32[1,256], index: 12, kind: input, shape index: {}]
  %s13 = inlined_call_operand.vmem [shape: f32[9,256,256], index: 13, kind: input, shape index: {}]
  %s14 = inlined_call_operand.vmem [shape: f32[1,256], index: 14, kind: input, shape index: {}]
  %s15 = inlined_call_operand.vmem [shape: f32[324,256], index: 15, kind: input, shape index: {}]
  %s16 = inlined_call_operand.vmem [shape: f32[100,134], index: 16, kind: input, shape index: {}]
  %s17 = inlined_call_operand.vmem [shape: f32[100,78], index: 17, kind: input, shape index: {}]
  %s18 = inlined_call_operand.vmem [shape: f32[100,78], index: 18, kind: input, shape index: {}]
  %s19 = inlined_call_operand.vmem [shape: f32[36,34], index: 19, kind: input, shape index: {}]
  %s20 = inlined_call_operand.vmem [shape: f32[36,22], index: 20, kind: input, shape index: {}]
  %s21 = inlined_call_operand.vmem [shape: f32[16,8], index: 21, kind: input, shape index: {}]
  %s22 = inlined_call_operand.vmem [shape: f32[4,6], index: 22, kind: input, shape index: {}]
  %s23 = inlined_call_operand.vmem [shape: f32[2,4,256], index: 23, kind: output, shape index: {}]
  %s24 = sld [smem:[#allocation0]]
  $region125: #{canvas_feature_extractor.1} parent=0
    _
  %s26 = ssub.s32 1, %s24
  %s27 = scalar_select 0, %s26, %s24
  loop: start=0, step=1, limit=4
  $region2: #{canvas_feature_extractor.1} parent=0 // loop_pre_header
    _
  $region3: #{canvas_feature_extractor.1} parent=0 // loop_header
    %s29 = sphi 0, %s33
    %p30 = scmp.ge.s32.totalorder %s29, 4
    %s39 = sphi 0, %s41
    %s42 = sphi 0, %s39
    %s43 = sphi 0, %s42
    %s59 = sphi 0, %s43
    %s63 = sphi 0, %s63
    %s65 = sphi 0, %s63
    %s66 = sphi 0, %s65
    %s80 = sphi 0, %s66
    %s84 = sphi 0, %s84
    %s86 = sphi 0, %s84
    %s87 = sphi 0, %s86
    %s101 = sphi 0, %s87
    %s105 = sphi 0, %s105
    %s107 = sphi 0, %s105
    %s108 = sphi 0, %s107
    %s122 = sphi 0, %s108
    %s126 = sphi 0, %s126
    %s128 = sphi 0, %s126
    %s129 = sphi 0, %s128
    %s143 = sphi 0, %s129
    %s147 = sphi 0, %s147
    %s149 = sphi 0, %s147
    %s150 = sphi 0, %s149
    %s164 = sphi 0, %s150
    %s168 = sphi 0, %s168
    %s170 = sphi 0, %s168
    %s171 = sphi 0, %s170
    %s185 = sphi 0, %s171
    %s189 = sphi 0, %s189
    %s191 = sphi 0, %s189
    %s192 = sphi 0, %s191
    %s206 = sphi 0, %s192
    %s210 = sphi 0, %s210
    %s212 = sphi 0, %s210
    %s213 = sphi 0, %s212
    %s227 = sphi 0, %s213
    %s231 = sphi 0, %s231
    %s233 = sphi 0, %s231
    %s234 = sphi 0, %s233
    %s248 = sphi 0, %s234
    %s252 = sphi 0, %s252
    %s254 = sphi 0, %s252
    %s255 = sphi 0, %s254
    %s269 = sphi 0, %s255
    %s273 = sphi 0, %s273
    %s275 = sphi 0, %s273
    %s276 = sphi 0, %s275
    %s290 = sphi 0, %s276
    %s294 = sphi 0, %s294
    %s296 = sphi 0, %s294
    %s297 = sphi 0, %s296
    %s311 = sphi 0, %s297
    %s315 = sphi 0, %s315
    %s317 = sphi 0, %s315
    %s318 = sphi 0, %s317
    %s332 = sphi 0, %s318
    %s336 = sphi 0, %s336
    %s338 = sphi 0, %s336
    %s339 = sphi 0, %s338
    %s353 = sphi 0, %s339
    %s357 = sphi 0, %s357
    %s359 = sphi 0, %s357
    %s360 = sphi 0, %s359
    %s374 = sphi 0, %s360
    %s378 = sphi 0, %s378
    %s380 = sphi 0, %s378
    %s381 = sphi 0, %s380
    %s395 = sphi 0, %s381
    %s399 = sphi 0, %s399
    %s401 = sphi 0, %s399
    %s402 = sphi 0, %s401
    %s416 = sphi 0, %s402
    %s420 = sphi 0, %s420
    %s422 = sphi 0, %s420
    %s423 = sphi 0, %s422
    %s437 = sphi 0, %s423
    %s441 = sphi 0, %s441
    %s443 = sphi 0, %s441
    %s444 = sphi 0, %s443
    %s458 = sphi 0, %s444
    %s462 = sphi 0, %s462
    %s464 = sphi 0, %s462
    %s465 = sphi 0, %s464
    %s479 = sphi 0, %s465
    %s483 = sphi 0, %s483
    %s485 = sphi 0, %s483
    %s486 = sphi 0, %s485
    %s500 = sphi 0, %s486
    %s504 = sphi 0, %s504
    %s506 = sphi 0, %s504
    %s507 = sphi 0, %s506
    %s521 = sphi 0, %s507
    %s527 = sphi 0, %s529
    %s530 = sphi 0, %s527
    %s531 = sphi 0, %s530
    %s547 = sphi 0, %s531
  $region4: #{canvas_feature_extractor.1} parent=0 // loop_header_branch
    %32 = sbr.rel (%p30) target = $region8
  $region5: #{canvas_feature_extractor.1} parent=0 // loop_body
    %s34 = ssub.s32 %s29, 1
    %s35 = ssub.s32 %s29, 2
    %s36 = sadd.s32 %s29, 1
    %s37 = ssub.s32 %s29, %s36
    %p38 = scmp.eq.s32.totalorder %s37, 0
    %s40 = sadd.s32 %s39, 1
    %s41 = scalar_select %p38, %s39, %s40
    %p44 = pneg %p38
    %p45 = scmp.eq.s32.totalorder %s29, 1
    %p46 = por %p44, %p45
    %p47 = scmp.ne.s32.totalorder %s39, %s42
    %p48 = scmp.eq.s32.totalorder %s29, 0
    %p49 = por %p47, %p48
    %p50 = scmp.ne.s32.totalorder %s39, %s42
    %p51 = scmp.eq.s32.totalorder %s34, 1
    %p52 = por %p50, %p51
    %p53 = scmp.ne.s32.totalorder %s42, %s43
    %p54 = scmp.eq.s32.totalorder %s34, 0
    %p55 = por %p53, %p54
    %p56 = scmp.ne.s32.totalorder %s42, %s43
    %p57 = scmp.eq.s32.totalorder %s35, 1
    %p58 = por %p56, %p57
    %p60 = scmp.ne.s32.totalorder %s43, %s59
    %p61 = scmp.eq.s32.totalorder %s35, 0
    %p62 = por %p60, %p61
    %s64 = sadd.s32 %s63, 1
    %p67 = scmp.eq.s32.totalorder %s29, 1
    %p68 = scmp.ne.s32.totalorder %s63, %s65
    %p69 = scmp.eq.s32.totalorder %s29, 0
    %p70 = por %p68, %p69
    %p71 = scmp.ne.s32.totalorder %s63, %s65
    %p72 = scmp.eq.s32.totalorder %s34, 1
    %p73 = por %p71, %p72
    %p74 = scmp.ne.s32.totalorder %s65, %s66
    %p75 = scmp.eq.s32.totalorder %s34, 0
    %p76 = por %p74, %p75
    %p77 = scmp.ne.s32.totalorder %s65, %s66
    %p78 = scmp.eq.s32.totalorder %s35, 1
    %p79 = por %p77, %p78
    %p81 = scmp.ne.s32.totalorder %s66, %s80
    %p82 = scmp.eq.s32.totalorder %s35, 0
    %p83 = por %p81, %p82
    %s85 = sadd.s32 %s84, 1
    %p88 = scmp.eq.s32.totalorder %s29, 1
    %p89 = scmp.ne.s32.totalorder %s84, %s86
    %p90 = scmp.eq.s32.totalorder %s29, 0
    %p91 = por %p89, %p90
    %p92 = scmp.ne.s32.totalorder %s84, %s86
    %p93 = scmp.eq.s32.totalorder %s34, 1
    %p94 = por %p92, %p93
    %p95 = scmp.ne.s32.totalorder %s86, %s87
    %p96 = scmp.eq.s32.totalorder %s34, 0
    %p97 = por %p95, %p96
    %p98 = scmp.ne.s32.totalorder %s86, %s87
    %p99 = scmp.eq.s32.totalorder %s35, 1
    %p100 = por %p98, %p99
    %p102 = scmp.ne.s32.totalorder %s87, %s101
    %p103 = scmp.eq.s32.totalorder %s35, 0
    %p104 = por %p102, %p103
    %s106 = sadd.s32 %s105, 1
    %p109 = scmp.eq.s32.totalorder %s29, 1
    %p110 = scmp.ne.s32.totalorder %s105, %s107
    %p111 = scmp.eq.s32.totalorder %s29, 0
    %p112 = por %p110, %p111
    %p113 = scmp.ne.s32.totalorder %s105, %s107
    %p114 = scmp.eq.s32.totalorder %s34, 1
    %p115 = por %p113, %p114
    %p116 = scmp.ne.s32.totalorder %s107, %s108
    %p117 = scmp.eq.s32.totalorder %s34, 0
    %p118 = por %p116, %p117
    %p119 = scmp.ne.s32.totalorder %s107, %s108
    %p120 = scmp.eq.s32.totalorder %s35, 1
    %p121 = por %p119, %p120
    %p123 = scmp.ne.s32.totalorder %s108, %s122
    %p124 = scmp.eq.s32.totalorder %s35, 0
    %p125 = por %p123, %p124
    %s127 = sadd.s32 %s126, 1
    %p130 = scmp.eq.s32.totalorder %s29, 1
    %p131 = scmp.ne.s32.totalorder %s126, %s128
    %p132 = scmp.eq.s32.totalorder %s29, 0
    %p133 = por %p131, %p132
    %p134 = scmp.ne.s32.totalorder %s126, %s128
    %p135 = scmp.eq.s32.totalorder %s34, 1
    %p136 = por %p134, %p135
    %p137 = scmp.ne.s32.totalorder %s128, %s129
    %p138 = scmp.eq.s32.totalorder %s34, 0
    %p139 = por %p137, %p138
    %p140 = scmp.ne.s32.totalorder %s128, %s129
    %p141 = scmp.eq.s32.totalorder %s35, 1
    %p142 = por %p140, %p141
    %p144 = scmp.ne.s32.totalorder %s129, %s143
    %p145 = scmp.eq.s32.totalorder %s35, 0
    %p146 = por %p144, %p145
    %s148 = sadd.s32 %s147, 1
    %p151 = scmp.eq.s32.totalorder %s29, 1
    %p152 = scmp.ne.s32.totalorder %s147, %s149
    %p153 = scmp.eq.s32.totalorder %s29, 0
    %p154 = por %p152, %p153
    %p155 = scmp.ne.s32.totalorder %s147, %s149
    %p156 = scmp.eq.s32.totalorder %s34, 1
    %p157 = por %p155, %p156
    %p158 = scmp.ne.s32.totalorder %s149, %s150
    %p159 = scmp.eq.s32.totalorder %s34, 0
    %p160 = por %p158, %p159
    %p161 = scmp.ne.s32.totalorder %s149, %s150
    %p162 = scmp.eq.s32.totalorder %s35, 1
    %p163 = por %p161, %p162
    %p165 = scmp.ne.s32.totalorder %s150, %s164
    %p166 = scmp.eq.s32.totalorder %s35, 0
    %p167 = por %p165, %p166
    %s169 = sadd.s32 %s168, 1
    %p172 = scmp.eq.s32.totalorder %s29, 1
    %p173 = scmp.ne.s32.totalorder %s168, %s170
    %p174 = scmp.eq.s32.totalorder %s29, 0
    %p175 = por %p173, %p174
    %p176 = scmp.ne.s32.totalorder %s168, %s170
    %p177 = scmp.eq.s32.totalorder %s34, 1
    %p178 = por %p176, %p177
    %p179 = scmp.ne.s32.totalorder %s170, %s171
    %p180 = scmp.eq.s32.totalorder %s34, 0
    %p181 = por %p179, %p180
    %p182 = scmp.ne.s32.totalorder %s170, %s171
    %p183 = scmp.eq.s32.totalorder %s35, 1
    %p184 = por %p182, %p183
    %p186 = scmp.ne.s32.totalorder %s171, %s185
    %p187 = scmp.eq.s32.totalorder %s35, 0
    %p188 = por %p186, %p187
    %s190 = sadd.s32 %s189, 1
    %p193 = scmp.eq.s32.totalorder %s29, 1
    %p194 = scmp.ne.s32.totalorder %s189, %s191
    %p195 = scmp.eq.s32.totalorder %s29, 0
    %p196 = por %p194, %p195
    %p197 = scmp.ne.s32.totalorder %s189, %s191
    %p198 = scmp.eq.s32.totalorder %s34, 1
    %p199 = por %p197, %p198
    %p200 = scmp.ne.s32.totalorder %s191, %s192
    %p201 = scmp.eq.s32.totalorder %s34, 0
    %p202 = por %p200, %p201
    %p203 = scmp.ne.s32.totalorder %s191, %s192
    %p204 = scmp.eq.s32.totalorder %s35, 1
    %p205 = por %p203, %p204
    %p207 = scmp.ne.s32.totalorder %s192, %s206
    %p208 = scmp.eq.s32.totalorder %s35, 0
    %p209 = por %p207, %p208
    %s211 = sadd.s32 %s210, 1
    %p214 = scmp.eq.s32.totalorder %s29, 1
    %p215 = scmp.ne.s32.totalorder %s210, %s212
    %p216 = scmp.eq.s32.totalorder %s29, 0
    %p217 = por %p215, %p216
    %p218 = scmp.ne.s32.totalorder %s210, %s212
    %p219 = scmp.eq.s32.totalorder %s34, 1
    %p220 = por %p218, %p219
    %p221 = scmp.ne.s32.totalorder %s212, %s213
    %p222 = scmp.eq.s32.totalorder %s34, 0
    %p223 = por %p221, %p222
    %p224 = scmp.ne.s32.totalorder %s212, %s213
    %p225 = scmp.eq.s32.totalorder %s35, 1
    %p226 = por %p224, %p225
    %p228 = scmp.ne.s32.totalorder %s213, %s227
    %p229 = scmp.eq.s32.totalorder %s35, 0
    %p230 = por %p228, %p229
    %s232 = sadd.s32 %s231, 1
    %p235 = scmp.eq.s32.totalorder %s29, 1
    %p236 = scmp.ne.s32.totalorder %s231, %s233
    %p237 = scmp.eq.s32.totalorder %s29, 0
    %p238 = por %p236, %p237
    %p239 = scmp.ne.s32.totalorder %s231, %s233
    %p240 = scmp.eq.s32.totalorder %s34, 1
    %p241 = por %p239, %p240
    %p242 = scmp.ne.s32.totalorder %s233, %s234
    %p243 = scmp.eq.s32.totalorder %s34, 0
    %p244 = por %p242, %p243
    %p245 = scmp.ne.s32.totalorder %s233, %s234
    %p246 = scmp.eq.s32.totalorder %s35, 1
    %p247 = por %p245, %p246
    %p249 = scmp.ne.s32.totalorder %s234, %s248
    %p250 = scmp.eq.s32.totalorder %s35, 0
    %p251 = por %p249, %p250
    %s253 = sadd.s32 %s252, 1
    %p256 = scmp.eq.s32.totalorder %s29, 1
    %p257 = scmp.ne.s32.totalorder %s252, %s254
    %p258 = scmp.eq.s32.totalorder %s29, 0
    %p259 = por %p257, %p258
    %p260 = scmp.ne.s32.totalorder %s252, %s254
    %p261 = scmp.eq.s32.totalorder %s34, 1
    %p262 = por %p260, %p261
    %p263 = scmp.ne.s32.totalorder %s254, %s255
    %p264 = scmp.eq.s32.totalorder %s34, 0
    %p265 = por %p263, %p264
    %p266 = scmp.ne.s32.totalorder %s254, %s255
    %p267 = scmp.eq.s32.totalorder %s35, 1
    %p268 = por %p266, %p267
    %p270 = scmp.ne.s32.totalorder %s255, %s269
    %p271 = scmp.eq.s32.totalorder %s35, 0
    %p272 = por %p270, %p271
    %s274 = sadd.s32 %s273, 1
    %p277 = scmp.eq.s32.totalorder %s29, 1
    %p278 = scmp.ne.s32.totalorder %s273, %s275
    %p279 = scmp.eq.s32.totalorder %s29, 0
    %p280 = por %p278, %p279
    %p281 = scmp.ne.s32.totalorder %s273, %s275
    %p282 = scmp.eq.s32.totalorder %s34, 1
    %p283 = por %p281, %p282
    %p284 = scmp.ne.s32.totalorder %s275, %s276
    %p285 = scmp.eq.s32.totalorder %s34, 0
    %p286 = por %p284, %p285
    %p287 = scmp.ne.s32.totalorder %s275, %s276
    %p288 = scmp.eq.s32.totalorder %s35, 1
    %p289 = por %p287, %p288
    %p291 = scmp.ne.s32.totalorder %s276, %s290
    %p292 = scmp.eq.s32.totalorder %s35, 0
    %p293 = por %p291, %p292
    %s295 = sadd.s32 %s294, 1
    %p298 = scmp.eq.s32.totalorder %s29, 1
    %p299 = scmp.ne.s32.totalorder %s294, %s296
    %p300 = scmp.eq.s32.totalorder %s29, 0
    %p301 = por %p299, %p300
    %p302 = scmp.ne.s32.totalorder %s294, %s296
    %p303 = scmp.eq.s32.totalorder %s34, 1
    %p304 = por %p302, %p303
    %p305 = scmp.ne.s32.totalorder %s296, %s297
    %p306 = scmp.eq.s32.totalorder %s34, 0
    %p307 = por %p305, %p306
    %p308 = scmp.ne.s32.totalorder %s296, %s297
    %p309 = scmp.eq.s32.totalorder %s35, 1
    %p310 = por %p308, %p309
    %p312 = scmp.ne.s32.totalorder %s297, %s311
    %p313 = scmp.eq.s32.totalorder %s35, 0
    %p314 = por %p312, %p313
    %s316 = sadd.s32 %s315, 1
    %p319 = scmp.eq.s32.totalorder %s29, 1
    %p320 = scmp.ne.s32.totalorder %s315, %s317
    %p321 = scmp.eq.s32.totalorder %s29, 0
    %p322 = por %p320, %p321
    %p323 = scmp.ne.s32.totalorder %s315, %s317
    %p324 = scmp.eq.s32.totalorder %s34, 1
    %p325 = por %p323, %p324
    %p326 = scmp.ne.s32.totalorder %s317, %s318
    %p327 = scmp.eq.s32.totalorder %s34, 0
    %p328 = por %p326, %p327
    %p329 = scmp.ne.s32.totalorder %s317, %s318
    %p330 = scmp.eq.s32.totalorder %s35, 1
    %p331 = por %p329, %p330
    %p333 = scmp.ne.s32.totalorder %s318, %s332
    %p334 = scmp.eq.s32.totalorder %s35, 0
    %p335 = por %p333, %p334
    %s337 = sadd.s32 %s336, 1
    %p340 = scmp.eq.s32.totalorder %s29, 1
    %p341 = scmp.ne.s32.totalorder %s336, %s338
    %p342 = scmp.eq.s32.totalorder %s29, 0
    %p343 = por %p341, %p342
    %p344 = scmp.ne.s32.totalorder %s336, %s338
    %p345 = scmp.eq.s32.totalorder %s34, 1
    %p346 = por %p344, %p345
    %p347 = scmp.ne.s32.totalorder %s338, %s339
    %p348 = scmp.eq.s32.totalorder %s34, 0
    %p349 = por %p347, %p348
    %p350 = scmp.ne.s32.totalorder %s338, %s339
    %p351 = scmp.eq.s32.totalorder %s35, 1
    %p352 = por %p350, %p351
    %p354 = scmp.ne.s32.totalorder %s339, %s353
    %p355 = scmp.eq.s32.totalorder %s35, 0
    %p356 = por %p354, %p355
    %s358 = sadd.s32 %s357, 1
    %p361 = scmp.eq.s32.totalorder %s29, 1
    %p362 = scmp.ne.s32.totalorder %s357, %s359
    %p363 = scmp.eq.s32.totalorder %s29, 0
    %p364 = por %p362, %p363
    %p365 = scmp.ne.s32.totalorder %s357, %s359
    %p366 = scmp.eq.s32.totalorder %s34, 1
    %p367 = por %p365, %p366
    %p368 = scmp.ne.s32.totalorder %s359, %s360
    %p369 = scmp.eq.s32.totalorder %s34, 0
    %p370 = por %p368, %p369
    %p371 = scmp.ne.s32.totalorder %s359, %s360
    %p372 = scmp.eq.s32.totalorder %s35, 1
    %p373 = por %p371, %p372
    %p375 = scmp.ne.s32.totalorder %s360, %s374
    %p376 = scmp.eq.s32.totalorder %s35, 0
    %p377 = por %p375, %p376
    %s379 = sadd.s32 %s378, 1
    %p382 = scmp.eq.s32.totalorder %s29, 1
    %p383 = scmp.ne.s32.totalorder %s378, %s380
    %p384 = scmp.eq.s32.totalorder %s29, 0
    %p385 = por %p383, %p384
    %p386 = scmp.ne.s32.totalorder %s378, %s380
    %p387 = scmp.eq.s32.totalorder %s34, 1
    %p388 = por %p386, %p387
    %p389 = scmp.ne.s32.totalorder %s380, %s381
    %p390 = scmp.eq.s32.totalorder %s34, 0
    %p391 = por %p389, %p390
    %p392 = scmp.ne.s32.totalorder %s380, %s381
    %p393 = scmp.eq.s32.totalorder %s35, 1
    %p394 = por %p392, %p393
    %p396 = scmp.ne.s32.totalorder %s381, %s395
    %p397 = scmp.eq.s32.totalorder %s35, 0
    %p398 = por %p396, %p397
    %s400 = sadd.s32 %s399, 1
    %p403 = scmp.eq.s32.totalorder %s29, 1
    %p404 = scmp.ne.s32.totalorder %s399, %s401
    %p405 = scmp.eq.s32.totalorder %s29, 0
    %p406 = por %p404, %p405
    %p407 = scmp.ne.s32.totalorder %s399, %s401
    %p408 = scmp.eq.s32.totalorder %s34, 1
    %p409 = por %p407, %p408
    %p410 = scmp.ne.s32.totalorder %s401, %s402
    %p411 = scmp.eq.s32.totalorder %s34, 0
    %p412 = por %p410, %p411
    %p413 = scmp.ne.s32.totalorder %s401, %s402
    %p414 = scmp.eq.s32.totalorder %s35, 1
    %p415 = por %p413, %p414
    %p417 = scmp.ne.s32.totalorder %s402, %s416
    %p418 = scmp.eq.s32.totalorder %s35, 0
    %p419 = por %p417, %p418
    %s421 = sadd.s32 %s420, 1
    %p424 = scmp.eq.s32.totalorder %s29, 1
    %p425 = scmp.ne.s32.totalorder %s420, %s422
    %p426 = scmp.eq.s32.totalorder %s29, 0
    %p427 = por %p425, %p426
    %p428 = scmp.ne.s32.totalorder %s420, %s422
    %p429 = scmp.eq.s32.totalorder %s34, 1
    %p430 = por %p428, %p429
    %p431 = scmp.ne.s32.totalorder %s422, %s423
    %p432 = scmp.eq.s32.totalorder %s34, 0
    %p433 = por %p431, %p432
    %p434 = scmp.ne.s32.totalorder %s422, %s423
    %p435 = scmp.eq.s32.totalorder %s35, 1
    %p436 = por %p434, %p435
    %p438 = scmp.ne.s32.totalorder %s423, %s437
    %p439 = scmp.eq.s32.totalorder %s35, 0
    %p440 = por %p438, %p439
    %s442 = sadd.s32 %s441, 1
    %p445 = scmp.eq.s32.totalorder %s29, 1
    %p446 = scmp.ne.s32.totalorder %s441, %s443
    %p447 = scmp.eq.s32.totalorder %s29, 0
    %p448 = por %p446, %p447
    %p449 = scmp.ne.s32.totalorder %s441, %s443
    %p450 = scmp.eq.s32.totalorder %s34, 1
    %p451 = por %p449, %p450
    %p452 = scmp.ne.s32.totalorder %s443, %s444
    %p453 = scmp.eq.s32.totalorder %s34, 0
    %p454 = por %p452, %p453
    %p455 = scmp.ne.s32.totalorder %s443, %s444
    %p456 = scmp.eq.s32.totalorder %s35, 1
    %p457 = por %p455, %p456
    %p459 = scmp.ne.s32.totalorder %s444, %s458
    %p460 = scmp.eq.s32.totalorder %s35, 0
    %p461 = por %p459, %p460
    %s463 = sadd.s32 %s462, 1
    %p466 = scmp.eq.s32.totalorder %s29, 1
    %p467 = scmp.ne.s32.totalorder %s462, %s464
    %p468 = scmp.eq.s32.totalorder %s29, 0
    %p469 = por %p467, %p468
    %p470 = scmp.ne.s32.totalorder %s462, %s464
    %p471 = scmp.eq.s32.totalorder %s34, 1
    %p472 = por %p470, %p471
    %p473 = scmp.ne.s32.totalorder %s464, %s465
    %p474 = scmp.eq.s32.totalorder %s34, 0
    %p475 = por %p473, %p474
    %p476 = scmp.ne.s32.totalorder %s464, %s465
    %p477 = scmp.eq.s32.totalorder %s35, 1
    %p478 = por %p476, %p477
    %p480 = scmp.ne.s32.totalorder %s465, %s479
    %p481 = scmp.eq.s32.totalorder %s35, 0
    %p482 = por %p480, %p481
    %s484 = sadd.s32 %s483, 1
    %p487 = scmp.eq.s32.totalorder %s29, 1
    %p488 = scmp.ne.s32.totalorder %s483, %s485
    %p489 = scmp.eq.s32.totalorder %s29, 0
    %p490 = por %p488, %p489
    %p491 = scmp.ne.s32.totalorder %s483, %s485
    %p492 = scmp.eq.s32.totalorder %s34, 1
    %p493 = por %p491, %p492
    %p494 = scmp.ne.s32.totalorder %s485, %s486
    %p495 = scmp.eq.s32.totalorder %s34, 0
    %p496 = por %p494, %p495
    %p497 = scmp.ne.s32.totalorder %s485, %s486
    %p498 = scmp.eq.s32.totalorder %s35, 1
    %p499 = por %p497, %p498
    %p501 = scmp.ne.s32.totalorder %s486, %s500
    %p502 = scmp.eq.s32.totalorder %s35, 0
    %p503 = por %p501, %p502
    %s505 = sadd.s32 %s504, 1
    %p508 = scmp.eq.s32.totalorder %s29, 1
    %p509 = scmp.ne.s32.totalorder %s504, %s506
    %p510 = scmp.eq.s32.totalorder %s29, 0
    %p511 = por %p509, %p510
    %p512 = scmp.ne.s32.totalorder %s504, %s506
    %p513 = scmp.eq.s32.totalorder %s34, 1
    %p514 = por %p512, %p513
    %p515 = scmp.ne.s32.totalorder %s506, %s507
    %p516 = scmp.eq.s32.totalorder %s34, 0
    %p517 = por %p515, %p516
    %p518 = scmp.ne.s32.totalorder %s506, %s507
    %p519 = scmp.eq.s32.totalorder %s35, 1
    %p520 = por %p518, %p519
    %p522 = scmp.ne.s32.totalorder %s507, %s521
    %p523 = scmp.eq.s32.totalorder %s35, 0
    %p524 = por %p522, %p523
    %s525 = ssub.s32 %s29, %s36
    %p526 = scmp.eq.s32.totalorder %s525, 0
    %s528 = sadd.s32 %s527, 1
    %s529 = scalar_select %p526, %s527, %s528
    %p532 = pneg %p526
    %p533 = scmp.eq.s32.totalorder %s29, 1
    %p534 = por %p532, %p533
    %p535 = scmp.ne.s32.totalorder %s527, %s530
    %p536 = scmp.eq.s32.totalorder %s29, 0
    %p537 = por %p535, %p536
    %p538 = scmp.ne.s32.totalorder %s527, %s530
    %p539 = scmp.eq.s32.totalorder %s34, 1
    %p540 = por %p538, %p539
    %p541 = scmp.ne.s32.totalorder %s530, %s531
    %p542 = scmp.eq.s32.totalorder %s34, 0
    %p543 = por %p541, %p542
    %p544 = scmp.ne.s32.totalorder %s530, %s531
    %p545 = scmp.eq.s32.totalorder %s35, 1
    %p546 = por %p544, %p545
    %p548 = scmp.ne.s32.totalorder %s531, %s547
    %p549 = scmp.eq.s32.totalorder %s35, 0
    %p550 = por %p548, %p549
    %p551 = scmp.le.s32.totalorder 1, %s29
    %p552 = scmp.lt.s32.totalorder %s29, 3
    %p553 = pnand %p551, %p552
    %p554 = pneg %p553
    // Predicated region
    $region9: #{canvas_feature_extractor.1} parent=5 // pred_check
      _
    $region10: #{canvas_feature_extractor.1} parent=5 // pred_check_branch
      %556 = sbr.rel (%p553) target = $region12
    $region11: #{canvas_feature_extractor.1} parent=5 // pred_region
      %s557 = ssub.s32 %s29, 1
      // Predicated region
      $region13: #{canvas_feature_extractor.1} parent=11 // pred_check
        %p558 = pneg %p76
      $region14: #{canvas_feature_extractor.1} parent=11 // pred_check_branch
        %560 = sbr.rel (%p558) target = $region16
      $region15: #{canvas_feature_extractor.1} parent=11 // pred_region
        _
      $region16: #{canvas_feature_extractor.1} parent=11 // pred_fallthru
        _
      // Predicated region
      $region17: #{canvas_feature_extractor.1} parent=11 // pred_check
        %p561 = pneg %p97
      $region18: #{canvas_feature_extractor.1} parent=11 // pred_check_branch
        %563 = sbr.rel (%p561) target = $region20
      $region19: #{canvas_feature_extractor.1} parent=11 // pred_region
        _
      $region20: #{canvas_feature_extractor.1} parent=11 // pred_fallthru
        _
      // Predicated region
      $region21: #{canvas_feature_extractor.1} parent=11 // pred_check
        %p564 = pneg %p118
      $region22: #{canvas_feature_extractor.1} parent=11 // pred_check_branch
        %566 = sbr.rel (%p564) target = $region24
      $region23: #{canvas_feature_extractor.1} parent=11 // pred_region
        _
      $region24: #{canvas_feature_extractor.1} parent=11 // pred_fallthru
        _
      // Predicated region
      $region25: #{canvas_feature_extractor.1} parent=11 // pred_check
        %p567 = pneg %p139
      $region26: #{canvas_feature_extractor.1} parent=11 // pred_check_branch
        %569 = sbr.rel (%p567) target = $region28
      $region27: #{canvas_feature_extractor.1} parent=11 // pred_region
        _
      $region28: #{canvas_feature_extractor.1} parent=11 // pred_fallthru
        _
      // Predicated region
      $region29: #{canvas_feature_extractor.1} parent=11 // pred_check
        %p570 = pneg %p160
      $region30: #{canvas_feature_extractor.1} parent=11 // pred_check_branch
        %572 = sbr.rel (%p570) target = $region32
      $region31: #{canvas_feature_extractor.1} parent=11 // pred_region
        _
      $region32: #{canvas_feature_extractor.1} parent=11 // pred_fallthru
        _
      // Predicated region
      $region33: #{canvas_feature_extractor.1} parent=11 // pred_check
        %p573 = pneg %p181
      $region34: #{canvas_feature_extractor.1} parent=11 // pred_check_branch
        %575 = sbr.rel (%p573) target = $region36
      $region35: #{canvas_feature_extractor.1} parent=11 // pred_region
        _
      $region36: #{canvas_feature_extractor.1} parent=11 // pred_fallthru
        _
      // Predicated region
      $region37: #{canvas_feature_extractor.1} parent=11 // pred_check
        %p576 = pneg %p202
      $region38: #{canvas_feature_extractor.1} parent=11 // pred_check_branch
        %578 = sbr.rel (%p576) target = $region40
      $region39: #{canvas_feature_extractor.1} parent=11 // pred_region
        _
      $region40: #{canvas_feature_extractor.1} parent=11 // pred_fallthru
        _
      // Predicated region
      $region41: #{canvas_feature_extractor.1} parent=11 // pred_check
        %p579 = pneg %p223
      $region42: #{canvas_feature_extractor.1} parent=11 // pred_check_branch
        %581 = sbr.rel (%p579) target = $region44
      $region43: #{canvas_feature_extractor.1} parent=11 // pred_region
        _
      $region44: #{canvas_feature_extractor.1} parent=11 // pred_fallthru
        _
      // Predicated region
      $region45: #{canvas_feature_extractor.1} parent=11 // pred_check
        %p582 = pneg %p244
      $region46: #{canvas_feature_extractor.1} parent=11 // pred_check_branch
        %584 = sbr.rel (%p582) target = $region48
      $region47: #{canvas_feature_extractor.1} parent=11 // pred_region
        _
      $region48: #{canvas_feature_extractor.1} parent=11 // pred_fallthru
        _
      // Predicated region
      $region49: #{canvas_feature_extractor.1} parent=11 // pred_check
        %p585 = pneg %p265
      $region50: #{canvas_feature_extractor.1} parent=11 // pred_check_branch
        %587 = sbr.rel (%p585) target = $region52
      $region51: #{canvas_feature_extractor.1} parent=11 // pred_region
        _
      $region52: #{canvas_feature_extractor.1} parent=11 // pred_fallthru
        _
      // Predicated region
      $region53: #{canvas_feature_extractor.1} parent=11 // pred_check
        %p588 = pneg %p286
      $region54: #{canvas_feature_extractor.1} parent=11 // pred_check_branch
        %590 = sbr.rel (%p588) target = $region56
      $region55: #{canvas_feature_extractor.1} parent=11 // pred_region
        _
      $region56: #{canvas_feature_extractor.1} parent=11 // pred_fallthru
        _
      // Predicated region
      $region57: #{canvas_feature_extractor.1} parent=11 // pred_check
        %p591 = pneg %p307
      $region58: #{canvas_feature_extractor.1} parent=11 // pred_check_branch
        %593 = sbr.rel (%p591) target = $region60
      $region59: #{canvas_feature_extractor.1} parent=11 // pred_region
        _
      $region60: #{canvas_feature_extractor.1} parent=11 // pred_fallthru
        _
      // Predicated region
      $region61: #{canvas_feature_extractor.1} parent=11 // pred_check
        %p594 = pneg %p328
      $region62: #{canvas_feature_extractor.1} parent=11 // pred_check_branch
        %596 = sbr.rel (%p594) target = $region64
      $region63: #{canvas_feature_extractor.1} parent=11 // pred_region
        _
      $region64: #{canvas_feature_extractor.1} parent=11 // pred_fallthru
        _
      // Predicated region
      $region65: #{canvas_feature_extractor.1} parent=11 // pred_check
        %p597 = pneg %p349
      $region66: #{canvas_feature_extractor.1} parent=11 // pred_check_branch
        %599 = sbr.rel (%p597) target = $region68
      $region67: #{canvas_feature_extractor.1} parent=11 // pred_region
        _
      $region68: #{canvas_feature_extractor.1} parent=11 // pred_fallthru
        _
      // Predicated region
      $region69: #{canvas_feature_extractor.1} parent=11 // pred_check
        %p600 = pneg %p370
      $region70: #{canvas_feature_extractor.1} parent=11 // pred_check_branch
        %602 = sbr.rel (%p600) target = $region72
      $region71: #{canvas_feature_extractor.1} parent=11 // pred_region
        _
      $region72: #{canvas_feature_extractor.1} parent=11 // pred_fallthru
        _
      // Predicated region
      $region73: #{canvas_feature_extractor.1} parent=11 // pred_check
        %p603 = pneg %p391
      $region74: #{canvas_feature_extractor.1} parent=11 // pred_check_branch
        %605 = sbr.rel (%p603) target = $region76
      $region75: #{canvas_feature_extractor.1} parent=11 // pred_region
        _
      $region76: #{canvas_feature_extractor.1} parent=11 // pred_fallthru
        _
      // Predicated region
      $region77: #{canvas_feature_extractor.1} parent=11 // pred_check
        %p606 = pneg %p412
      $region78: #{canvas_feature_extractor.1} parent=11 // pred_check_branch
        %608 = sbr.rel (%p606) target = $region80
      $region79: #{canvas_feature_extractor.1} parent=11 // pred_region
        _
      $region80: #{canvas_feature_extractor.1} parent=11 // pred_fallthru
        _
      // Predicated region
      $region81: #{canvas_feature_extractor.1} parent=11 // pred_check
        %p609 = pneg %p433
      $region82: #{canvas_feature_extractor.1} parent=11 // pred_check_branch
        %611 = sbr.rel (%p609) target = $region84
      $region83: #{canvas_feature_extractor.1} parent=11 // pred_region
        _
      $region84: #{canvas_feature_extractor.1} parent=11 // pred_fallthru
        _
      // Predicated region
      $region85: #{canvas_feature_extractor.1} parent=11 // pred_check
        %p612 = pneg %p454
      $region86: #{canvas_feature_extractor.1} parent=11 // pred_check_branch
        %614 = sbr.rel (%p612) target = $region88
      $region87: #{canvas_feature_extractor.1} parent=11 // pred_region
        _
      $region88: #{canvas_feature_extractor.1} parent=11 // pred_fallthru
        _
      // Predicated region
      $region89: #{canvas_feature_extractor.1} parent=11 // pred_check
        %p615 = pneg %p475
      $region90: #{canvas_feature_extractor.1} parent=11 // pred_check_branch
        %617 = sbr.rel (%p615) target = $region92
      $region91: #{canvas_feature_extractor.1} parent=11 // pred_region
        _
      $region92: #{canvas_feature_extractor.1} parent=11 // pred_fallthru
        _
      // Predicated region
      $region93: #{canvas_feature_extractor.1} parent=11 // pred_check
        %p618 = pneg %p496
      $region94: #{canvas_feature_extractor.1} parent=11 // pred_check_branch
        %620 = sbr.rel (%p618) target = $region96
      $region95: #{canvas_feature_extractor.1} parent=11 // pred_region
        _
      $region96: #{canvas_feature_extractor.1} parent=11 // pred_fallthru
        _
      // Predicated region
      $region97: #{canvas_feature_extractor.1} parent=11 // pred_check
        %p621 = pneg %p517
      $region98: #{canvas_feature_extractor.1} parent=11 // pred_check_branch
        %623 = sbr.rel (%p621) target = $region100
      $region99: #{canvas_feature_extractor.1} parent=11 // pred_region
        _
      $region100: #{canvas_feature_extractor.1} parent=11 // pred_fallthru
        _
    $region12: #{canvas_feature_extractor.1} parent=5 // pred_fallthru
      _
    %p624 = scmp.lt.s32.totalorder %s29, 2
    // Predicated region
    $region101: #{canvas_feature_extractor.1} parent=5 // pred_check
      %p625 = pneg %p624
    $region102: #{canvas_feature_extractor.1} parent=5 // pred_check_branch
      %627 = sbr.rel (%p625) target = $region104
    $region103: #{canvas_feature_extractor.1} parent=5 // pred_region
      // Predicated region
      $region105: #{canvas_feature_extractor.1} parent=103 // pred_check
        %p628 = pneg %p49
      $region106: #{canvas_feature_extractor.1} parent=103 // pred_check_branch
        %630 = sbr.rel (%p628) target = $region108
      $region107: #{canvas_feature_extractor.1} parent=103 // pred_region
        %p631 = scmp.lt.s32.totalorder %s29, 1
        %s632 = scalar_select %p631, %s29, 1
        %s633 = smul.addr %s632, 64
        %s634 = smul.addr %s633, 8
        %s635 = scalar_lea.vmem %s0, %s634
      $region108: #{canvas_feature_extractor.1} parent=103 // pred_fallthru
        _
    $region104: #{canvas_feature_extractor.1} parent=5 // pred_fallthru
      _
    %p636 = scmp.le.s32.totalorder 1, %s29
    %p637 = scmp.lt.s32.totalorder %s29, 3
    %p638 = pnand %p636, %p637
    %p639 = pneg %p638
    // Predicated region
    $region109: #{canvas_feature_extractor.1} parent=5 // pred_check
      _
    $region110: #{canvas_feature_extractor.1} parent=5 // pred_check_branch
      %641 = sbr.rel (%p638) target = $region112
    $region111: #{canvas_feature_extractor.1} parent=5 // pred_region
      %s642 = ssub.s32 %s29, 1
      %p643 = scmp.lt.s32.totalorder %s34, 1
      %s644 = scalar_select %p643, %s34, 1
      %s645 = smul.addr %s644, 64
      %s646 = smul.addr %s645, 8
      %s647 = scalar_lea.vmem %s0, %s646
      %p648 = pneg %p55
      %p649 = pneg %p52
      %p650 = pneg %p76
      %p651 = pneg %p73
      %p652 = pneg %p97
      %p653 = pneg %p94
      %p654 = pneg %p118
      %p655 = pneg %p115
      %p656 = pneg %p139
      %p657 = pneg %p136
      %p658 = pneg %p160
      %p659 = pneg %p157
      %p660 = pneg %p181
      %p661 = pneg %p178
      %p662 = pneg %p202
      %p663 = pneg %p199
      %p664 = pneg %p223
      %p665 = pneg %p220
      %p666 = pneg %p244
      %p667 = pneg %p241
      %p668 = pneg %p265
      %p669 = pneg %p262
      %p670 = pneg %p286
      %p671 = pneg %p283
      %p672 = pneg %p307
      %p673 = pneg %p304
      %p674 = pneg %p328
      %p675 = pneg %p325
      %p676 = pneg %p349
      %p677 = pneg %p346
      %p678 = pneg %p370
      %p679 = pneg %p367
      %p680 = pneg %p391
      %p681 = pneg %p388
      %p682 = pneg %p412
      %p683 = pneg %p409
      %p684 = pneg %p433
      %p685 = pneg %p430
      %p686 = pneg %p454
      %p687 = pneg %p451
      %p688 = pneg %p475
      %p689 = pneg %p472
      %p690 = pneg %p496
      %p691 = pneg %p493
      %p692 = pneg %p517
      %p693 = pneg %p514
      %p694 = pneg %p543
      %p695 = pneg %p540
      %p696 = scmp.lt.s32.totalorder %s34, 1
      %s697 = scalar_select %p696, %s34, 1
      %s698 = smul.addr %s697, 2
      %s699 = smul.addr %s698, 4
      %s700 = scalar_lea.vmem %s23, %s699
      %p701 = scmp.lt.s32.totalorder %s34, 1
      %s702 = scalar_select %p701, %s34, 1
      %s703 = smul.addr %s702, 64
      %s704 = smul.addr %s703, 8
      %s705 = scalar_lea.vmem %s0, %s704
      %p706 = scmp.lt.s32.totalorder %s34, 1
      %s707 = scalar_select %p706, %s34, 1
      %s708 = smul.addr %s707, 2
      %s709 = smul.addr %s708, 4
      %s710 = scalar_lea.vmem %s23, %s709
      %v711 = vld [vmem:[%s705] sm:$0xff]
      %v712 = vld [vmem:[%s705 + $0x8] sm:$0xff]
      %v713 = vld [vmem:[%s705 + $0x10] sm:$0xff]
      %v714 = vld [vmem:[%s705 + $0x18] sm:$0xff]
      %v715 = vld [vmem:[%s705 + $0x20] sm:$0xff]
      %v716 = vld [vmem:[%s705 + $0x28] sm:$0xff]
      %v717 = vld [vmem:[%s705 + $0x30] sm:$0xff]
      %v718 = vld [vmem:[%s705 + $0x38] sm:$0xff]
      %v719 = vld [vmem:[%s705 + $0x40] sm:$0xff]
      %v720 = vld [vmem:[%s705 + $0x48] sm:$0xff]
      %v721 = vld [vmem:[%s705 + $0x50] sm:$0xff]
      %v722 = vld [vmem:[%s705 + $0x58] sm:$0xff]
      %v723 = vld [vmem:[%s705 + $0x60] sm:$0xff]
      %v724 = vld [vmem:[%s705 + $0x68] sm:$0xff]
      %v725 = vld [vmem:[%s705 + $0x70] sm:$0xff]
      %v726 = vld [vmem:[%s705 + $0x78] sm:$0xff]
      %v727 = vld [vmem:[%s705 + $0x80] sm:$0xff]
      %v728 = vld [vmem:[%s705 + $0x88] sm:$0xff]
      %v729 = vld [vmem:[%s705 + $0x90] sm:$0xff]
      %v730 = vld [vmem:[%s705 + $0x98] sm:$0xff]
      %v731 = vld [vmem:[%s705 + $0xa0] sm:$0xff]
      %v732 = vld [vmem:[%s705 + $0xa8] sm:$0xff]
      %v733 = vld [vmem:[%s705 + $0xb0] sm:$0xff]
      %v734 = vld [vmem:[%s705 + $0xb8] sm:$0xff]
      %v735 = vld [vmem:[%s705 + $0xc0] sm:$0xff]
      %v736 = vld [vmem:[%s705 + $0xc8] sm:$0xff]
      %v737 = vld [vmem:[%s705 + $0xd0] sm:$0xff]
      %v738 = vld [vmem:[%s705 + $0xd8] sm:$0xff]
      %v739 = vld [vmem:[%s705 + $0xe0] sm:$0xff]
      %v740 = vld [vmem:[%s705 + $0xe8] sm:$0xff]
      %v741 = vld [vmem:[%s705 + $0xf0] sm:$0xff]
      %v742 = vld [vmem:[%s705 + $0xf8] sm:$0xff]
      %v743 = vld [vmem:[%s705 + $0x100] sm:$0xff]
      %v744 = vld [vmem:[%s705 + $0x108] sm:$0xff]
      %v745 = vld [vmem:[%s705 + $0x110] sm:$0xff]
      %v746 = vld [vmem:[%s705 + $0x118] sm:$0xff]
      %v747 = vld [vmem:[%s705 + $0x120] sm:$0xff]
      %v748 = vld [vmem:[%s705 + $0x128] sm:$0xff]
      %v749 = vld [vmem:[%s705 + $0x130] sm:$0xff]
      %v750 = vld [vmem:[%s705 + $0x138] sm:$0xff]
      %v751 = vld [vmem:[%s705 + $0x140] sm:$0xff]
      %v752 = vld [vmem:[%s705 + $0x148] sm:$0xff]
      %v753 = vld [vmem:[%s705 + $0x150] sm:$0xff]
      %v754 = vld [vmem:[%s705 + $0x158] sm:$0xff]
      %v755 = vld [vmem:[%s705 + $0x160] sm:$0xff]
      %v756 = vld [vmem:[%s705 + $0x168] sm:$0xff]
      %v757 = vld [vmem:[%s705 + $0x170] sm:$0xff]
      %v758 = vld [vmem:[%s705 + $0x178] sm:$0xff]
      %v759 = vld [vmem:[%s705 + $0x180] sm:$0xff]
      %v760 = vld [vmem:[%s705 + $0x188] sm:$0xff]
      %v761 = vld [vmem:[%s705 + $0x190] sm:$0xff]
      %v762 = vld [vmem:[%s705 + $0x198] sm:$0xff]
      %v763 = vld [vmem:[%s705 + $0x1a0] sm:$0xff]
      %v764 = vld [vmem:[%s705 + $0x1a8] sm:$0xff]
      %v765 = vld [vmem:[%s705 + $0x1b0] sm:$0xff]
      %v766 = vld [vmem:[%s705 + $0x1b8] sm:$0xff]
      %v767 = vld [vmem:[%s705 + $0x1c0] sm:$0xff]
      %v768 = vld [vmem:[%s705 + $0x1c8] sm:$0xff]
      %v769 = vld [vmem:[%s705 + $0x1d0] sm:$0xff]
      %v770 = vld [vmem:[%s705 + $0x1d8] sm:$0xff]
      %v771 = vld [vmem:[%s705 + $0x1e0] sm:$0xff]
      %v772 = vld [vmem:[%s705 + $0x1e8] sm:$0xff]
      %v773 = vld [vmem:[%s705 + $0x1f0] sm:$0xff]
      %v774 = vld [vmem:[%s705 + $0x1f8] sm:$0xff]
      %v775 = vld [vmem:[%s1] sm:$0xff]
      %v776 = vld [vmem:[%s1 + $0x8] sm:$0xff]
      %v777 = vld [vmem:[%s1 + $0x10] sm:$0xff]
      %v778 = vld [vmem:[%s1 + $0x18] sm:$0xff]
      %v779 = vld [vmem:[%s1 + $0x20] sm:$0xff]
      %v780 = vld [vmem:[%s1 + $0x28] sm:$0xff]
      %v781 = vld [vmem:[%s1 + $0x30] sm:$0xff]
      %v782 = vld [vmem:[%s1 + $0x38] sm:$0xff]
      %v783 = vld [vmem:[%s1 + $0x40] sm:$0xff]
      %v784 = vld [vmem:[%s1 + $0x48] sm:$0xff]
      %v785 = vld [vmem:[%s1 + $0x50] sm:$0xff]
      %v786 = vld [vmem:[%s1 + $0x58] sm:$0xff]
      %v787 = vld [vmem:[%s1 + $0x60] sm:$0xff]
      %v788 = vld [vmem:[%s1 + $0x68] sm:$0xff]
      %v789 = vld [vmem:[%s1 + $0x70] sm:$0xff]
      %v790 = vld [vmem:[%s1 + $0x78] sm:$0xff]
      %v791 = vld [vmem:[%s1 + $0x80] sm:$0xff]
      %v792 = vld [vmem:[%s1 + $0x88] sm:$0xff]
      %v793 = vld [vmem:[%s1 + $0x90] sm:$0xff]
      %v794 = vld [vmem:[%s1 + $0x98] sm:$0xff]
      %v795 = vld [vmem:[%s1 + $0xa0] sm:$0xff]
      %v796 = vld [vmem:[%s1 + $0xa8] sm:$0xff]
      %v797 = vld [vmem:[%s1 + $0xb0] sm:$0xff]
      %v798 = vld [vmem:[%s1 + $0xb8] sm:$0xff]
      %v799 = vld [vmem:[%s1 + $0xc0] sm:$0xff]
      %v800 = vld [vmem:[%s1 + $0xc8] sm:$0xff]
      %v801 = vld [vmem:[%s1 + $0xd0] sm:$0xff]
      %v802 = vld [vmem:[%s1 + $0xd8] sm:$0xff]
      %v803 = vld [vmem:[%s1 + $0xe0] sm:$0xff]
      %v804 = vld [vmem:[%s1 + $0xe8] sm:$0xff]
      %v805 = vld [vmem:[%s1 + $0xf0] sm:$0xff]
      %v806 = vld [vmem:[%s1 + $0xf8] sm:$0xff]
      %v807 = vld [vmem:[%s2] sm:$0x1]
      %v809 = vperm.slane %v807, 0
      %811 = vmatpush.msra.mxu0 %v790
      %812 = vmatpush.msra.mxu0 %v789
      %813 = vmatpush.msra.mxu0 %v788
      %814 = vmatpush.msra.mxu0 %v787
      %815 = vmatpush.msra.mxu0 %v786
      %816 = vmatpush.msra.mxu0 %v785
      %817 = vmatpush.msra.mxu0 %v784
      %818 = vmatpush.msra.mxu0 %v783
      %819 = vmatpush.msra.mxu0 %v782
      %820 = vmatpush.msra.mxu0 %v781
      %821 = vmatpush.msra.mxu0 %v780
      %822 = vmatpush.msra.mxu0 %v779
      %823 = vmatpush.msra.mxu0 %v778
      %824 = vmatpush.msra.mxu0 %v777
      %825 = vmatpush.msra.mxu0 %v776
      %826 = vmatpush.msra.mxu0 %v775
      %827 = vmatmul.f32.gmra.mxu0 %v711
      %v828 = vpop.f32.mrf.mxu0
      %v829 = vadd.f32 %v809, %v828
      %830 = vmatmul.f32.gmra.mxu0 %v713
      %v831 = vpop.f32.mrf.mxu0
      %v832 = vadd.f32 %v809, %v831
      %833 = vmatmul.f32.gmra.mxu0 %v715
      %v834 = vpop.f32.mrf.mxu0
      %v835 = vadd.f32 %v809, %v834
      %836 = vmatmul.f32.gmra.mxu0 %v717
      %v837 = vpop.f32.mrf.mxu0
      %v838 = vadd.f32 %v809, %v837
      %839 = vmatmul.f32.gmra.mxu0 %v719
      %v840 = vpop.f32.mrf.mxu0
      %v841 = vadd.f32 %v809, %v840
      %842 = vmatmul.f32.gmra.mxu0 %v721
      %v843 = vpop.f32.mrf.mxu0
      %v844 = vadd.f32 %v809, %v843
      %845 = vmatmul.f32.gmra.mxu0 %v723
      %v846 = vpop.f32.mrf.mxu0
      %v847 = vadd.f32 %v809, %v846
      %848 = vmatmul.f32.gmra.mxu0 %v725
      %v849 = vpop.f32.mrf.mxu0
      %v850 = vadd.f32 %v809, %v849
      %851 = vmatmul.f32.gmra.mxu0 %v727
      %v852 = vpop.f32.mrf.mxu0
      %v853 = vadd.f32 %v809, %v852
      %854 = vmatmul.f32.gmra.mxu0 %v729
      %v855 = vpop.f32.mrf.mxu0
      %v856 = vadd.f32 %v809, %v855
      %857 = vmatmul.f32.gmra.mxu0 %v731
      %v858 = vpop.f32.mrf.mxu0
      %v859 = vadd.f32 %v809, %v858
      %860 = vmatmul.f32.gmra.mxu0 %v733
      %v861 = vpop.f32.mrf.mxu0
      %v862 = vadd.f32 %v809, %v861
      %863 = vmatmul.f32.gmra.mxu0 %v735
      %v864 = vpop.f32.mrf.mxu0
      %v865 = vadd.f32 %v809, %v864
      %866 = vmatmul.f32.gmra.mxu0 %v737
      %v867 = vpop.f32.mrf.mxu0
      %v868 = vadd.f32 %v809, %v867
      %869 = vmatmul.f32.gmra.mxu0 %v739
      %v870 = vpop.f32.mrf.mxu0
      %v871 = vadd.f32 %v809, %v870
      %872 = vmatmul.f32.gmra.mxu0 %v741
      %v873 = vpop.f32.mrf.mxu0
      %v874 = vadd.f32 %v809, %v873
      %875 = vmatmul.f32.gmra.mxu0 %v743
      %v876 = vpop.f32.mrf.mxu0
      %v877 = vadd.f32 %v809, %v876
      %878 = vmatmul.f32.gmra.mxu0 %v745
      %v879 = vpop.f32.mrf.mxu0
      %v880 = vadd.f32 %v809, %v879
      %881 = vmatmul.f32.gmra.mxu0 %v747
      %v882 = vpop.f32.mrf.mxu0
      %v883 = vadd.f32 %v809, %v882
      %884 = vmatmul.f32.gmra.mxu0 %v749
      %v885 = vpop.f32.mrf.mxu0
      %v886 = vadd.f32 %v809, %v885
      %887 = vmatmul.f32.gmra.mxu0 %v751
      %v888 = vpop.f32.mrf.mxu0
      %v889 = vadd.f32 %v809, %v888
      %890 = vmatmul.f32.gmra.mxu0 %v753
      %v891 = vpop.f32.mrf.mxu0
      %v892 = vadd.f32 %v809, %v891
      %893 = vmatmul.f32.gmra.mxu0 %v755
      %v894 = vpop.f32.mrf.mxu0
      %v895 = vadd.f32 %v809, %v894
      %896 = vmatmul.f32.gmra.mxu0 %v757
      %v897 = vpop.f32.mrf.mxu0
      %v898 = vadd.f32 %v809, %v897
      %899 = vmatmul.f32.gmra.mxu0 %v759
      %v900 = vpop.f32.mrf.mxu0
      %v901 = vadd.f32 %v809, %v900
      %902 = vmatmul.f32.gmra.mxu0 %v761
      %v903 = vpop.f32.mrf.mxu0
      %v904 = vadd.f32 %v809, %v903
      %905 = vmatmul.f32.gmra.mxu0 %v763
      %v906 = vpop.f32.mrf.mxu0
      %v907 = vadd.f32 %v809, %v906
      %908 = vmatmul.f32.gmra.mxu0 %v765
      %v909 = vpop.f32.mrf.mxu0
      %v910 = vadd.f32 %v809, %v909
      %911 = vmatmul.f32.gmra.mxu0 %v767
      %v912 = vpop.f32.mrf.mxu0
      %v913 = vadd.f32 %v809, %v912
      %914 = vmatmul.f32.gmra.mxu0 %v769
      %v915 = vpop.f32.mrf.mxu0
      %v916 = vadd.f32 %v809, %v915
      %917 = vmatmul.f32.gmra.mxu0 %v771
      %v918 = vpop.f32.mrf.mxu0
      %v919 = vadd.f32 %v809, %v918
      %920 = vmatmul.f32.gmra.mxu0 %v773
      %v921 = vpop.f32.mrf.mxu0
      %v922 = vadd.f32 %v809, %v921
      %923 = vdwg.mxu0
      %924 = vmatpush.msra.mxu0 %v806
      %925 = vmatpush.msra.mxu0 %v805
      %926 = vmatpush.msra.mxu0 %v804
      %927 = vmatpush.msra.mxu0 %v803
      %928 = vmatpush.msra.mxu0 %v802
      %929 = vmatpush.msra.mxu0 %v801
      %930 = vmatpush.msra.mxu0 %v800
      %931 = vmatpush.msra.mxu0 %v799
      %932 = vmatpush.msra.mxu0 %v798
      %933 = vmatpush.msra.mxu0 %v797
      %934 = vmatpush.msra.mxu0 %v796
      %935 = vmatpush.msra.mxu0 %v795
      %936 = vmatpush.msra.mxu0 %v794
      %937 = vmatpush.msra.mxu0 %v793
      %938 = vmatpush.msra.mxu0 %v792
      %939 = vmatpush.msra.mxu0 %v791
      %940 = vmatmul.f32.gmra.mxu0 %v712
      %v941 = vpop.f32.mrf.mxu0
      %v942 = vadd.f32 %v829, %v941
      %943 = vmatmul.f32.gmra.mxu0 %v714
      %v944 = vpop.f32.mrf.mxu0
      %v945 = vadd.f32 %v832, %v944
      %946 = vmatmul.f32.gmra.mxu0 %v716
      %v947 = vpop.f32.mrf.mxu0
      %v948 = vadd.f32 %v835, %v947
      %949 = vmatmul.f32.gmra.mxu0 %v718
      %v950 = vpop.f32.mrf.mxu0
      %v951 = vadd.f32 %v838, %v950
      %952 = vmatmul.f32.gmra.mxu0 %v720
      %v953 = vpop.f32.mrf.mxu0
      %v954 = vadd.f32 %v841, %v953
      %955 = vmatmul.f32.gmra.mxu0 %v722
      %v956 = vpop.f32.mrf.mxu0
      %v957 = vadd.f32 %v844, %v956
      %958 = vmatmul.f32.gmra.mxu0 %v724
      %v959 = vpop.f32.mrf.mxu0
      %v960 = vadd.f32 %v847, %v959
      %961 = vmatmul.f32.gmra.mxu0 %v726
      %v962 = vpop.f32.mrf.mxu0
      %v963 = vadd.f32 %v850, %v962
      %964 = vmatmul.f32.gmra.mxu0 %v728
      %v965 = vpop.f32.mrf.mxu0
      %v966 = vadd.f32 %v853, %v965
      %967 = vmatmul.f32.gmra.mxu0 %v730
      %v968 = vpop.f32.mrf.mxu0
      %v969 = vadd.f32 %v856, %v968
      %970 = vmatmul.f32.gmra.mxu0 %v732
      %v971 = vpop.f32.mrf.mxu0
      %v972 = vadd.f32 %v859, %v971
      %973 = vmatmul.f32.gmra.mxu0 %v734
      %v974 = vpop.f32.mrf.mxu0
      %v975 = vadd.f32 %v862, %v974
      %976 = vmatmul.f32.gmra.mxu0 %v736
      %v977 = vpop.f32.mrf.mxu0
      %v978 = vadd.f32 %v865, %v977
      %979 = vmatmul.f32.gmra.mxu0 %v738
      %v980 = vpop.f32.mrf.mxu0
      %v981 = vadd.f32 %v868, %v980
      %982 = vmatmul.f32.gmra.mxu0 %v740
      %v983 = vpop.f32.mrf.mxu0
      %v984 = vadd.f32 %v871, %v983
      %985 = vmatmul.f32.gmra.mxu0 %v742
      %v986 = vpop.f32.mrf.mxu0
      %v987 = vadd.f32 %v874, %v986
      %988 = vmatmul.f32.gmra.mxu0 %v744
      %v989 = vpop.f32.mrf.mxu0
      %v990 = vadd.f32 %v877, %v989
      %991 = vmatmul.f32.gmra.mxu0 %v746
      %v992 = vpop.f32.mrf.mxu0
      %v993 = vadd.f32 %v880, %v992
      %994 = vmatmul.f32.gmra.mxu0 %v748
      %v995 = vpop.f32.mrf.mxu0
      %v996 = vadd.f32 %v883, %v995
      %997 = vmatmul.f32.gmra.mxu0 %v750
      %v998 = vpop.f32.mrf.mxu0
      %v999 = vadd.f32 %v886, %v998
      %1000 = vmatmul.f32.gmra.mxu0 %v752
      %v1001 = vpop.f32.mrf.mxu0
      %v1002 = vadd.f32 %v889, %v1001
      %1003 = vmatmul.f32.gmra.mxu0 %v754
      %v1004 = vpop.f32.mrf.mxu0
      %v1005 = vadd.f32 %v892, %v1004
      %1006 = vmatmul.f32.gmra.mxu0 %v756
      %v1007 = vpop.f32.mrf.mxu0
      %v1008 = vadd.f32 %v895, %v1007
      %1009 = vmatmul.f32.gmra.mxu0 %v758
      %v1010 = vpop.f32.mrf.mxu0
      %v1011 = vadd.f32 %v898, %v1010
      %1012 = vmatmul.f32.gmra.mxu0 %v760
      %v1013 = vpop.f32.mrf.mxu0
      %v1014 = vadd.f32 %v901, %v1013
      %1015 = vmatmul.f32.gmra.mxu0 %v762
      %v1016 = vpop.f32.mrf.mxu0
      %v1017 = vadd.f32 %v904, %v1016
      %1018 = vmatmul.f32.gmra.mxu0 %v764
      %v1019 = vpop.f32.mrf.mxu0
      %v1020 = vadd.f32 %v907, %v1019
      %1021 = vmatmul.f32.gmra.mxu0 %v766
      %v1022 = vpop.f32.mrf.mxu0
      %v1023 = vadd.f32 %v910, %v1022
      %1024 = vmatmul.f32.gmra.mxu0 %v768
      %v1025 = vpop.f32.mrf.mxu0
      %v1026 = vadd.f32 %v913, %v1025
      %1027 = vmatmul.f32.gmra.mxu0 %v770
      %v1028 = vpop.f32.mrf.mxu0
      %v1029 = vadd.f32 %v916, %v1028
      %1030 = vmatmul.f32.gmra.mxu0 %v772
      %v1031 = vpop.f32.mrf.mxu0
      %v1032 = vadd.f32 %v919, %v1031
      %1033 = vmatmul.f32.gmra.mxu0 %v774
      %v1034 = vpop.f32.mrf.mxu0
      %v1035 = vadd.f32 %v922, %v1034
      %1036 = vdwg.mxu0
      %v1037 = vmax.f32 %v942, 0.0
      %v1038 = vmax.f32 %v945, 0.0
      %v1039 = vmax.f32 %v948, 0.0
      %v1040 = vmax.f32 %v951, 0.0
      %v1041 = vmax.f32 %v954, 0.0
      %v1042 = vmax.f32 %v957, 0.0
      %v1043 = vmax.f32 %v960, 0.0
      %v1044 = vmax.f32 %v963, 0.0
      %v1045 = vmax.f32 %v966, 0.0
      %v1046 = vmax.f32 %v969, 0.0
      %v1047 = vmax.f32 %v972, 0.0
      %v1048 = vmax.f32 %v975, 0.0
      %v1049 = vmax.f32 %v978, 0.0
      %v1050 = vmax.f32 %v981, 0.0
      %v1051 = vmax.f32 %v984, 0.0
      %v1052 = vmax.f32 %v987, 0.0
      %v1053 = vmax.f32 %v990, 0.0
      %v1054 = vmax.f32 %v993, 0.0
      %v1055 = vmax.f32 %v996, 0.0
      %v1056 = vmax.f32 %v999, 0.0
      %v1057 = vmax.f32 %v1002, 0.0
      %v1058 = vmax.f32 %v1005, 0.0
      %v1059 = vmax.f32 %v1008, 0.0
      %v1060 = vmax.f32 %v1011, 0.0
      %v1061 = vmax.f32 %v1014, 0.0
      %v1062 = vmax.f32 %v1017, 0.0
      %v1063 = vmax.f32 %v1020, 0.0
      %v1064 = vmax.f32 %v1023, 0.0
      %v1065 = vmax.f32 %v1026, 0.0
      %v1066 = vmax.f32 %v1029, 0.0
      %v1067 = vmax.f32 %v1032, 0.0
      %v1068 = vmax.f32 %v1035, 0.0
      %v1069 = vld [vmem:[%s15] sm:$0xff]
      %v1070 = vld [vmem:[%s15 + $0x8] sm:$0xff]
      %v1071 = vld [vmem:[%s15 + $0x10] sm:$0xff]
      %v1072 = vld [vmem:[%s15 + $0x18] sm:$0xff]
      %v1073 = vld [vmem:[%s15 + $0x20] sm:$0xff]
      %v1074 = vld [vmem:[%s15 + $0x28] sm:$0xff]
      %v1075 = vld [vmem:[%s15 + $0x30] sm:$0xff]
      %v1076 = vld [vmem:[%s15 + $0x38] sm:$0xff]
      %v1077 = vld [vmem:[%s15 + $0x40] sm:$0xff]
      %v1078 = vld [vmem:[%s15 + $0x48] sm:$0xff]
      %v1079 = vld [vmem:[%s15 + $0x50] sm:$0xff]
      %v1080 = vld [vmem:[%s15 + $0x58] sm:$0xff]
      %v1081 = vld [vmem:[%s15 + $0x60] sm:$0xff]
      %v1082 = vld [vmem:[%s15 + $0x68] sm:$0xff]
      %v1083 = vld [vmem:[%s15 + $0x70] sm:$0xff]
      %v1084 = vld [vmem:[%s15 + $0x78] sm:$0xff]
      %v1085 = vld [vmem:[%s15 + $0x80] sm:$0xff]
      %v1086 = vld [vmem:[%s15 + $0x88] sm:$0xff]
      %v1087 = vld [vmem:[%s15 + $0x90] sm:$0xff]
      %v1088 = vld [vmem:[%s15 + $0x98] sm:$0xff]
      %v1089 = vld [vmem:[%s15 + $0xa0] sm:$0xff]
      %v1090 = vld [vmem:[%s15 + $0xa8] sm:$0xff]
      %v1091 = vld [vmem:[%s15 + $0xb0] sm:$0xff]
      %v1092 = vld [vmem:[%s15 + $0xb8] sm:$0xff]
      %v1093 = vld [vmem:[%s15 + $0xc0] sm:$0xff]
      %v1094 = vld [vmem:[%s15 + $0xc8] sm:$0xff]
      %v1095 = vld [vmem:[%s15 + $0xd0] sm:$0xff]
      %v1096 = vld [vmem:[%s15 + $0xd8] sm:$0xff]
      %v1097 = vld [vmem:[%s15 + $0xe0] sm:$0xff]
      %v1098 = vld [vmem:[%s15 + $0xe8] sm:$0xff]
      %v1099 = vld [vmem:[%s15 + $0xf0] sm:$0xff]
      %v1100 = vld [vmem:[%s15 + $0xf8] sm:$0xff]
      %v1101 = vld [vmem:[%s15 + $0x100] sm:$0xff]
      %v1102 = vld [vmem:[%s15 + $0x108] sm:$0xff]
      %v1103 = vld [vmem:[%s15 + $0x110] sm:$0xff]
      %v1104 = vld [vmem:[%s15 + $0x118] sm:$0xff]
      %v1105 = vld [vmem:[%s15 + $0x120] sm:$0xff]
      %v1106 = vld [vmem:[%s15 + $0x128] sm:$0xff]
      %v1107 = vld [vmem:[%s15 + $0x130] sm:$0xff]
      %v1108 = vld [vmem:[%s15 + $0x138] sm:$0xff]
      %v1109 = vld [vmem:[%s15 + $0x140] sm:$0xff]
      %v1110 = vld [vmem:[%s15 + $0x148] sm:$0xff]
      %v1111 = vld [vmem:[%s15 + $0x150] sm:$0xff]
      %v1112 = vld [vmem:[%s15 + $0x158] sm:$0xff]
      %v1113 = vld [vmem:[%s15 + $0x160] sm:$0xff]
      %v1114 = vld [vmem:[%s15 + $0x168] sm:$0xff]
      %v1115 = vld [vmem:[%s15 + $0x170] sm:$0xff]
      %v1116 = vld [vmem:[%s15 + $0x178] sm:$0xff]
      %v1117 = vld [vmem:[%s15 + $0x180] sm:$0xff]
      %v1118 = vld [vmem:[%s15 + $0x188] sm:$0xff]
      %v1119 = vld [vmem:[%s15 + $0x190] sm:$0xff]
      %v1120 = vld [vmem:[%s15 + $0x198] sm:$0xff]
      %v1121 = vld [vmem:[%s15 + $0x1a0] sm:$0xff]
      %v1122 = vld [vmem:[%s15 + $0x1a8] sm:$0xff]
      %v1123 = vld [vmem:[%s15 + $0x1b0] sm:$0xff]
      %v1124 = vld [vmem:[%s15 + $0x1b8] sm:$0xff]
      %v1125 = vld [vmem:[%s15 + $0x1c0] sm:$0xff]
      %v1126 = vld [vmem:[%s15 + $0x1c8] sm:$0xff]
      %v1127 = vld [vmem:[%s15 + $0x1d0] sm:$0xff]
      %v1128 = vld [vmem:[%s15 + $0x1d8] sm:$0xff]
      %v1129 = vld [vmem:[%s15 + $0x1e0] sm:$0xff]
      %v1130 = vld [vmem:[%s15 + $0x1e8] sm:$0xff]
      %v1131 = vld [vmem:[%s15 + $0x1f0] sm:$0xff]
      %v1132 = vld [vmem:[%s15 + $0x1f8] sm:$0xff]
      %v1133 = vld [vmem:[%s15 + $0x200] sm:$0xff]
      %v1134 = vld [vmem:[%s15 + $0x208] sm:$0xff]
      %v1135 = vld [vmem:[%s15 + $0x210] sm:$0xff]
      %v1136 = vld [vmem:[%s15 + $0x218] sm:$0xff]
      %v1137 = vld [vmem:[%s15 + $0x220] sm:$0xff]
      %v1138 = vld [vmem:[%s15 + $0x228] sm:$0xff]
      %v1139 = vld [vmem:[%s15 + $0x230] sm:$0xff]
      %v1140 = vld [vmem:[%s15 + $0x238] sm:$0xff]
      %v1141 = vld [vmem:[%s15 + $0x240] sm:$0xff]
      %v1142 = vld [vmem:[%s15 + $0x248] sm:$0xff]
      %v1143 = vld [vmem:[%s15 + $0x250] sm:$0xff]
      %v1144 = vld [vmem:[%s15 + $0x258] sm:$0xff]
      %v1145 = vld [vmem:[%s15 + $0x260] sm:$0xff]
      %v1146 = vld [vmem:[%s15 + $0x268] sm:$0xff]
      %v1147 = vld [vmem:[%s15 + $0x270] sm:$0xff]
      %v1148 = vld [vmem:[%s15 + $0x278] sm:$0xff]
      %v1149 = vld [vmem:[%s15 + $0x280] sm:$0xf]
      %v1150 = vld [vmem:[%s15 + $0x288] sm:$0xf]
      %1151 = vmatpush.msra.mxu0 %v1052
      %1152 = vmatpush.msra.mxu0 %v1051
      %1153 = vmatpush.msra.mxu0 %v1050
      %1154 = vmatpush.msra.mxu0 %v1049
      %1155 = vmatpush.msra.mxu0 %v1048
      %1156 = vmatpush.msra.mxu0 %v1047
      %1157 = vmatpush.msra.mxu0 %v1046
      %1158 = vmatpush.msra.mxu0 %v1045
      %1159 = vmatpush.msra.mxu0 %v1044
      %1160 = vmatpush.msra.mxu0 %v1043
      %1161 = vmatpush.msra.mxu0 %v1042
      %1162 = vmatpush.msra.mxu0 %v1041
      %1163 = vmatpush.msra.mxu0 %v1040
      %1164 = vmatpush.msra.mxu0 %v1039
      %1165 = vmatpush.msra.mxu0 %v1038
      %1166 = vmatpush.msra.mxu0 %v1037
      %1167 = vmatmul.f32.gmra.mxu0 %v1069
      %v1168 = vpop.f32.mrf.mxu0
      %v1169 = vadd.f32 0.0, %v1168
      %1170 = vmatmul.f32.gmra.mxu0 %v1071
      %v1171 = vpop.f32.mrf.mxu0
      %v1172 = vadd.f32 0.0, %v1171
      %1173 = vmatmul.f32.gmra.mxu0 %v1073
      %v1174 = vpop.f32.mrf.mxu0
      %v1175 = vadd.f32 0.0, %v1174
      %1176 = vmatmul.f32.gmra.mxu0 %v1075
      %v1177 = vpop.f32.mrf.mxu0
      %v1178 = vadd.f32 0.0, %v1177
      %1179 = vmatmul.f32.gmra.mxu0 %v1077
      %v1180 = vpop.f32.mrf.mxu0
      %v1181 = vadd.f32 0.0, %v1180
      %1182 = vmatmul.f32.gmra.mxu0 %v1079
      %v1183 = vpop.f32.mrf.mxu0
      %v1184 = vadd.f32 0.0, %v1183
      %1185 = vmatmul.f32.gmra.mxu0 %v1081
      %v1186 = vpop.f32.mrf.mxu0
      %v1187 = vadd.f32 0.0, %v1186
      %1188 = vmatmul.f32.gmra.mxu0 %v1083
      %v1189 = vpop.f32.mrf.mxu0
      %v1190 = vadd.f32 0.0, %v1189
      %1191 = vmatmul.f32.gmra.mxu0 %v1085
      %v1192 = vpop.f32.mrf.mxu0
      %v1193 = vadd.f32 0.0, %v1192
      %1194 = vmatmul.f32.gmra.mxu0 %v1087
      %v1195 = vpop.f32.mrf.mxu0
      %v1196 = vadd.f32 0.0, %v1195
      %1197 = vmatmul.f32.gmra.mxu0 %v1089
      %v1198 = vpop.f32.mrf.mxu0
      %v1199 = vadd.f32 0.0, %v1198
      %1200 = vmatmul.f32.gmra.mxu0 %v1091
      %v1201 = vpop.f32.mrf.mxu0
      %v1202 = vadd.f32 0.0, %v1201
      %1203 = vmatmul.f32.gmra.mxu0 %v1093
      %v1204 = vpop.f32.mrf.mxu0
      %v1205 = vadd.f32 0.0, %v1204
      %1206 = vmatmul.f32.gmra.mxu0 %v1095
      %v1207 = vpop.f32.mrf.mxu0
      %v1208 = vadd.f32 0.0, %v1207
      %1209 = vmatmul.f32.gmra.mxu0 %v1097
      %v1210 = vpop.f32.mrf.mxu0
      %v1211 = vadd.f32 0.0, %v1210
      %1212 = vmatmul.f32.gmra.mxu0 %v1099
      %v1213 = vpop.f32.mrf.mxu0
      %v1214 = vadd.f32 0.0, %v1213
      %1215 = vmatmul.f32.gmra.mxu0 %v1101
      %v1216 = vpop.f32.mrf.mxu0
      %v1217 = vadd.f32 0.0, %v1216
      %1218 = vmatmul.f32.gmra.mxu0 %v1103
      %v1219 = vpop.f32.mrf.mxu0
      %v1220 = vadd.f32 0.0, %v1219
      %1221 = vmatmul.f32.gmra.mxu0 %v1105
      %v1222 = vpop.f32.mrf.mxu0
      %v1223 = vadd.f32 0.0, %v1222
      %1224 = vmatmul.f32.gmra.mxu0 %v1107
      %v1225 = vpop.f32.mrf.mxu0
      %v1226 = vadd.f32 0.0, %v1225
      %1227 = vmatmul.f32.gmra.mxu0 %v1109
      %v1228 = vpop.f32.mrf.mxu0
      %v1229 = vadd.f32 0.0, %v1228
      %1230 = vmatmul.f32.gmra.mxu0 %v1111
      %v1231 = vpop.f32.mrf.mxu0
      %v1232 = vadd.f32 0.0, %v1231
      %1233 = vmatmul.f32.gmra.mxu0 %v1113
      %v1234 = vpop.f32.mrf.mxu0
      %v1235 = vadd.f32 0.0, %v1234
      %1236 = vmatmul.f32.gmra.mxu0 %v1115
      %v1237 = vpop.f32.mrf.mxu0
      %v1238 = vadd.f32 0.0, %v1237
      %1239 = vmatmul.f32.gmra.mxu0 %v1117
      %v1240 = vpop.f32.mrf.mxu0
      %v1241 = vadd.f32 0.0, %v1240
      %1242 = vmatmul.f32.gmra.mxu0 %v1119
      %v1243 = vpop.f32.mrf.mxu0
      %v1244 = vadd.f32 0.0, %v1243
      %1245 = vmatmul.f32.gmra.mxu0 %v1121
      %v1246 = vpop.f32.mrf.mxu0
      %v1247 = vadd.f32 0.0, %v1246
      %1248 = vmatmul.f32.gmra.mxu0 %v1123
      %v1249 = vpop.f32.mrf.mxu0
      %v1250 = vadd.f32 0.0, %v1249
      %1251 = vmatmul.f32.gmra.mxu0 %v1125
      %v1252 = vpop.f32.mrf.mxu0
      %v1253 = vadd.f32 0.0, %v1252
      %1254 = vmatmul.f32.gmra.mxu0 %v1127
      %v1255 = vpop.f32.mrf.mxu0
      %v1256 = vadd.f32 0.0, %v1255
      %1257 = vmatmul.f32.gmra.mxu0 %v1129
      %v1258 = vpop.f32.mrf.mxu0
      %v1259 = vadd.f32 0.0, %v1258
      %1260 = vmatmul.f32.gmra.mxu0 %v1131
      %v1261 = vpop.f32.mrf.mxu0
      %v1262 = vadd.f32 0.0, %v1261
      %1263 = vmatmul.f32.gmra.mxu0 %v1133
      %v1264 = vpop.f32.mrf.mxu0
      %v1265 = vadd.f32 0.0, %v1264
      %1266 = vmatmul.f32.gmra.mxu0 %v1135
      %v1267 = vpop.f32.mrf.mxu0
      %v1268 = vadd.f32 0.0, %v1267
      %1269 = vmatmul.f32.gmra.mxu0 %v1137
      %v1270 = vpop.f32.mrf.mxu0
      %v1271 = vadd.f32 0.0, %v1270
      %1272 = vmatmul.f32.gmra.mxu0 %v1139
      %v1273 = vpop.f32.mrf.mxu0
      %v1274 = vadd.f32 0.0, %v1273
      %1275 = vmatmul.f32.gmra.mxu0 %v1141
      %v1276 = vpop.f32.mrf.mxu0
      %v1277 = vadd.f32 0.0, %v1276
      %1278 = vmatmul.f32.gmra.mxu0 %v1143
      %v1279 = vpop.f32.mrf.mxu0
      %v1280 = vadd.f32 0.0, %v1279
      %1281 = vmatmul.f32.gmra.mxu0 %v1145
      %v1282 = vpop.f32.mrf.mxu0
      %v1283 = vadd.f32 0.0, %v1282
      %1284 = vmatmul.f32.gmra.mxu0 %v1147
      %v1285 = vpop.f32.mrf.mxu0
      %v1286 = vadd.f32 0.0, %v1285
      %1287 = vmatmul.f32.gmra.mxu0 %v1149
      %v1288 = vpop.f32.mrf.mxu0
      %v1289 = vadd.f32 0.0, %v1288
      %1290 = vdwg.mxu0
      %1291 = vmatpush.msra.mxu0 %v1068
      %1292 = vmatpush.msra.mxu0 %v1067
      %1293 = vmatpush.msra.mxu0 %v1066
      %1294 = vmatpush.msra.mxu0 %v1065
      %1295 = vmatpush.msra.mxu0 %v1064
      %1296 = vmatpush.msra.mxu0 %v1063
      %1297 = vmatpush.msra.mxu0 %v1062
      %1298 = vmatpush.msra.mxu0 %v1061
      %1299 = vmatpush.msra.mxu0 %v1060
      %1300 = vmatpush.msra.mxu0 %v1059
      %1301 = vmatpush.msra.mxu0 %v1058
      %1302 = vmatpush.msra.mxu0 %v1057
      %1303 = vmatpush.msra.mxu0 %v1056
      %1304 = vmatpush.msra.mxu0 %v1055
      %1305 = vmatpush.msra.mxu0 %v1054
      %1306 = vmatpush.msra.mxu0 %v1053
      %1307 = vmatmul.f32.gmra.mxu0 %v1070
      %v1308 = vpop.f32.mrf.mxu0
      %v1309 = vadd.f32 %v1169, %v1308
      %1310 = vmatmul.f32.gmra.mxu0 %v1072
      %v1311 = vpop.f32.mrf.mxu0
      %v1312 = vadd.f32 %v1172, %v1311
      %1313 = vmatmul.f32.gmra.mxu0 %v1074
      %v1314 = vpop.f32.mrf.mxu0
      %v1315 = vadd.f32 %v1175, %v1314
      %1316 = vmatmul.f32.gmra.mxu0 %v1076
      %v1317 = vpop.f32.mrf.mxu0
      %v1318 = vadd.f32 %v1178, %v1317
      %1319 = vmatmul.f32.gmra.mxu0 %v1078
      %v1320 = vpop.f32.mrf.mxu0
      %v1321 = vadd.f32 %v1181, %v1320
      %1322 = vmatmul.f32.gmra.mxu0 %v1080
      %v1323 = vpop.f32.mrf.mxu0
      %v1324 = vadd.f32 %v1184, %v1323
      %1325 = vmatmul.f32.gmra.mxu0 %v1082
      %v1326 = vpop.f32.mrf.mxu0
      %v1327 = vadd.f32 %v1187, %v1326
      %1328 = vmatmul.f32.gmra.mxu0 %v1084
      %v1329 = vpop.f32.mrf.mxu0
      %v1330 = vadd.f32 %v1190, %v1329
      %1331 = vmatmul.f32.gmra.mxu0 %v1086
      %v1332 = vpop.f32.mrf.mxu0
      %v1333 = vadd.f32 %v1193, %v1332
      %1334 = vmatmul.f32.gmra.mxu0 %v1088
      %v1335 = vpop.f32.mrf.mxu0
      %v1336 = vadd.f32 %v1196, %v1335
      %1337 = vmatmul.f32.gmra.mxu0 %v1090
      %v1338 = vpop.f32.mrf.mxu0
      %v1339 = vadd.f32 %v1199, %v1338
      %1340 = vmatmul.f32.gmra.mxu0 %v1092
      %v1341 = vpop.f32.mrf.mxu0
      %v1342 = vadd.f32 %v1202, %v1341
      %1343 = vmatmul.f32.gmra.mxu0 %v1094
      %v1344 = vpop.f32.mrf.mxu0
      %v1345 = vadd.f32 %v1205, %v1344
      %1346 = vmatmul.f32.gmra.mxu0 %v1096
      %v1347 = vpop.f32.mrf.mxu0
      %v1348 = vadd.f32 %v1208, %v1347
      %1349 = vmatmul.f32.gmra.mxu0 %v1098
      %v1350 = vpop.f32.mrf.mxu0
      %v1351 = vadd.f32 %v1211, %v1350
      %1352 = vmatmul.f32.gmra.mxu0 %v1100
      %v1353 = vpop.f32.mrf.mxu0
      %v1354 = vadd.f32 %v1214, %v1353
      %1355 = vmatmul.f32.gmra.mxu0 %v1102
      %v1356 = vpop.f32.mrf.mxu0
      %v1357 = vadd.f32 %v1217, %v1356
      %1358 = vmatmul.f32.gmra.mxu0 %v1104
      %v1359 = vpop.f32.mrf.mxu0
      %v1360 = vadd.f32 %v1220, %v1359
      %1361 = vmatmul.f32.gmra.mxu0 %v1106
      %v1362 = vpop.f32.mrf.mxu0
      %v1363 = vadd.f32 %v1223, %v1362
      %1364 = vmatmul.f32.gmra.mxu0 %v1108
      %v1365 = vpop.f32.mrf.mxu0
      %v1366 = vadd.f32 %v1226, %v1365
      %1367 = vmatmul.f32.gmra.mxu0 %v1110
      %v1368 = vpop.f32.mrf.mxu0
      %v1369 = vadd.f32 %v1229, %v1368
      %1370 = vmatmul.f32.gmra.mxu0 %v1112
      %v1371 = vpop.f32.mrf.mxu0
      %v1372 = vadd.f32 %v1232, %v1371
      %1373 = vmatmul.f32.gmra.mxu0 %v1114
      %v1374 = vpop.f32.mrf.mxu0
      %v1375 = vadd.f32 %v1235, %v1374
      %1376 = vmatmul.f32.gmra.mxu0 %v1116
      %v1377 = vpop.f32.mrf.mxu0
      %v1378 = vadd.f32 %v1238, %v1377
      %1379 = vmatmul.f32.gmra.mxu0 %v1118
      %v1380 = vpop.f32.mrf.mxu0
      %v1381 = vadd.f32 %v1241, %v1380
      %1382 = vmatmul.f32.gmra.mxu0 %v1120
      %v1383 = vpop.f32.mrf.mxu0
      %v1384 = vadd.f32 %v1244, %v1383
      %1385 = vmatmul.f32.gmra.mxu0 %v1122
      %v1386 = vpop.f32.mrf.mxu0
      %v1387 = vadd.f32 %v1247, %v1386
      %1388 = vmatmul.f32.gmra.mxu0 %v1124
      %v1389 = vpop.f32.mrf.mxu0
      %v1390 = vadd.f32 %v1250, %v1389
      %1391 = vmatmul.f32.gmra.mxu0 %v1126
      %v1392 = vpop.f32.mrf.mxu0
      %v1393 = vadd.f32 %v1253, %v1392
      %1394 = vmatmul.f32.gmra.mxu0 %v1128
      %v1395 = vpop.f32.mrf.mxu0
      %v1396 = vadd.f32 %v1256, %v1395
      %1397 = vmatmul.f32.gmra.mxu0 %v1130
      %v1398 = vpop.f32.mrf.mxu0
      %v1399 = vadd.f32 %v1259, %v1398
      %1400 = vmatmul.f32.gmra.mxu0 %v1132
      %v1401 = vpop.f32.mrf.mxu0
      %v1402 = vadd.f32 %v1262, %v1401
      %1403 = vmatmul.f32.gmra.mxu0 %v1134
      %v1404 = vpop.f32.mrf.mxu0
      %v1405 = vadd.f32 %v1265, %v1404
      %1406 = vmatmul.f32.gmra.mxu0 %v1136
      %v1407 = vpop.f32.mrf.mxu0
      %v1408 = vadd.f32 %v1268, %v1407
      %1409 = vmatmul.f32.gmra.mxu0 %v1138
      %v1410 = vpop.f32.mrf.mxu0
      %v1411 = vadd.f32 %v1271, %v1410
      %1412 = vmatmul.f32.gmra.mxu0 %v1140
      %v1413 = vpop.f32.mrf.mxu0
      %v1414 = vadd.f32 %v1274, %v1413
      %1415 = vmatmul.f32.gmra.mxu0 %v1142
      %v1416 = vpop.f32.mrf.mxu0
      %v1417 = vadd.f32 %v1277, %v1416
      %1418 = vmatmul.f32.gmra.mxu0 %v1144
      %v1419 = vpop.f32.mrf.mxu0
      %v1420 = vadd.f32 %v1280, %v1419
      %1421 = vmatmul.f32.gmra.mxu0 %v1146
      %v1422 = vpop.f32.mrf.mxu0
      %v1423 = vadd.f32 %v1283, %v1422
      %1424 = vmatmul.f32.gmra.mxu0 %v1148
      %v1425 = vpop.f32.mrf.mxu0
      %v1426 = vadd.f32 %v1286, %v1425
      %1427 = vmatmul.f32.gmra.mxu0 %v1150
      %v1428 = vpop.f32.mrf.mxu0
      %v1429 = vadd.f32 %v1289, %v1428
      %1430 = vdwg.mxu0
      %vm1431 = vcmask 523264
      %1432 = vst.msk [vmem:[#allocation2] sm:$0xff] %vm1431, %v1309
      %1433 = vst.msk [vmem:[#allocation2 + $0x8] sm:$0xff] %vm1431, %v1312
      %1434 = vst.msk [vmem:[#allocation2 + $0x10] sm:$0xff] %vm1431, %v1315
      %1435 = vst.msk [vmem:[#allocation2 + $0x18] sm:$0xff] %vm1431, %v1318
      %1436 = vst.msk [vmem:[#allocation2 + $0x20] sm:$0xff] %vm1431, %v1321
      %1437 = vst.msk [vmem:[#allocation2 + $0x28] sm:$0xff] %vm1431, %v1324
      %1438 = vst.msk [vmem:[#allocation2 + $0x30] sm:$0xff] %vm1431, %v1327
      %1439 = vst.msk [vmem:[#allocation2 + $0x38] sm:$0xff] %vm1431, %v1330
      %1440 = vst.msk [vmem:[#allocation2 + $0x40] sm:$0xff] %vm1431, %v1333
      %1441 = vst.msk [vmem:[#allocation2 + $0x48] sm:$0xff] %vm1431, %v1336
      %1442 = vst.msk [vmem:[#allocation2 + $0x50] sm:$0xff] %vm1431, %v1339
      %1443 = vst.msk [vmem:[#allocation2 + $0x58] sm:$0xff] %vm1431, %v1342
      %1444 = vst.msk [vmem:[#allocation2 + $0x60] sm:$0xff] %vm1431, %v1345
      %1445 = vst.msk [vmem:[#allocation2 + $0x68] sm:$0xff] %vm1431, %v1348
      %1446 = vst.msk [vmem:[#allocation2 + $0x70] sm:$0xff] %vm1431, %v1351
      %1447 = vst.msk [vmem:[#allocation2 + $0x78] sm:$0xff] %vm1431, %v1354
      %1448 = vst.msk [vmem:[#allocation2 + $0x80] sm:$0xff] %vm1431, %v1357
      %1449 = vst.msk [vmem:[#allocation2 + $0x88] sm:$0xff] %vm1431, %v1360
      %1450 = vst.msk [vmem:[#allocation2 + $0x90] sm:$0xff] %vm1431, %v1363
      %1451 = vst.msk [vmem:[#allocation2 + $0x98] sm:$0xff] %vm1431, %v1366
      %1452 = vst.msk [vmem:[#allocation2 + $0xa0] sm:$0xff] %vm1431, %v1369
      %1453 = vst.msk [vmem:[#allocation2 + $0xa8] sm:$0xff] %vm1431, %v1372
      %1454 = vst.msk [vmem:[#allocation2 + $0xb0] sm:$0xff] %vm1431, %v1375
      %1455 = vst.msk [vmem:[#allocation2 + $0xb8] sm:$0xff] %vm1431, %v1378
      %1456 = vst.msk [vmem:[#allocation2 + $0xc0] sm:$0xff] %vm1431, %v1381
      %1457 = vst.msk [vmem:[#allocation2 + $0xc8] sm:$0xff] %vm1431, %v1384
      %1458 = vst.msk [vmem:[#allocation2 + $0xd0] sm:$0xff] %vm1431, %v1387
      %1459 = vst.msk [vmem:[#allocation2 + $0xd8] sm:$0xff] %vm1431, %v1390
      %1460 = vst.msk [vmem:[#allocation2 + $0xe0] sm:$0xff] %vm1431, %v1393
      %1461 = vst.msk [vmem:[#allocation2 + $0xe8] sm:$0xff] %vm1431, %v1396
      %1462 = vst.msk [vmem:[#allocation2 + $0xf0] sm:$0xff] %vm1431, %v1399
      %1463 = vst.msk [vmem:[#allocation2 + $0xf8] sm:$0xff] %vm1431, %v1402
      %1464 = vst.msk [vmem:[#allocation2 + $0x100] sm:$0xff] %vm1431, %v1405
      %1465 = vst.msk [vmem:[#allocation2 + $0x108] sm:$0xff] %vm1431, %v1408
      %1466 = vst.msk [vmem:[#allocation2 + $0x110] sm:$0xff] %vm1431, %v1411
      %1467 = vst.msk [vmem:[#allocation2 + $0x118] sm:$0xff] %vm1431, %v1414
      %1468 = vst.msk [vmem:[#allocation2 + $0x120] sm:$0xff] %vm1431, %v1417
      %1469 = vst.msk [vmem:[#allocation2 + $0x128] sm:$0xff] %vm1431, %v1420
      %1470 = vst.msk [vmem:[#allocation2 + $0x130] sm:$0xff] %vm1431, %v1423
      %1471 = vst.msk [vmem:[#allocation2 + $0x138] sm:$0xff] %vm1431, %v1426
      %vm1472 = vcmask 519168
      %1473 = vst.msk [vmem:[#allocation2 + $0x140] sm:$0xf] %vm1472, %v1429
      %v1474 = vld [vmem:[#allocation2] sm:$0xff]
      %v1475 = vld [vmem:[#allocation2 + $0x8] sm:$0xff]
      %v1476 = vld [vmem:[#allocation2 + $0x10] sm:$0xff]
      %v1477 = vld [vmem:[#allocation2 + $0x18] sm:$0xff]
      %v1478 = vld [vmem:[#allocation2 + $0x20] sm:$0xff]
      %v1479 = vld [vmem:[#allocation2 + $0x28] sm:$0xff]
      %v1480 = vld [vmem:[#allocation2 + $0x30] sm:$0xff]
      %v1481 = vld [vmem:[#allocation2 + $0x38] sm:$0xff]
      %v1482 = vld [vmem:[#allocation2 + $0x40] sm:$0xff]
      %v1483 = vld [vmem:[#allocation2 + $0x48] sm:$0xff]
      %v1484 = vld [vmem:[#allocation2 + $0x50] sm:$0xff]
      %v1485 = vld [vmem:[#allocation2 + $0x58] sm:$0xff]
      %v1486 = vld [vmem:[#allocation2 + $0x60] sm:$0xff]
      %v1487 = vld [vmem:[#allocation2 + $0x68] sm:$0xff]
      %v1488 = vld [vmem:[#allocation2 + $0x70] sm:$0xff]
      %v1489 = vld [vmem:[#allocation2 + $0x78] sm:$0xff]
      %v1490 = vld [vmem:[#allocation2 + $0x80] sm:$0x3f]
      %v1491 = vld [vmem:[#allocation2 + $0xa2] sm:$0xff]
      %v1492 = vld [vmem:[#allocation2 + $0xaa] sm:$0xff]
      %v1493 = vld [vmem:[#allocation2 + $0xb2] sm:$0xff]
      %v1494 = vld [vmem:[#allocation2 + $0xba] sm:$0xff]
      %v1495 = vld [vmem:[#allocation2 + $0xc2] sm:$0xff]
      %v1496 = vld [vmem:[#allocation2 + $0xca] sm:$0xff]
      %v1497 = vld [vmem:[#allocation2 + $0xd2] sm:$0xff]
      %v1498 = vld [vmem:[#allocation2 + $0xda] sm:$0xff]
      %v1499 = vld [vmem:[#allocation2 + $0xe2] sm:$0xff]
      %v1500 = vld [vmem:[#allocation2 + $0xea] sm:$0xff]
      %v1501 = vld [vmem:[#allocation2 + $0xf2] sm:$0xff]
      %v1502 = vld [vmem:[#allocation2 + $0xfa] sm:$0xff]
      %v1503 = vld [vmem:[#allocation2 + $0x102] sm:$0xff]
      %v1504 = vld [vmem:[#allocation2 + $0x10a] sm:$0xff]
      %v1505 = vld [vmem:[#allocation2 + $0x112] sm:$0xff]
      %v1506 = vld [vmem:[#allocation2 + $0x11a] sm:$0xff]
      %v1507 = vld [vmem:[#allocation2 + $0x122] sm:$0x3f]
      %v1508 = vmax.f32 %v1474, %v1491
      %v1509 = vmax.f32 %v1475, %v1492
      %v1510 = vmax.f32 %v1476, %v1493
      %v1511 = vmax.f32 %v1477, %v1494
      %v1512 = vmax.f32 %v1478, %v1495
      %v1513 = vmax.f32 %v1479, %v1496
      %v1514 = vmax.f32 %v1480, %v1497
      %v1515 = vmax.f32 %v1481, %v1498
      %v1516 = vmax.f32 %v1482, %v1499
      %v1517 = vmax.f32 %v1483, %v1500
      %v1518 = vmax.f32 %v1484, %v1501
      %v1519 = vmax.f32 %v1485, %v1502
      %v1520 = vmax.f32 %v1486, %v1503
      %v1521 = vmax.f32 %v1487, %v1504
      %v1522 = vmax.f32 %v1488, %v1505
      %v1523 = vmax.f32 %v1489, %v1506
      %v1524 = vmax.f32 %v1490, %v1507
      %v1525 = vld [vmem:[#allocation2 + $0x1] sm:$0xff]
      %v1526 = vld [vmem:[#allocation2 + $0x9] sm:$0xff]
      %v1527 = vld [vmem:[#allocation2 + $0x11] sm:$0xff]
      %v1528 = vld [vmem:[#allocation2 + $0x19] sm:$0xff]
      %v1529 = vld [vmem:[#allocation2 + $0x21] sm:$0xff]
      %v1530 = vld [vmem:[#allocation2 + $0x29] sm:$0xff]
      %v1531 = vld [vmem:[#allocation2 + $0x31] sm:$0xff]
      %v1532 = vld [vmem:[#allocation2 + $0x39] sm:$0xff]
      %v1533 = vld [vmem:[#allocation2 + $0x41] sm:$0xff]
      %v1534 = vld [vmem:[#allocation2 + $0x49] sm:$0xff]
      %v1535 = vld [vmem:[#allocation2 + $0x51] sm:$0xff]
      %v1536 = vld [vmem:[#allocation2 + $0x59] sm:$0xff]
      %v1537 = vld [vmem:[#allocation2 + $0x61] sm:$0xff]
      %v1538 = vld [vmem:[#allocation2 + $0x69] sm:$0xff]
      %v1539 = vld [vmem:[#allocation2 + $0x71] sm:$0xff]
      %v1540 = vld [vmem:[#allocation2 + $0x79] sm:$0xff]
      %v1541 = vld [vmem:[#allocation2 + $0x81] sm:$0x3f]
      %v1542 = vmax.f32 %v1508, %v1525
      %v1543 = vmax.f32 %v1509, %v1526
      %v1544 = vmax.f32 %v1510, %v1527
      %v1545 = vmax.f32 %v1511, %v1528
      %v1546 = vmax.f32 %v1512, %v1529
      %v1547 = vmax.f32 %v1513, %v1530
      %v1548 = vmax.f32 %v1514, %v1531
      %v1549 = vmax.f32 %v1515, %v1532
      %v1550 = vmax.f32 %v1516, %v1533
      %v1551 = vmax.f32 %v1517, %v1534
      %v1552 = vmax.f32 %v1518, %v1535
      %v1553 = vmax.f32 %v1519, %v1536
      %v1554 = vmax.f32 %v1520, %v1537
      %v1555 = vmax.f32 %v1521, %v1538
      %v1556 = vmax.f32 %v1522, %v1539
      %v1557 = vmax.f32 %v1523, %v1540
      %v1558 = vmax.f32 %v1524, %v1541
      %v1559 = vld [vmem:[#allocation2 + $0x81] sm:$0xff]
      %v1560 = vld [vmem:[#allocation2 + $0x89] sm:$0x3f]
      %v1561 = vmax.f32 %v1542, %v1526
      %v1562 = vmax.f32 %v1543, %v1527
      %v1563 = vmax.f32 %v1544, %v1528
      %v1564 = vmax.f32 %v1545, %v1529
      %v1565 = vmax.f32 %v1546, %v1530
      %v1566 = vmax.f32 %v1547, %v1531
      %v1567 = vmax.f32 %v1548, %v1532
      %v1568 = vmax.f32 %v1549, %v1533
      %v1569 = vmax.f32 %v1550, %v1534
      %v1570 = vmax.f32 %v1551, %v1535
      %v1571 = vmax.f32 %v1552, %v1536
      %v1572 = vmax.f32 %v1553, %v1537
      %v1573 = vmax.f32 %v1554, %v1538
      %v1574 = vmax.f32 %v1555, %v1539
      %v1575 = vmax.f32 %v1556, %v1540
      %v1576 = vmax.f32 %v1557, %v1559
      %v1577 = vmax.f32 %v1558, %v1560
      %v1578 = vld [vmem:[#allocation2 + $0xab] sm:$0xff]
      %v1579 = vld [vmem:[#allocation2 + $0xb3] sm:$0xff]
      %v1580 = vld [vmem:[#allocation2 + $0xbb] sm:$0xff]
      %v1581 = vld [vmem:[#allocation2 + $0xc3] sm:$0xff]
      %v1582 = vld [vmem:[#allocation2 + $0xcb] sm:$0xff]
      %v1583 = vld [vmem:[#allocation2 + $0xd3] sm:$0xff]
      %v1584 = vld [vmem:[#allocation2 + $0xdb] sm:$0xff]
      %v1585 = vld [vmem:[#allocation2 + $0xe3] sm:$0xff]
      %v1586 = vld [vmem:[#allocation2 + $0xeb] sm:$0xff]
      %v1587 = vld [vmem:[#allocation2 + $0xf3] sm:$0xff]
      %v1588 = vld [vmem:[#allocation2 + $0xfb] sm:$0xff]
      %v1589 = vld [vmem:[#allocation2 + $0x103] sm:$0xff]
      %v1590 = vld [vmem:[#allocation2 + $0x10b] sm:$0xff]
      %v1591 = vld [vmem:[#allocation2 + $0x113] sm:$0xff]
      %v1592 = vld [vmem:[#allocation2 + $0x11b] sm:$0xff]
      %v1593 = vld [vmem:[#allocation2 + $0x123] sm:$0xff]
      %v1594 = vld [vmem:[#allocation2 + $0x12b] sm:$0x3f]
      %v1595 = vmax.f32 %v1561, %v1578
      %v1596 = vmax.f32 %v1562, %v1579
      %v1597 = vmax.f32 %v1563, %v1580
      %v1598 = vmax.f32 %v1564, %v1581
      %v1599 = vmax.f32 %v1565, %v1582
      %v1600 = vmax.f32 %v1566, %v1583
      %v1601 = vmax.f32 %v1567, %v1584
      %v1602 = vmax.f32 %v1568, %v1585
      %v1603 = vmax.f32 %v1569, %v1586
      %v1604 = vmax.f32 %v1570, %v1587
      %v1605 = vmax.f32 %v1571, %v1588
      %v1606 = vmax.f32 %v1572, %v1589
      %v1607 = vmax.f32 %v1573, %v1590
      %v1608 = vmax.f32 %v1574, %v1591
      %v1609 = vmax.f32 %v1575, %v1592
      %v1610 = vmax.f32 %v1576, %v1593
      %v1611 = vmax.f32 %v1577, %v1594
      %v1612 = vld [vmem:[#allocation2 + $0xa] sm:$0xff]
      %v1613 = vld [vmem:[#allocation2 + $0x12] sm:$0xff]
      %v1614 = vld [vmem:[#allocation2 + $0x1a] sm:$0xff]
      %v1615 = vld [vmem:[#allocation2 + $0x22] sm:$0xff]
      %v1616 = vld [vmem:[#allocation2 + $0x2a] sm:$0xff]
      %v1617 = vld [vmem:[#allocation2 + $0x32] sm:$0xff]
      %v1618 = vld [vmem:[#allocation2 + $0x3a] sm:$0xff]
      %v1619 = vld [vmem:[#allocation2 + $0x42] sm:$0xff]
      %v1620 = vld [vmem:[#allocation2 + $0x4a] sm:$0xff]
      %v1621 = vld [vmem:[#allocation2 + $0x52] sm:$0xff]
      %v1622 = vld [vmem:[#allocation2 + $0x5a] sm:$0xff]
      %v1623 = vld [vmem:[#allocation2 + $0x62] sm:$0xff]
      %v1624 = vld [vmem:[#allocation2 + $0x6a] sm:$0xff]
      %v1625 = vld [vmem:[#allocation2 + $0x72] sm:$0xff]
      %v1626 = vld [vmem:[#allocation2 + $0x7a] sm:$0xff]
      %v1627 = vld [vmem:[#allocation2 + $0x82] sm:$0xff]
      %v1628 = vld [vmem:[#allocation2 + $0x8a] sm:$0x3f]
      %v1629 = vmax.f32 %v1595, %v1612
      %v1630 = vmax.f32 %v1596, %v1613
      %v1631 = vmax.f32 %v1597, %v1614
      %v1632 = vmax.f32 %v1598, %v1615
      %v1633 = vmax.f32 %v1599, %v1616
      %v1634 = vmax.f32 %v1600, %v1617
      %v1635 = vmax.f32 %v1601, %v1618
      %v1636 = vmax.f32 %v1602, %v1619
      %v1637 = vmax.f32 %v1603, %v1620
      %v1638 = vmax.f32 %v1604, %v1621
      %v1639 = vmax.f32 %v1605, %v1622
      %v1640 = vmax.f32 %v1606, %v1623
      %v1641 = vmax.f32 %v1607, %v1624
      %v1642 = vmax.f32 %v1608, %v1625
      %v1643 = vmax.f32 %v1609, %v1626
      %v1644 = vmax.f32 %v1610, %v1627
      %v1645 = vmax.f32 %v1611, %v1628
      %v1646 = vld [vmem:[#allocation2 + $0x8a] sm:$0xff]
      %v1647 = vld [vmem:[#allocation2 + $0x92] sm:$0x3f]
      %v1648 = vmax.f32 %v1629, %v1613
      %v1649 = vmax.f32 %v1630, %v1614
      %v1650 = vmax.f32 %v1631, %v1615
      %v1651 = vmax.f32 %v1632, %v1616
      %v1652 = vmax.f32 %v1633, %v1617
      %v1653 = vmax.f32 %v1634, %v1618
      %v1654 = vmax.f32 %v1635, %v1619
      %v1655 = vmax.f32 %v1636, %v1620
      %v1656 = vmax.f32 %v1637, %v1621
      %v1657 = vmax.f32 %v1638, %v1622
      %v1658 = vmax.f32 %v1639, %v1623
      %v1659 = vmax.f32 %v1640, %v1624
      %v1660 = vmax.f32 %v1641, %v1625
      %v1661 = vmax.f32 %v1642, %v1626
      %v1662 = vmax.f32 %v1643, %v1627
      %v1663 = vmax.f32 %v1644, %v1646
      %v1664 = vmax.f32 %v1645, %v1647
      %v1665 = vld [vmem:[#allocation2 + $0xb4] sm:$0xff]
      %v1666 = vld [vmem:[#allocation2 + $0xbc] sm:$0xff]
      %v1667 = vld [vmem:[#allocation2 + $0xc4] sm:$0xff]
      %v1668 = vld [vmem:[#allocation2 + $0xcc] sm:$0xff]
      %v1669 = vld [vmem:[#allocation2 + $0xd4] sm:$0xff]
      %v1670 = vld [vmem:[#allocation2 + $0xdc] sm:$0xff]
      %v1671 = vld [vmem:[#allocation2 + $0xe4] sm:$0xff]
      %v1672 = vld [vmem:[#allocation2 + $0xec] sm:$0xff]
      %v1673 = vld [vmem:[#allocation2 + $0xf4] sm:$0xff]
      %v1674 = vld [vmem:[#allocation2 + $0xfc] sm:$0xff]
      %v1675 = vld [vmem:[#allocation2 + $0x104] sm:$0xff]
      %v1676 = vld [vmem:[#allocation2 + $0x10c] sm:$0xff]
      %v1677 = vld [vmem:[#allocation2 + $0x114] sm:$0xff]
      %v1678 = vld [vmem:[#allocation2 + $0x11c] sm:$0xff]
      %v1679 = vld [vmem:[#allocation2 + $0x124] sm:$0xff]
      %v1680 = vld [vmem:[#allocation2 + $0x12c] sm:$0xff]
      %v1681 = vld [vmem:[#allocation2 + $0x134] sm:$0x3f]
      %v1682 = vmax.f32 %v1648, %v1665
      %v1683 = vmax.f32 %v1649, %v1666
      %v1684 = vmax.f32 %v1650, %v1667
      %v1685 = vmax.f32 %v1651, %v1668
      %v1686 = vmax.f32 %v1652, %v1669
      %v1687 = vmax.f32 %v1653, %v1670
      %v1688 = vmax.f32 %v1654, %v1671
      %v1689 = vmax.f32 %v1655, %v1672
      %v1690 = vmax.f32 %v1656, %v1673
      %v1691 = vmax.f32 %v1657, %v1674
      %v1692 = vmax.f32 %v1658, %v1675
      %v1693 = vmax.f32 %v1659, %v1676
      %v1694 = vmax.f32 %v1660, %v1677
      %v1695 = vmax.f32 %v1661, %v1678
      %v1696 = vmax.f32 %v1662, %v1679
      %v1697 = vmax.f32 %v1663, %v1680
      %v1698 = vmax.f32 %v1664, %v1681
      %v1699 = vld [vmem:[#allocation2 + $0x13] sm:$0xff]
      %v1700 = vld [vmem:[#allocation2 + $0x1b] sm:$0xff]
      %v1701 = vld [vmem:[#allocation2 + $0x23] sm:$0xff]
      %v1702 = vld [vmem:[#allocation2 + $0x2b] sm:$0xff]
      %v1703 = vld [vmem:[#allocation2 + $0x33] sm:$0xff]
      %v1704 = vld [vmem:[#allocation2 + $0x3b] sm:$0xff]
      %v1705 = vld [vmem:[#allocation2 + $0x43] sm:$0xff]
      %v1706 = vld [vmem:[#allocation2 + $0x4b] sm:$0xff]
      %v1707 = vld [vmem:[#allocation2 + $0x53] sm:$0xff]
      %v1708 = vld [vmem:[#allocation2 + $0x5b] sm:$0xff]
      %v1709 = vld [vmem:[#allocation2 + $0x63] sm:$0xff]
      %v1710 = vld [vmem:[#allocation2 + $0x6b] sm:$0xff]
      %v1711 = vld [vmem:[#allocation2 + $0x73] sm:$0xff]
      %v1712 = vld [vmem:[#allocation2 + $0x7b] sm:$0xff]
      %v1713 = vld [vmem:[#allocation2 + $0x83] sm:$0xff]
      %v1714 = vld [vmem:[#allocation2 + $0x8b] sm:$0xff]
      %v1715 = vld [vmem:[#allocation2 + $0x93] sm:$0x3f]
      %v1716 = vmax.f32 %v1682, %v1699
      %v1717 = vmax.f32 %v1683, %v1700
      %v1718 = vmax.f32 %v1684, %v1701
      %v1719 = vmax.f32 %v1685, %v1702
      %v1720 = vmax.f32 %v1686, %v1703
      %v1721 = vmax.f32 %v1687, %v1704
      %v1722 = vmax.f32 %v1688, %v1705
      %v1723 = vmax.f32 %v1689, %v1706
      %v1724 = vmax.f32 %v1690, %v1707
      %v1725 = vmax.f32 %v1691, %v1708
      %v1726 = vmax.f32 %v1692, %v1709
      %v1727 = vmax.f32 %v1693, %v1710
      %v1728 = vmax.f32 %v1694, %v1711
      %v1729 = vmax.f32 %v1695, %v1712
      %v1730 = vmax.f32 %v1696, %v1713
      %v1731 = vmax.f32 %v1697, %v1714
      %v1732 = vmax.f32 %v1698, %v1715
      %v1733 = vld [vmem:[%s16] sm:$0xff]
      %v1734 = vld [vmem:[%s16 + $0x8] sm:$0xff]
      %v1735 = vld [vmem:[%s16 + $0x10] sm:$0xff]
      %v1736 = vld [vmem:[%s16 + $0x18] sm:$0xff]
      %v1737 = vld [vmem:[%s16 + $0x20] sm:$0xff]
      %v1738 = vld [vmem:[%s16 + $0x28] sm:$0xff]
      %v1739 = vld [vmem:[%s16 + $0x30] sm:$0xff]
      %v1740 = vld [vmem:[%s16 + $0x38] sm:$0xff]
      %v1741 = vld [vmem:[%s16 + $0x40] sm:$0xff]
      %v1742 = vld [vmem:[%s16 + $0x48] sm:$0xff]
      %v1743 = vld [vmem:[%s16 + $0x50] sm:$0xff]
      %v1744 = vld [vmem:[%s16 + $0x58] sm:$0xff]
      %v1745 = vld [vmem:[%s16 + $0x60] sm:$0xff]
      %v1746 = vld [vmem:[%s16 + $0x68] sm:$0xff]
      %v1747 = vld [vmem:[%s16 + $0x70] sm:$0xff]
      %v1748 = vld [vmem:[%s16 + $0x78] sm:$0xff]
      %v1749 = vld [vmem:[%s16 + $0x80] sm:$0xff]
      %v1750 = vld [vmem:[%s16 + $0x88] sm:$0xff]
      %v1751 = vld [vmem:[%s16 + $0x90] sm:$0xff]
      %v1752 = vld [vmem:[%s16 + $0x98] sm:$0xff]
      %v1753 = vld [vmem:[%s16 + $0xa0] sm:$0xff]
      %v1754 = vld [vmem:[%s16 + $0xa8] sm:$0xff]
      %v1755 = vld [vmem:[%s16 + $0xb0] sm:$0xff]
      %v1756 = vld [vmem:[%s16 + $0xb8] sm:$0xff]
      %v1757 = vld [vmem:[%s16 + $0xc0] sm:$0xf]
      %v1758 = vld [vmem:[%s16 + $0xc8] sm:$0xf]
      %vm1759 = vcmask 48128
      %v1761 = vsel %vm1759, %v1734, 0
      %v1764 = vsel %vm1759, %v1736, 0
      %v1767 = vsel %vm1759, %v1738, 0
      %v1770 = vsel %vm1759, %v1740, 0
      %v1773 = vsel %vm1759, %v1742, 0
      %v1776 = vsel %vm1759, %v1744, 0
      %v1779 = vsel %vm1759, %v1746, 0
      %v1782 = vsel %vm1759, %v1748, 0
      %v1785 = vsel %vm1759, %v1750, 0
      %v1788 = vsel %vm1759, %v1752, 0
      %v1791 = vsel %vm1759, %v1754, 0
      %v1794 = vsel %vm1759, %v1756, 0
      %v1797 = vsel %vm1759, %v1758, 0
      %vm1799 = vcmask 1045504
      %v1801 = vsel %vm1799, %v1732, 0
      %1803 = vmatpush.msra.mxu0 %v1731
      %1804 = vmatpush.msra.mxu0 %v1730
      %1805 = vmatpush.msra.mxu0 %v1729
      %1806 = vmatpush.msra.mxu0 %v1728
      %1807 = vmatpush.msra.mxu0 %v1727
      %1808 = vmatpush.msra.mxu0 %v1726
      %1809 = vmatpush.msra.mxu0 %v1725
      %1810 = vmatpush.msra.mxu0 %v1724
      %1811 = vmatpush.msra.mxu0 %v1723
      %1812 = vmatpush.msra.mxu0 %v1722
      %1813 = vmatpush.msra.mxu0 %v1721
      %1814 = vmatpush.msra.mxu0 %v1720
      %1815 = vmatpush.msra.mxu0 %v1719
      %1816 = vmatpush.msra.mxu0 %v1718
      %1817 = vmatpush.msra.mxu0 %v1717
      %1818 = vmatpush.msra.mxu0 %v1716
      %1819 = vmatmul.f32.gmra.mxu0 %v1733
      %v1820 = vpop.f32.mrf.mxu0
      %v1821 = vadd.f32 0.0, %v1820
      %1822 = vmatmul.f32.gmra.mxu0 %v1735
      %v1823 = vpop.f32.mrf.mxu0
      %v1824 = vadd.f32 0.0, %v1823
      %1825 = vmatmul.f32.gmra.mxu0 %v1737
      %v1826 = vpop.f32.mrf.mxu0
      %v1827 = vadd.f32 0.0, %v1826
      %1828 = vmatmul.f32.gmra.mxu0 %v1739
      %v1829 = vpop.f32.mrf.mxu0
      %v1830 = vadd.f32 0.0, %v1829
      %1831 = vmatmul.f32.gmra.mxu0 %v1741
      %v1832 = vpop.f32.mrf.mxu0
      %v1833 = vadd.f32 0.0, %v1832
      %1834 = vmatmul.f32.gmra.mxu0 %v1743
      %v1835 = vpop.f32.mrf.mxu0
      %v1836 = vadd.f32 0.0, %v1835
      %1837 = vmatmul.f32.gmra.mxu0 %v1745
      %v1838 = vpop.f32.mrf.mxu0
      %v1839 = vadd.f32 0.0, %v1838
      %1840 = vmatmul.f32.gmra.mxu0 %v1747
      %v1841 = vpop.f32.mrf.mxu0
      %v1842 = vadd.f32 0.0, %v1841
      %1843 = vmatmul.f32.gmra.mxu0 %v1749
      %v1844 = vpop.f32.mrf.mxu0
      %v1845 = vadd.f32 0.0, %v1844
      %1846 = vmatmul.f32.gmra.mxu0 %v1751
      %v1847 = vpop.f32.mrf.mxu0
      %v1848 = vadd.f32 0.0, %v1847
      %1849 = vmatmul.f32.gmra.mxu0 %v1753
      %v1850 = vpop.f32.mrf.mxu0
      %v1851 = vadd.f32 0.0, %v1850
      %1852 = vmatmul.f32.gmra.mxu0 %v1755
      %v1853 = vpop.f32.mrf.mxu0
      %v1854 = vadd.f32 0.0, %v1853
      %1855 = vmatmul.f32.gmra.mxu0 %v1757
      %v1856 = vpop.f32.mrf.mxu0
      %v1857 = vadd.f32 0.0, %v1856
      %1858 = vdwg.mxu0
      %1859 = vmatpush.msra.mxu0 0.0
      %1860 = vmatpush.msra.mxu0 0.0
      %1861 = vmatpush.msra.mxu0 0.0
      %1862 = vmatpush.msra.mxu0 0.0
      %1863 = vmatpush.msra.mxu0 0.0
      %1864 = vmatpush.msra.mxu0 0.0
      %1865 = vmatpush.msra.mxu0 0.0
      %1866 = vmatpush.msra.mxu0 0.0
      %1867 = vmatpush.msra.mxu0 0.0
      %1868 = vmatpush.msra.mxu0 0.0
      %1869 = vmatpush.msra.mxu0 0.0
      %1870 = vmatpush.msra.mxu0 0.0
      %1871 = vmatpush.msra.mxu0 0.0
      %1872 = vmatpush.msra.mxu0 0.0
      %1873 = vmatpush.msra.mxu0 0.0
      %1874 = vmatpush.msra.mxu0 %v1801
      %1875 = vmatmul.f32.gmra.mxu0 %v1761
      %v1876 = vpop.f32.mrf.mxu0
      %v1877 = vadd.f32 %v1821, %v1876
      %1878 = vmatmul.f32.gmra.mxu0 %v1764
      %v1879 = vpop.f32.mrf.mxu0
      %v1880 = vadd.f32 %v1824, %v1879
      %1881 = vmatmul.f32.gmra.mxu0 %v1767
      %v1882 = vpop.f32.mrf.mxu0
      %v1883 = vadd.f32 %v1827, %v1882
      %1884 = vmatmul.f32.gmra.mxu0 %v1770
      %v1885 = vpop.f32.mrf.mxu0
      %v1886 = vadd.f32 %v1830, %v1885
      %1887 = vmatmul.f32.gmra.mxu0 %v1773
      %v1888 = vpop.f32.mrf.mxu0
      %v1889 = vadd.f32 %v1833, %v1888
      %1890 = vmatmul.f32.gmra.mxu0 %v1776
      %v1891 = vpop.f32.mrf.mxu0
      %v1892 = vadd.f32 %v1836, %v1891
      %1893 = vmatmul.f32.gmra.mxu0 %v1779
      %v1894 = vpop.f32.mrf.mxu0
      %v1895 = vadd.f32 %v1839, %v1894
      %1896 = vmatmul.f32.gmra.mxu0 %v1782
      %v1897 = vpop.f32.mrf.mxu0
      %v1898 = vadd.f32 %v1842, %v1897
      %1899 = vmatmul.f32.gmra.mxu0 %v1785
      %v1900 = vpop.f32.mrf.mxu0
      %v1901 = vadd.f32 %v1845, %v1900
      %1902 = vmatmul.f32.gmra.mxu0 %v1788
      %v1903 = vpop.f32.mrf.mxu0
      %v1904 = vadd.f32 %v1848, %v1903
      %1905 = vmatmul.f32.gmra.mxu0 %v1791
      %v1906 = vpop.f32.mrf.mxu0
      %v1907 = vadd.f32 %v1851, %v1906
      %1908 = vmatmul.f32.gmra.mxu0 %v1794
      %v1909 = vpop.f32.mrf.mxu0
      %v1910 = vadd.f32 %v1854, %v1909
      %1911 = vmatmul.f32.gmra.mxu0 %v1797
      %v1912 = vpop.f32.mrf.mxu0
      %v1913 = vadd.f32 %v1857, %v1912
      %1914 = vdwg.mxu0
      %1915 = vst.msk [vmem:[#allocation3] sm:$0xff] %vm1431, %v1877
      %1916 = vst.msk [vmem:[#allocation3 + $0x8] sm:$0xff] %vm1431, %v1880
      %1917 = vst.msk [vmem:[#allocation3 + $0x10] sm:$0xff] %vm1431, %v1883
      %1918 = vst.msk [vmem:[#allocation3 + $0x18] sm:$0xff] %vm1431, %v1886
      %1919 = vst.msk [vmem:[#allocation3 + $0x20] sm:$0xff] %vm1431, %v1889
      %1920 = vst.msk [vmem:[#allocation3 + $0x28] sm:$0xff] %vm1431, %v1892
      %1921 = vst.msk [vmem:[#allocation3 + $0x30] sm:$0xff] %vm1431, %v1895
      %1922 = vst.msk [vmem:[#allocation3 + $0x38] sm:$0xff] %vm1431, %v1898
      %1923 = vst.msk [vmem:[#allocation3 + $0x40] sm:$0xff] %vm1431, %v1901
      %1924 = vst.msk [vmem:[#allocation3 + $0x48] sm:$0xff] %vm1431, %v1904
      %1925 = vst.msk [vmem:[#allocation3 + $0x50] sm:$0xff] %vm1431, %v1907
      %1926 = vst.msk [vmem:[#allocation3 + $0x58] sm:$0xff] %vm1431, %v1910
      %1927 = vst.msk [vmem:[#allocation3 + $0x60] sm:$0xf] %vm1472, %v1913
      %v1928 = vld [vmem:[#allocation3] sm:$0xff]
      %v1929 = vld [vmem:[#allocation3 + $0x8] sm:$0xff]
      %v1930 = vld [vmem:[#allocation3 + $0x10] sm:$0xff]
      %v1931 = vld [vmem:[#allocation3 + $0x18] sm:$0xff]
      %v1932 = vld [vmem:[#allocation3 + $0x20] sm:$0xff]
      %v1933 = vld [vmem:[#allocation3 + $0x28] sm:$0xff]
      %v1934 = vld [vmem:[#allocation3 + $0x30] sm:$0xff]
      %v1935 = vld [vmem:[#allocation3 + $0x38] sm:$0xff]
      %v1936 = vld [vmem:[#allocation3 + $0x40] sm:$0xff]
      %v1937 = vld [vmem:[#allocation3 + $0x48] sm:$0x3f]
      %v1938 = vld [vmem:[%s3] sm:$0xff]
      %v1939 = vld [vmem:[%s3 + $0x8] sm:$0xff]
      %v1940 = vld [vmem:[%s3 + $0x10] sm:$0xff]
      %v1941 = vld [vmem:[%s3 + $0x18] sm:$0xff]
      %v1942 = vld [vmem:[%s3 + $0x20] sm:$0xff]
      %v1943 = vld [vmem:[%s3 + $0x28] sm:$0xff]
      %v1944 = vld [vmem:[%s3 + $0x30] sm:$0xff]
      %v1945 = vld [vmem:[%s3 + $0x38] sm:$0xff]
      %v1946 = vld [vmem:[#allocation3 + $0x1] sm:$0xff]
      %v1947 = vld [vmem:[#allocation3 + $0x9] sm:$0xff]
      %v1948 = vld [vmem:[#allocation3 + $0x11] sm:$0xff]
      %v1949 = vld [vmem:[#allocation3 + $0x19] sm:$0xff]
      %v1950 = vld [vmem:[#allocation3 + $0x21] sm:$0xff]
      %v1951 = vld [vmem:[#allocation3 + $0x29] sm:$0xff]
      %v1952 = vld [vmem:[#allocation3 + $0x31] sm:$0xff]
      %v1953 = vld [vmem:[#allocation3 + $0x39] sm:$0xff]
      %v1954 = vld [vmem:[#allocation3 + $0x41] sm:$0xff]
      %v1955 = vld [vmem:[#allocation3 + $0x49] sm:$0x3f]
      %s1956 = scalar_lea.vmem %s3, 64
      %v1957 = vld [vmem:[%s1956] sm:$0xff]
      %v1958 = vld [vmem:[%s1956 + $0x8] sm:$0xff]
      %v1959 = vld [vmem:[%s1956 + $0x10] sm:$0xff]
      %v1960 = vld [vmem:[%s1956 + $0x18] sm:$0xff]
      %v1961 = vld [vmem:[%s1956 + $0x20] sm:$0xff]
      %v1962 = vld [vmem:[%s1956 + $0x28] sm:$0xff]
      %v1963 = vld [vmem:[%s1956 + $0x30] sm:$0xff]
      %v1964 = vld [vmem:[%s1956 + $0x38] sm:$0xff]
      %v1966 = vsel %vm1431, %v1946, 0
      %v1969 = vsel %vm1431, %v1947, 0
      %v1972 = vsel %vm1431, %v1948, 0
      %v1975 = vsel %vm1431, %v1949, 0
      %v1978 = vsel %vm1431, %v1950, 0
      %v1981 = vsel %vm1431, %v1951, 0
      %v1984 = vsel %vm1431, %v1952, 0
      %v1987 = vsel %vm1431, %v1953, 0
      %v1990 = vsel %vm1431, %v1954, 0
      %v1993 = vsel %vm1431, %v1955, 0
      %1995 = vmatpush.msra.mxu0 0.0
      %1996 = vmatpush.msra.mxu0 0.0
      %1997 = vmatpush.msra.mxu0 0.0
      %1998 = vmatpush.msra.mxu0 0.0
      %1999 = vmatpush.msra.mxu0 0.0
      %2000 = vmatpush.msra.mxu0 0.0
      %2001 = vmatpush.msra.mxu0 0.0
      %2002 = vmatpush.msra.mxu0 0.0
      %2003 = vmatpush.msra.mxu0 %v1964
      %2004 = vmatpush.msra.mxu0 %v1963
      %2005 = vmatpush.msra.mxu0 %v1962
      %2006 = vmatpush.msra.mxu0 %v1961
      %2007 = vmatpush.msra.mxu0 %v1960
      %2008 = vmatpush.msra.mxu0 %v1959
      %2009 = vmatpush.msra.mxu0 %v1958
      %2010 = vmatpush.msra.mxu0 %v1957
      %2011 = vmatmul.f32.gmra.mxu0 %v1966
      %v2012 = vpop.f32.mrf.mxu0
      %v2013 = vadd.f32 0.0, %v2012
      %2014 = vmatmul.f32.gmra.mxu0 %v1969
      %v2015 = vpop.f32.mrf.mxu0
      %v2016 = vadd.f32 0.0, %v2015
      %2017 = vmatmul.f32.gmra.mxu0 %v1972
      %v2018 = vpop.f32.mrf.mxu0
      %v2019 = vadd.f32 0.0, %v2018
      %2020 = vmatmul.f32.gmra.mxu0 %v1975
      %v2021 = vpop.f32.mrf.mxu0
      %v2022 = vadd.f32 0.0, %v2021
      %2023 = vmatmul.f32.gmra.mxu0 %v1978
      %v2024 = vpop.f32.mrf.mxu0
      %v2025 = vadd.f32 0.0, %v2024
      %2026 = vmatmul.f32.gmra.mxu0 %v1981
      %v2027 = vpop.f32.mrf.mxu0
      %v2028 = vadd.f32 0.0, %v2027
      %2029 = vmatmul.f32.gmra.mxu0 %v1984
      %v2030 = vpop.f32.mrf.mxu0
      %v2031 = vadd.f32 0.0, %v2030
      %2032 = vmatmul.f32.gmra.mxu0 %v1987
      %v2033 = vpop.f32.mrf.mxu0
      %v2034 = vadd.f32 0.0, %v2033
      %2035 = vmatmul.f32.gmra.mxu0 %v1990
      %v2036 = vpop.f32.mrf.mxu0
      %v2037 = vadd.f32 0.0, %v2036
      %2038 = vmatmul.f32.gmra.mxu0 %v1993
      %v2039 = vpop.f32.mrf.mxu0
      %v2040 = vadd.f32 0.0, %v2039
      %2041 = vdwg.mxu0
      %v2043 = vsel %vm1431, %v1928, 0
      %v2046 = vsel %vm1431, %v1929, 0
      %v2049 = vsel %vm1431, %v1930, 0
      %v2052 = vsel %vm1431, %v1931, 0
      %v2055 = vsel %vm1431, %v1932, 0
      %v2058 = vsel %vm1431, %v1933, 0
      %v2061 = vsel %vm1431, %v1934, 0
      %v2064 = vsel %vm1431, %v1935, 0
      %v2067 = vsel %vm1431, %v1936, 0
      %v2070 = vsel %vm1431, %v1937, 0
      %2072 = vmatpush.msra.mxu0 0.0
      %2073 = vmatpush.msra.mxu0 0.0
      %2074 = vmatpush.msra.mxu0 0.0
      %2075 = vmatpush.msra.mxu0 0.0
      %2076 = vmatpush.msra.mxu0 0.0
      %2077 = vmatpush.msra.mxu0 0.0
      %2078 = vmatpush.msra.mxu0 0.0
      %2079 = vmatpush.msra.mxu0 0.0
      %2080 = vmatpush.msra.mxu0 %v1945
      %2081 = vmatpush.msra.mxu0 %v1944
      %2082 = vmatpush.msra.mxu0 %v1943
      %2083 = vmatpush.msra.mxu0 %v1942
      %2084 = vmatpush.msra.mxu0 %v1941
      %2085 = vmatpush.msra.mxu0 %v1940
      %2086 = vmatpush.msra.mxu0 %v1939
      %2087 = vmatpush.msra.mxu0 %v1938
      %2088 = vmatmul.f32.gmra.mxu0 %v2043
      %v2089 = vpop.f32.mrf.mxu0
      %v2090 = vadd.f32 %v2013, %v2089
      %2091 = vmatmul.f32.gmra.mxu0 %v2046
      %v2092 = vpop.f32.mrf.mxu0
      %v2093 = vadd.f32 %v2016, %v2092
      %2094 = vmatmul.f32.gmra.mxu0 %v2049
      %v2095 = vpop.f32.mrf.mxu0
      %v2096 = vadd.f32 %v2019, %v2095
      %2097 = vmatmul.f32.gmra.mxu0 %v2052
      %v2098 = vpop.f32.mrf.mxu0
      %v2099 = vadd.f32 %v2022, %v2098
      %2100 = vmatmul.f32.gmra.mxu0 %v2055
      %v2101 = vpop.f32.mrf.mxu0
      %v2102 = vadd.f32 %v2025, %v2101
      %2103 = vmatmul.f32.gmra.mxu0 %v2058
      %v2104 = vpop.f32.mrf.mxu0
      %v2105 = vadd.f32 %v2028, %v2104
      %2106 = vmatmul.f32.gmra.mxu0 %v2061
      %v2107 = vpop.f32.mrf.mxu0
      %v2108 = vadd.f32 %v2031, %v2107
      %2109 = vmatmul.f32.gmra.mxu0 %v2064
      %v2110 = vpop.f32.mrf.mxu0
      %v2111 = vadd.f32 %v2034, %v2110
      %2112 = vmatmul.f32.gmra.mxu0 %v2067
      %v2113 = vpop.f32.mrf.mxu0
      %v2114 = vadd.f32 %v2037, %v2113
      %2115 = vmatmul.f32.gmra.mxu0 %v2070
      %v2116 = vpop.f32.mrf.mxu0
      %v2117 = vadd.f32 %v2040, %v2116
      %2118 = vdwg.mxu0
      %v2119 = vld [vmem:[#allocation3 + $0x2] sm:$0xff]
      %v2120 = vld [vmem:[#allocation3 + $0xa] sm:$0xff]
      %v2121 = vld [vmem:[#allocation3 + $0x12] sm:$0xff]
      %v2122 = vld [vmem:[#allocation3 + $0x1a] sm:$0xff]
      %v2123 = vld [vmem:[#allocation3 + $0x22] sm:$0xff]
      %v2124 = vld [vmem:[#allocation3 + $0x2a] sm:$0xff]
      %v2125 = vld [vmem:[#allocation3 + $0x32] sm:$0xff]
      %v2126 = vld [vmem:[#allocation3 + $0x3a] sm:$0xff]
      %v2127 = vld [vmem:[#allocation3 + $0x42] sm:$0xff]
      %v2128 = vld [vmem:[#allocation3 + $0x4a] sm:$0x3f]
      %s2129 = scalar_lea.vmem %s3, 128
      %v2130 = vld [vmem:[%s2129] sm:$0xff]
      %v2131 = vld [vmem:[%s2129 + $0x8] sm:$0xff]
      %v2132 = vld [vmem:[%s2129 + $0x10] sm:$0xff]
      %v2133 = vld [vmem:[%s2129 + $0x18] sm:$0xff]
      %v2134 = vld [vmem:[%s2129 + $0x20] sm:$0xff]
      %v2135 = vld [vmem:[%s2129 + $0x28] sm:$0xff]
      %v2136 = vld [vmem:[%s2129 + $0x30] sm:$0xff]
      %v2137 = vld [vmem:[%s2129 + $0x38] sm:$0xff]
      %v2139 = vsel %vm1431, %v2119, 0
      %v2142 = vsel %vm1431, %v2120, 0
      %v2145 = vsel %vm1431, %v2121, 0
      %v2148 = vsel %vm1431, %v2122, 0
      %v2151 = vsel %vm1431, %v2123, 0
      %v2154 = vsel %vm1431, %v2124, 0
      %v2157 = vsel %vm1431, %v2125, 0
      %v2160 = vsel %vm1431, %v2126, 0
      %v2163 = vsel %vm1431, %v2127, 0
      %v2166 = vsel %vm1431, %v2128, 0
      %2168 = vmatpush.msra.mxu0 0.0
      %2169 = vmatpush.msra.mxu0 0.0
      %2170 = vmatpush.msra.mxu0 0.0
      %2171 = vmatpush.msra.mxu0 0.0
      %2172 = vmatpush.msra.mxu0 0.0
      %2173 = vmatpush.msra.mxu0 0.0
      %2174 = vmatpush.msra.mxu0 0.0
      %2175 = vmatpush.msra.mxu0 0.0
      %2176 = vmatpush.msra.mxu0 %v2137
      %2177 = vmatpush.msra.mxu0 %v2136
      %2178 = vmatpush.msra.mxu0 %v2135
      %2179 = vmatpush.msra.mxu0 %v2134
      %2180 = vmatpush.msra.mxu0 %v2133
      %2181 = vmatpush.msra.mxu0 %v2132
      %2182 = vmatpush.msra.mxu0 %v2131
      %2183 = vmatpush.msra.mxu0 %v2130
      %2184 = vmatmul.f32.gmra.mxu0 %v2139
      %v2185 = vpop.f32.mrf.mxu0
      %v2186 = vadd.f32 0.0, %v2185
      %2187 = vmatmul.f32.gmra.mxu0 %v2142
      %v2188 = vpop.f32.mrf.mxu0
      %v2189 = vadd.f32 0.0, %v2188
      %2190 = vmatmul.f32.gmra.mxu0 %v2145
      %v2191 = vpop.f32.mrf.mxu0
      %v2192 = vadd.f32 0.0, %v2191
      %2193 = vmatmul.f32.gmra.mxu0 %v2148
      %v2194 = vpop.f32.mrf.mxu0
      %v2195 = vadd.f32 0.0, %v2194
      %2196 = vmatmul.f32.gmra.mxu0 %v2151
      %v2197 = vpop.f32.mrf.mxu0
      %v2198 = vadd.f32 0.0, %v2197
      %2199 = vmatmul.f32.gmra.mxu0 %v2154
      %v2200 = vpop.f32.mrf.mxu0
      %v2201 = vadd.f32 0.0, %v2200
      %2202 = vmatmul.f32.gmra.mxu0 %v2157
      %v2203 = vpop.f32.mrf.mxu0
      %v2204 = vadd.f32 0.0, %v2203
      %2205 = vmatmul.f32.gmra.mxu0 %v2160
      %v2206 = vpop.f32.mrf.mxu0
      %v2207 = vadd.f32 0.0, %v2206
      %2208 = vmatmul.f32.gmra.mxu0 %v2163
      %v2209 = vpop.f32.mrf.mxu0
      %v2210 = vadd.f32 0.0, %v2209
      %2211 = vmatmul.f32.gmra.mxu0 %v2166
      %v2212 = vpop.f32.mrf.mxu0
      %v2213 = vadd.f32 0.0, %v2212
      %2214 = vdwg.mxu0
      %v2215 = vadd.f32 %v2090, %v2186
      %v2216 = vadd.f32 %v2093, %v2189
      %v2217 = vadd.f32 %v2096, %v2192
      %v2218 = vadd.f32 %v2099, %v2195
      %v2219 = vadd.f32 %v2102, %v2198
      %v2220 = vadd.f32 %v2105, %v2201
      %v2221 = vadd.f32 %v2108, %v2204
      %v2222 = vadd.f32 %v2111, %v2207
      %v2223 = vadd.f32 %v2114, %v2210
      %v2224 = vadd.f32 %v2117, %v2213
      %v2225 = vld [vmem:[#allocation3 + $0xa] sm:$0xff]
      %v2226 = vld [vmem:[#allocation3 + $0x12] sm:$0xff]
      %v2227 = vld [vmem:[#allocation3 + $0x1a] sm:$0xff]
      %v2228 = vld [vmem:[#allocation3 + $0x22] sm:$0xff]
      %v2229 = vld [vmem:[#allocation3 + $0x2a] sm:$0xff]
      %v2230 = vld [vmem:[#allocation3 + $0x32] sm:$0xff]
      %v2231 = vld [vmem:[#allocation3 + $0x3a] sm:$0xff]
      %v2232 = vld [vmem:[#allocation3 + $0x42] sm:$0xff]
      %v2233 = vld [vmem:[#allocation3 + $0x4a] sm:$0xff]
      %v2234 = vld [vmem:[#allocation3 + $0x52] sm:$0x3f]
      %s2235 = scalar_lea.vmem %s3, 192
      %v2236 = vld [vmem:[%s2235] sm:$0xff]
      %v2237 = vld [vmem:[%s2235 + $0x8] sm:$0xff]
      %v2238 = vld [vmem:[%s2235 + $0x10] sm:$0xff]
      %v2239 = vld [vmem:[%s2235 + $0x18] sm:$0xff]
      %v2240 = vld [vmem:[%s2235 + $0x20] sm:$0xff]
      %v2241 = vld [vmem:[%s2235 + $0x28] sm:$0xff]
      %v2242 = vld [vmem:[%s2235 + $0x30] sm:$0xff]
      %v2243 = vld [vmem:[%s2235 + $0x38] sm:$0xff]
      %v2245 = vsel %vm1431, %v2225, 0
      %v2248 = vsel %vm1431, %v2226, 0
      %v2251 = vsel %vm1431, %v2227, 0
      %v2254 = vsel %vm1431, %v2228, 0
      %v2257 = vsel %vm1431, %v2229, 0
      %v2260 = vsel %vm1431, %v2230, 0
      %v2263 = vsel %vm1431, %v2231, 0
      %v2266 = vsel %vm1431, %v2232, 0
      %v2269 = vsel %vm1431, %v2233, 0
      %v2272 = vsel %vm1431, %v2234, 0
      %2274 = vmatpush.msra.mxu0 0.0
      %2275 = vmatpush.msra.mxu0 0.0
      %2276 = vmatpush.msra.mxu0 0.0
      %2277 = vmatpush.msra.mxu0 0.0
      %2278 = vmatpush.msra.mxu0 0.0
      %2279 = vmatpush.msra.mxu0 0.0
      %2280 = vmatpush.msra.mxu0 0.0
      %2281 = vmatpush.msra.mxu0 0.0
      %2282 = vmatpush.msra.mxu0 %v2243
      %2283 = vmatpush.msra.mxu0 %v2242
      %2284 = vmatpush.msra.mxu0 %v2241
      %2285 = vmatpush.msra.mxu0 %v2240
      %2286 = vmatpush.msra.mxu0 %v2239
      %2287 = vmatpush.msra.mxu0 %v2238
      %2288 = vmatpush.msra.mxu0 %v2237
      %2289 = vmatpush.msra.mxu0 %v2236
      %2290 = vmatmul.f32.gmra.mxu0 %v2245
      %v2291 = vpop.f32.mrf.mxu0
      %v2292 = vadd.f32 0.0, %v2291
      %2293 = vmatmul.f32.gmra.mxu0 %v2248
      %v2294 = vpop.f32.mrf.mxu0
      %v2295 = vadd.f32 0.0, %v2294
      %2296 = vmatmul.f32.gmra.mxu0 %v2251
      %v2297 = vpop.f32.mrf.mxu0
      %v2298 = vadd.f32 0.0, %v2297
      %2299 = vmatmul.f32.gmra.mxu0 %v2254
      %v2300 = vpop.f32.mrf.mxu0
      %v2301 = vadd.f32 0.0, %v2300
      %2302 = vmatmul.f32.gmra.mxu0 %v2257
      %v2303 = vpop.f32.mrf.mxu0
      %v2304 = vadd.f32 0.0, %v2303
      %2305 = vmatmul.f32.gmra.mxu0 %v2260
      %v2306 = vpop.f32.mrf.mxu0
      %v2307 = vadd.f32 0.0, %v2306
      %2308 = vmatmul.f32.gmra.mxu0 %v2263
      %v2309 = vpop.f32.mrf.mxu0
      %v2310 = vadd.f32 0.0, %v2309
      %2311 = vmatmul.f32.gmra.mxu0 %v2266
      %v2312 = vpop.f32.mrf.mxu0
      %v2313 = vadd.f32 0.0, %v2312
      %2314 = vmatmul.f32.gmra.mxu0 %v2269
      %v2315 = vpop.f32.mrf.mxu0
      %v2316 = vadd.f32 0.0, %v2315
      %2317 = vmatmul.f32.gmra.mxu0 %v2272
      %v2318 = vpop.f32.mrf.mxu0
      %v2319 = vadd.f32 0.0, %v2318
      %2320 = vdwg.mxu0
      %v2321 = vadd.f32 %v2215, %v2292
      %v2322 = vadd.f32 %v2216, %v2295
      %v2323 = vadd.f32 %v2217, %v2298
      %v2324 = vadd.f32 %v2218, %v2301
      %v2325 = vadd.f32 %v2219, %v2304
      %v2326 = vadd.f32 %v2220, %v2307
      %v2327 = vadd.f32 %v2221, %v2310
      %v2328 = vadd.f32 %v2222, %v2313
      %v2329 = vadd.f32 %v2223, %v2316
      %v2330 = vadd.f32 %v2224, %v2319
      %v2331 = vld [vmem:[#allocation3 + $0xb] sm:$0xff]
      %v2332 = vld [vmem:[#allocation3 + $0x13] sm:$0xff]
      %v2333 = vld [vmem:[#allocation3 + $0x1b] sm:$0xff]
      %v2334 = vld [vmem:[#allocation3 + $0x23] sm:$0xff]
      %v2335 = vld [vmem:[#allocation3 + $0x2b] sm:$0xff]
      %v2336 = vld [vmem:[#allocation3 + $0x33] sm:$0xff]
      %v2337 = vld [vmem:[#allocation3 + $0x3b] sm:$0xff]
      %v2338 = vld [vmem:[#allocation3 + $0x43] sm:$0xff]
      %v2339 = vld [vmem:[#allocation3 + $0x4b] sm:$0xff]
      %v2340 = vld [vmem:[#allocation3 + $0x53] sm:$0x3f]
      %s2341 = scalar_lea.vmem %s3, 256
      %v2342 = vld [vmem:[%s2341] sm:$0xff]
      %v2343 = vld [vmem:[%s2341 + $0x8] sm:$0xff]
      %v2344 = vld [vmem:[%s2341 + $0x10] sm:$0xff]
      %v2345 = vld [vmem:[%s2341 + $0x18] sm:$0xff]
      %v2346 = vld [vmem:[%s2341 + $0x20] sm:$0xff]
      %v2347 = vld [vmem:[%s2341 + $0x28] sm:$0xff]
      %v2348 = vld [vmem:[%s2341 + $0x30] sm:$0xff]
      %v2349 = vld [vmem:[%s2341 + $0x38] sm:$0xff]
      %v2351 = vsel %vm1431, %v2331, 0
      %v2354 = vsel %vm1431, %v2332, 0
      %v2357 = vsel %vm1431, %v2333, 0
      %v2360 = vsel %vm1431, %v2334, 0
      %v2363 = vsel %vm1431, %v2335, 0
      %v2366 = vsel %vm1431, %v2336, 0
      %v2369 = vsel %vm1431, %v2337, 0
      %v2372 = vsel %vm1431, %v2338, 0
      %v2375 = vsel %vm1431, %v2339, 0
      %v2378 = vsel %vm1431, %v2340, 0
      %2380 = vmatpush.msra.mxu0 0.0
      %2381 = vmatpush.msra.mxu0 0.0
      %2382 = vmatpush.msra.mxu0 0.0
      %2383 = vmatpush.msra.mxu0 0.0
      %2384 = vmatpush.msra.mxu0 0.0
      %2385 = vmatpush.msra.mxu0 0.0
      %2386 = vmatpush.msra.mxu0 0.0
      %2387 = vmatpush.msra.mxu0 0.0
      %2388 = vmatpush.msra.mxu0 %v2349
      %2389 = vmatpush.msra.mxu0 %v2348
      %2390 = vmatpush.msra.mxu0 %v2347
      %2391 = vmatpush.msra.mxu0 %v2346
      %2392 = vmatpush.msra.mxu0 %v2345
      %2393 = vmatpush.msra.mxu0 %v2344
      %2394 = vmatpush.msra.mxu0 %v2343
      %2395 = vmatpush.msra.mxu0 %v2342
      %2396 = vmatmul.f32.gmra.mxu0 %v2351
      %v2397 = vpop.f32.mrf.mxu0
      %v2398 = vadd.f32 0.0, %v2397
      %2399 = vmatmul.f32.gmra.mxu0 %v2354
      %v2400 = vpop.f32.mrf.mxu0
      %v2401 = vadd.f32 0.0, %v2400
      %2402 = vmatmul.f32.gmra.mxu0 %v2357
      %v2403 = vpop.f32.mrf.mxu0
      %v2404 = vadd.f32 0.0, %v2403
      %2405 = vmatmul.f32.gmra.mxu0 %v2360
      %v2406 = vpop.f32.mrf.mxu0
      %v2407 = vadd.f32 0.0, %v2406
      %2408 = vmatmul.f32.gmra.mxu0 %v2363
      %v2409 = vpop.f32.mrf.mxu0
      %v2410 = vadd.f32 0.0, %v2409
      %2411 = vmatmul.f32.gmra.mxu0 %v2366
      %v2412 = vpop.f32.mrf.mxu0
      %v2413 = vadd.f32 0.0, %v2412
      %2414 = vmatmul.f32.gmra.mxu0 %v2369
      %v2415 = vpop.f32.mrf.mxu0
      %v2416 = vadd.f32 0.0, %v2415
      %2417 = vmatmul.f32.gmra.mxu0 %v2372
      %v2418 = vpop.f32.mrf.mxu0
      %v2419 = vadd.f32 0.0, %v2418
      %2420 = vmatmul.f32.gmra.mxu0 %v2375
      %v2421 = vpop.f32.mrf.mxu0
      %v2422 = vadd.f32 0.0, %v2421
      %2423 = vmatmul.f32.gmra.mxu0 %v2378
      %v2424 = vpop.f32.mrf.mxu0
      %v2425 = vadd.f32 0.0, %v2424
      %2426 = vdwg.mxu0
      %v2427 = vadd.f32 %v2321, %v2398
      %v2428 = vadd.f32 %v2322, %v2401
      %v2429 = vadd.f32 %v2323, %v2404
      %v2430 = vadd.f32 %v2324, %v2407
      %v2431 = vadd.f32 %v2325, %v2410
      %v2432 = vadd.f32 %v2326, %v2413
      %v2433 = vadd.f32 %v2327, %v2416
      %v2434 = vadd.f32 %v2328, %v2419
      %v2435 = vadd.f32 %v2329, %v2422
      %v2436 = vadd.f32 %v2330, %v2425
      %v2437 = vld [vmem:[#allocation3 + $0xc] sm:$0xff]
      %v2438 = vld [vmem:[#allocation3 + $0x14] sm:$0xff]
      %v2439 = vld [vmem:[#allocation3 + $0x1c] sm:$0xff]
      %v2440 = vld [vmem:[#allocation3 + $0x24] sm:$0xff]
      %v2441 = vld [vmem:[#allocation3 + $0x2c] sm:$0xff]
      %v2442 = vld [vmem:[#allocation3 + $0x34] sm:$0xff]
      %v2443 = vld [vmem:[#allocation3 + $0x3c] sm:$0xff]
      %v2444 = vld [vmem:[#allocation3 + $0x44] sm:$0xff]
      %v2445 = vld [vmem:[#allocation3 + $0x4c] sm:$0xff]
      %v2446 = vld [vmem:[#allocation3 + $0x54] sm:$0x3f]
      %s2447 = scalar_lea.vmem %s3, 320
      %v2448 = vld [vmem:[%s2447] sm:$0xff]
      %v2449 = vld [vmem:[%s2447 + $0x8] sm:$0xff]
      %v2450 = vld [vmem:[%s2447 + $0x10] sm:$0xff]
      %v2451 = vld [vmem:[%s2447 + $0x18] sm:$0xff]
      %v2452 = vld [vmem:[%s2447 + $0x20] sm:$0xff]
      %v2453 = vld [vmem:[%s2447 + $0x28] sm:$0xff]
      %v2454 = vld [vmem:[%s2447 + $0x30] sm:$0xff]
      %v2455 = vld [vmem:[%s2447 + $0x38] sm:$0xff]
      %v2457 = vsel %vm1431, %v2437, 0
      %v2460 = vsel %vm1431, %v2438, 0
      %v2463 = vsel %vm1431, %v2439, 0
      %v2466 = vsel %vm1431, %v2440, 0
      %v2469 = vsel %vm1431, %v2441, 0
      %v2472 = vsel %vm1431, %v2442, 0
      %v2475 = vsel %vm1431, %v2443, 0
      %v2478 = vsel %vm1431, %v2444, 0
      %v2481 = vsel %vm1431, %v2445, 0
      %v2484 = vsel %vm1431, %v2446, 0
      %2486 = vmatpush.msra.mxu0 0.0
      %2487 = vmatpush.msra.mxu0 0.0
      %2488 = vmatpush.msra.mxu0 0.0
      %2489 = vmatpush.msra.mxu0 0.0
      %2490 = vmatpush.msra.mxu0 0.0
      %2491 = vmatpush.msra.mxu0 0.0
      %2492 = vmatpush.msra.mxu0 0.0
      %2493 = vmatpush.msra.mxu0 0.0
      %2494 = vmatpush.msra.mxu0 %v2455
      %2495 = vmatpush.msra.mxu0 %v2454
      %2496 = vmatpush.msra.mxu0 %v2453
      %2497 = vmatpush.msra.mxu0 %v2452
      %2498 = vmatpush.msra.mxu0 %v2451
      %2499 = vmatpush.msra.mxu0 %v2450
      %2500 = vmatpush.msra.mxu0 %v2449
      %2501 = vmatpush.msra.mxu0 %v2448
      %2502 = vmatmul.f32.gmra.mxu0 %v2457
      %v2503 = vpop.f32.mrf.mxu0
      %v2504 = vadd.f32 0.0, %v2503
      %2505 = vmatmul.f32.gmra.mxu0 %v2460
      %v2506 = vpop.f32.mrf.mxu0
      %v2507 = vadd.f32 0.0, %v2506
      %2508 = vmatmul.f32.gmra.mxu0 %v2463
      %v2509 = vpop.f32.mrf.mxu0
      %v2510 = vadd.f32 0.0, %v2509
      %2511 = vmatmul.f32.gmra.mxu0 %v2466
      %v2512 = vpop.f32.mrf.mxu0
      %v2513 = vadd.f32 0.0, %v2512
      %2514 = vmatmul.f32.gmra.mxu0 %v2469
      %v2515 = vpop.f32.mrf.mxu0
      %v2516 = vadd.f32 0.0, %v2515
      %2517 = vmatmul.f32.gmra.mxu0 %v2472
      %v2518 = vpop.f32.mrf.mxu0
      %v2519 = vadd.f32 0.0, %v2518
      %2520 = vmatmul.f32.gmra.mxu0 %v2475
      %v2521 = vpop.f32.mrf.mxu0
      %v2522 = vadd.f32 0.0, %v2521
      %2523 = vmatmul.f32.gmra.mxu0 %v2478
      %v2524 = vpop.f32.mrf.mxu0
      %v2525 = vadd.f32 0.0, %v2524
      %2526 = vmatmul.f32.gmra.mxu0 %v2481
      %v2527 = vpop.f32.mrf.mxu0
      %v2528 = vadd.f32 0.0, %v2527
      %2529 = vmatmul.f32.gmra.mxu0 %v2484
      %v2530 = vpop.f32.mrf.mxu0
      %v2531 = vadd.f32 0.0, %v2530
      %2532 = vdwg.mxu0
      %v2533 = vadd.f32 %v2427, %v2504
      %v2534 = vadd.f32 %v2428, %v2507
      %v2535 = vadd.f32 %v2429, %v2510
      %v2536 = vadd.f32 %v2430, %v2513
      %v2537 = vadd.f32 %v2431, %v2516
      %v2538 = vadd.f32 %v2432, %v2519
      %v2539 = vadd.f32 %v2433, %v2522
      %v2540 = vadd.f32 %v2434, %v2525
      %v2541 = vadd.f32 %v2435, %v2528
      %v2542 = vadd.f32 %v2436, %v2531
      %v2543 = vld [vmem:[#allocation3 + $0x14] sm:$0xff]
      %v2544 = vld [vmem:[#allocation3 + $0x1c] sm:$0xff]
      %v2545 = vld [vmem:[#allocation3 + $0x24] sm:$0xff]
      %v2546 = vld [vmem:[#allocation3 + $0x2c] sm:$0xff]
      %v2547 = vld [vmem:[#allocation3 + $0x34] sm:$0xff]
      %v2548 = vld [vmem:[#allocation3 + $0x3c] sm:$0xff]
      %v2549 = vld [vmem:[#allocation3 + $0x44] sm:$0xff]
      %v2550 = vld [vmem:[#allocation3 + $0x4c] sm:$0xff]
      %v2551 = vld [vmem:[#allocation3 + $0x54] sm:$0xff]
      %v2552 = vld [vmem:[#allocation3 + $0x5c] sm:$0x3f]
      %s2553 = scalar_lea.vmem %s3, 384
      %v2554 = vld [vmem:[%s2553] sm:$0xff]
      %v2555 = vld [vmem:[%s2553 + $0x8] sm:$0xff]
      %v2556 = vld [vmem:[%s2553 + $0x10] sm:$0xff]
      %v2557 = vld [vmem:[%s2553 + $0x18] sm:$0xff]
      %v2558 = vld [vmem:[%s2553 + $0x20] sm:$0xff]
      %v2559 = vld [vmem:[%s2553 + $0x28] sm:$0xff]
      %v2560 = vld [vmem:[%s2553 + $0x30] sm:$0xff]
      %v2561 = vld [vmem:[%s2553 + $0x38] sm:$0xff]
      %v2563 = vsel %vm1431, %v2543, 0
      %v2566 = vsel %vm1431, %v2544, 0
      %v2569 = vsel %vm1431, %v2545, 0
      %v2572 = vsel %vm1431, %v2546, 0
      %v2575 = vsel %vm1431, %v2547, 0
      %v2578 = vsel %vm1431, %v2548, 0
      %v2581 = vsel %vm1431, %v2549, 0
      %v2584 = vsel %vm1431, %v2550, 0
      %v2587 = vsel %vm1431, %v2551, 0
      %v2590 = vsel %vm1431, %v2552, 0
      %2592 = vmatpush.msra.mxu0 0.0
      %2593 = vmatpush.msra.mxu0 0.0
      %2594 = vmatpush.msra.mxu0 0.0
      %2595 = vmatpush.msra.mxu0 0.0
      %2596 = vmatpush.msra.mxu0 0.0
      %2597 = vmatpush.msra.mxu0 0.0
      %2598 = vmatpush.msra.mxu0 0.0
      %2599 = vmatpush.msra.mxu0 0.0
      %2600 = vmatpush.msra.mxu0 %v2561
      %2601 = vmatpush.msra.mxu0 %v2560
      %2602 = vmatpush.msra.mxu0 %v2559
      %2603 = vmatpush.msra.mxu0 %v2558
      %2604 = vmatpush.msra.mxu0 %v2557
      %2605 = vmatpush.msra.mxu0 %v2556
      %2606 = vmatpush.msra.mxu0 %v2555
      %2607 = vmatpush.msra.mxu0 %v2554
      %2608 = vmatmul.f32.gmra.mxu0 %v2563
      %v2609 = vpop.f32.mrf.mxu0
      %v2610 = vadd.f32 0.0, %v2609
      %2611 = vmatmul.f32.gmra.mxu0 %v2566
      %v2612 = vpop.f32.mrf.mxu0
      %v2613 = vadd.f32 0.0, %v2612
      %2614 = vmatmul.f32.gmra.mxu0 %v2569
      %v2615 = vpop.f32.mrf.mxu0
      %v2616 = vadd.f32 0.0, %v2615
      %2617 = vmatmul.f32.gmra.mxu0 %v2572
      %v2618 = vpop.f32.mrf.mxu0
      %v2619 = vadd.f32 0.0, %v2618
      %2620 = vmatmul.f32.gmra.mxu0 %v2575
      %v2621 = vpop.f32.mrf.mxu0
      %v2622 = vadd.f32 0.0, %v2621
      %2623 = vmatmul.f32.gmra.mxu0 %v2578
      %v2624 = vpop.f32.mrf.mxu0
      %v2625 = vadd.f32 0.0, %v2624
      %2626 = vmatmul.f32.gmra.mxu0 %v2581
      %v2627 = vpop.f32.mrf.mxu0
      %v2628 = vadd.f32 0.0, %v2627
      %2629 = vmatmul.f32.gmra.mxu0 %v2584
      %v2630 = vpop.f32.mrf.mxu0
      %v2631 = vadd.f32 0.0, %v2630
      %2632 = vmatmul.f32.gmra.mxu0 %v2587
      %v2633 = vpop.f32.mrf.mxu0
      %v2634 = vadd.f32 0.0, %v2633
      %2635 = vmatmul.f32.gmra.mxu0 %v2590
      %v2636 = vpop.f32.mrf.mxu0
      %v2637 = vadd.f32 0.0, %v2636
      %2638 = vdwg.mxu0
      %v2639 = vadd.f32 %v2533, %v2610
      %v2640 = vadd.f32 %v2534, %v2613
      %v2641 = vadd.f32 %v2535, %v2616
      %v2642 = vadd.f32 %v2536, %v2619
      %v2643 = vadd.f32 %v2537, %v2622
      %v2644 = vadd.f32 %v2538, %v2625
      %v2645 = vadd.f32 %v2539, %v2628
      %v2646 = vadd.f32 %v2540, %v2631
      %v2647 = vadd.f32 %v2541, %v2634
      %v2648 = vadd.f32 %v2542, %v2637
      %v2649 = vld [vmem:[#allocation3 + $0x15] sm:$0xff]
      %v2650 = vld [vmem:[#allocation3 + $0x1d] sm:$0xff]
      %v2651 = vld [vmem:[#allocation3 + $0x25] sm:$0xff]
      %v2652 = vld [vmem:[#allocation3 + $0x2d] sm:$0xff]
      %v2653 = vld [vmem:[#allocation3 + $0x35] sm:$0xff]
      %v2654 = vld [vmem:[#allocation3 + $0x3d] sm:$0xff]
      %v2655 = vld [vmem:[#allocation3 + $0x45] sm:$0xff]
      %v2656 = vld [vmem:[#allocation3 + $0x4d] sm:$0xff]
      %v2657 = vld [vmem:[#allocation3 + $0x55] sm:$0xff]
      %v2658 = vld [vmem:[#allocation3 + $0x5d] sm:$0x3f]
      %s2659 = scalar_lea.vmem %s3, 448
      %v2660 = vld [vmem:[%s2659] sm:$0xff]
      %v2661 = vld [vmem:[%s2659 + $0x8] sm:$0xff]
      %v2662 = vld [vmem:[%s2659 + $0x10] sm:$0xff]
      %v2663 = vld [vmem:[%s2659 + $0x18] sm:$0xff]
      %v2664 = vld [vmem:[%s2659 + $0x20] sm:$0xff]
      %v2665 = vld [vmem:[%s2659 + $0x28] sm:$0xff]
      %v2666 = vld [vmem:[%s2659 + $0x30] sm:$0xff]
      %v2667 = vld [vmem:[%s2659 + $0x38] sm:$0xff]
      %v2669 = vsel %vm1431, %v2649, 0
      %v2672 = vsel %vm1431, %v2650, 0
      %v2675 = vsel %vm1431, %v2651, 0
      %v2678 = vsel %vm1431, %v2652, 0
      %v2681 = vsel %vm1431, %v2653, 0
      %v2684 = vsel %vm1431, %v2654, 0
      %v2687 = vsel %vm1431, %v2655, 0
      %v2690 = vsel %vm1431, %v2656, 0
      %v2693 = vsel %vm1431, %v2657, 0
      %v2696 = vsel %vm1431, %v2658, 0
      %2698 = vmatpush.msra.mxu0 0.0
      %2699 = vmatpush.msra.mxu0 0.0
      %2700 = vmatpush.msra.mxu0 0.0
      %2701 = vmatpush.msra.mxu0 0.0
      %2702 = vmatpush.msra.mxu0 0.0
      %2703 = vmatpush.msra.mxu0 0.0
      %2704 = vmatpush.msra.mxu0 0.0
      %2705 = vmatpush.msra.mxu0 0.0
      %2706 = vmatpush.msra.mxu0 %v2667
      %2707 = vmatpush.msra.mxu0 %v2666
      %2708 = vmatpush.msra.mxu0 %v2665
      %2709 = vmatpush.msra.mxu0 %v2664
      %2710 = vmatpush.msra.mxu0 %v2663
      %2711 = vmatpush.msra.mxu0 %v2662
      %2712 = vmatpush.msra.mxu0 %v2661
      %2713 = vmatpush.msra.mxu0 %v2660
      %2714 = vmatmul.f32.gmra.mxu0 %v2669
      %v2715 = vpop.f32.mrf.mxu0
      %v2716 = vadd.f32 0.0, %v2715
      %2717 = vmatmul.f32.gmra.mxu0 %v2672
      %v2718 = vpop.f32.mrf.mxu0
      %v2719 = vadd.f32 0.0, %v2718
      %2720 = vmatmul.f32.gmra.mxu0 %v2675
      %v2721 = vpop.f32.mrf.mxu0
      %v2722 = vadd.f32 0.0, %v2721
      %2723 = vmatmul.f32.gmra.mxu0 %v2678
      %v2724 = vpop.f32.mrf.mxu0
      %v2725 = vadd.f32 0.0, %v2724
      %2726 = vmatmul.f32.gmra.mxu0 %v2681
      %v2727 = vpop.f32.mrf.mxu0
      %v2728 = vadd.f32 0.0, %v2727
      %2729 = vmatmul.f32.gmra.mxu0 %v2684
      %v2730 = vpop.f32.mrf.mxu0
      %v2731 = vadd.f32 0.0, %v2730
      %2732 = vmatmul.f32.gmra.mxu0 %v2687
      %v2733 = vpop.f32.mrf.mxu0
      %v2734 = vadd.f32 0.0, %v2733
      %2735 = vmatmul.f32.gmra.mxu0 %v2690
      %v2736 = vpop.f32.mrf.mxu0
      %v2737 = vadd.f32 0.0, %v2736
      %2738 = vmatmul.f32.gmra.mxu0 %v2693
      %v2739 = vpop.f32.mrf.mxu0
      %v2740 = vadd.f32 0.0, %v2739
      %2741 = vmatmul.f32.gmra.mxu0 %v2696
      %v2742 = vpop.f32.mrf.mxu0
      %v2743 = vadd.f32 0.0, %v2742
      %2744 = vdwg.mxu0
      %v2745 = vadd.f32 %v2639, %v2716
      %v2746 = vadd.f32 %v2640, %v2719
      %v2747 = vadd.f32 %v2641, %v2722
      %v2748 = vadd.f32 %v2642, %v2725
      %v2749 = vadd.f32 %v2643, %v2728
      %v2750 = vadd.f32 %v2644, %v2731
      %v2751 = vadd.f32 %v2645, %v2734
      %v2752 = vadd.f32 %v2646, %v2737
      %v2753 = vadd.f32 %v2647, %v2740
      %v2754 = vadd.f32 %v2648, %v2743
      %v2755 = vld [vmem:[#allocation3 + $0x16] sm:$0xff]
      %v2756 = vld [vmem:[#allocation3 + $0x1e] sm:$0xff]
      %v2757 = vld [vmem:[#allocation3 + $0x26] sm:$0xff]
      %v2758 = vld [vmem:[#allocation3 + $0x2e] sm:$0xff]
      %v2759 = vld [vmem:[#allocation3 + $0x36] sm:$0xff]
      %v2760 = vld [vmem:[#allocation3 + $0x3e] sm:$0xff]
      %v2761 = vld [vmem:[#allocation3 + $0x46] sm:$0xff]
      %v2762 = vld [vmem:[#allocation3 + $0x4e] sm:$0xff]
      %v2763 = vld [vmem:[#allocation3 + $0x56] sm:$0xff]
      %v2764 = vld [vmem:[#allocation3 + $0x5e] sm:$0x3f]
      %s2765 = scalar_lea.vmem %s3, 512
      %v2766 = vld [vmem:[%s2765] sm:$0xff]
      %v2767 = vld [vmem:[%s2765 + $0x8] sm:$0xff]
      %v2768 = vld [vmem:[%s2765 + $0x10] sm:$0xff]
      %v2769 = vld [vmem:[%s2765 + $0x18] sm:$0xff]
      %v2770 = vld [vmem:[%s2765 + $0x20] sm:$0xff]
      %v2771 = vld [vmem:[%s2765 + $0x28] sm:$0xff]
      %v2772 = vld [vmem:[%s2765 + $0x30] sm:$0xff]
      %v2773 = vld [vmem:[%s2765 + $0x38] sm:$0xff]
      %v2775 = vsel %vm1431, %v2755, 0
      %v2778 = vsel %vm1431, %v2756, 0
      %v2781 = vsel %vm1431, %v2757, 0
      %v2784 = vsel %vm1431, %v2758, 0
      %v2787 = vsel %vm1431, %v2759, 0
      %v2790 = vsel %vm1431, %v2760, 0
      %v2793 = vsel %vm1431, %v2761, 0
      %v2796 = vsel %vm1431, %v2762, 0
      %v2799 = vsel %vm1431, %v2763, 0
      %v2802 = vsel %vm1431, %v2764, 0
      %2804 = vmatpush.msra.mxu0 0.0
      %2805 = vmatpush.msra.mxu0 0.0
      %2806 = vmatpush.msra.mxu0 0.0
      %2807 = vmatpush.msra.mxu0 0.0
      %2808 = vmatpush.msra.mxu0 0.0
      %2809 = vmatpush.msra.mxu0 0.0
      %2810 = vmatpush.msra.mxu0 0.0
      %2811 = vmatpush.msra.mxu0 0.0
      %2812 = vmatpush.msra.mxu0 %v2773
      %2813 = vmatpush.msra.mxu0 %v2772
      %2814 = vmatpush.msra.mxu0 %v2771
      %2815 = vmatpush.msra.mxu0 %v2770
      %2816 = vmatpush.msra.mxu0 %v2769
      %2817 = vmatpush.msra.mxu0 %v2768
      %2818 = vmatpush.msra.mxu0 %v2767
      %2819 = vmatpush.msra.mxu0 %v2766
      %2820 = vmatmul.f32.gmra.mxu0 %v2775
      %v2821 = vpop.f32.mrf.mxu0
      %v2822 = vadd.f32 0.0, %v2821
      %2823 = vmatmul.f32.gmra.mxu0 %v2778
      %v2824 = vpop.f32.mrf.mxu0
      %v2825 = vadd.f32 0.0, %v2824
      %2826 = vmatmul.f32.gmra.mxu0 %v2781
      %v2827 = vpop.f32.mrf.mxu0
      %v2828 = vadd.f32 0.0, %v2827
      %2829 = vmatmul.f32.gmra.mxu0 %v2784
      %v2830 = vpop.f32.mrf.mxu0
      %v2831 = vadd.f32 0.0, %v2830
      %2832 = vmatmul.f32.gmra.mxu0 %v2787
      %v2833 = vpop.f32.mrf.mxu0
      %v2834 = vadd.f32 0.0, %v2833
      %2835 = vmatmul.f32.gmra.mxu0 %v2790
      %v2836 = vpop.f32.mrf.mxu0
      %v2837 = vadd.f32 0.0, %v2836
      %2838 = vmatmul.f32.gmra.mxu0 %v2793
      %v2839 = vpop.f32.mrf.mxu0
      %v2840 = vadd.f32 0.0, %v2839
      %2841 = vmatmul.f32.gmra.mxu0 %v2796
      %v2842 = vpop.f32.mrf.mxu0
      %v2843 = vadd.f32 0.0, %v2842
      %2844 = vmatmul.f32.gmra.mxu0 %v2799
      %v2845 = vpop.f32.mrf.mxu0
      %v2846 = vadd.f32 0.0, %v2845
      %2847 = vmatmul.f32.gmra.mxu0 %v2802
      %v2848 = vpop.f32.mrf.mxu0
      %v2849 = vadd.f32 0.0, %v2848
      %2850 = vdwg.mxu0
      %v2851 = vadd.f32 %v2745, %v2822
      %v2852 = vadd.f32 %v2746, %v2825
      %v2853 = vadd.f32 %v2747, %v2828
      %v2854 = vadd.f32 %v2748, %v2831
      %v2855 = vadd.f32 %v2749, %v2834
      %v2856 = vadd.f32 %v2750, %v2837
      %v2857 = vadd.f32 %v2751, %v2840
      %v2858 = vadd.f32 %v2752, %v2843
      %v2859 = vadd.f32 %v2753, %v2846
      %v2860 = vadd.f32 %v2754, %v2849
      %v2861 = vld [vmem:[%s4] sm:$0x1]
      %v2863 = vperm.slane %v2861, 0
      %v2865 = vadd.f32 %v2851, %v2863
      %v2866 = vadd.f32 %v2852, %v2863
      %v2867 = vadd.f32 %v2853, %v2863
      %v2868 = vadd.f32 %v2854, %v2863
      %v2869 = vadd.f32 %v2855, %v2863
      %v2870 = vadd.f32 %v2856, %v2863
      %v2871 = vadd.f32 %v2857, %v2863
      %v2872 = vadd.f32 %v2858, %v2863
      %v2873 = vadd.f32 %v2859, %v2863
      %v2874 = vadd.f32 %v2860, %v2863
      %v2875 = vmax.f32 %v2865, 0.0
      %v2876 = vmax.f32 %v2866, 0.0
      %v2877 = vmax.f32 %v2867, 0.0
      %v2878 = vmax.f32 %v2868, 0.0
      %v2879 = vmax.f32 %v2869, 0.0
      %v2880 = vmax.f32 %v2870, 0.0
      %v2881 = vmax.f32 %v2871, 0.0
      %v2882 = vmax.f32 %v2872, 0.0
      %v2883 = vmax.f32 %v2873, 0.0
      %v2884 = vmax.f32 %v2874, 0.0
      %v2885 = vld [vmem:[%s17] sm:$0xff]
      %v2886 = vld [vmem:[%s17 + $0x8] sm:$0xff]
      %v2887 = vld [vmem:[%s17 + $0x10] sm:$0xff]
      %v2888 = vld [vmem:[%s17 + $0x18] sm:$0xff]
      %v2889 = vld [vmem:[%s17 + $0x20] sm:$0xff]
      %v2890 = vld [vmem:[%s17 + $0x28] sm:$0xff]
      %v2891 = vld [vmem:[%s17 + $0x30] sm:$0xff]
      %v2892 = vld [vmem:[%s17 + $0x38] sm:$0xff]
      %v2893 = vld [vmem:[%s17 + $0x40] sm:$0xff]
      %v2894 = vld [vmem:[%s17 + $0x48] sm:$0xff]
      %v2895 = vld [vmem:[%s17 + $0x50] sm:$0xff]
      %v2896 = vld [vmem:[%s17 + $0x58] sm:$0xff]
      %v2897 = vld [vmem:[%s17 + $0x60] sm:$0xf]
      %vm2898 = vcmask 637952
      %v2900 = vsel %vm2898, %v2885, 0
      %v2903 = vsel %vm2898, %v2886, 0
      %v2906 = vsel %vm2898, %v2887, 0
      %v2909 = vsel %vm2898, %v2888, 0
      %v2912 = vsel %vm2898, %v2889, 0
      %v2915 = vsel %vm2898, %v2890, 0
      %v2918 = vsel %vm2898, %v2891, 0
      %v2921 = vsel %vm2898, %v2892, 0
      %v2924 = vsel %vm2898, %v2893, 0
      %v2927 = vsel %vm2898, %v2894, 0
      %v2930 = vsel %vm2898, %v2895, 0
      %v2933 = vsel %vm2898, %v2896, 0
      %v2936 = vsel %vm2898, %v2897, 0
      %v2939 = vsel %vm1799, %v2884, 0
      %2941 = vmatpush.msra.mxu0 0.0
      %2942 = vmatpush.msra.mxu0 0.0
      %2943 = vmatpush.msra.mxu0 0.0
      %2944 = vmatpush.msra.mxu0 0.0
      %2945 = vmatpush.msra.mxu0 0.0
      %2946 = vmatpush.msra.mxu0 0.0
      %2947 = vmatpush.msra.mxu0 %v2939
      %2948 = vmatpush.msra.mxu0 %v2883
      %2949 = vmatpush.msra.mxu0 %v2882
      %2950 = vmatpush.msra.mxu0 %v2881
      %2951 = vmatpush.msra.mxu0 %v2880
      %2952 = vmatpush.msra.mxu0 %v2879
      %2953 = vmatpush.msra.mxu0 %v2878
      %2954 = vmatpush.msra.mxu0 %v2877
      %2955 = vmatpush.msra.mxu0 %v2876
      %2956 = vmatpush.msra.mxu0 %v2875
      %2957 = vmatmul.f32.gmra.mxu0 %v2900
      %v2958 = vpop.f32.mrf.mxu0
      %v2959 = vadd.f32 0.0, %v2958
      %2960 = vmatmul.f32.gmra.mxu0 %v2903
      %v2961 = vpop.f32.mrf.mxu0
      %v2962 = vadd.f32 0.0, %v2961
      %2963 = vmatmul.f32.gmra.mxu0 %v2906
      %v2964 = vpop.f32.mrf.mxu0
      %v2965 = vadd.f32 0.0, %v2964
      %2966 = vmatmul.f32.gmra.mxu0 %v2909
      %v2967 = vpop.f32.mrf.mxu0
      %v2968 = vadd.f32 0.0, %v2967
      %2969 = vmatmul.f32.gmra.mxu0 %v2912
      %v2970 = vpop.f32.mrf.mxu0
      %v2971 = vadd.f32 0.0, %v2970
      %2972 = vmatmul.f32.gmra.mxu0 %v2915
      %v2973 = vpop.f32.mrf.mxu0
      %v2974 = vadd.f32 0.0, %v2973
      %2975 = vmatmul.f32.gmra.mxu0 %v2918
      %v2976 = vpop.f32.mrf.mxu0
      %v2977 = vadd.f32 0.0, %v2976
      %2978 = vmatmul.f32.gmra.mxu0 %v2921
      %v2979 = vpop.f32.mrf.mxu0
      %v2980 = vadd.f32 0.0, %v2979
      %2981 = vmatmul.f32.gmra.mxu0 %v2924
      %v2982 = vpop.f32.mrf.mxu0
      %v2983 = vadd.f32 0.0, %v2982
      %2984 = vmatmul.f32.gmra.mxu0 %v2927
      %v2985 = vpop.f32.mrf.mxu0
      %v2986 = vadd.f32 0.0, %v2985
      %2987 = vmatmul.f32.gmra.mxu0 %v2930
      %v2988 = vpop.f32.mrf.mxu0
      %v2989 = vadd.f32 0.0, %v2988
      %2990 = vmatmul.f32.gmra.mxu0 %v2933
      %v2991 = vpop.f32.mrf.mxu0
      %v2992 = vadd.f32 0.0, %v2991
      %2993 = vmatmul.f32.gmra.mxu0 %v2936
      %v2994 = vpop.f32.mrf.mxu0
      %v2995 = vadd.f32 0.0, %v2994
      %2996 = vdwg.mxu0
      %2997 = vst.msk [vmem:[#allocation4] sm:$0xff] %vm1431, %v2959
      %2998 = vst.msk [vmem:[#allocation4 + $0x8] sm:$0xff] %vm1431, %v2962
      %2999 = vst.msk [vmem:[#allocation4 + $0x10] sm:$0xff] %vm1431, %v2965
      %3000 = vst.msk [vmem:[#allocation4 + $0x18] sm:$0xff] %vm1431, %v2968
      %3001 = vst.msk [vmem:[#allocation4 + $0x20] sm:$0xff] %vm1431, %v2971
      %3002 = vst.msk [vmem:[#allocation4 + $0x28] sm:$0xff] %vm1431, %v2974
      %3003 = vst.msk [vmem:[#allocation4 + $0x30] sm:$0xff] %vm1431, %v2977
      %3004 = vst.msk [vmem:[#allocation4 + $0x38] sm:$0xff] %vm1431, %v2980
      %3005 = vst.msk [vmem:[#allocation4 + $0x40] sm:$0xff] %vm1431, %v2983
      %3006 = vst.msk [vmem:[#allocation4 + $0x48] sm:$0xff] %vm1431, %v2986
      %3007 = vst.msk [vmem:[#allocation4 + $0x50] sm:$0xff] %vm1431, %v2989
      %3008 = vst.msk [vmem:[#allocation4 + $0x58] sm:$0xff] %vm1431, %v2992
      %3009 = vst.msk [vmem:[#allocation4 + $0x60] sm:$0xf] %vm1472, %v2995
      %v3010 = vld [vmem:[#allocation4] sm:$0xff]
      %v3011 = vld [vmem:[#allocation4 + $0x8] sm:$0xff]
      %v3012 = vld [vmem:[#allocation4 + $0x10] sm:$0xff]
      %v3013 = vld [vmem:[#allocation4 + $0x18] sm:$0xff]
      %v3014 = vld [vmem:[#allocation4 + $0x20] sm:$0xff]
      %v3015 = vld [vmem:[#allocation4 + $0x28] sm:$0xff]
      %v3016 = vld [vmem:[#allocation4 + $0x30] sm:$0xff]
      %v3017 = vld [vmem:[#allocation4 + $0x38] sm:$0xff]
      %v3018 = vld [vmem:[#allocation4 + $0x40] sm:$0xff]
      %v3019 = vld [vmem:[#allocation4 + $0x48] sm:$0x3f]
      %v3020 = vld [vmem:[%s5] sm:$0xff]
      %v3021 = vld [vmem:[%s5 + $0x8] sm:$0xff]
      %v3022 = vld [vmem:[%s5 + $0x10] sm:$0xff]
      %v3023 = vld [vmem:[%s5 + $0x18] sm:$0xff]
      %v3024 = vld [vmem:[%s5 + $0x20] sm:$0xff]
      %v3025 = vld [vmem:[%s5 + $0x28] sm:$0xff]
      %v3026 = vld [vmem:[%s5 + $0x30] sm:$0xff]
      %v3027 = vld [vmem:[%s5 + $0x38] sm:$0xff]
      %v3028 = vld [vmem:[#allocation4 + $0x1] sm:$0xff]
      %v3029 = vld [vmem:[#allocation4 + $0x9] sm:$0xff]
      %v3030 = vld [vmem:[#allocation4 + $0x11] sm:$0xff]
      %v3031 = vld [vmem:[#allocation4 + $0x19] sm:$0xff]
      %v3032 = vld [vmem:[#allocation4 + $0x21] sm:$0xff]
      %v3033 = vld [vmem:[#allocation4 + $0x29] sm:$0xff]
      %v3034 = vld [vmem:[#allocation4 + $0x31] sm:$0xff]
      %v3035 = vld [vmem:[#allocation4 + $0x39] sm:$0xff]
      %v3036 = vld [vmem:[#allocation4 + $0x41] sm:$0xff]
      %v3037 = vld [vmem:[#allocation4 + $0x49] sm:$0x3f]
      %s3038 = scalar_lea.vmem %s5, 64
      %v3039 = vld [vmem:[%s3038] sm:$0xff]
      %v3040 = vld [vmem:[%s3038 + $0x8] sm:$0xff]
      %v3041 = vld [vmem:[%s3038 + $0x10] sm:$0xff]
      %v3042 = vld [vmem:[%s3038 + $0x18] sm:$0xff]
      %v3043 = vld [vmem:[%s3038 + $0x20] sm:$0xff]
      %v3044 = vld [vmem:[%s3038 + $0x28] sm:$0xff]
      %v3045 = vld [vmem:[%s3038 + $0x30] sm:$0xff]
      %v3046 = vld [vmem:[%s3038 + $0x38] sm:$0xff]
      %v3048 = vsel %vm1431, %v3028, 0
      %v3051 = vsel %vm1431, %v3029, 0
      %v3054 = vsel %vm1431, %v3030, 0
      %v3057 = vsel %vm1431, %v3031, 0
      %v3060 = vsel %vm1431, %v3032, 0
      %v3063 = vsel %vm1431, %v3033, 0
      %v3066 = vsel %vm1431, %v3034, 0
      %v3069 = vsel %vm1431, %v3035, 0
      %v3072 = vsel %vm1431, %v3036, 0
      %v3075 = vsel %vm1431, %v3037, 0
      %3077 = vmatpush.msra.mxu0 0.0
      %3078 = vmatpush.msra.mxu0 0.0
      %3079 = vmatpush.msra.mxu0 0.0
      %3080 = vmatpush.msra.mxu0 0.0
      %3081 = vmatpush.msra.mxu0 0.0
      %3082 = vmatpush.msra.mxu0 0.0
      %3083 = vmatpush.msra.mxu0 0.0
      %3084 = vmatpush.msra.mxu0 0.0
      %3085 = vmatpush.msra.mxu0 %v3046
      %3086 = vmatpush.msra.mxu0 %v3045
      %3087 = vmatpush.msra.mxu0 %v3044
      %3088 = vmatpush.msra.mxu0 %v3043
      %3089 = vmatpush.msra.mxu0 %v3042
      %3090 = vmatpush.msra.mxu0 %v3041
      %3091 = vmatpush.msra.mxu0 %v3040
      %3092 = vmatpush.msra.mxu0 %v3039
      %3093 = vmatmul.f32.gmra.mxu0 %v3048
      %v3094 = vpop.f32.mrf.mxu0
      %v3095 = vadd.f32 0.0, %v3094
      %3096 = vmatmul.f32.gmra.mxu0 %v3051
      %v3097 = vpop.f32.mrf.mxu0
      %v3098 = vadd.f32 0.0, %v3097
      %3099 = vmatmul.f32.gmra.mxu0 %v3054
      %v3100 = vpop.f32.mrf.mxu0
      %v3101 = vadd.f32 0.0, %v3100
      %3102 = vmatmul.f32.gmra.mxu0 %v3057
      %v3103 = vpop.f32.mrf.mxu0
      %v3104 = vadd.f32 0.0, %v3103
      %3105 = vmatmul.f32.gmra.mxu0 %v3060
      %v3106 = vpop.f32.mrf.mxu0
      %v3107 = vadd.f32 0.0, %v3106
      %3108 = vmatmul.f32.gmra.mxu0 %v3063
      %v3109 = vpop.f32.mrf.mxu0
      %v3110 = vadd.f32 0.0, %v3109
      %3111 = vmatmul.f32.gmra.mxu0 %v3066
      %v3112 = vpop.f32.mrf.mxu0
      %v3113 = vadd.f32 0.0, %v3112
      %3114 = vmatmul.f32.gmra.mxu0 %v3069
      %v3115 = vpop.f32.mrf.mxu0
      %v3116 = vadd.f32 0.0, %v3115
      %3117 = vmatmul.f32.gmra.mxu0 %v3072
      %v3118 = vpop.f32.mrf.mxu0
      %v3119 = vadd.f32 0.0, %v3118
      %3120 = vmatmul.f32.gmra.mxu0 %v3075
      %v3121 = vpop.f32.mrf.mxu0
      %v3122 = vadd.f32 0.0, %v3121
      %3123 = vdwg.mxu0
      %v3125 = vsel %vm1431, %v3010, 0
      %v3128 = vsel %vm1431, %v3011, 0
      %v3131 = vsel %vm1431, %v3012, 0
      %v3134 = vsel %vm1431, %v3013, 0
      %v3137 = vsel %vm1431, %v3014, 0
      %v3140 = vsel %vm1431, %v3015, 0
      %v3143 = vsel %vm1431, %v3016, 0
      %v3146 = vsel %vm1431, %v3017, 0
      %v3149 = vsel %vm1431, %v3018, 0
      %v3152 = vsel %vm1431, %v3019, 0
      %3154 = vmatpush.msra.mxu0 0.0
      %3155 = vmatpush.msra.mxu0 0.0
      %3156 = vmatpush.msra.mxu0 0.0
      %3157 = vmatpush.msra.mxu0 0.0
      %3158 = vmatpush.msra.mxu0 0.0
      %3159 = vmatpush.msra.mxu0 0.0
      %3160 = vmatpush.msra.mxu0 0.0
      %3161 = vmatpush.msra.mxu0 0.0
      %3162 = vmatpush.msra.mxu0 %v3027
      %3163 = vmatpush.msra.mxu0 %v3026
      %3164 = vmatpush.msra.mxu0 %v3025
      %3165 = vmatpush.msra.mxu0 %v3024
      %3166 = vmatpush.msra.mxu0 %v3023
      %3167 = vmatpush.msra.mxu0 %v3022
      %3168 = vmatpush.msra.mxu0 %v3021
      %3169 = vmatpush.msra.mxu0 %v3020
      %3170 = vmatmul.f32.gmra.mxu0 %v3125
      %v3171 = vpop.f32.mrf.mxu0
      %v3172 = vadd.f32 %v3095, %v3171
      %3173 = vmatmul.f32.gmra.mxu0 %v3128
      %v3174 = vpop.f32.mrf.mxu0
      %v3175 = vadd.f32 %v3098, %v3174
      %3176 = vmatmul.f32.gmra.mxu0 %v3131
      %v3177 = vpop.f32.mrf.mxu0
      %v3178 = vadd.f32 %v3101, %v3177
      %3179 = vmatmul.f32.gmra.mxu0 %v3134
      %v3180 = vpop.f32.mrf.mxu0
      %v3181 = vadd.f32 %v3104, %v3180
      %3182 = vmatmul.f32.gmra.mxu0 %v3137
      %v3183 = vpop.f32.mrf.mxu0
      %v3184 = vadd.f32 %v3107, %v3183
      %3185 = vmatmul.f32.gmra.mxu0 %v3140
      %v3186 = vpop.f32.mrf.mxu0
      %v3187 = vadd.f32 %v3110, %v3186
      %3188 = vmatmul.f32.gmra.mxu0 %v3143
      %v3189 = vpop.f32.mrf.mxu0
      %v3190 = vadd.f32 %v3113, %v3189
      %3191 = vmatmul.f32.gmra.mxu0 %v3146
      %v3192 = vpop.f32.mrf.mxu0
      %v3193 = vadd.f32 %v3116, %v3192
      %3194 = vmatmul.f32.gmra.mxu0 %v3149
      %v3195 = vpop.f32.mrf.mxu0
      %v3196 = vadd.f32 %v3119, %v3195
      %3197 = vmatmul.f32.gmra.mxu0 %v3152
      %v3198 = vpop.f32.mrf.mxu0
      %v3199 = vadd.f32 %v3122, %v3198
      %3200 = vdwg.mxu0
      %v3201 = vld [vmem:[#allocation4 + $0x2] sm:$0xff]
      %v3202 = vld [vmem:[#allocation4 + $0xa] sm:$0xff]
      %v3203 = vld [vmem:[#allocation4 + $0x12] sm:$0xff]
      %v3204 = vld [vmem:[#allocation4 + $0x1a] sm:$0xff]
      %v3205 = vld [vmem:[#allocation4 + $0x22] sm:$0xff]
      %v3206 = vld [vmem:[#allocation4 + $0x2a] sm:$0xff]
      %v3207 = vld [vmem:[#allocation4 + $0x32] sm:$0xff]
      %v3208 = vld [vmem:[#allocation4 + $0x3a] sm:$0xff]
      %v3209 = vld [vmem:[#allocation4 + $0x42] sm:$0xff]
      %v3210 = vld [vmem:[#allocation4 + $0x4a] sm:$0x3f]
      %s3211 = scalar_lea.vmem %s5, 128
      %v3212 = vld [vmem:[%s3211] sm:$0xff]
      %v3213 = vld [vmem:[%s3211 + $0x8] sm:$0xff]
      %v3214 = vld [vmem:[%s3211 + $0x10] sm:$0xff]
      %v3215 = vld [vmem:[%s3211 + $0x18] sm:$0xff]
      %v3216 = vld [vmem:[%s3211 + $0x20] sm:$0xff]
      %v3217 = vld [vmem:[%s3211 + $0x28] sm:$0xff]
      %v3218 = vld [vmem:[%s3211 + $0x30] sm:$0xff]
      %v3219 = vld [vmem:[%s3211 + $0x38] sm:$0xff]
      %v3221 = vsel %vm1431, %v3201, 0
      %v3224 = vsel %vm1431, %v3202, 0
      %v3227 = vsel %vm1431, %v3203, 0
      %v3230 = vsel %vm1431, %v3204, 0
      %v3233 = vsel %vm1431, %v3205, 0
      %v3236 = vsel %vm1431, %v3206, 0
      %v3239 = vsel %vm1431, %v3207, 0
      %v3242 = vsel %vm1431, %v3208, 0
      %v3245 = vsel %vm1431, %v3209, 0
      %v3248 = vsel %vm1431, %v3210, 0
      %3250 = vmatpush.msra.mxu0 0.0
      %3251 = vmatpush.msra.mxu0 0.0
      %3252 = vmatpush.msra.mxu0 0.0
      %3253 = vmatpush.msra.mxu0 0.0
      %3254 = vmatpush.msra.mxu0 0.0
      %3255 = vmatpush.msra.mxu0 0.0
      %3256 = vmatpush.msra.mxu0 0.0
      %3257 = vmatpush.msra.mxu0 0.0
      %3258 = vmatpush.msra.mxu0 %v3219
      %3259 = vmatpush.msra.mxu0 %v3218
      %3260 = vmatpush.msra.mxu0 %v3217
      %3261 = vmatpush.msra.mxu0 %v3216
      %3262 = vmatpush.msra.mxu0 %v3215
      %3263 = vmatpush.msra.mxu0 %v3214
      %3264 = vmatpush.msra.mxu0 %v3213
      %3265 = vmatpush.msra.mxu0 %v3212
      %3266 = vmatmul.f32.gmra.mxu0 %v3221
      %v3267 = vpop.f32.mrf.mxu0
      %v3268 = vadd.f32 0.0, %v3267
      %3269 = vmatmul.f32.gmra.mxu0 %v3224
      %v3270 = vpop.f32.mrf.mxu0
      %v3271 = vadd.f32 0.0, %v3270
      %3272 = vmatmul.f32.gmra.mxu0 %v3227
      %v3273 = vpop.f32.mrf.mxu0
      %v3274 = vadd.f32 0.0, %v3273
      %3275 = vmatmul.f32.gmra.mxu0 %v3230
      %v3276 = vpop.f32.mrf.mxu0
      %v3277 = vadd.f32 0.0, %v3276
      %3278 = vmatmul.f32.gmra.mxu0 %v3233
      %v3279 = vpop.f32.mrf.mxu0
      %v3280 = vadd.f32 0.0, %v3279
      %3281 = vmatmul.f32.gmra.mxu0 %v3236
      %v3282 = vpop.f32.mrf.mxu0
      %v3283 = vadd.f32 0.0, %v3282
      %3284 = vmatmul.f32.gmra.mxu0 %v3239
      %v3285 = vpop.f32.mrf.mxu0
      %v3286 = vadd.f32 0.0, %v3285
      %3287 = vmatmul.f32.gmra.mxu0 %v3242
      %v3288 = vpop.f32.mrf.mxu0
      %v3289 = vadd.f32 0.0, %v3288
      %3290 = vmatmul.f32.gmra.mxu0 %v3245
      %v3291 = vpop.f32.mrf.mxu0
      %v3292 = vadd.f32 0.0, %v3291
      %3293 = vmatmul.f32.gmra.mxu0 %v3248
      %v3294 = vpop.f32.mrf.mxu0
      %v3295 = vadd.f32 0.0, %v3294
      %3296 = vdwg.mxu0
      %v3297 = vadd.f32 %v3172, %v3268
      %v3298 = vadd.f32 %v3175, %v3271
      %v3299 = vadd.f32 %v3178, %v3274
      %v3300 = vadd.f32 %v3181, %v3277
      %v3301 = vadd.f32 %v3184, %v3280
      %v3302 = vadd.f32 %v3187, %v3283
      %v3303 = vadd.f32 %v3190, %v3286
      %v3304 = vadd.f32 %v3193, %v3289
      %v3305 = vadd.f32 %v3196, %v3292
      %v3306 = vadd.f32 %v3199, %v3295
      %v3307 = vld [vmem:[#allocation4 + $0xa] sm:$0xff]
      %v3308 = vld [vmem:[#allocation4 + $0x12] sm:$0xff]
      %v3309 = vld [vmem:[#allocation4 + $0x1a] sm:$0xff]
      %v3310 = vld [vmem:[#allocation4 + $0x22] sm:$0xff]
      %v3311 = vld [vmem:[#allocation4 + $0x2a] sm:$0xff]
      %v3312 = vld [vmem:[#allocation4 + $0x32] sm:$0xff]
      %v3313 = vld [vmem:[#allocation4 + $0x3a] sm:$0xff]
      %v3314 = vld [vmem:[#allocation4 + $0x42] sm:$0xff]
      %v3315 = vld [vmem:[#allocation4 + $0x4a] sm:$0xff]
      %v3316 = vld [vmem:[#allocation4 + $0x52] sm:$0x3f]
      %s3317 = scalar_lea.vmem %s5, 192
      %v3318 = vld [vmem:[%s3317] sm:$0xff]
      %v3319 = vld [vmem:[%s3317 + $0x8] sm:$0xff]
      %v3320 = vld [vmem:[%s3317 + $0x10] sm:$0xff]
      %v3321 = vld [vmem:[%s3317 + $0x18] sm:$0xff]
      %v3322 = vld [vmem:[%s3317 + $0x20] sm:$0xff]
      %v3323 = vld [vmem:[%s3317 + $0x28] sm:$0xff]
      %v3324 = vld [vmem:[%s3317 + $0x30] sm:$0xff]
      %v3325 = vld [vmem:[%s3317 + $0x38] sm:$0xff]
      %v3327 = vsel %vm1431, %v3307, 0
      %v3330 = vsel %vm1431, %v3308, 0
      %v3333 = vsel %vm1431, %v3309, 0
      %v3336 = vsel %vm1431, %v3310, 0
      %v3339 = vsel %vm1431, %v3311, 0
      %v3342 = vsel %vm1431, %v3312, 0
      %v3345 = vsel %vm1431, %v3313, 0
      %v3348 = vsel %vm1431, %v3314, 0
      %v3351 = vsel %vm1431, %v3315, 0
      %v3354 = vsel %vm1431, %v3316, 0
      %3356 = vmatpush.msra.mxu0 0.0
      %3357 = vmatpush.msra.mxu0 0.0
      %3358 = vmatpush.msra.mxu0 0.0
      %3359 = vmatpush.msra.mxu0 0.0
      %3360 = vmatpush.msra.mxu0 0.0
      %3361 = vmatpush.msra.mxu0 0.0
      %3362 = vmatpush.msra.mxu0 0.0
      %3363 = vmatpush.msra.mxu0 0.0
      %3364 = vmatpush.msra.mxu0 %v3325
      %3365 = vmatpush.msra.mxu0 %v3324
      %3366 = vmatpush.msra.mxu0 %v3323
      %3367 = vmatpush.msra.mxu0 %v3322
      %3368 = vmatpush.msra.mxu0 %v3321
      %3369 = vmatpush.msra.mxu0 %v3320
      %3370 = vmatpush.msra.mxu0 %v3319
      %3371 = vmatpush.msra.mxu0 %v3318
      %3372 = vmatmul.f32.gmra.mxu0 %v3327
      %v3373 = vpop.f32.mrf.mxu0
      %v3374 = vadd.f32 0.0, %v3373
      %3375 = vmatmul.f32.gmra.mxu0 %v3330
      %v3376 = vpop.f32.mrf.mxu0
      %v3377 = vadd.f32 0.0, %v3376
      %3378 = vmatmul.f32.gmra.mxu0 %v3333
      %v3379 = vpop.f32.mrf.mxu0
      %v3380 = vadd.f32 0.0, %v3379
      %3381 = vmatmul.f32.gmra.mxu0 %v3336
      %v3382 = vpop.f32.mrf.mxu0
      %v3383 = vadd.f32 0.0, %v3382
      %3384 = vmatmul.f32.gmra.mxu0 %v3339
      %v3385 = vpop.f32.mrf.mxu0
      %v3386 = vadd.f32 0.0, %v3385
      %3387 = vmatmul.f32.gmra.mxu0 %v3342
      %v3388 = vpop.f32.mrf.mxu0
      %v3389 = vadd.f32 0.0, %v3388
      %3390 = vmatmul.f32.gmra.mxu0 %v3345
      %v3391 = vpop.f32.mrf.mxu0
      %v3392 = vadd.f32 0.0, %v3391
      %3393 = vmatmul.f32.gmra.mxu0 %v3348
      %v3394 = vpop.f32.mrf.mxu0
      %v3395 = vadd.f32 0.0, %v3394
      %3396 = vmatmul.f32.gmra.mxu0 %v3351
      %v3397 = vpop.f32.mrf.mxu0
      %v3398 = vadd.f32 0.0, %v3397
      %3399 = vmatmul.f32.gmra.mxu0 %v3354
      %v3400 = vpop.f32.mrf.mxu0
      %v3401 = vadd.f32 0.0, %v3400
      %3402 = vdwg.mxu0
      %v3403 = vadd.f32 %v3297, %v3374
      %v3404 = vadd.f32 %v3298, %v3377
      %v3405 = vadd.f32 %v3299, %v3380
      %v3406 = vadd.f32 %v3300, %v3383
      %v3407 = vadd.f32 %v3301, %v3386
      %v3408 = vadd.f32 %v3302, %v3389
      %v3409 = vadd.f32 %v3303, %v3392
      %v3410 = vadd.f32 %v3304, %v3395
      %v3411 = vadd.f32 %v3305, %v3398
      %v3412 = vadd.f32 %v3306, %v3401
      %v3413 = vld [vmem:[#allocation4 + $0xb] sm:$0xff]
      %v3414 = vld [vmem:[#allocation4 + $0x13] sm:$0xff]
      %v3415 = vld [vmem:[#allocation4 + $0x1b] sm:$0xff]
      %v3416 = vld [vmem:[#allocation4 + $0x23] sm:$0xff]
      %v3417 = vld [vmem:[#allocation4 + $0x2b] sm:$0xff]
      %v3418 = vld [vmem:[#allocation4 + $0x33] sm:$0xff]
      %v3419 = vld [vmem:[#allocation4 + $0x3b] sm:$0xff]
      %v3420 = vld [vmem:[#allocation4 + $0x43] sm:$0xff]
      %v3421 = vld [vmem:[#allocation4 + $0x4b] sm:$0xff]
      %v3422 = vld [vmem:[#allocation4 + $0x53] sm:$0x3f]
      %s3423 = scalar_lea.vmem %s5, 256
      %v3424 = vld [vmem:[%s3423] sm:$0xff]
      %v3425 = vld [vmem:[%s3423 + $0x8] sm:$0xff]
      %v3426 = vld [vmem:[%s3423 + $0x10] sm:$0xff]
      %v3427 = vld [vmem:[%s3423 + $0x18] sm:$0xff]
      %v3428 = vld [vmem:[%s3423 + $0x20] sm:$0xff]
      %v3429 = vld [vmem:[%s3423 + $0x28] sm:$0xff]
      %v3430 = vld [vmem:[%s3423 + $0x30] sm:$0xff]
      %v3431 = vld [vmem:[%s3423 + $0x38] sm:$0xff]
      %v3433 = vsel %vm1431, %v3413, 0
      %v3436 = vsel %vm1431, %v3414, 0
      %v3439 = vsel %vm1431, %v3415, 0
      %v3442 = vsel %vm1431, %v3416, 0
      %v3445 = vsel %vm1431, %v3417, 0
      %v3448 = vsel %vm1431, %v3418, 0
      %v3451 = vsel %vm1431, %v3419, 0
      %v3454 = vsel %vm1431, %v3420, 0
      %v3457 = vsel %vm1431, %v3421, 0
      %v3460 = vsel %vm1431, %v3422, 0
      %3462 = vmatpush.msra.mxu0 0.0
      %3463 = vmatpush.msra.mxu0 0.0
      %3464 = vmatpush.msra.mxu0 0.0
      %3465 = vmatpush.msra.mxu0 0.0
      %3466 = vmatpush.msra.mxu0 0.0
      %3467 = vmatpush.msra.mxu0 0.0
      %3468 = vmatpush.msra.mxu0 0.0
      %3469 = vmatpush.msra.mxu0 0.0
      %3470 = vmatpush.msra.mxu0 %v3431
      %3471 = vmatpush.msra.mxu0 %v3430
      %3472 = vmatpush.msra.mxu0 %v3429
      %3473 = vmatpush.msra.mxu0 %v3428
      %3474 = vmatpush.msra.mxu0 %v3427
      %3475 = vmatpush.msra.mxu0 %v3426
      %3476 = vmatpush.msra.mxu0 %v3425
      %3477 = vmatpush.msra.mxu0 %v3424
      %3478 = vmatmul.f32.gmra.mxu0 %v3433
      %v3479 = vpop.f32.mrf.mxu0
      %v3480 = vadd.f32 0.0, %v3479
      %3481 = vmatmul.f32.gmra.mxu0 %v3436
      %v3482 = vpop.f32.mrf.mxu0
      %v3483 = vadd.f32 0.0, %v3482
      %3484 = vmatmul.f32.gmra.mxu0 %v3439
      %v3485 = vpop.f32.mrf.mxu0
      %v3486 = vadd.f32 0.0, %v3485
      %3487 = vmatmul.f32.gmra.mxu0 %v3442
      %v3488 = vpop.f32.mrf.mxu0
      %v3489 = vadd.f32 0.0, %v3488
      %3490 = vmatmul.f32.gmra.mxu0 %v3445
      %v3491 = vpop.f32.mrf.mxu0
      %v3492 = vadd.f32 0.0, %v3491
      %3493 = vmatmul.f32.gmra.mxu0 %v3448
      %v3494 = vpop.f32.mrf.mxu0
      %v3495 = vadd.f32 0.0, %v3494
      %3496 = vmatmul.f32.gmra.mxu0 %v3451
      %v3497 = vpop.f32.mrf.mxu0
      %v3498 = vadd.f32 0.0, %v3497
      %3499 = vmatmul.f32.gmra.mxu0 %v3454
      %v3500 = vpop.f32.mrf.mxu0
      %v3501 = vadd.f32 0.0, %v3500
      %3502 = vmatmul.f32.gmra.mxu0 %v3457
      %v3503 = vpop.f32.mrf.mxu0
      %v3504 = vadd.f32 0.0, %v3503
      %3505 = vmatmul.f32.gmra.mxu0 %v3460
      %v3506 = vpop.f32.mrf.mxu0
      %v3507 = vadd.f32 0.0, %v3506
      %3508 = vdwg.mxu0
      %v3509 = vadd.f32 %v3403, %v3480
      %v3510 = vadd.f32 %v3404, %v3483
      %v3511 = vadd.f32 %v3405, %v3486
      %v3512 = vadd.f32 %v3406, %v3489
      %v3513 = vadd.f32 %v3407, %v3492
      %v3514 = vadd.f32 %v3408, %v3495
      %v3515 = vadd.f32 %v3409, %v3498
      %v3516 = vadd.f32 %v3410, %v3501
      %v3517 = vadd.f32 %v3411, %v3504
      %v3518 = vadd.f32 %v3412, %v3507
      %v3519 = vld [vmem:[#allocation4 + $0xc] sm:$0xff]
      %v3520 = vld [vmem:[#allocation4 + $0x14] sm:$0xff]
      %v3521 = vld [vmem:[#allocation4 + $0x1c] sm:$0xff]
      %v3522 = vld [vmem:[#allocation4 + $0x24] sm:$0xff]
      %v3523 = vld [vmem:[#allocation4 + $0x2c] sm:$0xff]
      %v3524 = vld [vmem:[#allocation4 + $0x34] sm:$0xff]
      %v3525 = vld [vmem:[#allocation4 + $0x3c] sm:$0xff]
      %v3526 = vld [vmem:[#allocation4 + $0x44] sm:$0xff]
      %v3527 = vld [vmem:[#allocation4 + $0x4c] sm:$0xff]
      %v3528 = vld [vmem:[#allocation4 + $0x54] sm:$0x3f]
      %s3529 = scalar_lea.vmem %s5, 320
      %v3530 = vld [vmem:[%s3529] sm:$0xff]
      %v3531 = vld [vmem:[%s3529 + $0x8] sm:$0xff]
      %v3532 = vld [vmem:[%s3529 + $0x10] sm:$0xff]
      %v3533 = vld [vmem:[%s3529 + $0x18] sm:$0xff]
      %v3534 = vld [vmem:[%s3529 + $0x20] sm:$0xff]
      %v3535 = vld [vmem:[%s3529 + $0x28] sm:$0xff]
      %v3536 = vld [vmem:[%s3529 + $0x30] sm:$0xff]
      %v3537 = vld [vmem:[%s3529 + $0x38] sm:$0xff]
      %v3539 = vsel %vm1431, %v3519, 0
      %v3542 = vsel %vm1431, %v3520, 0
      %v3545 = vsel %vm1431, %v3521, 0
      %v3548 = vsel %vm1431, %v3522, 0
      %v3551 = vsel %vm1431, %v3523, 0
      %v3554 = vsel %vm1431, %v3524, 0
      %v3557 = vsel %vm1431, %v3525, 0
      %v3560 = vsel %vm1431, %v3526, 0
      %v3563 = vsel %vm1431, %v3527, 0
      %v3566 = vsel %vm1431, %v3528, 0
      %3568 = vmatpush.msra.mxu0 0.0
      %3569 = vmatpush.msra.mxu0 0.0
      %3570 = vmatpush.msra.mxu0 0.0
      %3571 = vmatpush.msra.mxu0 0.0
      %3572 = vmatpush.msra.mxu0 0.0
      %3573 = vmatpush.msra.mxu0 0.0
      %3574 = vmatpush.msra.mxu0 0.0
      %3575 = vmatpush.msra.mxu0 0.0
      %3576 = vmatpush.msra.mxu0 %v3537
      %3577 = vmatpush.msra.mxu0 %v3536
      %3578 = vmatpush.msra.mxu0 %v3535
      %3579 = vmatpush.msra.mxu0 %v3534
      %3580 = vmatpush.msra.mxu0 %v3533
      %3581 = vmatpush.msra.mxu0 %v3532
      %3582 = vmatpush.msra.mxu0 %v3531
      %3583 = vmatpush.msra.mxu0 %v3530
      %3584 = vmatmul.f32.gmra.mxu0 %v3539
      %v3585 = vpop.f32.mrf.mxu0
      %v3586 = vadd.f32 0.0, %v3585
      %3587 = vmatmul.f32.gmra.mxu0 %v3542
      %v3588 = vpop.f32.mrf.mxu0
      %v3589 = vadd.f32 0.0, %v3588
      %3590 = vmatmul.f32.gmra.mxu0 %v3545
      %v3591 = vpop.f32.mrf.mxu0
      %v3592 = vadd.f32 0.0, %v3591
      %3593 = vmatmul.f32.gmra.mxu0 %v3548
      %v3594 = vpop.f32.mrf.mxu0
      %v3595 = vadd.f32 0.0, %v3594
      %3596 = vmatmul.f32.gmra.mxu0 %v3551
      %v3597 = vpop.f32.mrf.mxu0
      %v3598 = vadd.f32 0.0, %v3597
      %3599 = vmatmul.f32.gmra.mxu0 %v3554
      %v3600 = vpop.f32.mrf.mxu0
      %v3601 = vadd.f32 0.0, %v3600
      %3602 = vmatmul.f32.gmra.mxu0 %v3557
      %v3603 = vpop.f32.mrf.mxu0
      %v3604 = vadd.f32 0.0, %v3603
      %3605 = vmatmul.f32.gmra.mxu0 %v3560
      %v3606 = vpop.f32.mrf.mxu0
      %v3607 = vadd.f32 0.0, %v3606
      %3608 = vmatmul.f32.gmra.mxu0 %v3563
      %v3609 = vpop.f32.mrf.mxu0
      %v3610 = vadd.f32 0.0, %v3609
      %3611 = vmatmul.f32.gmra.mxu0 %v3566
      %v3612 = vpop.f32.mrf.mxu0
      %v3613 = vadd.f32 0.0, %v3612
      %3614 = vdwg.mxu0
      %v3615 = vadd.f32 %v3509, %v3586
      %v3616 = vadd.f32 %v3510, %v3589
      %v3617 = vadd.f32 %v3511, %v3592
      %v3618 = vadd.f32 %v3512, %v3595
      %v3619 = vadd.f32 %v3513, %v3598
      %v3620 = vadd.f32 %v3514, %v3601
      %v3621 = vadd.f32 %v3515, %v3604
      %v3622 = vadd.f32 %v3516, %v3607
      %v3623 = vadd.f32 %v3517, %v3610
      %v3624 = vadd.f32 %v3518, %v3613
      %v3625 = vld [vmem:[#allocation4 + $0x14] sm:$0xff]
      %v3626 = vld [vmem:[#allocation4 + $0x1c] sm:$0xff]
      %v3627 = vld [vmem:[#allocation4 + $0x24] sm:$0xff]
      %v3628 = vld [vmem:[#allocation4 + $0x2c] sm:$0xff]
      %v3629 = vld [vmem:[#allocation4 + $0x34] sm:$0xff]
      %v3630 = vld [vmem:[#allocation4 + $0x3c] sm:$0xff]
      %v3631 = vld [vmem:[#allocation4 + $0x44] sm:$0xff]
      %v3632 = vld [vmem:[#allocation4 + $0x4c] sm:$0xff]
      %v3633 = vld [vmem:[#allocation4 + $0x54] sm:$0xff]
      %v3634 = vld [vmem:[#allocation4 + $0x5c] sm:$0x3f]
      %s3635 = scalar_lea.vmem %s5, 384
      %v3636 = vld [vmem:[%s3635] sm:$0xff]
      %v3637 = vld [vmem:[%s3635 + $0x8] sm:$0xff]
      %v3638 = vld [vmem:[%s3635 + $0x10] sm:$0xff]
      %v3639 = vld [vmem:[%s3635 + $0x18] sm:$0xff]
      %v3640 = vld [vmem:[%s3635 + $0x20] sm:$0xff]
      %v3641 = vld [vmem:[%s3635 + $0x28] sm:$0xff]
      %v3642 = vld [vmem:[%s3635 + $0x30] sm:$0xff]
      %v3643 = vld [vmem:[%s3635 + $0x38] sm:$0xff]
      %v3645 = vsel %vm1431, %v3625, 0
      %v3648 = vsel %vm1431, %v3626, 0
      %v3651 = vsel %vm1431, %v3627, 0
      %v3654 = vsel %vm1431, %v3628, 0
      %v3657 = vsel %vm1431, %v3629, 0
      %v3660 = vsel %vm1431, %v3630, 0
      %v3663 = vsel %vm1431, %v3631, 0
      %v3666 = vsel %vm1431, %v3632, 0
      %v3669 = vsel %vm1431, %v3633, 0
      %v3672 = vsel %vm1431, %v3634, 0
      %3674 = vmatpush.msra.mxu0 0.0
      %3675 = vmatpush.msra.mxu0 0.0
      %3676 = vmatpush.msra.mxu0 0.0
      %3677 = vmatpush.msra.mxu0 0.0
      %3678 = vmatpush.msra.mxu0 0.0
      %3679 = vmatpush.msra.mxu0 0.0
      %3680 = vmatpush.msra.mxu0 0.0
      %3681 = vmatpush.msra.mxu0 0.0
      %3682 = vmatpush.msra.mxu0 %v3643
      %3683 = vmatpush.msra.mxu0 %v3642
      %3684 = vmatpush.msra.mxu0 %v3641
      %3685 = vmatpush.msra.mxu0 %v3640
      %3686 = vmatpush.msra.mxu0 %v3639
      %3687 = vmatpush.msra.mxu0 %v3638
      %3688 = vmatpush.msra.mxu0 %v3637
      %3689 = vmatpush.msra.mxu0 %v3636
      %3690 = vmatmul.f32.gmra.mxu0 %v3645
      %v3691 = vpop.f32.mrf.mxu0
      %v3692 = vadd.f32 0.0, %v3691
      %3693 = vmatmul.f32.gmra.mxu0 %v3648
      %v3694 = vpop.f32.mrf.mxu0
      %v3695 = vadd.f32 0.0, %v3694
      %3696 = vmatmul.f32.gmra.mxu0 %v3651
      %v3697 = vpop.f32.mrf.mxu0
      %v3698 = vadd.f32 0.0, %v3697
      %3699 = vmatmul.f32.gmra.mxu0 %v3654
      %v3700 = vpop.f32.mrf.mxu0
      %v3701 = vadd.f32 0.0, %v3700
      %3702 = vmatmul.f32.gmra.mxu0 %v3657
      %v3703 = vpop.f32.mrf.mxu0
      %v3704 = vadd.f32 0.0, %v3703
      %3705 = vmatmul.f32.gmra.mxu0 %v3660
      %v3706 = vpop.f32.mrf.mxu0
      %v3707 = vadd.f32 0.0, %v3706
      %3708 = vmatmul.f32.gmra.mxu0 %v3663
      %v3709 = vpop.f32.mrf.mxu0
      %v3710 = vadd.f32 0.0, %v3709
      %3711 = vmatmul.f32.gmra.mxu0 %v3666
      %v3712 = vpop.f32.mrf.mxu0
      %v3713 = vadd.f32 0.0, %v3712
      %3714 = vmatmul.f32.gmra.mxu0 %v3669
      %v3715 = vpop.f32.mrf.mxu0
      %v3716 = vadd.f32 0.0, %v3715
      %3717 = vmatmul.f32.gmra.mxu0 %v3672
      %v3718 = vpop.f32.mrf.mxu0
      %v3719 = vadd.f32 0.0, %v3718
      %3720 = vdwg.mxu0
      %v3721 = vadd.f32 %v3615, %v3692
      %v3722 = vadd.f32 %v3616, %v3695
      %v3723 = vadd.f32 %v3617, %v3698
      %v3724 = vadd.f32 %v3618, %v3701
      %v3725 = vadd.f32 %v3619, %v3704
      %v3726 = vadd.f32 %v3620, %v3707
      %v3727 = vadd.f32 %v3621, %v3710
      %v3728 = vadd.f32 %v3622, %v3713
      %v3729 = vadd.f32 %v3623, %v3716
      %v3730 = vadd.f32 %v3624, %v3719
      %v3731 = vld [vmem:[#allocation4 + $0x15] sm:$0xff]
      %v3732 = vld [vmem:[#allocation4 + $0x1d] sm:$0xff]
      %v3733 = vld [vmem:[#allocation4 + $0x25] sm:$0xff]
      %v3734 = vld [vmem:[#allocation4 + $0x2d] sm:$0xff]
      %v3735 = vld [vmem:[#allocation4 + $0x35] sm:$0xff]
      %v3736 = vld [vmem:[#allocation4 + $0x3d] sm:$0xff]
      %v3737 = vld [vmem:[#allocation4 + $0x45] sm:$0xff]
      %v3738 = vld [vmem:[#allocation4 + $0x4d] sm:$0xff]
      %v3739 = vld [vmem:[#allocation4 + $0x55] sm:$0xff]
      %v3740 = vld [vmem:[#allocation4 + $0x5d] sm:$0x3f]
      %s3741 = scalar_lea.vmem %s5, 448
      %v3742 = vld [vmem:[%s3741] sm:$0xff]
      %v3743 = vld [vmem:[%s3741 + $0x8] sm:$0xff]
      %v3744 = vld [vmem:[%s3741 + $0x10] sm:$0xff]
      %v3745 = vld [vmem:[%s3741 + $0x18] sm:$0xff]
      %v3746 = vld [vmem:[%s3741 + $0x20] sm:$0xff]
      %v3747 = vld [vmem:[%s3741 + $0x28] sm:$0xff]
      %v3748 = vld [vmem:[%s3741 + $0x30] sm:$0xff]
      %v3749 = vld [vmem:[%s3741 + $0x38] sm:$0xff]
      %v3751 = vsel %vm1431, %v3731, 0
      %v3754 = vsel %vm1431, %v3732, 0
      %v3757 = vsel %vm1431, %v3733, 0
      %v3760 = vsel %vm1431, %v3734, 0
      %v3763 = vsel %vm1431, %v3735, 0
      %v3766 = vsel %vm1431, %v3736, 0
      %v3769 = vsel %vm1431, %v3737, 0
      %v3772 = vsel %vm1431, %v3738, 0
      %v3775 = vsel %vm1431, %v3739, 0
      %v3778 = vsel %vm1431, %v3740, 0
      %3780 = vmatpush.msra.mxu0 0.0
      %3781 = vmatpush.msra.mxu0 0.0
      %3782 = vmatpush.msra.mxu0 0.0
      %3783 = vmatpush.msra.mxu0 0.0
      %3784 = vmatpush.msra.mxu0 0.0
      %3785 = vmatpush.msra.mxu0 0.0
      %3786 = vmatpush.msra.mxu0 0.0
      %3787 = vmatpush.msra.mxu0 0.0
      %3788 = vmatpush.msra.mxu0 %v3749
      %3789 = vmatpush.msra.mxu0 %v3748
      %3790 = vmatpush.msra.mxu0 %v3747
      %3791 = vmatpush.msra.mxu0 %v3746
      %3792 = vmatpush.msra.mxu0 %v3745
      %3793 = vmatpush.msra.mxu0 %v3744
      %3794 = vmatpush.msra.mxu0 %v3743
      %3795 = vmatpush.msra.mxu0 %v3742
      %3796 = vmatmul.f32.gmra.mxu0 %v3751
      %v3797 = vpop.f32.mrf.mxu0
      %v3798 = vadd.f32 0.0, %v3797
      %3799 = vmatmul.f32.gmra.mxu0 %v3754
      %v3800 = vpop.f32.mrf.mxu0
      %v3801 = vadd.f32 0.0, %v3800
      %3802 = vmatmul.f32.gmra.mxu0 %v3757
      %v3803 = vpop.f32.mrf.mxu0
      %v3804 = vadd.f32 0.0, %v3803
      %3805 = vmatmul.f32.gmra.mxu0 %v3760
      %v3806 = vpop.f32.mrf.mxu0
      %v3807 = vadd.f32 0.0, %v3806
      %3808 = vmatmul.f32.gmra.mxu0 %v3763
      %v3809 = vpop.f32.mrf.mxu0
      %v3810 = vadd.f32 0.0, %v3809
      %3811 = vmatmul.f32.gmra.mxu0 %v3766
      %v3812 = vpop.f32.mrf.mxu0
      %v3813 = vadd.f32 0.0, %v3812
      %3814 = vmatmul.f32.gmra.mxu0 %v3769
      %v3815 = vpop.f32.mrf.mxu0
      %v3816 = vadd.f32 0.0, %v3815
      %3817 = vmatmul.f32.gmra.mxu0 %v3772
      %v3818 = vpop.f32.mrf.mxu0
      %v3819 = vadd.f32 0.0, %v3818
      %3820 = vmatmul.f32.gmra.mxu0 %v3775
      %v3821 = vpop.f32.mrf.mxu0
      %v3822 = vadd.f32 0.0, %v3821
      %3823 = vmatmul.f32.gmra.mxu0 %v3778
      %v3824 = vpop.f32.mrf.mxu0
      %v3825 = vadd.f32 0.0, %v3824
      %3826 = vdwg.mxu0
      %v3827 = vadd.f32 %v3721, %v3798
      %v3828 = vadd.f32 %v3722, %v3801
      %v3829 = vadd.f32 %v3723, %v3804
      %v3830 = vadd.f32 %v3724, %v3807
      %v3831 = vadd.f32 %v3725, %v3810
      %v3832 = vadd.f32 %v3726, %v3813
      %v3833 = vadd.f32 %v3727, %v3816
      %v3834 = vadd.f32 %v3728, %v3819
      %v3835 = vadd.f32 %v3729, %v3822
      %v3836 = vadd.f32 %v3730, %v3825
      %v3837 = vld [vmem:[#allocation4 + $0x16] sm:$0xff]
      %v3838 = vld [vmem:[#allocation4 + $0x1e] sm:$0xff]
      %v3839 = vld [vmem:[#allocation4 + $0x26] sm:$0xff]
      %v3840 = vld [vmem:[#allocation4 + $0x2e] sm:$0xff]
      %v3841 = vld [vmem:[#allocation4 + $0x36] sm:$0xff]
      %v3842 = vld [vmem:[#allocation4 + $0x3e] sm:$0xff]
      %v3843 = vld [vmem:[#allocation4 + $0x46] sm:$0xff]
      %v3844 = vld [vmem:[#allocation4 + $0x4e] sm:$0xff]
      %v3845 = vld [vmem:[#allocation4 + $0x56] sm:$0xff]
      %v3846 = vld [vmem:[#allocation4 + $0x5e] sm:$0x3f]
      %s3847 = scalar_lea.vmem %s5, 512
      %v3848 = vld [vmem:[%s3847] sm:$0xff]
      %v3849 = vld [vmem:[%s3847 + $0x8] sm:$0xff]
      %v3850 = vld [vmem:[%s3847 + $0x10] sm:$0xff]
      %v3851 = vld [vmem:[%s3847 + $0x18] sm:$0xff]
      %v3852 = vld [vmem:[%s3847 + $0x20] sm:$0xff]
      %v3853 = vld [vmem:[%s3847 + $0x28] sm:$0xff]
      %v3854 = vld [vmem:[%s3847 + $0x30] sm:$0xff]
      %v3855 = vld [vmem:[%s3847 + $0x38] sm:$0xff]
      %v3857 = vsel %vm1431, %v3837, 0
      %v3860 = vsel %vm1431, %v3838, 0
      %v3863 = vsel %vm1431, %v3839, 0
      %v3866 = vsel %vm1431, %v3840, 0
      %v3869 = vsel %vm1431, %v3841, 0
      %v3872 = vsel %vm1431, %v3842, 0
      %v3875 = vsel %vm1431, %v3843, 0
      %v3878 = vsel %vm1431, %v3844, 0
      %v3881 = vsel %vm1431, %v3845, 0
      %v3884 = vsel %vm1431, %v3846, 0
      %3886 = vmatpush.msra.mxu0 0.0
      %3887 = vmatpush.msra.mxu0 0.0
      %3888 = vmatpush.msra.mxu0 0.0
      %3889 = vmatpush.msra.mxu0 0.0
      %3890 = vmatpush.msra.mxu0 0.0
      %3891 = vmatpush.msra.mxu0 0.0
      %3892 = vmatpush.msra.mxu0 0.0
      %3893 = vmatpush.msra.mxu0 0.0
      %3894 = vmatpush.msra.mxu0 %v3855
      %3895 = vmatpush.msra.mxu0 %v3854
      %3896 = vmatpush.msra.mxu0 %v3853
      %3897 = vmatpush.msra.mxu0 %v3852
      %3898 = vmatpush.msra.mxu0 %v3851
      %3899 = vmatpush.msra.mxu0 %v3850
      %3900 = vmatpush.msra.mxu0 %v3849
      %3901 = vmatpush.msra.mxu0 %v3848
      %3902 = vmatmul.f32.gmra.mxu0 %v3857
      %v3903 = vpop.f32.mrf.mxu0
      %v3904 = vadd.f32 0.0, %v3903
      %3905 = vmatmul.f32.gmra.mxu0 %v3860
      %v3906 = vpop.f32.mrf.mxu0
      %v3907 = vadd.f32 0.0, %v3906
      %3908 = vmatmul.f32.gmra.mxu0 %v3863
      %v3909 = vpop.f32.mrf.mxu0
      %v3910 = vadd.f32 0.0, %v3909
      %3911 = vmatmul.f32.gmra.mxu0 %v3866
      %v3912 = vpop.f32.mrf.mxu0
      %v3913 = vadd.f32 0.0, %v3912
      %3914 = vmatmul.f32.gmra.mxu0 %v3869
      %v3915 = vpop.f32.mrf.mxu0
      %v3916 = vadd.f32 0.0, %v3915
      %3917 = vmatmul.f32.gmra.mxu0 %v3872
      %v3918 = vpop.f32.mrf.mxu0
      %v3919 = vadd.f32 0.0, %v3918
      %3920 = vmatmul.f32.gmra.mxu0 %v3875
      %v3921 = vpop.f32.mrf.mxu0
      %v3922 = vadd.f32 0.0, %v3921
      %3923 = vmatmul.f32.gmra.mxu0 %v3878
      %v3924 = vpop.f32.mrf.mxu0
      %v3925 = vadd.f32 0.0, %v3924
      %3926 = vmatmul.f32.gmra.mxu0 %v3881
      %v3927 = vpop.f32.mrf.mxu0
      %v3928 = vadd.f32 0.0, %v3927
      %3929 = vmatmul.f32.gmra.mxu0 %v3884
      %v3930 = vpop.f32.mrf.mxu0
      %v3931 = vadd.f32 0.0, %v3930
      %3932 = vdwg.mxu0
      %v3933 = vadd.f32 %v3827, %v3904
      %v3934 = vadd.f32 %v3828, %v3907
      %v3935 = vadd.f32 %v3829, %v3910
      %v3936 = vadd.f32 %v3830, %v3913
      %v3937 = vadd.f32 %v3831, %v3916
      %v3938 = vadd.f32 %v3832, %v3919
      %v3939 = vadd.f32 %v3833, %v3922
      %v3940 = vadd.f32 %v3834, %v3925
      %v3941 = vadd.f32 %v3835, %v3928
      %v3942 = vadd.f32 %v3836, %v3931
      %v3943 = vld [vmem:[%s6] sm:$0x1]
      %v3945 = vperm.slane %v3943, 0
      %v3947 = vadd.f32 %v3933, %v3945
      %v3948 = vadd.f32 %v3934, %v3945
      %v3949 = vadd.f32 %v3935, %v3945
      %v3950 = vadd.f32 %v3936, %v3945
      %v3951 = vadd.f32 %v3937, %v3945
      %v3952 = vadd.f32 %v3938, %v3945
      %v3953 = vadd.f32 %v3939, %v3945
      %v3954 = vadd.f32 %v3940, %v3945
      %v3955 = vadd.f32 %v3941, %v3945
      %v3956 = vadd.f32 %v3942, %v3945
      %v3957 = vmax.f32 %v3947, 0.0
      %v3958 = vmax.f32 %v3948, 0.0
      %v3959 = vmax.f32 %v3949, 0.0
      %v3960 = vmax.f32 %v3950, 0.0
      %v3961 = vmax.f32 %v3951, 0.0
      %v3962 = vmax.f32 %v3952, 0.0
      %v3963 = vmax.f32 %v3953, 0.0
      %v3964 = vmax.f32 %v3954, 0.0
      %v3965 = vmax.f32 %v3955, 0.0
      %v3966 = vmax.f32 %v3956, 0.0
      %v3967 = vld [vmem:[%s18] sm:$0xff]
      %v3968 = vld [vmem:[%s18 + $0x8] sm:$0xff]
      %v3969 = vld [vmem:[%s18 + $0x10] sm:$0xff]
      %v3970 = vld [vmem:[%s18 + $0x18] sm:$0xff]
      %v3971 = vld [vmem:[%s18 + $0x20] sm:$0xff]
      %v3972 = vld [vmem:[%s18 + $0x28] sm:$0xff]
      %v3973 = vld [vmem:[%s18 + $0x30] sm:$0xff]
      %v3974 = vld [vmem:[%s18 + $0x38] sm:$0xff]
      %v3975 = vld [vmem:[%s18 + $0x40] sm:$0xff]
      %v3976 = vld [vmem:[%s18 + $0x48] sm:$0xff]
      %v3977 = vld [vmem:[%s18 + $0x50] sm:$0xff]
      %v3978 = vld [vmem:[%s18 + $0x58] sm:$0xff]
      %v3979 = vld [vmem:[%s18 + $0x60] sm:$0xf]
      %v3981 = vsel %vm2898, %v3967, 0
      %v3984 = vsel %vm2898, %v3968, 0
      %v3987 = vsel %vm2898, %v3969, 0
      %v3990 = vsel %vm2898, %v3970, 0
      %v3993 = vsel %vm2898, %v3971, 0
      %v3996 = vsel %vm2898, %v3972, 0
      %v3999 = vsel %vm2898, %v3973, 0
      %v4002 = vsel %vm2898, %v3974, 0
      %v4005 = vsel %vm2898, %v3975, 0
      %v4008 = vsel %vm2898, %v3976, 0
      %v4011 = vsel %vm2898, %v3977, 0
      %v4014 = vsel %vm2898, %v3978, 0
      %v4017 = vsel %vm2898, %v3979, 0
      %v4020 = vsel %vm1799, %v3966, 0
      %4022 = vmatpush.msra.mxu0 0.0
      %4023 = vmatpush.msra.mxu0 0.0
      %4024 = vmatpush.msra.mxu0 0.0
      %4025 = vmatpush.msra.mxu0 0.0
      %4026 = vmatpush.msra.mxu0 0.0
      %4027 = vmatpush.msra.mxu0 0.0
      %4028 = vmatpush.msra.mxu0 %v4020
      %4029 = vmatpush.msra.mxu0 %v3965
      %4030 = vmatpush.msra.mxu0 %v3964
      %4031 = vmatpush.msra.mxu0 %v3963
      %4032 = vmatpush.msra.mxu0 %v3962
      %4033 = vmatpush.msra.mxu0 %v3961
      %4034 = vmatpush.msra.mxu0 %v3960
      %4035 = vmatpush.msra.mxu0 %v3959
      %4036 = vmatpush.msra.mxu0 %v3958
      %4037 = vmatpush.msra.mxu0 %v3957
      %4038 = vmatmul.f32.gmra.mxu0 %v3981
      %v4039 = vpop.f32.mrf.mxu0
      %v4040 = vadd.f32 0.0, %v4039
      %4041 = vmatmul.f32.gmra.mxu0 %v3984
      %v4042 = vpop.f32.mrf.mxu0
      %v4043 = vadd.f32 0.0, %v4042
      %4044 = vmatmul.f32.gmra.mxu0 %v3987
      %v4045 = vpop.f32.mrf.mxu0
      %v4046 = vadd.f32 0.0, %v4045
      %4047 = vmatmul.f32.gmra.mxu0 %v3990
      %v4048 = vpop.f32.mrf.mxu0
      %v4049 = vadd.f32 0.0, %v4048
      %4050 = vmatmul.f32.gmra.mxu0 %v3993
      %v4051 = vpop.f32.mrf.mxu0
      %v4052 = vadd.f32 0.0, %v4051
      %4053 = vmatmul.f32.gmra.mxu0 %v3996
      %v4054 = vpop.f32.mrf.mxu0
      %v4055 = vadd.f32 0.0, %v4054
      %4056 = vmatmul.f32.gmra.mxu0 %v3999
      %v4057 = vpop.f32.mrf.mxu0
      %v4058 = vadd.f32 0.0, %v4057
      %4059 = vmatmul.f32.gmra.mxu0 %v4002
      %v4060 = vpop.f32.mrf.mxu0
      %v4061 = vadd.f32 0.0, %v4060
      %4062 = vmatmul.f32.gmra.mxu0 %v4005
      %v4063 = vpop.f32.mrf.mxu0
      %v4064 = vadd.f32 0.0, %v4063
      %4065 = vmatmul.f32.gmra.mxu0 %v4008
      %v4066 = vpop.f32.mrf.mxu0
      %v4067 = vadd.f32 0.0, %v4066
      %4068 = vmatmul.f32.gmra.mxu0 %v4011
      %v4069 = vpop.f32.mrf.mxu0
      %v4070 = vadd.f32 0.0, %v4069
      %4071 = vmatmul.f32.gmra.mxu0 %v4014
      %v4072 = vpop.f32.mrf.mxu0
      %v4073 = vadd.f32 0.0, %v4072
      %4074 = vmatmul.f32.gmra.mxu0 %v4017
      %v4075 = vpop.f32.mrf.mxu0
      %v4076 = vadd.f32 0.0, %v4075
      %4077 = vdwg.mxu0
      %4078 = vst.msk [vmem:[#allocation5] sm:$0xff] %vm1431, %v4040
      %4079 = vst.msk [vmem:[#allocation5 + $0x8] sm:$0xff] %vm1431, %v4043
      %4080 = vst.msk [vmem:[#allocation5 + $0x10] sm:$0xff] %vm1431, %v4046
      %4081 = vst.msk [vmem:[#allocation5 + $0x18] sm:$0xff] %vm1431, %v4049
      %4082 = vst.msk [vmem:[#allocation5 + $0x20] sm:$0xff] %vm1431, %v4052
      %4083 = vst.msk [vmem:[#allocation5 + $0x28] sm:$0xff] %vm1431, %v4055
      %4084 = vst.msk [vmem:[#allocation5 + $0x30] sm:$0xff] %vm1431, %v4058
      %4085 = vst.msk [vmem:[#allocation5 + $0x38] sm:$0xff] %vm1431, %v4061
      %4086 = vst.msk [vmem:[#allocation5 + $0x40] sm:$0xff] %vm1431, %v4064
      %4087 = vst.msk [vmem:[#allocation5 + $0x48] sm:$0xff] %vm1431, %v4067
      %4088 = vst.msk [vmem:[#allocation5 + $0x50] sm:$0xff] %vm1431, %v4070
      %4089 = vst.msk [vmem:[#allocation5 + $0x58] sm:$0xff] %vm1431, %v4073
      %4090 = vst.msk [vmem:[#allocation5 + $0x60] sm:$0xf] %vm1472, %v4076
      %v4091 = vld [vmem:[#allocation5] sm:$0xff]
      %v4092 = vld [vmem:[#allocation5 + $0x8] sm:$0xff]
      %v4093 = vld [vmem:[#allocation5 + $0x10] sm:$0xff]
      %v4094 = vld [vmem:[#allocation5 + $0x18] sm:$0xff]
      %v4095 = vld [vmem:[#allocation5 + $0x20] sm:$0x3]
      %v4096 = vld [vmem:[%s7] sm:$0xff]
      %v4097 = vld [vmem:[%s7 + $0x8] sm:$0xff]
      %v4098 = vld [vmem:[%s7 + $0x10] sm:$0xff]
      %v4099 = vld [vmem:[%s7 + $0x18] sm:$0xff]
      %v4100 = vld [vmem:[%s7 + $0x20] sm:$0xff]
      %v4101 = vld [vmem:[%s7 + $0x28] sm:$0xff]
      %v4102 = vld [vmem:[%s7 + $0x30] sm:$0xff]
      %v4103 = vld [vmem:[%s7 + $0x38] sm:$0xff]
      %v4104 = vld [vmem:[#allocation5 + $0x32] sm:$0xff]
      %v4105 = vld [vmem:[#allocation5 + $0x3a] sm:$0xff]
      %v4106 = vld [vmem:[#allocation5 + $0x42] sm:$0xff]
      %v4107 = vld [vmem:[#allocation5 + $0x4a] sm:$0xff]
      %v4108 = vld [vmem:[#allocation5 + $0x52] sm:$0x3]
      %s4109 = scalar_lea.vmem %s7, 64
      %v4110 = vld [vmem:[%s4109] sm:$0xff]
      %v4111 = vld [vmem:[%s4109 + $0x8] sm:$0xff]
      %v4112 = vld [vmem:[%s4109 + $0x10] sm:$0xff]
      %v4113 = vld [vmem:[%s4109 + $0x18] sm:$0xff]
      %v4114 = vld [vmem:[%s4109 + $0x20] sm:$0xff]
      %v4115 = vld [vmem:[%s4109 + $0x28] sm:$0xff]
      %v4116 = vld [vmem:[%s4109 + $0x30] sm:$0xff]
      %v4117 = vld [vmem:[%s4109 + $0x38] sm:$0xff]
      %v4119 = vsel %vm1431, %v4104, 0
      %v4122 = vsel %vm1431, %v4105, 0
      %v4125 = vsel %vm1431, %v4106, 0
      %v4128 = vsel %vm1431, %v4107, 0
      %v4131 = vsel %vm1431, %v4108, 0
      %4133 = vmatpush.msra.mxu0 0.0
      %4134 = vmatpush.msra.mxu0 0.0
      %4135 = vmatpush.msra.mxu0 0.0
      %4136 = vmatpush.msra.mxu0 0.0
      %4137 = vmatpush.msra.mxu0 0.0
      %4138 = vmatpush.msra.mxu0 0.0
      %4139 = vmatpush.msra.mxu0 0.0
      %4140 = vmatpush.msra.mxu0 0.0
      %4141 = vmatpush.msra.mxu0 %v4117
      %4142 = vmatpush.msra.mxu0 %v4116
      %4143 = vmatpush.msra.mxu0 %v4115
      %4144 = vmatpush.msra.mxu0 %v4114
      %4145 = vmatpush.msra.mxu0 %v4113
      %4146 = vmatpush.msra.mxu0 %v4112
      %4147 = vmatpush.msra.mxu0 %v4111
      %4148 = vmatpush.msra.mxu0 %v4110
      %4149 = vmatmul.f32.gmra.mxu0 %v4119
      %v4150 = vpop.f32.mrf.mxu0
      %v4151 = vadd.f32 0.0, %v4150
      %4152 = vmatmul.f32.gmra.mxu0 %v4122
      %v4153 = vpop.f32.mrf.mxu0
      %v4154 = vadd.f32 0.0, %v4153
      %4155 = vmatmul.f32.gmra.mxu0 %v4125
      %v4156 = vpop.f32.mrf.mxu0
      %v4157 = vadd.f32 0.0, %v4156
      %4158 = vmatmul.f32.gmra.mxu0 %v4128
      %v4159 = vpop.f32.mrf.mxu0
      %v4160 = vadd.f32 0.0, %v4159
      %4161 = vmatmul.f32.gmra.mxu0 %v4131
      %v4162 = vpop.f32.mrf.mxu0
      %v4163 = vadd.f32 0.0, %v4162
      %4164 = vdwg.mxu0
      %v4166 = vsel %vm1431, %v4091, 0
      %v4169 = vsel %vm1431, %v4092, 0
      %v4172 = vsel %vm1431, %v4093, 0
      %v4175 = vsel %vm1431, %v4094, 0
      %v4178 = vsel %vm1431, %v4095, 0
      %4180 = vmatpush.msra.mxu0 0.0
      %4181 = vmatpush.msra.mxu0 0.0
      %4182 = vmatpush.msra.mxu0 0.0
      %4183 = vmatpush.msra.mxu0 0.0
      %4184 = vmatpush.msra.mxu0 0.0
      %4185 = vmatpush.msra.mxu0 0.0
      %4186 = vmatpush.msra.mxu0 0.0
      %4187 = vmatpush.msra.mxu0 0.0
      %4188 = vmatpush.msra.mxu0 %v4103
      %4189 = vmatpush.msra.mxu0 %v4102
      %4190 = vmatpush.msra.mxu0 %v4101
      %4191 = vmatpush.msra.mxu0 %v4100
      %4192 = vmatpush.msra.mxu0 %v4099
      %4193 = vmatpush.msra.mxu0 %v4098
      %4194 = vmatpush.msra.mxu0 %v4097
      %4195 = vmatpush.msra.mxu0 %v4096
      %4196 = vmatmul.f32.gmra.mxu0 %v4166
      %v4197 = vpop.f32.mrf.mxu0
      %v4198 = vadd.f32 %v4151, %v4197
      %4199 = vmatmul.f32.gmra.mxu0 %v4169
      %v4200 = vpop.f32.mrf.mxu0
      %v4201 = vadd.f32 %v4154, %v4200
      %4202 = vmatmul.f32.gmra.mxu0 %v4172
      %v4203 = vpop.f32.mrf.mxu0
      %v4204 = vadd.f32 %v4157, %v4203
      %4205 = vmatmul.f32.gmra.mxu0 %v4175
      %v4206 = vpop.f32.mrf.mxu0
      %v4207 = vadd.f32 %v4160, %v4206
      %4208 = vmatmul.f32.gmra.mxu0 %v4178
      %v4209 = vpop.f32.mrf.mxu0
      %v4210 = vadd.f32 %v4163, %v4209
      %4211 = vdwg.mxu0
      %v4212 = vld [vmem:[#allocation5 + $0x1] sm:$0xff]
      %v4213 = vld [vmem:[#allocation5 + $0x9] sm:$0xff]
      %v4214 = vld [vmem:[#allocation5 + $0x11] sm:$0xff]
      %v4215 = vld [vmem:[#allocation5 + $0x19] sm:$0xff]
      %v4216 = vld [vmem:[#allocation5 + $0x21] sm:$0x3]
      %s4217 = scalar_lea.vmem %s7, 128
      %v4218 = vld [vmem:[%s4217] sm:$0xff]
      %v4219 = vld [vmem:[%s4217 + $0x8] sm:$0xff]
      %v4220 = vld [vmem:[%s4217 + $0x10] sm:$0xff]
      %v4221 = vld [vmem:[%s4217 + $0x18] sm:$0xff]
      %v4222 = vld [vmem:[%s4217 + $0x20] sm:$0xff]
      %v4223 = vld [vmem:[%s4217 + $0x28] sm:$0xff]
      %v4224 = vld [vmem:[%s4217 + $0x30] sm:$0xff]
      %v4225 = vld [vmem:[%s4217 + $0x38] sm:$0xff]
      %v4227 = vsel %vm1431, %v4212, 0
      %v4230 = vsel %vm1431, %v4213, 0
      %v4233 = vsel %vm1431, %v4214, 0
      %v4236 = vsel %vm1431, %v4215, 0
      %v4239 = vsel %vm1431, %v4216, 0
      %4241 = vmatpush.msra.mxu0 0.0
      %4242 = vmatpush.msra.mxu0 0.0
      %4243 = vmatpush.msra.mxu0 0.0
      %4244 = vmatpush.msra.mxu0 0.0
      %4245 = vmatpush.msra.mxu0 0.0
      %4246 = vmatpush.msra.mxu0 0.0
      %4247 = vmatpush.msra.mxu0 0.0
      %4248 = vmatpush.msra.mxu0 0.0
      %4249 = vmatpush.msra.mxu0 %v4225
      %4250 = vmatpush.msra.mxu0 %v4224
      %4251 = vmatpush.msra.mxu0 %v4223
      %4252 = vmatpush.msra.mxu0 %v4222
      %4253 = vmatpush.msra.mxu0 %v4221
      %4254 = vmatpush.msra.mxu0 %v4220
      %4255 = vmatpush.msra.mxu0 %v4219
      %4256 = vmatpush.msra.mxu0 %v4218
      %4257 = vmatmul.f32.gmra.mxu0 %v4227
      %v4258 = vpop.f32.mrf.mxu0
      %v4259 = vadd.f32 0.0, %v4258
      %4260 = vmatmul.f32.gmra.mxu0 %v4230
      %v4261 = vpop.f32.mrf.mxu0
      %v4262 = vadd.f32 0.0, %v4261
      %4263 = vmatmul.f32.gmra.mxu0 %v4233
      %v4264 = vpop.f32.mrf.mxu0
      %v4265 = vadd.f32 0.0, %v4264
      %4266 = vmatmul.f32.gmra.mxu0 %v4236
      %v4267 = vpop.f32.mrf.mxu0
      %v4268 = vadd.f32 0.0, %v4267
      %4269 = vmatmul.f32.gmra.mxu0 %v4239
      %v4270 = vpop.f32.mrf.mxu0
      %v4271 = vadd.f32 0.0, %v4270
      %4272 = vdwg.mxu0
      %v4273 = vadd.f32 %v4198, %v4259
      %v4274 = vadd.f32 %v4201, %v4262
      %v4275 = vadd.f32 %v4204, %v4265
      %v4276 = vadd.f32 %v4207, %v4268
      %v4277 = vadd.f32 %v4210, %v4271
      %v4278 = vld [vmem:[#allocation5 + $0x5] sm:$0xff]
      %v4279 = vld [vmem:[#allocation5 + $0xd] sm:$0xff]
      %v4280 = vld [vmem:[#allocation5 + $0x15] sm:$0xff]
      %v4281 = vld [vmem:[#allocation5 + $0x1d] sm:$0xff]
      %v4282 = vld [vmem:[#allocation5 + $0x25] sm:$0x3]
      %s4283 = scalar_lea.vmem %s7, 192
      %v4284 = vld [vmem:[%s4283] sm:$0xff]
      %v4285 = vld [vmem:[%s4283 + $0x8] sm:$0xff]
      %v4286 = vld [vmem:[%s4283 + $0x10] sm:$0xff]
      %v4287 = vld [vmem:[%s4283 + $0x18] sm:$0xff]
      %v4288 = vld [vmem:[%s4283 + $0x20] sm:$0xff]
      %v4289 = vld [vmem:[%s4283 + $0x28] sm:$0xff]
      %v4290 = vld [vmem:[%s4283 + $0x30] sm:$0xff]
      %v4291 = vld [vmem:[%s4283 + $0x38] sm:$0xff]
      %v4293 = vsel %vm1431, %v4278, 0
      %v4296 = vsel %vm1431, %v4279, 0
      %v4299 = vsel %vm1431, %v4280, 0
      %v4302 = vsel %vm1431, %v4281, 0
      %v4305 = vsel %vm1431, %v4282, 0
      %4307 = vmatpush.msra.mxu0 0.0
      %4308 = vmatpush.msra.mxu0 0.0
      %4309 = vmatpush.msra.mxu0 0.0
      %4310 = vmatpush.msra.mxu0 0.0
      %4311 = vmatpush.msra.mxu0 0.0
      %4312 = vmatpush.msra.mxu0 0.0
      %4313 = vmatpush.msra.mxu0 0.0
      %4314 = vmatpush.msra.mxu0 0.0
      %4315 = vmatpush.msra.mxu0 %v4291
      %4316 = vmatpush.msra.mxu0 %v4290
      %4317 = vmatpush.msra.mxu0 %v4289
      %4318 = vmatpush.msra.mxu0 %v4288
      %4319 = vmatpush.msra.mxu0 %v4287
      %4320 = vmatpush.msra.mxu0 %v4286
      %4321 = vmatpush.msra.mxu0 %v4285
      %4322 = vmatpush.msra.mxu0 %v4284
      %4323 = vmatmul.f32.gmra.mxu0 %v4293
      %v4324 = vpop.f32.mrf.mxu0
      %v4325 = vadd.f32 0.0, %v4324
      %4326 = vmatmul.f32.gmra.mxu0 %v4296
      %v4327 = vpop.f32.mrf.mxu0
      %v4328 = vadd.f32 0.0, %v4327
      %4329 = vmatmul.f32.gmra.mxu0 %v4299
      %v4330 = vpop.f32.mrf.mxu0
      %v4331 = vadd.f32 0.0, %v4330
      %4332 = vmatmul.f32.gmra.mxu0 %v4302
      %v4333 = vpop.f32.mrf.mxu0
      %v4334 = vadd.f32 0.0, %v4333
      %4335 = vmatmul.f32.gmra.mxu0 %v4305
      %v4336 = vpop.f32.mrf.mxu0
      %v4337 = vadd.f32 0.0, %v4336
      %4338 = vdwg.mxu0
      %v4339 = vadd.f32 %v4273, %v4325
      %v4340 = vadd.f32 %v4274, %v4328
      %v4341 = vadd.f32 %v4275, %v4331
      %v4342 = vadd.f32 %v4276, %v4334
      %v4343 = vadd.f32 %v4277, %v4337
      %v4344 = vld [vmem:[#allocation5 + $0x37] sm:$0xff]
      %v4345 = vld [vmem:[#allocation5 + $0x3f] sm:$0xff]
      %v4346 = vld [vmem:[#allocation5 + $0x47] sm:$0xff]
      %v4347 = vld [vmem:[#allocation5 + $0x4f] sm:$0xff]
      %v4348 = vld [vmem:[#allocation5 + $0x57] sm:$0x3]
      %s4349 = scalar_lea.vmem %s7, 256
      %v4350 = vld [vmem:[%s4349] sm:$0xff]
      %v4351 = vld [vmem:[%s4349 + $0x8] sm:$0xff]
      %v4352 = vld [vmem:[%s4349 + $0x10] sm:$0xff]
      %v4353 = vld [vmem:[%s4349 + $0x18] sm:$0xff]
      %v4354 = vld [vmem:[%s4349 + $0x20] sm:$0xff]
      %v4355 = vld [vmem:[%s4349 + $0x28] sm:$0xff]
      %v4356 = vld [vmem:[%s4349 + $0x30] sm:$0xff]
      %v4357 = vld [vmem:[%s4349 + $0x38] sm:$0xff]
      %v4359 = vsel %vm1431, %v4344, 0
      %v4362 = vsel %vm1431, %v4345, 0
      %v4365 = vsel %vm1431, %v4346, 0
      %v4368 = vsel %vm1431, %v4347, 0
      %v4371 = vsel %vm1431, %v4348, 0
      %4373 = vmatpush.msra.mxu0 0.0
      %4374 = vmatpush.msra.mxu0 0.0
      %4375 = vmatpush.msra.mxu0 0.0
      %4376 = vmatpush.msra.mxu0 0.0
      %4377 = vmatpush.msra.mxu0 0.0
      %4378 = vmatpush.msra.mxu0 0.0
      %4379 = vmatpush.msra.mxu0 0.0
      %4380 = vmatpush.msra.mxu0 0.0
      %4381 = vmatpush.msra.mxu0 %v4357
      %4382 = vmatpush.msra.mxu0 %v4356
      %4383 = vmatpush.msra.mxu0 %v4355
      %4384 = vmatpush.msra.mxu0 %v4354
      %4385 = vmatpush.msra.mxu0 %v4353
      %4386 = vmatpush.msra.mxu0 %v4352
      %4387 = vmatpush.msra.mxu0 %v4351
      %4388 = vmatpush.msra.mxu0 %v4350
      %4389 = vmatmul.f32.gmra.mxu0 %v4359
      %v4390 = vpop.f32.mrf.mxu0
      %v4391 = vadd.f32 0.0, %v4390
      %4392 = vmatmul.f32.gmra.mxu0 %v4362
      %v4393 = vpop.f32.mrf.mxu0
      %v4394 = vadd.f32 0.0, %v4393
      %4395 = vmatmul.f32.gmra.mxu0 %v4365
      %v4396 = vpop.f32.mrf.mxu0
      %v4397 = vadd.f32 0.0, %v4396
      %4398 = vmatmul.f32.gmra.mxu0 %v4368
      %v4399 = vpop.f32.mrf.mxu0
      %v4400 = vadd.f32 0.0, %v4399
      %4401 = vmatmul.f32.gmra.mxu0 %v4371
      %v4402 = vpop.f32.mrf.mxu0
      %v4403 = vadd.f32 0.0, %v4402
      %4404 = vdwg.mxu0
      %v4405 = vadd.f32 %v4339, %v4391
      %v4406 = vadd.f32 %v4340, %v4394
      %v4407 = vadd.f32 %v4341, %v4397
      %v4408 = vadd.f32 %v4342, %v4400
      %v4409 = vadd.f32 %v4343, %v4403
      %v4410 = vld [vmem:[#allocation5 + $0x6] sm:$0xff]
      %v4411 = vld [vmem:[#allocation5 + $0xe] sm:$0xff]
      %v4412 = vld [vmem:[#allocation5 + $0x16] sm:$0xff]
      %v4413 = vld [vmem:[#allocation5 + $0x1e] sm:$0xff]
      %v4414 = vld [vmem:[#allocation5 + $0x26] sm:$0x3]
      %s4415 = scalar_lea.vmem %s7, 320
      %v4416 = vld [vmem:[%s4415] sm:$0xff]
      %v4417 = vld [vmem:[%s4415 + $0x8] sm:$0xff]
      %v4418 = vld [vmem:[%s4415 + $0x10] sm:$0xff]
      %v4419 = vld [vmem:[%s4415 + $0x18] sm:$0xff]
      %v4420 = vld [vmem:[%s4415 + $0x20] sm:$0xff]
      %v4421 = vld [vmem:[%s4415 + $0x28] sm:$0xff]
      %v4422 = vld [vmem:[%s4415 + $0x30] sm:$0xff]
      %v4423 = vld [vmem:[%s4415 + $0x38] sm:$0xff]
      %v4425 = vsel %vm1431, %v4410, 0
      %v4428 = vsel %vm1431, %v4411, 0
      %v4431 = vsel %vm1431, %v4412, 0
      %v4434 = vsel %vm1431, %v4413, 0
      %v4437 = vsel %vm1431, %v4414, 0
      %4439 = vmatpush.msra.mxu0 0.0
      %4440 = vmatpush.msra.mxu0 0.0
      %4441 = vmatpush.msra.mxu0 0.0
      %4442 = vmatpush.msra.mxu0 0.0
      %4443 = vmatpush.msra.mxu0 0.0
      %4444 = vmatpush.msra.mxu0 0.0
      %4445 = vmatpush.msra.mxu0 0.0
      %4446 = vmatpush.msra.mxu0 0.0
      %4447 = vmatpush.msra.mxu0 %v4423
      %4448 = vmatpush.msra.mxu0 %v4422
      %4449 = vmatpush.msra.mxu0 %v4421
      %4450 = vmatpush.msra.mxu0 %v4420
      %4451 = vmatpush.msra.mxu0 %v4419
      %4452 = vmatpush.msra.mxu0 %v4418
      %4453 = vmatpush.msra.mxu0 %v4417
      %4454 = vmatpush.msra.mxu0 %v4416
      %4455 = vmatmul.f32.gmra.mxu0 %v4425
      %v4456 = vpop.f32.mrf.mxu0
      %v4457 = vadd.f32 0.0, %v4456
      %4458 = vmatmul.f32.gmra.mxu0 %v4428
      %v4459 = vpop.f32.mrf.mxu0
      %v4460 = vadd.f32 0.0, %v4459
      %4461 = vmatmul.f32.gmra.mxu0 %v4431
      %v4462 = vpop.f32.mrf.mxu0
      %v4463 = vadd.f32 0.0, %v4462
      %4464 = vmatmul.f32.gmra.mxu0 %v4434
      %v4465 = vpop.f32.mrf.mxu0
      %v4466 = vadd.f32 0.0, %v4465
      %4467 = vmatmul.f32.gmra.mxu0 %v4437
      %v4468 = vpop.f32.mrf.mxu0
      %v4469 = vadd.f32 0.0, %v4468
      %4470 = vdwg.mxu0
      %v4471 = vadd.f32 %v4405, %v4457
      %v4472 = vadd.f32 %v4406, %v4460
      %v4473 = vadd.f32 %v4407, %v4463
      %v4474 = vadd.f32 %v4408, %v4466
      %v4475 = vadd.f32 %v4409, %v4469
      %v4476 = vld [vmem:[#allocation5 + $0xa] sm:$0xff]
      %v4477 = vld [vmem:[#allocation5 + $0x12] sm:$0xff]
      %v4478 = vld [vmem:[#allocation5 + $0x1a] sm:$0xff]
      %v4479 = vld [vmem:[#allocation5 + $0x22] sm:$0xff]
      %v4480 = vld [vmem:[#allocation5 + $0x2a] sm:$0x3]
      %s4481 = scalar_lea.vmem %s7, 384
      %v4482 = vld [vmem:[%s4481] sm:$0xff]
      %v4483 = vld [vmem:[%s4481 + $0x8] sm:$0xff]
      %v4484 = vld [vmem:[%s4481 + $0x10] sm:$0xff]
      %v4485 = vld [vmem:[%s4481 + $0x18] sm:$0xff]
      %v4486 = vld [vmem:[%s4481 + $0x20] sm:$0xff]
      %v4487 = vld [vmem:[%s4481 + $0x28] sm:$0xff]
      %v4488 = vld [vmem:[%s4481 + $0x30] sm:$0xff]
      %v4489 = vld [vmem:[%s4481 + $0x38] sm:$0xff]
      %v4491 = vsel %vm1431, %v4476, 0
      %v4494 = vsel %vm1431, %v4477, 0
      %v4497 = vsel %vm1431, %v4478, 0
      %v4500 = vsel %vm1431, %v4479, 0
      %v4503 = vsel %vm1431, %v4480, 0
      %4505 = vmatpush.msra.mxu0 0.0
      %4506 = vmatpush.msra.mxu0 0.0
      %4507 = vmatpush.msra.mxu0 0.0
      %4508 = vmatpush.msra.mxu0 0.0
      %4509 = vmatpush.msra.mxu0 0.0
      %4510 = vmatpush.msra.mxu0 0.0
      %4511 = vmatpush.msra.mxu0 0.0
      %4512 = vmatpush.msra.mxu0 0.0
      %4513 = vmatpush.msra.mxu0 %v4489
      %4514 = vmatpush.msra.mxu0 %v4488
      %4515 = vmatpush.msra.mxu0 %v4487
      %4516 = vmatpush.msra.mxu0 %v4486
      %4517 = vmatpush.msra.mxu0 %v4485
      %4518 = vmatpush.msra.mxu0 %v4484
      %4519 = vmatpush.msra.mxu0 %v4483
      %4520 = vmatpush.msra.mxu0 %v4482
      %4521 = vmatmul.f32.gmra.mxu0 %v4491
      %v4522 = vpop.f32.mrf.mxu0
      %v4523 = vadd.f32 0.0, %v4522
      %4524 = vmatmul.f32.gmra.mxu0 %v4494
      %v4525 = vpop.f32.mrf.mxu0
      %v4526 = vadd.f32 0.0, %v4525
      %4527 = vmatmul.f32.gmra.mxu0 %v4497
      %v4528 = vpop.f32.mrf.mxu0
      %v4529 = vadd.f32 0.0, %v4528
      %4530 = vmatmul.f32.gmra.mxu0 %v4500
      %v4531 = vpop.f32.mrf.mxu0
      %v4532 = vadd.f32 0.0, %v4531
      %4533 = vmatmul.f32.gmra.mxu0 %v4503
      %v4534 = vpop.f32.mrf.mxu0
      %v4535 = vadd.f32 0.0, %v4534
      %4536 = vdwg.mxu0
      %v4537 = vadd.f32 %v4471, %v4523
      %v4538 = vadd.f32 %v4472, %v4526
      %v4539 = vadd.f32 %v4473, %v4529
      %v4540 = vadd.f32 %v4474, %v4532
      %v4541 = vadd.f32 %v4475, %v4535
      %v4542 = vld [vmem:[#allocation5 + $0x3c] sm:$0xff]
      %v4543 = vld [vmem:[#allocation5 + $0x44] sm:$0xff]
      %v4544 = vld [vmem:[#allocation5 + $0x4c] sm:$0xff]
      %v4545 = vld [vmem:[#allocation5 + $0x54] sm:$0xff]
      %v4546 = vld [vmem:[#allocation5 + $0x5c] sm:$0x3]
      %s4547 = scalar_lea.vmem %s7, 448
      %v4548 = vld [vmem:[%s4547] sm:$0xff]
      %v4549 = vld [vmem:[%s4547 + $0x8] sm:$0xff]
      %v4550 = vld [vmem:[%s4547 + $0x10] sm:$0xff]
      %v4551 = vld [vmem:[%s4547 + $0x18] sm:$0xff]
      %v4552 = vld [vmem:[%s4547 + $0x20] sm:$0xff]
      %v4553 = vld [vmem:[%s4547 + $0x28] sm:$0xff]
      %v4554 = vld [vmem:[%s4547 + $0x30] sm:$0xff]
      %v4555 = vld [vmem:[%s4547 + $0x38] sm:$0xff]
      %v4557 = vsel %vm1431, %v4542, 0
      %v4560 = vsel %vm1431, %v4543, 0
      %v4563 = vsel %vm1431, %v4544, 0
      %v4566 = vsel %vm1431, %v4545, 0
      %v4569 = vsel %vm1431, %v4546, 0
      %4571 = vmatpush.msra.mxu0 0.0
      %4572 = vmatpush.msra.mxu0 0.0
      %4573 = vmatpush.msra.mxu0 0.0
      %4574 = vmatpush.msra.mxu0 0.0
      %4575 = vmatpush.msra.mxu0 0.0
      %4576 = vmatpush.msra.mxu0 0.0
      %4577 = vmatpush.msra.mxu0 0.0
      %4578 = vmatpush.msra.mxu0 0.0
      %4579 = vmatpush.msra.mxu0 %v4555
      %4580 = vmatpush.msra.mxu0 %v4554
      %4581 = vmatpush.msra.mxu0 %v4553
      %4582 = vmatpush.msra.mxu0 %v4552
      %4583 = vmatpush.msra.mxu0 %v4551
      %4584 = vmatpush.msra.mxu0 %v4550
      %4585 = vmatpush.msra.mxu0 %v4549
      %4586 = vmatpush.msra.mxu0 %v4548
      %4587 = vmatmul.f32.gmra.mxu0 %v4557
      %v4588 = vpop.f32.mrf.mxu0
      %v4589 = vadd.f32 0.0, %v4588
      %4590 = vmatmul.f32.gmra.mxu0 %v4560
      %v4591 = vpop.f32.mrf.mxu0
      %v4592 = vadd.f32 0.0, %v4591
      %4593 = vmatmul.f32.gmra.mxu0 %v4563
      %v4594 = vpop.f32.mrf.mxu0
      %v4595 = vadd.f32 0.0, %v4594
      %4596 = vmatmul.f32.gmra.mxu0 %v4566
      %v4597 = vpop.f32.mrf.mxu0
      %v4598 = vadd.f32 0.0, %v4597
      %4599 = vmatmul.f32.gmra.mxu0 %v4569
      %v4600 = vpop.f32.mrf.mxu0
      %v4601 = vadd.f32 0.0, %v4600
      %4602 = vdwg.mxu0
      %v4603 = vadd.f32 %v4537, %v4589
      %v4604 = vadd.f32 %v4538, %v4592
      %v4605 = vadd.f32 %v4539, %v4595
      %v4606 = vadd.f32 %v4540, %v4598
      %v4607 = vadd.f32 %v4541, %v4601
      %v4608 = vld [vmem:[#allocation5 + $0xb] sm:$0xff]
      %v4609 = vld [vmem:[#allocation5 + $0x13] sm:$0xff]
      %v4610 = vld [vmem:[#allocation5 + $0x1b] sm:$0xff]
      %v4611 = vld [vmem:[#allocation5 + $0x23] sm:$0xff]
      %v4612 = vld [vmem:[#allocation5 + $0x2b] sm:$0x3]
      %s4613 = scalar_lea.vmem %s7, 512
      %v4614 = vld [vmem:[%s4613] sm:$0xff]
      %v4615 = vld [vmem:[%s4613 + $0x8] sm:$0xff]
      %v4616 = vld [vmem:[%s4613 + $0x10] sm:$0xff]
      %v4617 = vld [vmem:[%s4613 + $0x18] sm:$0xff]
      %v4618 = vld [vmem:[%s4613 + $0x20] sm:$0xff]
      %v4619 = vld [vmem:[%s4613 + $0x28] sm:$0xff]
      %v4620 = vld [vmem:[%s4613 + $0x30] sm:$0xff]
      %v4621 = vld [vmem:[%s4613 + $0x38] sm:$0xff]
      %v4623 = vsel %vm1431, %v4608, 0
      %v4626 = vsel %vm1431, %v4609, 0
      %v4629 = vsel %vm1431, %v4610, 0
      %v4632 = vsel %vm1431, %v4611, 0
      %v4635 = vsel %vm1431, %v4612, 0
      %4637 = vmatpush.msra.mxu0 0.0
      %4638 = vmatpush.msra.mxu0 0.0
      %4639 = vmatpush.msra.mxu0 0.0
      %4640 = vmatpush.msra.mxu0 0.0
      %4641 = vmatpush.msra.mxu0 0.0
      %4642 = vmatpush.msra.mxu0 0.0
      %4643 = vmatpush.msra.mxu0 0.0
      %4644 = vmatpush.msra.mxu0 0.0
      %4645 = vmatpush.msra.mxu0 %v4621
      %4646 = vmatpush.msra.mxu0 %v4620
      %4647 = vmatpush.msra.mxu0 %v4619
      %4648 = vmatpush.msra.mxu0 %v4618
      %4649 = vmatpush.msra.mxu0 %v4617
      %4650 = vmatpush.msra.mxu0 %v4616
      %4651 = vmatpush.msra.mxu0 %v4615
      %4652 = vmatpush.msra.mxu0 %v4614
      %4653 = vmatmul.f32.gmra.mxu0 %v4623
      %v4654 = vpop.f32.mrf.mxu0
      %v4655 = vadd.f32 0.0, %v4654
      %4656 = vmatmul.f32.gmra.mxu0 %v4626
      %v4657 = vpop.f32.mrf.mxu0
      %v4658 = vadd.f32 0.0, %v4657
      %4659 = vmatmul.f32.gmra.mxu0 %v4629
      %v4660 = vpop.f32.mrf.mxu0
      %v4661 = vadd.f32 0.0, %v4660
      %4662 = vmatmul.f32.gmra.mxu0 %v4632
      %v4663 = vpop.f32.mrf.mxu0
      %v4664 = vadd.f32 0.0, %v4663
      %4665 = vmatmul.f32.gmra.mxu0 %v4635
      %v4666 = vpop.f32.mrf.mxu0
      %v4667 = vadd.f32 0.0, %v4666
      %4668 = vdwg.mxu0
      %v4669 = vadd.f32 %v4603, %v4655
      %v4670 = vadd.f32 %v4604, %v4658
      %v4671 = vadd.f32 %v4605, %v4661
      %v4672 = vadd.f32 %v4606, %v4664
      %v4673 = vadd.f32 %v4607, %v4667
      %v4674 = vld [vmem:[%s8] sm:$0x1]
      %v4676 = vperm.slane %v4674, 0
      %v4678 = vadd.f32 %v4669, %v4676
      %v4679 = vadd.f32 %v4670, %v4676
      %v4680 = vadd.f32 %v4671, %v4676
      %v4681 = vadd.f32 %v4672, %v4676
      %v4682 = vadd.f32 %v4673, %v4676
      %v4683 = vmax.f32 %v4678, 0.0
      %v4684 = vmax.f32 %v4679, 0.0
      %v4685 = vmax.f32 %v4680, 0.0
      %v4686 = vmax.f32 %v4681, 0.0
      %v4687 = vmax.f32 %v4682, 0.0
      %v4688 = vld [vmem:[%s19] sm:$0xff]
      %v4689 = vld [vmem:[%s19 + $0x8] sm:$0xff]
      %v4690 = vld [vmem:[%s19 + $0x10] sm:$0xff]
      %v4691 = vld [vmem:[%s19 + $0x18] sm:$0xff]
      %v4692 = vld [vmem:[%s19 + $0x20] sm:$0xf]
      %vm4693 = vcmask 277504
      %v4695 = vsel %vm4693, %v4688, 0
      %v4698 = vsel %vm4693, %v4689, 0
      %v4701 = vsel %vm4693, %v4690, 0
      %v4704 = vsel %vm4693, %v4691, 0
      %v4707 = vsel %vm4693, %v4692, 0
      %vm4709 = vcmask 1041408
      %v4711 = vsel %vm4709, %v4687, 0
      %4713 = vmatpush.msra.mxu0 0.0
      %4714 = vmatpush.msra.mxu0 0.0
      %4715 = vmatpush.msra.mxu0 0.0
      %4716 = vmatpush.msra.mxu0 0.0
      %4717 = vmatpush.msra.mxu0 0.0
      %4718 = vmatpush.msra.mxu0 0.0
      %4719 = vmatpush.msra.mxu0 0.0
      %4720 = vmatpush.msra.mxu0 0.0
      %4721 = vmatpush.msra.mxu0 0.0
      %4722 = vmatpush.msra.mxu0 0.0
      %4723 = vmatpush.msra.mxu0 0.0
      %4724 = vmatpush.msra.mxu0 %v4711
      %4725 = vmatpush.msra.mxu0 %v4686
      %4726 = vmatpush.msra.mxu0 %v4685
      %4727 = vmatpush.msra.mxu0 %v4684
      %4728 = vmatpush.msra.mxu0 %v4683
      %4729 = vmatmul.f32.gmra.mxu0 %v4695
      %v4730 = vpop.f32.mrf.mxu0
      %v4731 = vadd.f32 0.0, %v4730
      %4732 = vmatmul.f32.gmra.mxu0 %v4698
      %v4733 = vpop.f32.mrf.mxu0
      %v4734 = vadd.f32 0.0, %v4733
      %4735 = vmatmul.f32.gmra.mxu0 %v4701
      %v4736 = vpop.f32.mrf.mxu0
      %v4737 = vadd.f32 0.0, %v4736
      %4738 = vmatmul.f32.gmra.mxu0 %v4704
      %v4739 = vpop.f32.mrf.mxu0
      %v4740 = vadd.f32 0.0, %v4739
      %4741 = vmatmul.f32.gmra.mxu0 %v4707
      %v4742 = vpop.f32.mrf.mxu0
      %v4743 = vadd.f32 0.0, %v4742
      %4744 = vdwg.mxu0
      %4745 = vst [vmem:[#allocation6] sm:$0xff] %v4731
      %4746 = vst [vmem:[#allocation6 + $0x8] sm:$0xff] %v4734
      %4747 = vst [vmem:[#allocation6 + $0x10] sm:$0xff] %v4737
      %4748 = vst [vmem:[#allocation6 + $0x18] sm:$0xff] %v4740
      %4749 = vst [vmem:[#allocation6 + $0x20] sm:$0xf] %v4743
      %v4750 = vld [vmem:[#allocation6] sm:$0xff]
      %v4751 = vld [vmem:[#allocation6 + $0x8] sm:$0xff]
      %v4752 = vld [vmem:[#allocation6 + $0x10] sm:$0x3f]
      %v4753 = vld [vmem:[%s9] sm:$0xff]
      %v4754 = vld [vmem:[%s9 + $0x8] sm:$0xff]
      %v4755 = vld [vmem:[%s9 + $0x10] sm:$0xff]
      %v4756 = vld [vmem:[%s9 + $0x18] sm:$0xff]
      %v4757 = vld [vmem:[%s9 + $0x20] sm:$0xff]
      %v4758 = vld [vmem:[%s9 + $0x28] sm:$0xff]
      %v4759 = vld [vmem:[%s9 + $0x30] sm:$0xff]
      %v4760 = vld [vmem:[%s9 + $0x38] sm:$0xff]
      %v4761 = vld [vmem:[%s9 + $0x40] sm:$0xff]
      %v4762 = vld [vmem:[%s9 + $0x48] sm:$0xff]
      %v4763 = vld [vmem:[%s9 + $0x50] sm:$0xff]
      %v4764 = vld [vmem:[%s9 + $0x58] sm:$0xff]
      %v4765 = vld [vmem:[%s9 + $0x60] sm:$0xff]
      %v4766 = vld [vmem:[%s9 + $0x68] sm:$0xff]
      %v4767 = vld [vmem:[%s9 + $0x70] sm:$0xff]
      %v4768 = vld [vmem:[%s9 + $0x78] sm:$0xff]
      %v4769 = vld [vmem:[#allocation6 + $0x1] sm:$0xff]
      %v4770 = vld [vmem:[#allocation6 + $0x9] sm:$0xff]
      %v4771 = vld [vmem:[#allocation6 + $0x11] sm:$0x3f]
      %s4772 = scalar_lea.vmem %s9, 128
      %v4773 = vld [vmem:[%s4772] sm:$0xff]
      %v4774 = vld [vmem:[%s4772 + $0x8] sm:$0xff]
      %v4775 = vld [vmem:[%s4772 + $0x10] sm:$0xff]
      %v4776 = vld [vmem:[%s4772 + $0x18] sm:$0xff]
      %v4777 = vld [vmem:[%s4772 + $0x20] sm:$0xff]
      %v4778 = vld [vmem:[%s4772 + $0x28] sm:$0xff]
      %v4779 = vld [vmem:[%s4772 + $0x30] sm:$0xff]
      %v4780 = vld [vmem:[%s4772 + $0x38] sm:$0xff]
      %v4781 = vld [vmem:[%s4772 + $0x40] sm:$0xff]
      %v4782 = vld [vmem:[%s4772 + $0x48] sm:$0xff]
      %v4783 = vld [vmem:[%s4772 + $0x50] sm:$0xff]
      %v4784 = vld [vmem:[%s4772 + $0x58] sm:$0xff]
      %v4785 = vld [vmem:[%s4772 + $0x60] sm:$0xff]
      %v4786 = vld [vmem:[%s4772 + $0x68] sm:$0xff]
      %v4787 = vld [vmem:[%s4772 + $0x70] sm:$0xff]
      %v4788 = vld [vmem:[%s4772 + $0x78] sm:$0xff]
      %4789 = vmatpush.msra.mxu0 %v4788
      %4790 = vmatpush.msra.mxu0 %v4787
      %4791 = vmatpush.msra.mxu0 %v4786
      %4792 = vmatpush.msra.mxu0 %v4785
      %4793 = vmatpush.msra.mxu0 %v4784
      %4794 = vmatpush.msra.mxu0 %v4783
      %4795 = vmatpush.msra.mxu0 %v4782
      %4796 = vmatpush.msra.mxu0 %v4781
      %4797 = vmatpush.msra.mxu0 %v4780
      %4798 = vmatpush.msra.mxu0 %v4779
      %4799 = vmatpush.msra.mxu0 %v4778
      %4800 = vmatpush.msra.mxu0 %v4777
      %4801 = vmatpush.msra.mxu0 %v4776
      %4802 = vmatpush.msra.mxu0 %v4775
      %4803 = vmatpush.msra.mxu0 %v4774
      %4804 = vmatpush.msra.mxu0 %v4773
      %4805 = vmatmul.f32.gmra.mxu0 %v4769
      %v4806 = vpop.f32.mrf.mxu0
      %v4807 = vadd.f32 0.0, %v4806
      %4808 = vmatmul.f32.gmra.mxu0 %v4770
      %v4809 = vpop.f32.mrf.mxu0
      %v4810 = vadd.f32 0.0, %v4809
      %4811 = vmatmul.f32.gmra.mxu0 %v4771
      %v4812 = vpop.f32.mrf.mxu0
      %v4813 = vadd.f32 0.0, %v4812
      %4814 = vdwg.mxu0
      %4815 = vmatpush.msra.mxu0 %v4768
      %4816 = vmatpush.msra.mxu0 %v4767
      %4817 = vmatpush.msra.mxu0 %v4766
      %4818 = vmatpush.msra.mxu0 %v4765
      %4819 = vmatpush.msra.mxu0 %v4764
      %4820 = vmatpush.msra.mxu0 %v4763
      %4821 = vmatpush.msra.mxu0 %v4762
      %4822 = vmatpush.msra.mxu0 %v4761
      %4823 = vmatpush.msra.mxu0 %v4760
      %4824 = vmatpush.msra.mxu0 %v4759
      %4825 = vmatpush.msra.mxu0 %v4758
      %4826 = vmatpush.msra.mxu0 %v4757
      %4827 = vmatpush.msra.mxu0 %v4756
      %4828 = vmatpush.msra.mxu0 %v4755
      %4829 = vmatpush.msra.mxu0 %v4754
      %4830 = vmatpush.msra.mxu0 %v4753
      %4831 = vmatmul.f32.gmra.mxu0 %v4750
      %v4832 = vpop.f32.mrf.mxu0
      %v4833 = vadd.f32 %v4807, %v4832
      %4834 = vmatmul.f32.gmra.mxu0 %v4751
      %v4835 = vpop.f32.mrf.mxu0
      %v4836 = vadd.f32 %v4810, %v4835
      %4837 = vmatmul.f32.gmra.mxu0 %v4752
      %v4838 = vpop.f32.mrf.mxu0
      %v4839 = vadd.f32 %v4813, %v4838
      %4840 = vdwg.mxu0
      %v4841 = vld [vmem:[#allocation6 + $0x2] sm:$0xff]
      %v4842 = vld [vmem:[#allocation6 + $0xa] sm:$0xff]
      %v4843 = vld [vmem:[#allocation6 + $0x12] sm:$0x3f]
      %s4844 = scalar_lea.vmem %s9, 256
      %v4845 = vld [vmem:[%s4844] sm:$0xff]
      %v4846 = vld [vmem:[%s4844 + $0x8] sm:$0xff]
      %v4847 = vld [vmem:[%s4844 + $0x10] sm:$0xff]
      %v4848 = vld [vmem:[%s4844 + $0x18] sm:$0xff]
      %v4849 = vld [vmem:[%s4844 + $0x20] sm:$0xff]
      %v4850 = vld [vmem:[%s4844 + $0x28] sm:$0xff]
      %v4851 = vld [vmem:[%s4844 + $0x30] sm:$0xff]
      %v4852 = vld [vmem:[%s4844 + $0x38] sm:$0xff]
      %v4853 = vld [vmem:[%s4844 + $0x40] sm:$0xff]
      %v4854 = vld [vmem:[%s4844 + $0x48] sm:$0xff]
      %v4855 = vld [vmem:[%s4844 + $0x50] sm:$0xff]
      %v4856 = vld [vmem:[%s4844 + $0x58] sm:$0xff]
      %v4857 = vld [vmem:[%s4844 + $0x60] sm:$0xff]
      %v4858 = vld [vmem:[%s4844 + $0x68] sm:$0xff]
      %v4859 = vld [vmem:[%s4844 + $0x70] sm:$0xff]
      %v4860 = vld [vmem:[%s4844 + $0x78] sm:$0xff]
      %4861 = vmatpush.msra.mxu0 %v4860
      %4862 = vmatpush.msra.mxu0 %v4859
      %4863 = vmatpush.msra.mxu0 %v4858
      %4864 = vmatpush.msra.mxu0 %v4857
      %4865 = vmatpush.msra.mxu0 %v4856
      %4866 = vmatpush.msra.mxu0 %v4855
      %4867 = vmatpush.msra.mxu0 %v4854
      %4868 = vmatpush.msra.mxu0 %v4853
      %4869 = vmatpush.msra.mxu0 %v4852
      %4870 = vmatpush.msra.mxu0 %v4851
      %4871 = vmatpush.msra.mxu0 %v4850
      %4872 = vmatpush.msra.mxu0 %v4849
      %4873 = vmatpush.msra.mxu0 %v4848
      %4874 = vmatpush.msra.mxu0 %v4847
      %4875 = vmatpush.msra.mxu0 %v4846
      %4876 = vmatpush.msra.mxu0 %v4845
      %4877 = vmatmul.f32.gmra.mxu0 %v4841
      %v4878 = vpop.f32.mrf.mxu0
      %v4879 = vadd.f32 0.0, %v4878
      %4880 = vmatmul.f32.gmra.mxu0 %v4842
      %v4881 = vpop.f32.mrf.mxu0
      %v4882 = vadd.f32 0.0, %v4881
      %4883 = vmatmul.f32.gmra.mxu0 %v4843
      %v4884 = vpop.f32.mrf.mxu0
      %v4885 = vadd.f32 0.0, %v4884
      %4886 = vdwg.mxu0
      %v4887 = vadd.f32 %v4833, %v4879
      %v4888 = vadd.f32 %v4836, %v4882
      %v4889 = vadd.f32 %v4839, %v4885
      %v4890 = vld [vmem:[#allocation6 + $0x6] sm:$0xff]
      %v4891 = vld [vmem:[#allocation6 + $0xe] sm:$0xff]
      %v4892 = vld [vmem:[#allocation6 + $0x16] sm:$0x3f]
      %s4893 = scalar_lea.vmem %s9, 384
      %v4894 = vld [vmem:[%s4893] sm:$0xff]
      %v4895 = vld [vmem:[%s4893 + $0x8] sm:$0xff]
      %v4896 = vld [vmem:[%s4893 + $0x10] sm:$0xff]
      %v4897 = vld [vmem:[%s4893 + $0x18] sm:$0xff]
      %v4898 = vld [vmem:[%s4893 + $0x20] sm:$0xff]
      %v4899 = vld [vmem:[%s4893 + $0x28] sm:$0xff]
      %v4900 = vld [vmem:[%s4893 + $0x30] sm:$0xff]
      %v4901 = vld [vmem:[%s4893 + $0x38] sm:$0xff]
      %v4902 = vld [vmem:[%s4893 + $0x40] sm:$0xff]
      %v4903 = vld [vmem:[%s4893 + $0x48] sm:$0xff]
      %v4904 = vld [vmem:[%s4893 + $0x50] sm:$0xff]
      %v4905 = vld [vmem:[%s4893 + $0x58] sm:$0xff]
      %v4906 = vld [vmem:[%s4893 + $0x60] sm:$0xff]
      %v4907 = vld [vmem:[%s4893 + $0x68] sm:$0xff]
      %v4908 = vld [vmem:[%s4893 + $0x70] sm:$0xff]
      %v4909 = vld [vmem:[%s4893 + $0x78] sm:$0xff]
      %4910 = vmatpush.msra.mxu0 %v4909
      %4911 = vmatpush.msra.mxu0 %v4908
      %4912 = vmatpush.msra.mxu0 %v4907
      %4913 = vmatpush.msra.mxu0 %v4906
      %4914 = vmatpush.msra.mxu0 %v4905
      %4915 = vmatpush.msra.mxu0 %v4904
      %4916 = vmatpush.msra.mxu0 %v4903
      %4917 = vmatpush.msra.mxu0 %v4902
      %4918 = vmatpush.msra.mxu0 %v4901
      %4919 = vmatpush.msra.mxu0 %v4900
      %4920 = vmatpush.msra.mxu0 %v4899
      %4921 = vmatpush.msra.mxu0 %v4898
      %4922 = vmatpush.msra.mxu0 %v4897
      %4923 = vmatpush.msra.mxu0 %v4896
      %4924 = vmatpush.msra.mxu0 %v4895
      %4925 = vmatpush.msra.mxu0 %v4894
      %4926 = vmatmul.f32.gmra.mxu0 %v4890
      %v4927 = vpop.f32.mrf.mxu0
      %v4928 = vadd.f32 0.0, %v4927
      %4929 = vmatmul.f32.gmra.mxu0 %v4891
      %v4930 = vpop.f32.mrf.mxu0
      %v4931 = vadd.f32 0.0, %v4930
      %4932 = vmatmul.f32.gmra.mxu0 %v4892
      %v4933 = vpop.f32.mrf.mxu0
      %v4934 = vadd.f32 0.0, %v4933
      %4935 = vdwg.mxu0
      %v4936 = vadd.f32 %v4887, %v4928
      %v4937 = vadd.f32 %v4888, %v4931
      %v4938 = vadd.f32 %v4889, %v4934
      %v4939 = vld [vmem:[#allocation6 + $0x7] sm:$0xff]
      %v4940 = vld [vmem:[#allocation6 + $0xf] sm:$0xff]
      %v4941 = vld [vmem:[#allocation6 + $0x17] sm:$0x3f]
      %s4942 = scalar_lea.vmem %s9, 512
      %v4943 = vld [vmem:[%s4942] sm:$0xff]
      %v4944 = vld [vmem:[%s4942 + $0x8] sm:$0xff]
      %v4945 = vld [vmem:[%s4942 + $0x10] sm:$0xff]
      %v4946 = vld [vmem:[%s4942 + $0x18] sm:$0xff]
      %v4947 = vld [vmem:[%s4942 + $0x20] sm:$0xff]
      %v4948 = vld [vmem:[%s4942 + $0x28] sm:$0xff]
      %v4949 = vld [vmem:[%s4942 + $0x30] sm:$0xff]
      %v4950 = vld [vmem:[%s4942 + $0x38] sm:$0xff]
      %v4951 = vld [vmem:[%s4942 + $0x40] sm:$0xff]
      %v4952 = vld [vmem:[%s4942 + $0x48] sm:$0xff]
      %v4953 = vld [vmem:[%s4942 + $0x50] sm:$0xff]
      %v4954 = vld [vmem:[%s4942 + $0x58] sm:$0xff]
      %v4955 = vld [vmem:[%s4942 + $0x60] sm:$0xff]
      %v4956 = vld [vmem:[%s4942 + $0x68] sm:$0xff]
      %v4957 = vld [vmem:[%s4942 + $0x70] sm:$0xff]
      %v4958 = vld [vmem:[%s4942 + $0x78] sm:$0xff]
      %4959 = vmatpush.msra.mxu0 %v4958
      %4960 = vmatpush.msra.mxu0 %v4957
      %4961 = vmatpush.msra.mxu0 %v4956
      %4962 = vmatpush.msra.mxu0 %v4955
      %4963 = vmatpush.msra.mxu0 %v4954
      %4964 = vmatpush.msra.mxu0 %v4953
      %4965 = vmatpush.msra.mxu0 %v4952
      %4966 = vmatpush.msra.mxu0 %v4951
      %4967 = vmatpush.msra.mxu0 %v4950
      %4968 = vmatpush.msra.mxu0 %v4949
      %4969 = vmatpush.msra.mxu0 %v4948
      %4970 = vmatpush.msra.mxu0 %v4947
      %4971 = vmatpush.msra.mxu0 %v4946
      %4972 = vmatpush.msra.mxu0 %v4945
      %4973 = vmatpush.msra.mxu0 %v4944
      %4974 = vmatpush.msra.mxu0 %v4943
      %4975 = vmatmul.f32.gmra.mxu0 %v4939
      %v4976 = vpop.f32.mrf.mxu0
      %v4977 = vadd.f32 0.0, %v4976
      %4978 = vmatmul.f32.gmra.mxu0 %v4940
      %v4979 = vpop.f32.mrf.mxu0
      %v4980 = vadd.f32 0.0, %v4979
      %4981 = vmatmul.f32.gmra.mxu0 %v4941
      %v4982 = vpop.f32.mrf.mxu0
      %v4983 = vadd.f32 0.0, %v4982
      %4984 = vdwg.mxu0
      %v4985 = vadd.f32 %v4936, %v4977
      %v4986 = vadd.f32 %v4937, %v4980
      %v4987 = vadd.f32 %v4938, %v4983
      %v4988 = vld [vmem:[#allocation6 + $0x8] sm:$0xff]
      %v4989 = vld [vmem:[#allocation6 + $0x10] sm:$0xff]
      %v4990 = vld [vmem:[#allocation6 + $0x18] sm:$0x3f]
      %s4991 = scalar_lea.vmem %s9, 640
      %v4992 = vld [vmem:[%s4991] sm:$0xff]
      %v4993 = vld [vmem:[%s4991 + $0x8] sm:$0xff]
      %v4994 = vld [vmem:[%s4991 + $0x10] sm:$0xff]
      %v4995 = vld [vmem:[%s4991 + $0x18] sm:$0xff]
      %v4996 = vld [vmem:[%s4991 + $0x20] sm:$0xff]
      %v4997 = vld [vmem:[%s4991 + $0x28] sm:$0xff]
      %v4998 = vld [vmem:[%s4991 + $0x30] sm:$0xff]
      %v4999 = vld [vmem:[%s4991 + $0x38] sm:$0xff]
      %v5000 = vld [vmem:[%s4991 + $0x40] sm:$0xff]
      %v5001 = vld [vmem:[%s4991 + $0x48] sm:$0xff]
      %v5002 = vld [vmem:[%s4991 + $0x50] sm:$0xff]
      %v5003 = vld [vmem:[%s4991 + $0x58] sm:$0xff]
      %v5004 = vld [vmem:[%s4991 + $0x60] sm:$0xff]
      %v5005 = vld [vmem:[%s4991 + $0x68] sm:$0xff]
      %v5006 = vld [vmem:[%s4991 + $0x70] sm:$0xff]
      %v5007 = vld [vmem:[%s4991 + $0x78] sm:$0xff]
      %5008 = vmatpush.msra.mxu0 %v5007
      %5009 = vmatpush.msra.mxu0 %v5006
      %5010 = vmatpush.msra.mxu0 %v5005
      %5011 = vmatpush.msra.mxu0 %v5004
      %5012 = vmatpush.msra.mxu0 %v5003
      %5013 = vmatpush.msra.mxu0 %v5002
      %5014 = vmatpush.msra.mxu0 %v5001
      %5015 = vmatpush.msra.mxu0 %v5000
      %5016 = vmatpush.msra.mxu0 %v4999
      %5017 = vmatpush.msra.mxu0 %v4998
      %5018 = vmatpush.msra.mxu0 %v4997
      %5019 = vmatpush.msra.mxu0 %v4996
      %5020 = vmatpush.msra.mxu0 %v4995
      %5021 = vmatpush.msra.mxu0 %v4994
      %5022 = vmatpush.msra.mxu0 %v4993
      %5023 = vmatpush.msra.mxu0 %v4992
      %5024 = vmatmul.f32.gmra.mxu0 %v4988
      %v5025 = vpop.f32.mrf.mxu0
      %v5026 = vadd.f32 0.0, %v5025
      %5027 = vmatmul.f32.gmra.mxu0 %v4989
      %v5028 = vpop.f32.mrf.mxu0
      %v5029 = vadd.f32 0.0, %v5028
      %5030 = vmatmul.f32.gmra.mxu0 %v4990
      %v5031 = vpop.f32.mrf.mxu0
      %v5032 = vadd.f32 0.0, %v5031
      %5033 = vdwg.mxu0
      %v5034 = vadd.f32 %v4985, %v5026
      %v5035 = vadd.f32 %v4986, %v5029
      %v5036 = vadd.f32 %v4987, %v5032
      %v5037 = vld [vmem:[#allocation6 + $0xc] sm:$0xff]
      %v5038 = vld [vmem:[#allocation6 + $0x14] sm:$0xff]
      %v5039 = vld [vmem:[#allocation6 + $0x1c] sm:$0x3f]
      %s5040 = scalar_lea.vmem %s9, 768
      %v5041 = vld [vmem:[%s5040] sm:$0xff]
      %v5042 = vld [vmem:[%s5040 + $0x8] sm:$0xff]
      %v5043 = vld [vmem:[%s5040 + $0x10] sm:$0xff]
      %v5044 = vld [vmem:[%s5040 + $0x18] sm:$0xff]
      %v5045 = vld [vmem:[%s5040 + $0x20] sm:$0xff]
      %v5046 = vld [vmem:[%s5040 + $0x28] sm:$0xff]
      %v5047 = vld [vmem:[%s5040 + $0x30] sm:$0xff]
      %v5048 = vld [vmem:[%s5040 + $0x38] sm:$0xff]
      %v5049 = vld [vmem:[%s5040 + $0x40] sm:$0xff]
      %v5050 = vld [vmem:[%s5040 + $0x48] sm:$0xff]
      %v5051 = vld [vmem:[%s5040 + $0x50] sm:$0xff]
      %v5052 = vld [vmem:[%s5040 + $0x58] sm:$0xff]
      %v5053 = vld [vmem:[%s5040 + $0x60] sm:$0xff]
      %v5054 = vld [vmem:[%s5040 + $0x68] sm:$0xff]
      %v5055 = vld [vmem:[%s5040 + $0x70] sm:$0xff]
      %v5056 = vld [vmem:[%s5040 + $0x78] sm:$0xff]
      %5057 = vmatpush.msra.mxu0 %v5056
      %5058 = vmatpush.msra.mxu0 %v5055
      %5059 = vmatpush.msra.mxu0 %v5054
      %5060 = vmatpush.msra.mxu0 %v5053
      %5061 = vmatpush.msra.mxu0 %v5052
      %5062 = vmatpush.msra.mxu0 %v5051
      %5063 = vmatpush.msra.mxu0 %v5050
      %5064 = vmatpush.msra.mxu0 %v5049
      %5065 = vmatpush.msra.mxu0 %v5048
      %5066 = vmatpush.msra.mxu0 %v5047
      %5067 = vmatpush.msra.mxu0 %v5046
      %5068 = vmatpush.msra.mxu0 %v5045
      %5069 = vmatpush.msra.mxu0 %v5044
      %5070 = vmatpush.msra.mxu0 %v5043
      %5071 = vmatpush.msra.mxu0 %v5042
      %5072 = vmatpush.msra.mxu0 %v5041
      %5073 = vmatmul.f32.gmra.mxu0 %v5037
      %v5074 = vpop.f32.mrf.mxu0
      %v5075 = vadd.f32 0.0, %v5074
      %5076 = vmatmul.f32.gmra.mxu0 %v5038
      %v5077 = vpop.f32.mrf.mxu0
      %v5078 = vadd.f32 0.0, %v5077
      %5079 = vmatmul.f32.gmra.mxu0 %v5039
      %v5080 = vpop.f32.mrf.mxu0
      %v5081 = vadd.f32 0.0, %v5080
      %5082 = vdwg.mxu0
      %v5083 = vadd.f32 %v5034, %v5075
      %v5084 = vadd.f32 %v5035, %v5078
      %v5085 = vadd.f32 %v5036, %v5081
      %v5086 = vld [vmem:[#allocation6 + $0xd] sm:$0xff]
      %v5087 = vld [vmem:[#allocation6 + $0x15] sm:$0xff]
      %v5088 = vld [vmem:[#allocation6 + $0x1d] sm:$0x3f]
      %s5089 = scalar_lea.vmem %s9, 896
      %v5090 = vld [vmem:[%s5089] sm:$0xff]
      %v5091 = vld [vmem:[%s5089 + $0x8] sm:$0xff]
      %v5092 = vld [vmem:[%s5089 + $0x10] sm:$0xff]
      %v5093 = vld [vmem:[%s5089 + $0x18] sm:$0xff]
      %v5094 = vld [vmem:[%s5089 + $0x20] sm:$0xff]
      %v5095 = vld [vmem:[%s5089 + $0x28] sm:$0xff]
      %v5096 = vld [vmem:[%s5089 + $0x30] sm:$0xff]
      %v5097 = vld [vmem:[%s5089 + $0x38] sm:$0xff]
      %v5098 = vld [vmem:[%s5089 + $0x40] sm:$0xff]
      %v5099 = vld [vmem:[%s5089 + $0x48] sm:$0xff]
      %v5100 = vld [vmem:[%s5089 + $0x50] sm:$0xff]
      %v5101 = vld [vmem:[%s5089 + $0x58] sm:$0xff]
      %v5102 = vld [vmem:[%s5089 + $0x60] sm:$0xff]
      %v5103 = vld [vmem:[%s5089 + $0x68] sm:$0xff]
      %v5104 = vld [vmem:[%s5089 + $0x70] sm:$0xff]
      %v5105 = vld [vmem:[%s5089 + $0x78] sm:$0xff]
      %5106 = vmatpush.msra.mxu0 %v5105
      %5107 = vmatpush.msra.mxu0 %v5104
      %5108 = vmatpush.msra.mxu0 %v5103
      %5109 = vmatpush.msra.mxu0 %v5102
      %5110 = vmatpush.msra.mxu0 %v5101
      %5111 = vmatpush.msra.mxu0 %v5100
      %5112 = vmatpush.msra.mxu0 %v5099
      %5113 = vmatpush.msra.mxu0 %v5098
      %5114 = vmatpush.msra.mxu0 %v5097
      %5115 = vmatpush.msra.mxu0 %v5096
      %5116 = vmatpush.msra.mxu0 %v5095
      %5117 = vmatpush.msra.mxu0 %v5094
      %5118 = vmatpush.msra.mxu0 %v5093
      %5119 = vmatpush.msra.mxu0 %v5092
      %5120 = vmatpush.msra.mxu0 %v5091
      %5121 = vmatpush.msra.mxu0 %v5090
      %5122 = vmatmul.f32.gmra.mxu0 %v5086
      %v5123 = vpop.f32.mrf.mxu0
      %v5124 = vadd.f32 0.0, %v5123
      %5125 = vmatmul.f32.gmra.mxu0 %v5087
      %v5126 = vpop.f32.mrf.mxu0
      %v5127 = vadd.f32 0.0, %v5126
      %5128 = vmatmul.f32.gmra.mxu0 %v5088
      %v5129 = vpop.f32.mrf.mxu0
      %v5130 = vadd.f32 0.0, %v5129
      %5131 = vdwg.mxu0
      %v5132 = vadd.f32 %v5083, %v5124
      %v5133 = vadd.f32 %v5084, %v5127
      %v5134 = vadd.f32 %v5085, %v5130
      %v5135 = vld [vmem:[#allocation6 + $0xe] sm:$0xff]
      %v5136 = vld [vmem:[#allocation6 + $0x16] sm:$0xff]
      %v5137 = vld [vmem:[#allocation6 + $0x1e] sm:$0x3f]
      %s5138 = scalar_lea.vmem %s9, 1024
      %v5139 = vld [vmem:[%s5138] sm:$0xff]
      %v5140 = vld [vmem:[%s5138 + $0x8] sm:$0xff]
      %v5141 = vld [vmem:[%s5138 + $0x10] sm:$0xff]
      %v5142 = vld [vmem:[%s5138 + $0x18] sm:$0xff]
      %v5143 = vld [vmem:[%s5138 + $0x20] sm:$0xff]
      %v5144 = vld [vmem:[%s5138 + $0x28] sm:$0xff]
      %v5145 = vld [vmem:[%s5138 + $0x30] sm:$0xff]
      %v5146 = vld [vmem:[%s5138 + $0x38] sm:$0xff]
      %v5147 = vld [vmem:[%s5138 + $0x40] sm:$0xff]
      %v5148 = vld [vmem:[%s5138 + $0x48] sm:$0xff]
      %v5149 = vld [vmem:[%s5138 + $0x50] sm:$0xff]
      %v5150 = vld [vmem:[%s5138 + $0x58] sm:$0xff]
      %v5151 = vld [vmem:[%s5138 + $0x60] sm:$0xff]
      %v5152 = vld [vmem:[%s5138 + $0x68] sm:$0xff]
      %v5153 = vld [vmem:[%s5138 + $0x70] sm:$0xff]
      %v5154 = vld [vmem:[%s5138 + $0x78] sm:$0xff]
      %5155 = vmatpush.msra.mxu0 %v5154
      %5156 = vmatpush.msra.mxu0 %v5153
      %5157 = vmatpush.msra.mxu0 %v5152
      %5158 = vmatpush.msra.mxu0 %v5151
      %5159 = vmatpush.msra.mxu0 %v5150
      %5160 = vmatpush.msra.mxu0 %v5149
      %5161 = vmatpush.msra.mxu0 %v5148
      %5162 = vmatpush.msra.mxu0 %v5147
      %5163 = vmatpush.msra.mxu0 %v5146
      %5164 = vmatpush.msra.mxu0 %v5145
      %5165 = vmatpush.msra.mxu0 %v5144
      %5166 = vmatpush.msra.mxu0 %v5143
      %5167 = vmatpush.msra.mxu0 %v5142
      %5168 = vmatpush.msra.mxu0 %v5141
      %5169 = vmatpush.msra.mxu0 %v5140
      %5170 = vmatpush.msra.mxu0 %v5139
      %5171 = vmatmul.f32.gmra.mxu0 %v5135
      %v5172 = vpop.f32.mrf.mxu0
      %v5173 = vadd.f32 0.0, %v5172
      %5174 = vmatmul.f32.gmra.mxu0 %v5136
      %v5175 = vpop.f32.mrf.mxu0
      %v5176 = vadd.f32 0.0, %v5175
      %5177 = vmatmul.f32.gmra.mxu0 %v5137
      %v5178 = vpop.f32.mrf.mxu0
      %v5179 = vadd.f32 0.0, %v5178
      %5180 = vdwg.mxu0
      %v5181 = vadd.f32 %v5132, %v5173
      %v5182 = vadd.f32 %v5133, %v5176
      %v5183 = vadd.f32 %v5134, %v5179
      %v5184 = vld [vmem:[%s10] sm:$0x1]
      %v5186 = vperm.slane %v5184, 0
      %v5188 = vadd.f32 %v5181, %v5186
      %v5189 = vadd.f32 %v5182, %v5186
      %v5190 = vadd.f32 %v5183, %v5186
      %v5191 = vmax.f32 %v5188, 0.0
      %v5192 = vmax.f32 %v5189, 0.0
      %v5193 = vmax.f32 %v5190, 0.0
      %v5194 = vld [vmem:[%s20] sm:$0xff]
      %v5195 = vld [vmem:[%s20 + $0x8] sm:$0xff]
      %v5196 = vld [vmem:[%s20 + $0x10] sm:$0xff]
      %v5197 = vld [vmem:[%s20 + $0x18] sm:$0xff]
      %v5198 = vld [vmem:[%s20 + $0x20] sm:$0xf]
      %vm5199 = vcmask 179200
      %v5201 = vsel %vm5199, %v5194, 0
      %v5204 = vsel %vm5199, %v5195, 0
      %v5207 = vsel %vm5199, %v5196, 0
      %v5210 = vsel %vm5199, %v5197, 0
      %v5213 = vsel %vm5199, %v5198, 0
      %v5216 = vsel %vm1799, %v5193, 0
      %5218 = vmatpush.msra.mxu0 0.0
      %5219 = vmatpush.msra.mxu0 0.0
      %5220 = vmatpush.msra.mxu0 0.0
      %5221 = vmatpush.msra.mxu0 0.0
      %5222 = vmatpush.msra.mxu0 0.0
      %5223 = vmatpush.msra.mxu0 0.0
      %5224 = vmatpush.msra.mxu0 0.0
      %5225 = vmatpush.msra.mxu0 0.0
      %5226 = vmatpush.msra.mxu0 0.0
      %5227 = vmatpush.msra.mxu0 0.0
      %5228 = vmatpush.msra.mxu0 0.0
      %5229 = vmatpush.msra.mxu0 0.0
      %5230 = vmatpush.msra.mxu0 0.0
      %5231 = vmatpush.msra.mxu0 %v5216
      %5232 = vmatpush.msra.mxu0 %v5192
      %5233 = vmatpush.msra.mxu0 %v5191
      %5234 = vmatmul.f32.gmra.mxu0 %v5201
      %v5235 = vpop.f32.mrf.mxu0
      %v5236 = vadd.f32 0.0, %v5235
      %5237 = vmatmul.f32.gmra.mxu0 %v5204
      %v5238 = vpop.f32.mrf.mxu0
      %v5239 = vadd.f32 0.0, %v5238
      %5240 = vmatmul.f32.gmra.mxu0 %v5207
      %v5241 = vpop.f32.mrf.mxu0
      %v5242 = vadd.f32 0.0, %v5241
      %5243 = vmatmul.f32.gmra.mxu0 %v5210
      %v5244 = vpop.f32.mrf.mxu0
      %v5245 = vadd.f32 0.0, %v5244
      %5246 = vmatmul.f32.gmra.mxu0 %v5213
      %v5247 = vpop.f32.mrf.mxu0
      %v5248 = vadd.f32 0.0, %v5247
      %5249 = vdwg.mxu0
      %5250 = vst [vmem:[#allocation7] sm:$0xff] %v5236
      %5251 = vst [vmem:[#allocation7 + $0x8] sm:$0xff] %v5239
      %5252 = vst [vmem:[#allocation7 + $0x10] sm:$0xff] %v5242
      %5253 = vst [vmem:[#allocation7 + $0x18] sm:$0xff] %v5245
      %5254 = vst [vmem:[#allocation7 + $0x20] sm:$0xf] %v5248
      %v5255 = vld [vmem:[#allocation7] sm:$0xff]
      %v5256 = vld [vmem:[%s11] sm:$0xff]
      %v5257 = vld [vmem:[%s11 + $0x8] sm:$0xff]
      %v5258 = vld [vmem:[%s11 + $0x10] sm:$0xff]
      %v5259 = vld [vmem:[%s11 + $0x18] sm:$0xff]
      %v5260 = vld [vmem:[%s11 + $0x20] sm:$0xff]
      %v5261 = vld [vmem:[%s11 + $0x28] sm:$0xff]
      %v5262 = vld [vmem:[%s11 + $0x30] sm:$0xff]
      %v5263 = vld [vmem:[%s11 + $0x38] sm:$0xff]
      %v5264 = vld [vmem:[%s11 + $0x40] sm:$0xff]
      %v5265 = vld [vmem:[%s11 + $0x48] sm:$0xff]
      %v5266 = vld [vmem:[%s11 + $0x50] sm:$0xff]
      %v5267 = vld [vmem:[%s11 + $0x58] sm:$0xff]
      %v5268 = vld [vmem:[%s11 + $0x60] sm:$0xff]
      %v5269 = vld [vmem:[%s11 + $0x68] sm:$0xff]
      %v5270 = vld [vmem:[%s11 + $0x70] sm:$0xff]
      %v5271 = vld [vmem:[%s11 + $0x78] sm:$0xff]
      %v5272 = vld [vmem:[%s11 + $0x80] sm:$0xff]
      %v5273 = vld [vmem:[%s11 + $0x88] sm:$0xff]
      %v5274 = vld [vmem:[%s11 + $0x90] sm:$0xff]
      %v5275 = vld [vmem:[%s11 + $0x98] sm:$0xff]
      %v5276 = vld [vmem:[%s11 + $0xa0] sm:$0xff]
      %v5277 = vld [vmem:[%s11 + $0xa8] sm:$0xff]
      %v5278 = vld [vmem:[%s11 + $0xb0] sm:$0xff]
      %v5279 = vld [vmem:[%s11 + $0xb8] sm:$0xff]
      %v5280 = vld [vmem:[%s11 + $0xc0] sm:$0xff]
      %v5281 = vld [vmem:[%s11 + $0xc8] sm:$0xff]
      %v5282 = vld [vmem:[%s11 + $0xd0] sm:$0xff]
      %v5283 = vld [vmem:[%s11 + $0xd8] sm:$0xff]
      %v5284 = vld [vmem:[%s11 + $0xe0] sm:$0xff]
      %v5285 = vld [vmem:[%s11 + $0xe8] sm:$0xff]
      %v5286 = vld [vmem:[%s11 + $0xf0] sm:$0xff]
      %v5287 = vld [vmem:[%s11 + $0xf8] sm:$0xff]
      %v5288 = vld [vmem:[#allocation7 + $0x12] sm:$0xff]
      %s5289 = scalar_lea.vmem %s11, 256
      %v5290 = vld [vmem:[%s5289] sm:$0xff]
      %v5291 = vld [vmem:[%s5289 + $0x8] sm:$0xff]
      %v5292 = vld [vmem:[%s5289 + $0x10] sm:$0xff]
      %v5293 = vld [vmem:[%s5289 + $0x18] sm:$0xff]
      %v5294 = vld [vmem:[%s5289 + $0x20] sm:$0xff]
      %v5295 = vld [vmem:[%s5289 + $0x28] sm:$0xff]
      %v5296 = vld [vmem:[%s5289 + $0x30] sm:$0xff]
      %v5297 = vld [vmem:[%s5289 + $0x38] sm:$0xff]
      %v5298 = vld [vmem:[%s5289 + $0x40] sm:$0xff]
      %v5299 = vld [vmem:[%s5289 + $0x48] sm:$0xff]
      %v5300 = vld [vmem:[%s5289 + $0x50] sm:$0xff]
      %v5301 = vld [vmem:[%s5289 + $0x58] sm:$0xff]
      %v5302 = vld [vmem:[%s5289 + $0x60] sm:$0xff]
      %v5303 = vld [vmem:[%s5289 + $0x68] sm:$0xff]
      %v5304 = vld [vmem:[%s5289 + $0x70] sm:$0xff]
      %v5305 = vld [vmem:[%s5289 + $0x78] sm:$0xff]
      %v5306 = vld [vmem:[%s5289 + $0x80] sm:$0xff]
      %v5307 = vld [vmem:[%s5289 + $0x88] sm:$0xff]
      %v5308 = vld [vmem:[%s5289 + $0x90] sm:$0xff]
      %v5309 = vld [vmem:[%s5289 + $0x98] sm:$0xff]
      %v5310 = vld [vmem:[%s5289 + $0xa0] sm:$0xff]
      %v5311 = vld [vmem:[%s5289 + $0xa8] sm:$0xff]
      %v5312 = vld [vmem:[%s5289 + $0xb0] sm:$0xff]
      %v5313 = vld [vmem:[%s5289 + $0xb8] sm:$0xff]
      %v5314 = vld [vmem:[%s5289 + $0xc0] sm:$0xff]
      %v5315 = vld [vmem:[%s5289 + $0xc8] sm:$0xff]
      %v5316 = vld [vmem:[%s5289 + $0xd0] sm:$0xff]
      %v5317 = vld [vmem:[%s5289 + $0xd8] sm:$0xff]
      %v5318 = vld [vmem:[%s5289 + $0xe0] sm:$0xff]
      %v5319 = vld [vmem:[%s5289 + $0xe8] sm:$0xff]
      %v5320 = vld [vmem:[%s5289 + $0xf0] sm:$0xff]
      %v5321 = vld [vmem:[%s5289 + $0xf8] sm:$0xff]
      %5322 = vmatpush.msra.mxu0 %v5320
      %5323 = vmatpush.msra.mxu0 %v5318
      %5324 = vmatpush.msra.mxu0 %v5316
      %5325 = vmatpush.msra.mxu0 %v5314
      %5326 = vmatpush.msra.mxu0 %v5312
      %5327 = vmatpush.msra.mxu0 %v5310
      %5328 = vmatpush.msra.mxu0 %v5308
      %5329 = vmatpush.msra.mxu0 %v5306
      %5330 = vmatpush.msra.mxu0 %v5304
      %5331 = vmatpush.msra.mxu0 %v5302
      %5332 = vmatpush.msra.mxu0 %v5300
      %5333 = vmatpush.msra.mxu0 %v5298
      %5334 = vmatpush.msra.mxu0 %v5296
      %5335 = vmatpush.msra.mxu0 %v5294
      %5336 = vmatpush.msra.mxu0 %v5292
      %5337 = vmatpush.msra.mxu0 %v5290
      %5338 = vmatmul.f32.gmra.mxu0 %v5288
      %v5339 = vpop.f32.mrf.mxu0
      %v5340 = vadd.f32 0.0, %v5339
      %5341 = vdwg.mxu0
      %5342 = vmatpush.msra.mxu0 %v5321
      %5343 = vmatpush.msra.mxu0 %v5319
      %5344 = vmatpush.msra.mxu0 %v5317
      %5345 = vmatpush.msra.mxu0 %v5315
      %5346 = vmatpush.msra.mxu0 %v5313
      %5347 = vmatpush.msra.mxu0 %v5311
      %5348 = vmatpush.msra.mxu0 %v5309
      %5349 = vmatpush.msra.mxu0 %v5307
      %5350 = vmatpush.msra.mxu0 %v5305
      %5351 = vmatpush.msra.mxu0 %v5303
      %5352 = vmatpush.msra.mxu0 %v5301
      %5353 = vmatpush.msra.mxu0 %v5299
      %5354 = vmatpush.msra.mxu0 %v5297
      %5355 = vmatpush.msra.mxu0 %v5295
      %5356 = vmatpush.msra.mxu0 %v5293
      %5357 = vmatpush.msra.mxu0 %v5291
      %5358 = vmatmul.f32.gmra.mxu0 %v5288
      %v5359 = vpop.f32.mrf.mxu0
      %v5360 = vadd.f32 0.0, %v5359
      %5361 = vdwg.mxu0
      %5362 = vmatpush.msra.mxu0 %v5286
      %5363 = vmatpush.msra.mxu0 %v5284
      %5364 = vmatpush.msra.mxu0 %v5282
      %5365 = vmatpush.msra.mxu0 %v5280
      %5366 = vmatpush.msra.mxu0 %v5278
      %5367 = vmatpush.msra.mxu0 %v5276
      %5368 = vmatpush.msra.mxu0 %v5274
      %5369 = vmatpush.msra.mxu0 %v5272
      %5370 = vmatpush.msra.mxu0 %v5270
      %5371 = vmatpush.msra.mxu0 %v5268
      %5372 = vmatpush.msra.mxu0 %v5266
      %5373 = vmatpush.msra.mxu0 %v5264
      %5374 = vmatpush.msra.mxu0 %v5262
      %5375 = vmatpush.msra.mxu0 %v5260
      %5376 = vmatpush.msra.mxu0 %v5258
      %5377 = vmatpush.msra.mxu0 %v5256
      %5378 = vmatmul.f32.gmra.mxu0 %v5255
      %v5379 = vpop.f32.mrf.mxu0
      %v5380 = vadd.f32 %v5340, %v5379
      %5381 = vdwg.mxu0
      %5382 = vmatpush.msra.mxu0 %v5287
      %5383 = vmatpush.msra.mxu0 %v5285
      %5384 = vmatpush.msra.mxu0 %v5283
      %5385 = vmatpush.msra.mxu0 %v5281
      %5386 = vmatpush.msra.mxu0 %v5279
      %5387 = vmatpush.msra.mxu0 %v5277
      %5388 = vmatpush.msra.mxu0 %v5275
      %5389 = vmatpush.msra.mxu0 %v5273
      %5390 = vmatpush.msra.mxu0 %v5271
      %5391 = vmatpush.msra.mxu0 %v5269
      %5392 = vmatpush.msra.mxu0 %v5267
      %5393 = vmatpush.msra.mxu0 %v5265
      %5394 = vmatpush.msra.mxu0 %v5263
      %5395 = vmatpush.msra.mxu0 %v5261
      %5396 = vmatpush.msra.mxu0 %v5259
      %5397 = vmatpush.msra.mxu0 %v5257
      %5398 = vmatmul.f32.gmra.mxu0 %v5255
      %v5399 = vpop.f32.mrf.mxu0
      %v5400 = vadd.f32 %v5360, %v5399
      %5401 = vdwg.mxu0
      %v5402 = vld [vmem:[#allocation7 + $0x1] sm:$0xff]
      %s5403 = scalar_lea.vmem %s11, 512
      %v5404 = vld [vmem:[%s5403] sm:$0xff]
      %v5405 = vld [vmem:[%s5403 + $0x8] sm:$0xff]
      %v5406 = vld [vmem:[%s5403 + $0x10] sm:$0xff]
      %v5407 = vld [vmem:[%s5403 + $0x18] sm:$0xff]
      %v5408 = vld [vmem:[%s5403 + $0x20] sm:$0xff]
      %v5409 = vld [vmem:[%s5403 + $0x28] sm:$0xff]
      %v5410 = vld [vmem:[%s5403 + $0x30] sm:$0xff]
      %v5411 = vld [vmem:[%s5403 + $0x38] sm:$0xff]
      %v5412 = vld [vmem:[%s5403 + $0x40] sm:$0xff]
      %v5413 = vld [vmem:[%s5403 + $0x48] sm:$0xff]
      %v5414 = vld [vmem:[%s5403 + $0x50] sm:$0xff]
      %v5415 = vld [vmem:[%s5403 + $0x58] sm:$0xff]
      %v5416 = vld [vmem:[%s5403 + $0x60] sm:$0xff]
      %v5417 = vld [vmem:[%s5403 + $0x68] sm:$0xff]
      %v5418 = vld [vmem:[%s5403 + $0x70] sm:$0xff]
      %v5419 = vld [vmem:[%s5403 + $0x78] sm:$0xff]
      %v5420 = vld [vmem:[%s5403 + $0x80] sm:$0xff]
      %v5421 = vld [vmem:[%s5403 + $0x88] sm:$0xff]
      %v5422 = vld [vmem:[%s5403 + $0x90] sm:$0xff]
      %v5423 = vld [vmem:[%s5403 + $0x98] sm:$0xff]
      %v5424 = vld [vmem:[%s5403 + $0xa0] sm:$0xff]
      %v5425 = vld [vmem:[%s5403 + $0xa8] sm:$0xff]
      %v5426 = vld [vmem:[%s5403 + $0xb0] sm:$0xff]
      %v5427 = vld [vmem:[%s5403 + $0xb8] sm:$0xff]
      %v5428 = vld [vmem:[%s5403 + $0xc0] sm:$0xff]
      %v5429 = vld [vmem:[%s5403 + $0xc8] sm:$0xff]
      %v5430 = vld [vmem:[%s5403 + $0xd0] sm:$0xff]
      %v5431 = vld [vmem:[%s5403 + $0xd8] sm:$0xff]
      %v5432 = vld [vmem:[%s5403 + $0xe0] sm:$0xff]
      %v5433 = vld [vmem:[%s5403 + $0xe8] sm:$0xff]
      %v5434 = vld [vmem:[%s5403 + $0xf0] sm:$0xff]
      %v5435 = vld [vmem:[%s5403 + $0xf8] sm:$0xff]
      %5436 = vmatpush.msra.mxu0 %v5434
      %5437 = vmatpush.msra.mxu0 %v5432
      %5438 = vmatpush.msra.mxu0 %v5430
      %5439 = vmatpush.msra.mxu0 %v5428
      %5440 = vmatpush.msra.mxu0 %v5426
      %5441 = vmatpush.msra.mxu0 %v5424
      %5442 = vmatpush.msra.mxu0 %v5422
      %5443 = vmatpush.msra.mxu0 %v5420
      %5444 = vmatpush.msra.mxu0 %v5418
      %5445 = vmatpush.msra.mxu0 %v5416
      %5446 = vmatpush.msra.mxu0 %v5414
      %5447 = vmatpush.msra.mxu0 %v5412
      %5448 = vmatpush.msra.mxu0 %v5410
      %5449 = vmatpush.msra.mxu0 %v5408
      %5450 = vmatpush.msra.mxu0 %v5406
      %5451 = vmatpush.msra.mxu0 %v5404
      %5452 = vmatmul.f32.gmra.mxu0 %v5402
      %v5453 = vpop.f32.mrf.mxu0
      %v5454 = vadd.f32 0.0, %v5453
      %5455 = vdwg.mxu0
      %5456 = vmatpush.msra.mxu0 %v5435
      %5457 = vmatpush.msra.mxu0 %v5433
      %5458 = vmatpush.msra.mxu0 %v5431
      %5459 = vmatpush.msra.mxu0 %v5429
      %5460 = vmatpush.msra.mxu0 %v5427
      %5461 = vmatpush.msra.mxu0 %v5425
      %5462 = vmatpush.msra.mxu0 %v5423
      %5463 = vmatpush.msra.mxu0 %v5421
      %5464 = vmatpush.msra.mxu0 %v5419
      %5465 = vmatpush.msra.mxu0 %v5417
      %5466 = vmatpush.msra.mxu0 %v5415
      %5467 = vmatpush.msra.mxu0 %v5413
      %5468 = vmatpush.msra.mxu0 %v5411
      %5469 = vmatpush.msra.mxu0 %v5409
      %5470 = vmatpush.msra.mxu0 %v5407
      %5471 = vmatpush.msra.mxu0 %v5405
      %5472 = vmatmul.f32.gmra.mxu0 %v5402
      %v5473 = vpop.f32.mrf.mxu0
      %v5474 = vadd.f32 0.0, %v5473
      %5475 = vdwg.mxu0
      %v5476 = vadd.f32 %v5380, %v5454
      %v5477 = vadd.f32 %v5400, %v5474
      %v5478 = vld [vmem:[#allocation7 + $0x3] sm:$0xff]
      %s5479 = scalar_lea.vmem %s11, 768
      %v5480 = vld [vmem:[%s5479] sm:$0xff]
      %v5481 = vld [vmem:[%s5479 + $0x8] sm:$0xff]
      %v5482 = vld [vmem:[%s5479 + $0x10] sm:$0xff]
      %v5483 = vld [vmem:[%s5479 + $0x18] sm:$0xff]
      %v5484 = vld [vmem:[%s5479 + $0x20] sm:$0xff]
      %v5485 = vld [vmem:[%s5479 + $0x28] sm:$0xff]
      %v5486 = vld [vmem:[%s5479 + $0x30] sm:$0xff]
      %v5487 = vld [vmem:[%s5479 + $0x38] sm:$0xff]
      %v5488 = vld [vmem:[%s5479 + $0x40] sm:$0xff]
      %v5489 = vld [vmem:[%s5479 + $0x48] sm:$0xff]
      %v5490 = vld [vmem:[%s5479 + $0x50] sm:$0xff]
      %v5491 = vld [vmem:[%s5479 + $0x58] sm:$0xff]
      %v5492 = vld [vmem:[%s5479 + $0x60] sm:$0xff]
      %v5493 = vld [vmem:[%s5479 + $0x68] sm:$0xff]
      %v5494 = vld [vmem:[%s5479 + $0x70] sm:$0xff]
      %v5495 = vld [vmem:[%s5479 + $0x78] sm:$0xff]
      %v5496 = vld [vmem:[%s5479 + $0x80] sm:$0xff]
      %v5497 = vld [vmem:[%s5479 + $0x88] sm:$0xff]
      %v5498 = vld [vmem:[%s5479 + $0x90] sm:$0xff]
      %v5499 = vld [vmem:[%s5479 + $0x98] sm:$0xff]
      %v5500 = vld [vmem:[%s5479 + $0xa0] sm:$0xff]
      %v5501 = vld [vmem:[%s5479 + $0xa8] sm:$0xff]
      %v5502 = vld [vmem:[%s5479 + $0xb0] sm:$0xff]
      %v5503 = vld [vmem:[%s5479 + $0xb8] sm:$0xff]
      %v5504 = vld [vmem:[%s5479 + $0xc0] sm:$0xff]
      %v5505 = vld [vmem:[%s5479 + $0xc8] sm:$0xff]
      %v5506 = vld [vmem:[%s5479 + $0xd0] sm:$0xff]
      %v5507 = vld [vmem:[%s5479 + $0xd8] sm:$0xff]
      %v5508 = vld [vmem:[%s5479 + $0xe0] sm:$0xff]
      %v5509 = vld [vmem:[%s5479 + $0xe8] sm:$0xff]
      %v5510 = vld [vmem:[%s5479 + $0xf0] sm:$0xff]
      %v5511 = vld [vmem:[%s5479 + $0xf8] sm:$0xff]
      %5512 = vmatpush.msra.mxu0 %v5510
      %5513 = vmatpush.msra.mxu0 %v5508
      %5514 = vmatpush.msra.mxu0 %v5506
      %5515 = vmatpush.msra.mxu0 %v5504
      %5516 = vmatpush.msra.mxu0 %v5502
      %5517 = vmatpush.msra.mxu0 %v5500
      %5518 = vmatpush.msra.mxu0 %v5498
      %5519 = vmatpush.msra.mxu0 %v5496
      %5520 = vmatpush.msra.mxu0 %v5494
      %5521 = vmatpush.msra.mxu0 %v5492
      %5522 = vmatpush.msra.mxu0 %v5490
      %5523 = vmatpush.msra.mxu0 %v5488
      %5524 = vmatpush.msra.mxu0 %v5486
      %5525 = vmatpush.msra.mxu0 %v5484
      %5526 = vmatpush.msra.mxu0 %v5482
      %5527 = vmatpush.msra.mxu0 %v5480
      %5528 = vmatmul.f32.gmra.mxu0 %v5478
      %v5529 = vpop.f32.mrf.mxu0
      %v5530 = vadd.f32 0.0, %v5529
      %5531 = vdwg.mxu0
      %5532 = vmatpush.msra.mxu0 %v5511
      %5533 = vmatpush.msra.mxu0 %v5509
      %5534 = vmatpush.msra.mxu0 %v5507
      %5535 = vmatpush.msra.mxu0 %v5505
      %5536 = vmatpush.msra.mxu0 %v5503
      %5537 = vmatpush.msra.mxu0 %v5501
      %5538 = vmatpush.msra.mxu0 %v5499
      %5539 = vmatpush.msra.mxu0 %v5497
      %5540 = vmatpush.msra.mxu0 %v5495
      %5541 = vmatpush.msra.mxu0 %v5493
      %5542 = vmatpush.msra.mxu0 %v5491
      %5543 = vmatpush.msra.mxu0 %v5489
      %5544 = vmatpush.msra.mxu0 %v5487
      %5545 = vmatpush.msra.mxu0 %v5485
      %5546 = vmatpush.msra.mxu0 %v5483
      %5547 = vmatpush.msra.mxu0 %v5481
      %5548 = vmatmul.f32.gmra.mxu0 %v5478
      %v5549 = vpop.f32.mrf.mxu0
      %v5550 = vadd.f32 0.0, %v5549
      %5551 = vdwg.mxu0
      %v5552 = vadd.f32 %v5476, %v5530
      %v5553 = vadd.f32 %v5477, %v5550
      %v5554 = vld [vmem:[#allocation7 + $0x15] sm:$0xff]
      %s5555 = scalar_lea.vmem %s11, 1024
      %v5556 = vld [vmem:[%s5555] sm:$0xff]
      %v5557 = vld [vmem:[%s5555 + $0x8] sm:$0xff]
      %v5558 = vld [vmem:[%s5555 + $0x10] sm:$0xff]
      %v5559 = vld [vmem:[%s5555 + $0x18] sm:$0xff]
      %v5560 = vld [vmem:[%s5555 + $0x20] sm:$0xff]
      %v5561 = vld [vmem:[%s5555 + $0x28] sm:$0xff]
      %v5562 = vld [vmem:[%s5555 + $0x30] sm:$0xff]
      %v5563 = vld [vmem:[%s5555 + $0x38] sm:$0xff]
      %v5564 = vld [vmem:[%s5555 + $0x40] sm:$0xff]
      %v5565 = vld [vmem:[%s5555 + $0x48] sm:$0xff]
      %v5566 = vld [vmem:[%s5555 + $0x50] sm:$0xff]
      %v5567 = vld [vmem:[%s5555 + $0x58] sm:$0xff]
      %v5568 = vld [vmem:[%s5555 + $0x60] sm:$0xff]
      %v5569 = vld [vmem:[%s5555 + $0x68] sm:$0xff]
      %v5570 = vld [vmem:[%s5555 + $0x70] sm:$0xff]
      %v5571 = vld [vmem:[%s5555 + $0x78] sm:$0xff]
      %v5572 = vld [vmem:[%s5555 + $0x80] sm:$0xff]
      %v5573 = vld [vmem:[%s5555 + $0x88] sm:$0xff]
      %v5574 = vld [vmem:[%s5555 + $0x90] sm:$0xff]
      %v5575 = vld [vmem:[%s5555 + $0x98] sm:$0xff]
      %v5576 = vld [vmem:[%s5555 + $0xa0] sm:$0xff]
      %v5577 = vld [vmem:[%s5555 + $0xa8] sm:$0xff]
      %v5578 = vld [vmem:[%s5555 + $0xb0] sm:$0xff]
      %v5579 = vld [vmem:[%s5555 + $0xb8] sm:$0xff]
      %v5580 = vld [vmem:[%s5555 + $0xc0] sm:$0xff]
      %v5581 = vld [vmem:[%s5555 + $0xc8] sm:$0xff]
      %v5582 = vld [vmem:[%s5555 + $0xd0] sm:$0xff]
      %v5583 = vld [vmem:[%s5555 + $0xd8] sm:$0xff]
      %v5584 = vld [vmem:[%s5555 + $0xe0] sm:$0xff]
      %v5585 = vld [vmem:[%s5555 + $0xe8] sm:$0xff]
      %v5586 = vld [vmem:[%s5555 + $0xf0] sm:$0xff]
      %v5587 = vld [vmem:[%s5555 + $0xf8] sm:$0xff]
      %5588 = vmatpush.msra.mxu0 %v5586
      %5589 = vmatpush.msra.mxu0 %v5584
      %5590 = vmatpush.msra.mxu0 %v5582
      %5591 = vmatpush.msra.mxu0 %v5580
      %5592 = vmatpush.msra.mxu0 %v5578
      %5593 = vmatpush.msra.mxu0 %v5576
      %5594 = vmatpush.msra.mxu0 %v5574
      %5595 = vmatpush.msra.mxu0 %v5572
      %5596 = vmatpush.msra.mxu0 %v5570
      %5597 = vmatpush.msra.mxu0 %v5568
      %5598 = vmatpush.msra.mxu0 %v5566
      %5599 = vmatpush.msra.mxu0 %v5564
      %5600 = vmatpush.msra.mxu0 %v5562
      %5601 = vmatpush.msra.mxu0 %v5560
      %5602 = vmatpush.msra.mxu0 %v5558
      %5603 = vmatpush.msra.mxu0 %v5556
      %5604 = vmatmul.f32.gmra.mxu0 %v5554
      %v5605 = vpop.f32.mrf.mxu0
      %v5606 = vadd.f32 0.0, %v5605
      %5607 = vdwg.mxu0
      %5608 = vmatpush.msra.mxu0 %v5587
      %5609 = vmatpush.msra.mxu0 %v5585
      %5610 = vmatpush.msra.mxu0 %v5583
      %5611 = vmatpush.msra.mxu0 %v5581
      %5612 = vmatpush.msra.mxu0 %v5579
      %5613 = vmatpush.msra.mxu0 %v5577
      %5614 = vmatpush.msra.mxu0 %v5575
      %5615 = vmatpush.msra.mxu0 %v5573
      %5616 = vmatpush.msra.mxu0 %v5571
      %5617 = vmatpush.msra.mxu0 %v5569
      %5618 = vmatpush.msra.mxu0 %v5567
      %5619 = vmatpush.msra.mxu0 %v5565
      %5620 = vmatpush.msra.mxu0 %v5563
      %5621 = vmatpush.msra.mxu0 %v5561
      %5622 = vmatpush.msra.mxu0 %v5559
      %5623 = vmatpush.msra.mxu0 %v5557
      %5624 = vmatmul.f32.gmra.mxu0 %v5554
      %v5625 = vpop.f32.mrf.mxu0
      %v5626 = vadd.f32 0.0, %v5625
      %5627 = vdwg.mxu0
      %v5628 = vadd.f32 %v5552, %v5606
      %v5629 = vadd.f32 %v5553, %v5626
      %v5630 = vld [vmem:[#allocation7 + $0x4] sm:$0xff]
      %s5631 = scalar_lea.vmem %s11, 1280
      %v5632 = vld [vmem:[%s5631] sm:$0xff]
      %v5633 = vld [vmem:[%s5631 + $0x8] sm:$0xff]
      %v5634 = vld [vmem:[%s5631 + $0x10] sm:$0xff]
      %v5635 = vld [vmem:[%s5631 + $0x18] sm:$0xff]
      %v5636 = vld [vmem:[%s5631 + $0x20] sm:$0xff]
      %v5637 = vld [vmem:[%s5631 + $0x28] sm:$0xff]
      %v5638 = vld [vmem:[%s5631 + $0x30] sm:$0xff]
      %v5639 = vld [vmem:[%s5631 + $0x38] sm:$0xff]
      %v5640 = vld [vmem:[%s5631 + $0x40] sm:$0xff]
      %v5641 = vld [vmem:[%s5631 + $0x48] sm:$0xff]
      %v5642 = vld [vmem:[%s5631 + $0x50] sm:$0xff]
      %v5643 = vld [vmem:[%s5631 + $0x58] sm:$0xff]
      %v5644 = vld [vmem:[%s5631 + $0x60] sm:$0xff]
      %v5645 = vld [vmem:[%s5631 + $0x68] sm:$0xff]
      %v5646 = vld [vmem:[%s5631 + $0x70] sm:$0xff]
      %v5647 = vld [vmem:[%s5631 + $0x78] sm:$0xff]
      %v5648 = vld [vmem:[%s5631 + $0x80] sm:$0xff]
      %v5649 = vld [vmem:[%s5631 + $0x88] sm:$0xff]
      %v5650 = vld [vmem:[%s5631 + $0x90] sm:$0xff]
      %v5651 = vld [vmem:[%s5631 + $0x98] sm:$0xff]
      %v5652 = vld [vmem:[%s5631 + $0xa0] sm:$0xff]
      %v5653 = vld [vmem:[%s5631 + $0xa8] sm:$0xff]
      %v5654 = vld [vmem:[%s5631 + $0xb0] sm:$0xff]
      %v5655 = vld [vmem:[%s5631 + $0xb8] sm:$0xff]
      %v5656 = vld [vmem:[%s5631 + $0xc0] sm:$0xff]
      %v5657 = vld [vmem:[%s5631 + $0xc8] sm:$0xff]
      %v5658 = vld [vmem:[%s5631 + $0xd0] sm:$0xff]
      %v5659 = vld [vmem:[%s5631 + $0xd8] sm:$0xff]
      %v5660 = vld [vmem:[%s5631 + $0xe0] sm:$0xff]
      %v5661 = vld [vmem:[%s5631 + $0xe8] sm:$0xff]
      %v5662 = vld [vmem:[%s5631 + $0xf0] sm:$0xff]
      %v5663 = vld [vmem:[%s5631 + $0xf8] sm:$0xff]
      %5664 = vmatpush.msra.mxu0 %v5662
      %5665 = vmatpush.msra.mxu0 %v5660
      %5666 = vmatpush.msra.mxu0 %v5658
      %5667 = vmatpush.msra.mxu0 %v5656
      %5668 = vmatpush.msra.mxu0 %v5654
      %5669 = vmatpush.msra.mxu0 %v5652
      %5670 = vmatpush.msra.mxu0 %v5650
      %5671 = vmatpush.msra.mxu0 %v5648
      %5672 = vmatpush.msra.mxu0 %v5646
      %5673 = vmatpush.msra.mxu0 %v5644
      %5674 = vmatpush.msra.mxu0 %v5642
      %5675 = vmatpush.msra.mxu0 %v5640
      %5676 = vmatpush.msra.mxu0 %v5638
      %5677 = vmatpush.msra.mxu0 %v5636
      %5678 = vmatpush.msra.mxu0 %v5634
      %5679 = vmatpush.msra.mxu0 %v5632
      %5680 = vmatmul.f32.gmra.mxu0 %v5630
      %v5681 = vpop.f32.mrf.mxu0
      %v5682 = vadd.f32 0.0, %v5681
      %5683 = vdwg.mxu0
      %5684 = vmatpush.msra.mxu0 %v5663
      %5685 = vmatpush.msra.mxu0 %v5661
      %5686 = vmatpush.msra.mxu0 %v5659
      %5687 = vmatpush.msra.mxu0 %v5657
      %5688 = vmatpush.msra.mxu0 %v5655
      %5689 = vmatpush.msra.mxu0 %v5653
      %5690 = vmatpush.msra.mxu0 %v5651
      %5691 = vmatpush.msra.mxu0 %v5649
      %5692 = vmatpush.msra.mxu0 %v5647
      %5693 = vmatpush.msra.mxu0 %v5645
      %5694 = vmatpush.msra.mxu0 %v5643
      %5695 = vmatpush.msra.mxu0 %v5641
      %5696 = vmatpush.msra.mxu0 %v5639
      %5697 = vmatpush.msra.mxu0 %v5637
      %5698 = vmatpush.msra.mxu0 %v5635
      %5699 = vmatpush.msra.mxu0 %v5633
      %5700 = vmatmul.f32.gmra.mxu0 %v5630
      %v5701 = vpop.f32.mrf.mxu0
      %v5702 = vadd.f32 0.0, %v5701
      %5703 = vdwg.mxu0
      %v5704 = vadd.f32 %v5628, %v5682
      %v5705 = vadd.f32 %v5629, %v5702
      %v5706 = vld [vmem:[#allocation7 + $0x6] sm:$0xff]
      %s5707 = scalar_lea.vmem %s11, 1536
      %v5708 = vld [vmem:[%s5707] sm:$0xff]
      %v5709 = vld [vmem:[%s5707 + $0x8] sm:$0xff]
      %v5710 = vld [vmem:[%s5707 + $0x10] sm:$0xff]
      %v5711 = vld [vmem:[%s5707 + $0x18] sm:$0xff]
      %v5712 = vld [vmem:[%s5707 + $0x20] sm:$0xff]
      %v5713 = vld [vmem:[%s5707 + $0x28] sm:$0xff]
      %v5714 = vld [vmem:[%s5707 + $0x30] sm:$0xff]
      %v5715 = vld [vmem:[%s5707 + $0x38] sm:$0xff]
      %v5716 = vld [vmem:[%s5707 + $0x40] sm:$0xff]
      %v5717 = vld [vmem:[%s5707 + $0x48] sm:$0xff]
      %v5718 = vld [vmem:[%s5707 + $0x50] sm:$0xff]
      %v5719 = vld [vmem:[%s5707 + $0x58] sm:$0xff]
      %v5720 = vld [vmem:[%s5707 + $0x60] sm:$0xff]
      %v5721 = vld [vmem:[%s5707 + $0x68] sm:$0xff]
      %v5722 = vld [vmem:[%s5707 + $0x70] sm:$0xff]
      %v5723 = vld [vmem:[%s5707 + $0x78] sm:$0xff]
      %v5724 = vld [vmem:[%s5707 + $0x80] sm:$0xff]
      %v5725 = vld [vmem:[%s5707 + $0x88] sm:$0xff]
      %v5726 = vld [vmem:[%s5707 + $0x90] sm:$0xff]
      %v5727 = vld [vmem:[%s5707 + $0x98] sm:$0xff]
      %v5728 = vld [vmem:[%s5707 + $0xa0] sm:$0xff]
      %v5729 = vld [vmem:[%s5707 + $0xa8] sm:$0xff]
      %v5730 = vld [vmem:[%s5707 + $0xb0] sm:$0xff]
      %v5731 = vld [vmem:[%s5707 + $0xb8] sm:$0xff]
      %v5732 = vld [vmem:[%s5707 + $0xc0] sm:$0xff]
      %v5733 = vld [vmem:[%s5707 + $0xc8] sm:$0xff]
      %v5734 = vld [vmem:[%s5707 + $0xd0] sm:$0xff]
      %v5735 = vld [vmem:[%s5707 + $0xd8] sm:$0xff]
      %v5736 = vld [vmem:[%s5707 + $0xe0] sm:$0xff]
      %v5737 = vld [vmem:[%s5707 + $0xe8] sm:$0xff]
      %v5738 = vld [vmem:[%s5707 + $0xf0] sm:$0xff]
      %v5739 = vld [vmem:[%s5707 + $0xf8] sm:$0xff]
      %5740 = vmatpush.msra.mxu0 %v5738
      %5741 = vmatpush.msra.mxu0 %v5736
      %5742 = vmatpush.msra.mxu0 %v5734
      %5743 = vmatpush.msra.mxu0 %v5732
      %5744 = vmatpush.msra.mxu0 %v5730
      %5745 = vmatpush.msra.mxu0 %v5728
      %5746 = vmatpush.msra.mxu0 %v5726
      %5747 = vmatpush.msra.mxu0 %v5724
      %5748 = vmatpush.msra.mxu0 %v5722
      %5749 = vmatpush.msra.mxu0 %v5720
      %5750 = vmatpush.msra.mxu0 %v5718
      %5751 = vmatpush.msra.mxu0 %v5716
      %5752 = vmatpush.msra.mxu0 %v5714
      %5753 = vmatpush.msra.mxu0 %v5712
      %5754 = vmatpush.msra.mxu0 %v5710
      %5755 = vmatpush.msra.mxu0 %v5708
      %5756 = vmatmul.f32.gmra.mxu0 %v5706
      %v5757 = vpop.f32.mrf.mxu0
      %v5758 = vadd.f32 0.0, %v5757
      %5759 = vdwg.mxu0
      %5760 = vmatpush.msra.mxu0 %v5739
      %5761 = vmatpush.msra.mxu0 %v5737
      %5762 = vmatpush.msra.mxu0 %v5735
      %5763 = vmatpush.msra.mxu0 %v5733
      %5764 = vmatpush.msra.mxu0 %v5731
      %5765 = vmatpush.msra.mxu0 %v5729
      %5766 = vmatpush.msra.mxu0 %v5727
      %5767 = vmatpush.msra.mxu0 %v5725
      %5768 = vmatpush.msra.mxu0 %v5723
      %5769 = vmatpush.msra.mxu0 %v5721
      %5770 = vmatpush.msra.mxu0 %v5719
      %5771 = vmatpush.msra.mxu0 %v5717
      %5772 = vmatpush.msra.mxu0 %v5715
      %5773 = vmatpush.msra.mxu0 %v5713
      %5774 = vmatpush.msra.mxu0 %v5711
      %5775 = vmatpush.msra.mxu0 %v5709
      %5776 = vmatmul.f32.gmra.mxu0 %v5706
      %v5777 = vpop.f32.mrf.mxu0
      %v5778 = vadd.f32 0.0, %v5777
      %5779 = vdwg.mxu0
      %v5780 = vadd.f32 %v5704, %v5758
      %v5781 = vadd.f32 %v5705, %v5778
      %v5782 = vld [vmem:[#allocation7 + $0x18] sm:$0xff]
      %s5783 = scalar_lea.vmem %s11, 1792
      %v5784 = vld [vmem:[%s5783] sm:$0xff]
      %v5785 = vld [vmem:[%s5783 + $0x8] sm:$0xff]
      %v5786 = vld [vmem:[%s5783 + $0x10] sm:$0xff]
      %v5787 = vld [vmem:[%s5783 + $0x18] sm:$0xff]
      %v5788 = vld [vmem:[%s5783 + $0x20] sm:$0xff]
      %v5789 = vld [vmem:[%s5783 + $0x28] sm:$0xff]
      %v5790 = vld [vmem:[%s5783 + $0x30] sm:$0xff]
      %v5791 = vld [vmem:[%s5783 + $0x38] sm:$0xff]
      %v5792 = vld [vmem:[%s5783 + $0x40] sm:$0xff]
      %v5793 = vld [vmem:[%s5783 + $0x48] sm:$0xff]
      %v5794 = vld [vmem:[%s5783 + $0x50] sm:$0xff]
      %v5795 = vld [vmem:[%s5783 + $0x58] sm:$0xff]
      %v5796 = vld [vmem:[%s5783 + $0x60] sm:$0xff]
      %v5797 = vld [vmem:[%s5783 + $0x68] sm:$0xff]
      %v5798 = vld [vmem:[%s5783 + $0x70] sm:$0xff]
      %v5799 = vld [vmem:[%s5783 + $0x78] sm:$0xff]
      %v5800 = vld [vmem:[%s5783 + $0x80] sm:$0xff]
      %v5801 = vld [vmem:[%s5783 + $0x88] sm:$0xff]
      %v5802 = vld [vmem:[%s5783 + $0x90] sm:$0xff]
      %v5803 = vld [vmem:[%s5783 + $0x98] sm:$0xff]
      %v5804 = vld [vmem:[%s5783 + $0xa0] sm:$0xff]
      %v5805 = vld [vmem:[%s5783 + $0xa8] sm:$0xff]
      %v5806 = vld [vmem:[%s5783 + $0xb0] sm:$0xff]
      %v5807 = vld [vmem:[%s5783 + $0xb8] sm:$0xff]
      %v5808 = vld [vmem:[%s5783 + $0xc0] sm:$0xff]
      %v5809 = vld [vmem:[%s5783 + $0xc8] sm:$0xff]
      %v5810 = vld [vmem:[%s5783 + $0xd0] sm:$0xff]
      %v5811 = vld [vmem:[%s5783 + $0xd8] sm:$0xff]
      %v5812 = vld [vmem:[%s5783 + $0xe0] sm:$0xff]
      %v5813 = vld [vmem:[%s5783 + $0xe8] sm:$0xff]
      %v5814 = vld [vmem:[%s5783 + $0xf0] sm:$0xff]
      %v5815 = vld [vmem:[%s5783 + $0xf8] sm:$0xff]
      %5816 = vmatpush.msra.mxu0 %v5814
      %5817 = vmatpush.msra.mxu0 %v5812
      %5818 = vmatpush.msra.mxu0 %v5810
      %5819 = vmatpush.msra.mxu0 %v5808
      %5820 = vmatpush.msra.mxu0 %v5806
      %5821 = vmatpush.msra.mxu0 %v5804
      %5822 = vmatpush.msra.mxu0 %v5802
      %5823 = vmatpush.msra.mxu0 %v5800
      %5824 = vmatpush.msra.mxu0 %v5798
      %5825 = vmatpush.msra.mxu0 %v5796
      %5826 = vmatpush.msra.mxu0 %v5794
      %5827 = vmatpush.msra.mxu0 %v5792
      %5828 = vmatpush.msra.mxu0 %v5790
      %5829 = vmatpush.msra.mxu0 %v5788
      %5830 = vmatpush.msra.mxu0 %v5786
      %5831 = vmatpush.msra.mxu0 %v5784
      %5832 = vmatmul.f32.gmra.mxu0 %v5782
      %v5833 = vpop.f32.mrf.mxu0
      %v5834 = vadd.f32 0.0, %v5833
      %5835 = vdwg.mxu0
      %5836 = vmatpush.msra.mxu0 %v5815
      %5837 = vmatpush.msra.mxu0 %v5813
      %5838 = vmatpush.msra.mxu0 %v5811
      %5839 = vmatpush.msra.mxu0 %v5809
      %5840 = vmatpush.msra.mxu0 %v5807
      %5841 = vmatpush.msra.mxu0 %v5805
      %5842 = vmatpush.msra.mxu0 %v5803
      %5843 = vmatpush.msra.mxu0 %v5801
      %5844 = vmatpush.msra.mxu0 %v5799
      %5845 = vmatpush.msra.mxu0 %v5797
      %5846 = vmatpush.msra.mxu0 %v5795
      %5847 = vmatpush.msra.mxu0 %v5793
      %5848 = vmatpush.msra.mxu0 %v5791
      %5849 = vmatpush.msra.mxu0 %v5789
      %5850 = vmatpush.msra.mxu0 %v5787
      %5851 = vmatpush.msra.mxu0 %v5785
      %5852 = vmatmul.f32.gmra.mxu0 %v5782
      %v5853 = vpop.f32.mrf.mxu0
      %v5854 = vadd.f32 0.0, %v5853
      %5855 = vdwg.mxu0
      %v5856 = vadd.f32 %v5780, %v5834
      %v5857 = vadd.f32 %v5781, %v5854
      %v5858 = vld [vmem:[#allocation7 + $0x7] sm:$0xff]
      %s5859 = scalar_lea.vmem %s11, 2048
      %v5860 = vld [vmem:[%s5859] sm:$0xff]
      %v5861 = vld [vmem:[%s5859 + $0x8] sm:$0xff]
      %v5862 = vld [vmem:[%s5859 + $0x10] sm:$0xff]
      %v5863 = vld [vmem:[%s5859 + $0x18] sm:$0xff]
      %v5864 = vld [vmem:[%s5859 + $0x20] sm:$0xff]
      %v5865 = vld [vmem:[%s5859 + $0x28] sm:$0xff]
      %v5866 = vld [vmem:[%s5859 + $0x30] sm:$0xff]
      %v5867 = vld [vmem:[%s5859 + $0x38] sm:$0xff]
      %v5868 = vld [vmem:[%s5859 + $0x40] sm:$0xff]
      %v5869 = vld [vmem:[%s5859 + $0x48] sm:$0xff]
      %v5870 = vld [vmem:[%s5859 + $0x50] sm:$0xff]
      %v5871 = vld [vmem:[%s5859 + $0x58] sm:$0xff]
      %v5872 = vld [vmem:[%s5859 + $0x60] sm:$0xff]
      %v5873 = vld [vmem:[%s5859 + $0x68] sm:$0xff]
      %v5874 = vld [vmem:[%s5859 + $0x70] sm:$0xff]
      %v5875 = vld [vmem:[%s5859 + $0x78] sm:$0xff]
      %v5876 = vld [vmem:[%s5859 + $0x80] sm:$0xff]
      %v5877 = vld [vmem:[%s5859 + $0x88] sm:$0xff]
      %v5878 = vld [vmem:[%s5859 + $0x90] sm:$0xff]
      %v5879 = vld [vmem:[%s5859 + $0x98] sm:$0xff]
      %v5880 = vld [vmem:[%s5859 + $0xa0] sm:$0xff]
      %v5881 = vld [vmem:[%s5859 + $0xa8] sm:$0xff]
      %v5882 = vld [vmem:[%s5859 + $0xb0] sm:$0xff]
      %v5883 = vld [vmem:[%s5859 + $0xb8] sm:$0xff]
      %v5884 = vld [vmem:[%s5859 + $0xc0] sm:$0xff]
      %v5885 = vld [vmem:[%s5859 + $0xc8] sm:$0xff]
      %v5886 = vld [vmem:[%s5859 + $0xd0] sm:$0xff]
      %v5887 = vld [vmem:[%s5859 + $0xd8] sm:$0xff]
      %v5888 = vld [vmem:[%s5859 + $0xe0] sm:$0xff]
      %v5889 = vld [vmem:[%s5859 + $0xe8] sm:$0xff]
      %v5890 = vld [vmem:[%s5859 + $0xf0] sm:$0xff]
      %v5891 = vld [vmem:[%s5859 + $0xf8] sm:$0xff]
      %5892 = vmatpush.msra.mxu0 %v5890
      %5893 = vmatpush.msra.mxu0 %v5888
      %5894 = vmatpush.msra.mxu0 %v5886
      %5895 = vmatpush.msra.mxu0 %v5884
      %5896 = vmatpush.msra.mxu0 %v5882
      %5897 = vmatpush.msra.mxu0 %v5880
      %5898 = vmatpush.msra.mxu0 %v5878
      %5899 = vmatpush.msra.mxu0 %v5876
      %5900 = vmatpush.msra.mxu0 %v5874
      %5901 = vmatpush.msra.mxu0 %v5872
      %5902 = vmatpush.msra.mxu0 %v5870
      %5903 = vmatpush.msra.mxu0 %v5868
      %5904 = vmatpush.msra.mxu0 %v5866
      %5905 = vmatpush.msra.mxu0 %v5864
      %5906 = vmatpush.msra.mxu0 %v5862
      %5907 = vmatpush.msra.mxu0 %v5860
      %5908 = vmatmul.f32.gmra.mxu0 %v5858
      %v5909 = vpop.f32.mrf.mxu0
      %v5910 = vadd.f32 0.0, %v5909
      %5911 = vdwg.mxu0
      %5912 = vmatpush.msra.mxu0 %v5891
      %5913 = vmatpush.msra.mxu0 %v5889
      %5914 = vmatpush.msra.mxu0 %v5887
      %5915 = vmatpush.msra.mxu0 %v5885
      %5916 = vmatpush.msra.mxu0 %v5883
      %5917 = vmatpush.msra.mxu0 %v5881
      %5918 = vmatpush.msra.mxu0 %v5879
      %5919 = vmatpush.msra.mxu0 %v5877
      %5920 = vmatpush.msra.mxu0 %v5875
      %5921 = vmatpush.msra.mxu0 %v5873
      %5922 = vmatpush.msra.mxu0 %v5871
      %5923 = vmatpush.msra.mxu0 %v5869
      %5924 = vmatpush.msra.mxu0 %v5867
      %5925 = vmatpush.msra.mxu0 %v5865
      %5926 = vmatpush.msra.mxu0 %v5863
      %5927 = vmatpush.msra.mxu0 %v5861
      %5928 = vmatmul.f32.gmra.mxu0 %v5858
      %v5929 = vpop.f32.mrf.mxu0
      %v5930 = vadd.f32 0.0, %v5929
      %5931 = vdwg.mxu0
      %v5932 = vadd.f32 %v5856, %v5910
      %v5933 = vadd.f32 %v5857, %v5930
      %v5934 = vld [vmem:[%s12] sm:$0x3]
      %v5936 = vperm.slane %v5934, 0
      %v5937 = vperm.slane %v5934, 1
      %v5940 = vadd.f32 %v5932, %v5936
      %v5941 = vadd.f32 %v5933, %v5937
      %v5942 = vmax.f32 %v5940, 0.0
      %v5943 = vmax.f32 %v5941, 0.0
      %v5944 = vld [vmem:[%s21] sm:$0xff]
      %v5945 = vld [vmem:[%s21 + $0x8] sm:$0xff]
      %vm5946 = vcmask 64512
      %v5948 = vsel %vm5946, %v5944, 0
      %v5951 = vsel %vm5946, %v5945, 0
      %5953 = vmatpush.msra.mxu0 0.0
      %5954 = vmatpush.msra.mxu0 0.0
      %5955 = vmatpush.msra.mxu0 0.0
      %5956 = vmatpush.msra.mxu0 0.0
      %5957 = vmatpush.msra.mxu0 0.0
      %5958 = vmatpush.msra.mxu0 0.0
      %5959 = vmatpush.msra.mxu0 0.0
      %5960 = vmatpush.msra.mxu0 0.0
      %5961 = vmatpush.msra.mxu0 0.0
      %5962 = vmatpush.msra.mxu0 0.0
      %5963 = vmatpush.msra.mxu0 0.0
      %5964 = vmatpush.msra.mxu0 0.0
      %5965 = vmatpush.msra.mxu0 0.0
      %5966 = vmatpush.msra.mxu0 0.0
      %5967 = vmatpush.msra.mxu0 0.0
      %5968 = vmatpush.msra.mxu0 %v5942
      %5969 = vmatmul.f32.gmra.mxu0 %v5948
      %v5970 = vpop.f32.mrf.mxu0
      %v5971 = vadd.f32 0.0, %v5970
      %5972 = vmatmul.f32.gmra.mxu0 %v5951
      %v5973 = vpop.f32.mrf.mxu0
      %v5974 = vadd.f32 0.0, %v5973
      %5975 = vdwg.mxu0
      %5976 = vmatpush.msra.mxu0 0.0
      %5977 = vmatpush.msra.mxu0 0.0
      %5978 = vmatpush.msra.mxu0 0.0
      %5979 = vmatpush.msra.mxu0 0.0
      %5980 = vmatpush.msra.mxu0 0.0
      %5981 = vmatpush.msra.mxu0 0.0
      %5982 = vmatpush.msra.mxu0 0.0
      %5983 = vmatpush.msra.mxu0 0.0
      %5984 = vmatpush.msra.mxu0 0.0
      %5985 = vmatpush.msra.mxu0 0.0
      %5986 = vmatpush.msra.mxu0 0.0
      %5987 = vmatpush.msra.mxu0 0.0
      %5988 = vmatpush.msra.mxu0 0.0
      %5989 = vmatpush.msra.mxu0 0.0
      %5990 = vmatpush.msra.mxu0 0.0
      %5991 = vmatpush.msra.mxu0 %v5943
      %5992 = vmatmul.f32.gmra.mxu0 %v5948
      %v5993 = vpop.f32.mrf.mxu0
      %v5994 = vadd.f32 0.0, %v5993
      %5995 = vmatmul.f32.gmra.mxu0 %v5951
      %v5996 = vpop.f32.mrf.mxu0
      %v5997 = vadd.f32 0.0, %v5996
      %5998 = vdwg.mxu0
      %5999 = vst [vmem:[#allocation8] sm:$0xff] %v5971
      %6000 = vst [vmem:[#allocation8 + $0x8] sm:$0xff] %v5994
      %6001 = vst [vmem:[#allocation8 + $0x10] sm:$0xff] %v5974
      %6002 = vst [vmem:[#allocation8 + $0x18] sm:$0xff] %v5997
      %v6003 = vld [vmem:[#allocation8] sm:$0x3f]
      %v6004 = vld [vmem:[#allocation8 + $0x8] sm:$0x3f]
      %v6005 = vld [vmem:[%s13] sm:$0xff]
      %v6006 = vld [vmem:[%s13 + $0x8] sm:$0xff]
      %v6007 = vld [vmem:[%s13 + $0x10] sm:$0xff]
      %v6008 = vld [vmem:[%s13 + $0x18] sm:$0xff]
      %v6009 = vld [vmem:[%s13 + $0x20] sm:$0xff]
      %v6010 = vld [vmem:[%s13 + $0x28] sm:$0xff]
      %v6011 = vld [vmem:[%s13 + $0x30] sm:$0xff]
      %v6012 = vld [vmem:[%s13 + $0x38] sm:$0xff]
      %v6013 = vld [vmem:[%s13 + $0x40] sm:$0xff]
      %v6014 = vld [vmem:[%s13 + $0x48] sm:$0xff]
      %v6015 = vld [vmem:[%s13 + $0x50] sm:$0xff]
      %v6016 = vld [vmem:[%s13 + $0x58] sm:$0xff]
      %v6017 = vld [vmem:[%s13 + $0x60] sm:$0xff]
      %v6018 = vld [vmem:[%s13 + $0x68] sm:$0xff]
      %v6019 = vld [vmem:[%s13 + $0x70] sm:$0xff]
      %v6020 = vld [vmem:[%s13 + $0x78] sm:$0xff]
      %v6021 = vld [vmem:[%s13 + $0x80] sm:$0xff]
      %v6022 = vld [vmem:[%s13 + $0x88] sm:$0xff]
      %v6023 = vld [vmem:[%s13 + $0x90] sm:$0xff]
      %v6024 = vld [vmem:[%s13 + $0x98] sm:$0xff]
      %v6025 = vld [vmem:[%s13 + $0xa0] sm:$0xff]
      %v6026 = vld [vmem:[%s13 + $0xa8] sm:$0xff]
      %v6027 = vld [vmem:[%s13 + $0xb0] sm:$0xff]
      %v6028 = vld [vmem:[%s13 + $0xb8] sm:$0xff]
      %v6029 = vld [vmem:[%s13 + $0xc0] sm:$0xff]
      %v6030 = vld [vmem:[%s13 + $0xc8] sm:$0xff]
      %v6031 = vld [vmem:[%s13 + $0xd0] sm:$0xff]
      %v6032 = vld [vmem:[%s13 + $0xd8] sm:$0xff]
      %v6033 = vld [vmem:[%s13 + $0xe0] sm:$0xff]
      %v6034 = vld [vmem:[%s13 + $0xe8] sm:$0xff]
      %v6035 = vld [vmem:[%s13 + $0xf0] sm:$0xff]
      %v6036 = vld [vmem:[%s13 + $0xf8] sm:$0xff]
      %v6037 = vld [vmem:[%s13 + $0x100] sm:$0xff]
      %v6038 = vld [vmem:[%s13 + $0x108] sm:$0xff]
      %v6039 = vld [vmem:[%s13 + $0x110] sm:$0xff]
      %v6040 = vld [vmem:[%s13 + $0x118] sm:$0xff]
      %v6041 = vld [vmem:[%s13 + $0x120] sm:$0xff]
      %v6042 = vld [vmem:[%s13 + $0x128] sm:$0xff]
      %v6043 = vld [vmem:[%s13 + $0x130] sm:$0xff]
      %v6044 = vld [vmem:[%s13 + $0x138] sm:$0xff]
      %v6045 = vld [vmem:[%s13 + $0x140] sm:$0xff]
      %v6046 = vld [vmem:[%s13 + $0x148] sm:$0xff]
      %v6047 = vld [vmem:[%s13 + $0x150] sm:$0xff]
      %v6048 = vld [vmem:[%s13 + $0x158] sm:$0xff]
      %v6049 = vld [vmem:[%s13 + $0x160] sm:$0xff]
      %v6050 = vld [vmem:[%s13 + $0x168] sm:$0xff]
      %v6051 = vld [vmem:[%s13 + $0x170] sm:$0xff]
      %v6052 = vld [vmem:[%s13 + $0x178] sm:$0xff]
      %v6053 = vld [vmem:[%s13 + $0x180] sm:$0xff]
      %v6054 = vld [vmem:[%s13 + $0x188] sm:$0xff]
      %v6055 = vld [vmem:[%s13 + $0x190] sm:$0xff]
      %v6056 = vld [vmem:[%s13 + $0x198] sm:$0xff]
      %v6057 = vld [vmem:[%s13 + $0x1a0] sm:$0xff]
      %v6058 = vld [vmem:[%s13 + $0x1a8] sm:$0xff]
      %v6059 = vld [vmem:[%s13 + $0x1b0] sm:$0xff]
      %v6060 = vld [vmem:[%s13 + $0x1b8] sm:$0xff]
      %v6061 = vld [vmem:[%s13 + $0x1c0] sm:$0xff]
      %v6062 = vld [vmem:[%s13 + $0x1c8] sm:$0xff]
      %v6063 = vld [vmem:[%s13 + $0x1d0] sm:$0xff]
      %v6064 = vld [vmem:[%s13 + $0x1d8] sm:$0xff]
      %v6065 = vld [vmem:[%s13 + $0x1e0] sm:$0xff]
      %v6066 = vld [vmem:[%s13 + $0x1e8] sm:$0xff]
      %v6067 = vld [vmem:[%s13 + $0x1f0] sm:$0xff]
      %v6068 = vld [vmem:[%s13 + $0x1f8] sm:$0xff]
      %v6069 = vld [vmem:[#allocation8] sm:$0x7e]
      %v6070 = vld [vmem:[#allocation8 + $0x8] sm:$0x7e]
      %s6071 = scalar_lea.vmem %s13, 512
      %v6072 = vld [vmem:[%s6071] sm:$0xff]
      %v6073 = vld [vmem:[%s6071 + $0x8] sm:$0xff]
      %v6074 = vld [vmem:[%s6071 + $0x10] sm:$0xff]
      %v6075 = vld [vmem:[%s6071 + $0x18] sm:$0xff]
      %v6076 = vld [vmem:[%s6071 + $0x20] sm:$0xff]
      %v6077 = vld [vmem:[%s6071 + $0x28] sm:$0xff]
      %v6078 = vld [vmem:[%s6071 + $0x30] sm:$0xff]
      %v6079 = vld [vmem:[%s6071 + $0x38] sm:$0xff]
      %v6080 = vld [vmem:[%s6071 + $0x40] sm:$0xff]
      %v6081 = vld [vmem:[%s6071 + $0x48] sm:$0xff]
      %v6082 = vld [vmem:[%s6071 + $0x50] sm:$0xff]
      %v6083 = vld [vmem:[%s6071 + $0x58] sm:$0xff]
      %v6084 = vld [vmem:[%s6071 + $0x60] sm:$0xff]
      %v6085 = vld [vmem:[%s6071 + $0x68] sm:$0xff]
      %v6086 = vld [vmem:[%s6071 + $0x70] sm:$0xff]
      %v6087 = vld [vmem:[%s6071 + $0x78] sm:$0xff]
      %v6088 = vld [vmem:[%s6071 + $0x80] sm:$0xff]
      %v6089 = vld [vmem:[%s6071 + $0x88] sm:$0xff]
      %v6090 = vld [vmem:[%s6071 + $0x90] sm:$0xff]
      %v6091 = vld [vmem:[%s6071 + $0x98] sm:$0xff]
      %v6092 = vld [vmem:[%s6071 + $0xa0] sm:$0xff]
      %v6093 = vld [vmem:[%s6071 + $0xa8] sm:$0xff]
      %v6094 = vld [vmem:[%s6071 + $0xb0] sm:$0xff]
      %v6095 = vld [vmem:[%s6071 + $0xb8] sm:$0xff]
      %v6096 = vld [vmem:[%s6071 + $0xc0] sm:$0xff]
      %v6097 = vld [vmem:[%s6071 + $0xc8] sm:$0xff]
      %v6098 = vld [vmem:[%s6071 + $0xd0] sm:$0xff]
      %v6099 = vld [vmem:[%s6071 + $0xd8] sm:$0xff]
      %v6100 = vld [vmem:[%s6071 + $0xe0] sm:$0xff]
      %v6101 = vld [vmem:[%s6071 + $0xe8] sm:$0xff]
      %v6102 = vld [vmem:[%s6071 + $0xf0] sm:$0xff]
      %v6103 = vld [vmem:[%s6071 + $0xf8] sm:$0xff]
      %v6104 = vld [vmem:[%s6071 + $0x100] sm:$0xff]
      %v6105 = vld [vmem:[%s6071 + $0x108] sm:$0xff]
      %v6106 = vld [vmem:[%s6071 + $0x110] sm:$0xff]
      %v6107 = vld [vmem:[%s6071 + $0x118] sm:$0xff]
      %v6108 = vld [vmem:[%s6071 + $0x120] sm:$0xff]
      %v6109 = vld [vmem:[%s6071 + $0x128] sm:$0xff]
      %v6110 = vld [vmem:[%s6071 + $0x130] sm:$0xff]
      %v6111 = vld [vmem:[%s6071 + $0x138] sm:$0xff]
      %v6112 = vld [vmem:[%s6071 + $0x140] sm:$0xff]
      %v6113 = vld [vmem:[%s6071 + $0x148] sm:$0xff]
      %v6114 = vld [vmem:[%s6071 + $0x150] sm:$0xff]
      %v6115 = vld [vmem:[%s6071 + $0x158] sm:$0xff]
      %v6116 = vld [vmem:[%s6071 + $0x160] sm:$0xff]
      %v6117 = vld [vmem:[%s6071 + $0x168] sm:$0xff]
      %v6118 = vld [vmem:[%s6071 + $0x170] sm:$0xff]
      %v6119 = vld [vmem:[%s6071 + $0x178] sm:$0xff]
      %v6120 = vld [vmem:[%s6071 + $0x180] sm:$0xff]
      %v6121 = vld [vmem:[%s6071 + $0x188] sm:$0xff]
      %v6122 = vld [vmem:[%s6071 + $0x190] sm:$0xff]
      %v6123 = vld [vmem:[%s6071 + $0x198] sm:$0xff]
      %v6124 = vld [vmem:[%s6071 + $0x1a0] sm:$0xff]
      %v6125 = vld [vmem:[%s6071 + $0x1a8] sm:$0xff]
      %v6126 = vld [vmem:[%s6071 + $0x1b0] sm:$0xff]
      %v6127 = vld [vmem:[%s6071 + $0x1b8] sm:$0xff]
      %v6128 = vld [vmem:[%s6071 + $0x1c0] sm:$0xff]
      %v6129 = vld [vmem:[%s6071 + $0x1c8] sm:$0xff]
      %v6130 = vld [vmem:[%s6071 + $0x1d0] sm:$0xff]
      %v6131 = vld [vmem:[%s6071 + $0x1d8] sm:$0xff]
      %v6132 = vld [vmem:[%s6071 + $0x1e0] sm:$0xff]
      %v6133 = vld [vmem:[%s6071 + $0x1e8] sm:$0xff]
      %v6134 = vld [vmem:[%s6071 + $0x1f0] sm:$0xff]
      %v6135 = vld [vmem:[%s6071 + $0x1f8] sm:$0xff]
      %v6138 = vrot.slane %v6069, 1
      %v6139 = vrot.slane %v6070, 1
      %6142 = vmatpush.msra.mxu0 %v6102
      %6143 = vmatpush.msra.mxu0 %v6100
      %6144 = vmatpush.msra.mxu0 %v6098
      %6145 = vmatpush.msra.mxu0 %v6096
      %6146 = vmatpush.msra.mxu0 %v6094
      %6147 = vmatpush.msra.mxu0 %v6092
      %6148 = vmatpush.msra.mxu0 %v6090
      %6149 = vmatpush.msra.mxu0 %v6088
      %6150 = vmatpush.msra.mxu0 %v6086
      %6151 = vmatpush.msra.mxu0 %v6084
      %6152 = vmatpush.msra.mxu0 %v6082
      %6153 = vmatpush.msra.mxu0 %v6080
      %6154 = vmatpush.msra.mxu0 %v6078
      %6155 = vmatpush.msra.mxu0 %v6076
      %6156 = vmatpush.msra.mxu0 %v6074
      %6157 = vmatpush.msra.mxu0 %v6072
      %6158 = vmatmul.f32.gmra.mxu0 %v6138
      %v6159 = vpop.f32.mrf.mxu0
      %v6160 = vadd.f32 0.0, %v6159
      %6161 = vdwg.mxu0
      %6162 = vmatpush.msra.mxu0 %v6134
      %6163 = vmatpush.msra.mxu0 %v6132
      %6164 = vmatpush.msra.mxu0 %v6130
      %6165 = vmatpush.msra.mxu0 %v6128
      %6166 = vmatpush.msra.mxu0 %v6126
      %6167 = vmatpush.msra.mxu0 %v6124
      %6168 = vmatpush.msra.mxu0 %v6122
      %6169 = vmatpush.msra.mxu0 %v6120
      %6170 = vmatpush.msra.mxu0 %v6118
      %6171 = vmatpush.msra.mxu0 %v6116
      %6172 = vmatpush.msra.mxu0 %v6114
      %6173 = vmatpush.msra.mxu0 %v6112
      %6174 = vmatpush.msra.mxu0 %v6110
      %6175 = vmatpush.msra.mxu0 %v6108
      %6176 = vmatpush.msra.mxu0 %v6106
      %6177 = vmatpush.msra.mxu0 %v6104
      %6178 = vmatmul.f32.gmra.mxu0 %v6139
      %v6179 = vpop.f32.mrf.mxu0
      %v6180 = vadd.f32 %v6160, %v6179
      %6181 = vdwg.mxu0
      %6182 = vmatpush.msra.mxu0 %v6103
      %6183 = vmatpush.msra.mxu0 %v6101
      %6184 = vmatpush.msra.mxu0 %v6099
      %6185 = vmatpush.msra.mxu0 %v6097
      %6186 = vmatpush.msra.mxu0 %v6095
      %6187 = vmatpush.msra.mxu0 %v6093
      %6188 = vmatpush.msra.mxu0 %v6091
      %6189 = vmatpush.msra.mxu0 %v6089
      %6190 = vmatpush.msra.mxu0 %v6087
      %6191 = vmatpush.msra.mxu0 %v6085
      %6192 = vmatpush.msra.mxu0 %v6083
      %6193 = vmatpush.msra.mxu0 %v6081
      %6194 = vmatpush.msra.mxu0 %v6079
      %6195 = vmatpush.msra.mxu0 %v6077
      %6196 = vmatpush.msra.mxu0 %v6075
      %6197 = vmatpush.msra.mxu0 %v6073
      %6198 = vmatmul.f32.gmra.mxu0 %v6138
      %v6199 = vpop.f32.mrf.mxu0
      %v6200 = vadd.f32 0.0, %v6199
      %6201 = vdwg.mxu0
      %6202 = vmatpush.msra.mxu0 %v6135
      %6203 = vmatpush.msra.mxu0 %v6133
      %6204 = vmatpush.msra.mxu0 %v6131
      %6205 = vmatpush.msra.mxu0 %v6129
      %6206 = vmatpush.msra.mxu0 %v6127
      %6207 = vmatpush.msra.mxu0 %v6125
      %6208 = vmatpush.msra.mxu0 %v6123
      %6209 = vmatpush.msra.mxu0 %v6121
      %6210 = vmatpush.msra.mxu0 %v6119
      %6211 = vmatpush.msra.mxu0 %v6117
      %6212 = vmatpush.msra.mxu0 %v6115
      %6213 = vmatpush.msra.mxu0 %v6113
      %6214 = vmatpush.msra.mxu0 %v6111
      %6215 = vmatpush.msra.mxu0 %v6109
      %6216 = vmatpush.msra.mxu0 %v6107
      %6217 = vmatpush.msra.mxu0 %v6105
      %6218 = vmatmul.f32.gmra.mxu0 %v6139
      %v6219 = vpop.f32.mrf.mxu0
      %v6220 = vadd.f32 %v6200, %v6219
      %6221 = vdwg.mxu0
      %6222 = vmatpush.msra.mxu0 %v6035
      %6223 = vmatpush.msra.mxu0 %v6033
      %6224 = vmatpush.msra.mxu0 %v6031
      %6225 = vmatpush.msra.mxu0 %v6029
      %6226 = vmatpush.msra.mxu0 %v6027
      %6227 = vmatpush.msra.mxu0 %v6025
      %6228 = vmatpush.msra.mxu0 %v6023
      %6229 = vmatpush.msra.mxu0 %v6021
      %6230 = vmatpush.msra.mxu0 %v6019
      %6231 = vmatpush.msra.mxu0 %v6017
      %6232 = vmatpush.msra.mxu0 %v6015
      %6233 = vmatpush.msra.mxu0 %v6013
      %6234 = vmatpush.msra.mxu0 %v6011
      %6235 = vmatpush.msra.mxu0 %v6009
      %6236 = vmatpush.msra.mxu0 %v6007
      %6237 = vmatpush.msra.mxu0 %v6005
      %6238 = vmatmul.f32.gmra.mxu0 %v6003
      %v6239 = vpop.f32.mrf.mxu0
      %v6240 = vadd.f32 %v6180, %v6239
      %6241 = vdwg.mxu0
      %6242 = vmatpush.msra.mxu0 %v6067
      %6243 = vmatpush.msra.mxu0 %v6065
      %6244 = vmatpush.msra.mxu0 %v6063
      %6245 = vmatpush.msra.mxu0 %v6061
      %6246 = vmatpush.msra.mxu0 %v6059
      %6247 = vmatpush.msra.mxu0 %v6057
      %6248 = vmatpush.msra.mxu0 %v6055
      %6249 = vmatpush.msra.mxu0 %v6053
      %6250 = vmatpush.msra.mxu0 %v6051
      %6251 = vmatpush.msra.mxu0 %v6049
      %6252 = vmatpush.msra.mxu0 %v6047
      %6253 = vmatpush.msra.mxu0 %v6045
      %6254 = vmatpush.msra.mxu0 %v6043
      %6255 = vmatpush.msra.mxu0 %v6041
      %6256 = vmatpush.msra.mxu0 %v6039
      %6257 = vmatpush.msra.mxu0 %v6037
      %6258 = vmatmul.f32.gmra.mxu0 %v6004
      %v6259 = vpop.f32.mrf.mxu0
      %v6260 = vadd.f32 %v6240, %v6259
      %6261 = vdwg.mxu0
      %6262 = vmatpush.msra.mxu0 %v6036
      %6263 = vmatpush.msra.mxu0 %v6034
      %6264 = vmatpush.msra.mxu0 %v6032
      %6265 = vmatpush.msra.mxu0 %v6030
      %6266 = vmatpush.msra.mxu0 %v6028
      %6267 = vmatpush.msra.mxu0 %v6026
      %6268 = vmatpush.msra.mxu0 %v6024
      %6269 = vmatpush.msra.mxu0 %v6022
      %6270 = vmatpush.msra.mxu0 %v6020
      %6271 = vmatpush.msra.mxu0 %v6018
      %6272 = vmatpush.msra.mxu0 %v6016
      %6273 = vmatpush.msra.mxu0 %v6014
      %6274 = vmatpush.msra.mxu0 %v6012
      %6275 = vmatpush.msra.mxu0 %v6010
      %6276 = vmatpush.msra.mxu0 %v6008
      %6277 = vmatpush.msra.mxu0 %v6006
      %6278 = vmatmul.f32.gmra.mxu0 %v6003
      %v6279 = vpop.f32.mrf.mxu0
      %v6280 = vadd.f32 %v6220, %v6279
      %6281 = vdwg.mxu0
      %6282 = vmatpush.msra.mxu0 %v6068
      %6283 = vmatpush.msra.mxu0 %v6066
      %6284 = vmatpush.msra.mxu0 %v6064
      %6285 = vmatpush.msra.mxu0 %v6062
      %6286 = vmatpush.msra.mxu0 %v6060
      %6287 = vmatpush.msra.mxu0 %v6058
      %6288 = vmatpush.msra.mxu0 %v6056
      %6289 = vmatpush.msra.mxu0 %v6054
      %6290 = vmatpush.msra.mxu0 %v6052
      %6291 = vmatpush.msra.mxu0 %v6050
      %6292 = vmatpush.msra.mxu0 %v6048
      %6293 = vmatpush.msra.mxu0 %v6046
      %6294 = vmatpush.msra.mxu0 %v6044
      %6295 = vmatpush.msra.mxu0 %v6042
      %6296 = vmatpush.msra.mxu0 %v6040
      %6297 = vmatpush.msra.mxu0 %v6038
      %6298 = vmatmul.f32.gmra.mxu0 %v6004
      %v6299 = vpop.f32.mrf.mxu0
      %v6300 = vadd.f32 %v6280, %v6299
      %6301 = vdwg.mxu0
      %v6302 = vld [vmem:[#allocation8] sm:$0xfc]
      %v6303 = vld [vmem:[#allocation8 + $0x8] sm:$0xfc]
      %s6304 = scalar_lea.vmem %s13, 1024
      %v6305 = vld [vmem:[%s6304] sm:$0xff]
      %v6306 = vld [vmem:[%s6304 + $0x8] sm:$0xff]
      %v6307 = vld [vmem:[%s6304 + $0x10] sm:$0xff]
      %v6308 = vld [vmem:[%s6304 + $0x18] sm:$0xff]
      %v6309 = vld [vmem:[%s6304 + $0x20] sm:$0xff]
      %v6310 = vld [vmem:[%s6304 + $0x28] sm:$0xff]
      %v6311 = vld [vmem:[%s6304 + $0x30] sm:$0xff]
      %v6312 = vld [vmem:[%s6304 + $0x38] sm:$0xff]
      %v6313 = vld [vmem:[%s6304 + $0x40] sm:$0xff]
      %v6314 = vld [vmem:[%s6304 + $0x48] sm:$0xff]
      %v6315 = vld [vmem:[%s6304 + $0x50] sm:$0xff]
      %v6316 = vld [vmem:[%s6304 + $0x58] sm:$0xff]
      %v6317 = vld [vmem:[%s6304 + $0x60] sm:$0xff]
      %v6318 = vld [vmem:[%s6304 + $0x68] sm:$0xff]
      %v6319 = vld [vmem:[%s6304 + $0x70] sm:$0xff]
      %v6320 = vld [vmem:[%s6304 + $0x78] sm:$0xff]
      %v6321 = vld [vmem:[%s6304 + $0x80] sm:$0xff]
      %v6322 = vld [vmem:[%s6304 + $0x88] sm:$0xff]
      %v6323 = vld [vmem:[%s6304 + $0x90] sm:$0xff]
      %v6324 = vld [vmem:[%s6304 + $0x98] sm:$0xff]
      %v6325 = vld [vmem:[%s6304 + $0xa0] sm:$0xff]
      %v6326 = vld [vmem:[%s6304 + $0xa8] sm:$0xff]
      %v6327 = vld [vmem:[%s6304 + $0xb0] sm:$0xff]
      %v6328 = vld [vmem:[%s6304 + $0xb8] sm:$0xff]
      %v6329 = vld [vmem:[%s6304 + $0xc0] sm:$0xff]
      %v6330 = vld [vmem:[%s6304 + $0xc8] sm:$0xff]
      %v6331 = vld [vmem:[%s6304 + $0xd0] sm:$0xff]
      %v6332 = vld [vmem:[%s6304 + $0xd8] sm:$0xff]
      %v6333 = vld [vmem:[%s6304 + $0xe0] sm:$0xff]
      %v6334 = vld [vmem:[%s6304 + $0xe8] sm:$0xff]
      %v6335 = vld [vmem:[%s6304 + $0xf0] sm:$0xff]
      %v6336 = vld [vmem:[%s6304 + $0xf8] sm:$0xff]
      %v6337 = vld [vmem:[%s6304 + $0x100] sm:$0xff]
      %v6338 = vld [vmem:[%s6304 + $0x108] sm:$0xff]
      %v6339 = vld [vmem:[%s6304 + $0x110] sm:$0xff]
      %v6340 = vld [vmem:[%s6304 + $0x118] sm:$0xff]
      %v6341 = vld [vmem:[%s6304 + $0x120] sm:$0xff]
      %v6342 = vld [vmem:[%s6304 + $0x128] sm:$0xff]
      %v6343 = vld [vmem:[%s6304 + $0x130] sm:$0xff]
      %v6344 = vld [vmem:[%s6304 + $0x138] sm:$0xff]
      %v6345 = vld [vmem:[%s6304 + $0x140] sm:$0xff]
      %v6346 = vld [vmem:[%s6304 + $0x148] sm:$0xff]
      %v6347 = vld [vmem:[%s6304 + $0x150] sm:$0xff]
      %v6348 = vld [vmem:[%s6304 + $0x158] sm:$0xff]
      %v6349 = vld [vmem:[%s6304 + $0x160] sm:$0xff]
      %v6350 = vld [vmem:[%s6304 + $0x168] sm:$0xff]
      %v6351 = vld [vmem:[%s6304 + $0x170] sm:$0xff]
      %v6352 = vld [vmem:[%s6304 + $0x178] sm:$0xff]
      %v6353 = vld [vmem:[%s6304 + $0x180] sm:$0xff]
      %v6354 = vld [vmem:[%s6304 + $0x188] sm:$0xff]
      %v6355 = vld [vmem:[%s6304 + $0x190] sm:$0xff]
      %v6356 = vld [vmem:[%s6304 + $0x198] sm:$0xff]
      %v6357 = vld [vmem:[%s6304 + $0x1a0] sm:$0xff]
      %v6358 = vld [vmem:[%s6304 + $0x1a8] sm:$0xff]
      %v6359 = vld [vmem:[%s6304 + $0x1b0] sm:$0xff]
      %v6360 = vld [vmem:[%s6304 + $0x1b8] sm:$0xff]
      %v6361 = vld [vmem:[%s6304 + $0x1c0] sm:$0xff]
      %v6362 = vld [vmem:[%s6304 + $0x1c8] sm:$0xff]
      %v6363 = vld [vmem:[%s6304 + $0x1d0] sm:$0xff]
      %v6364 = vld [vmem:[%s6304 + $0x1d8] sm:$0xff]
      %v6365 = vld [vmem:[%s6304 + $0x1e0] sm:$0xff]
      %v6366 = vld [vmem:[%s6304 + $0x1e8] sm:$0xff]
      %v6367 = vld [vmem:[%s6304 + $0x1f0] sm:$0xff]
      %v6368 = vld [vmem:[%s6304 + $0x1f8] sm:$0xff]
      %v6371 = vrot.slane %v6302, 2
      %v6372 = vrot.slane %v6303, 2
      %6375 = vmatpush.msra.mxu0 %v6335
      %6376 = vmatpush.msra.mxu0 %v6333
      %6377 = vmatpush.msra.mxu0 %v6331
      %6378 = vmatpush.msra.mxu0 %v6329
      %6379 = vmatpush.msra.mxu0 %v6327
      %6380 = vmatpush.msra.mxu0 %v6325
      %6381 = vmatpush.msra.mxu0 %v6323
      %6382 = vmatpush.msra.mxu0 %v6321
      %6383 = vmatpush.msra.mxu0 %v6319
      %6384 = vmatpush.msra.mxu0 %v6317
      %6385 = vmatpush.msra.mxu0 %v6315
      %6386 = vmatpush.msra.mxu0 %v6313
      %6387 = vmatpush.msra.mxu0 %v6311
      %6388 = vmatpush.msra.mxu0 %v6309
      %6389 = vmatpush.msra.mxu0 %v6307
      %6390 = vmatpush.msra.mxu0 %v6305
      %6391 = vmatmul.f32.gmra.mxu0 %v6371
      %v6392 = vpop.f32.mrf.mxu0
      %v6393 = vadd.f32 0.0, %v6392
      %6394 = vdwg.mxu0
      %6395 = vmatpush.msra.mxu0 %v6367
      %6396 = vmatpush.msra.mxu0 %v6365
      %6397 = vmatpush.msra.mxu0 %v6363
      %6398 = vmatpush.msra.mxu0 %v6361
      %6399 = vmatpush.msra.mxu0 %v6359
      %6400 = vmatpush.msra.mxu0 %v6357
      %6401 = vmatpush.msra.mxu0 %v6355
      %6402 = vmatpush.msra.mxu0 %v6353
      %6403 = vmatpush.msra.mxu0 %v6351
      %6404 = vmatpush.msra.mxu0 %v6349
      %6405 = vmatpush.msra.mxu0 %v6347
      %6406 = vmatpush.msra.mxu0 %v6345
      %6407 = vmatpush.msra.mxu0 %v6343
      %6408 = vmatpush.msra.mxu0 %v6341
      %6409 = vmatpush.msra.mxu0 %v6339
      %6410 = vmatpush.msra.mxu0 %v6337
      %6411 = vmatmul.f32.gmra.mxu0 %v6372
      %v6412 = vpop.f32.mrf.mxu0
      %v6413 = vadd.f32 %v6393, %v6412
      %6414 = vdwg.mxu0
      %6415 = vmatpush.msra.mxu0 %v6336
      %6416 = vmatpush.msra.mxu0 %v6334
      %6417 = vmatpush.msra.mxu0 %v6332
      %6418 = vmatpush.msra.mxu0 %v6330
      %6419 = vmatpush.msra.mxu0 %v6328
      %6420 = vmatpush.msra.mxu0 %v6326
      %6421 = vmatpush.msra.mxu0 %v6324
      %6422 = vmatpush.msra.mxu0 %v6322
      %6423 = vmatpush.msra.mxu0 %v6320
      %6424 = vmatpush.msra.mxu0 %v6318
      %6425 = vmatpush.msra.mxu0 %v6316
      %6426 = vmatpush.msra.mxu0 %v6314
      %6427 = vmatpush.msra.mxu0 %v6312
      %6428 = vmatpush.msra.mxu0 %v6310
      %6429 = vmatpush.msra.mxu0 %v6308
      %6430 = vmatpush.msra.mxu0 %v6306
      %6431 = vmatmul.f32.gmra.mxu0 %v6371
      %v6432 = vpop.f32.mrf.mxu0
      %v6433 = vadd.f32 0.0, %v6432
      %6434 = vdwg.mxu0
      %6435 = vmatpush.msra.mxu0 %v6368
      %6436 = vmatpush.msra.mxu0 %v6366
      %6437 = vmatpush.msra.mxu0 %v6364
      %6438 = vmatpush.msra.mxu0 %v6362
      %6439 = vmatpush.msra.mxu0 %v6360
      %6440 = vmatpush.msra.mxu0 %v6358
      %6441 = vmatpush.msra.mxu0 %v6356
      %6442 = vmatpush.msra.mxu0 %v6354
      %6443 = vmatpush.msra.mxu0 %v6352
      %6444 = vmatpush.msra.mxu0 %v6350
      %6445 = vmatpush.msra.mxu0 %v6348
      %6446 = vmatpush.msra.mxu0 %v6346
      %6447 = vmatpush.msra.mxu0 %v6344
      %6448 = vmatpush.msra.mxu0 %v6342
      %6449 = vmatpush.msra.mxu0 %v6340
      %6450 = vmatpush.msra.mxu0 %v6338
      %6451 = vmatmul.f32.gmra.mxu0 %v6372
      %v6452 = vpop.f32.mrf.mxu0
      %v6453 = vadd.f32 %v6433, %v6452
      %6454 = vdwg.mxu0
      %v6455 = vadd.f32 %v6260, %v6413
      %v6456 = vadd.f32 %v6300, %v6453
      %v6457 = vld [vmem:[#allocation8] sm:$0xf0]
      %v6458 = vld [vmem:[#allocation8 + $0x8] sm:$0xf0]
      %v6459 = vld [vmem:[#allocation8 + $0x10] sm:$0x3]
      %v6460 = vld [vmem:[#allocation8 + $0x18] sm:$0x3]
      %s6461 = scalar_lea.vmem %s13, 1536
      %v6462 = vld [vmem:[%s6461] sm:$0xff]
      %v6463 = vld [vmem:[%s6461 + $0x8] sm:$0xff]
      %v6464 = vld [vmem:[%s6461 + $0x10] sm:$0xff]
      %v6465 = vld [vmem:[%s6461 + $0x18] sm:$0xff]
      %v6466 = vld [vmem:[%s6461 + $0x20] sm:$0xff]
      %v6467 = vld [vmem:[%s6461 + $0x28] sm:$0xff]
      %v6468 = vld [vmem:[%s6461 + $0x30] sm:$0xff]
      %v6469 = vld [vmem:[%s6461 + $0x38] sm:$0xff]
      %v6470 = vld [vmem:[%s6461 + $0x40] sm:$0xff]
      %v6471 = vld [vmem:[%s6461 + $0x48] sm:$0xff]
      %v6472 = vld [vmem:[%s6461 + $0x50] sm:$0xff]
      %v6473 = vld [vmem:[%s6461 + $0x58] sm:$0xff]
      %v6474 = vld [vmem:[%s6461 + $0x60] sm:$0xff]
      %v6475 = vld [vmem:[%s6461 + $0x68] sm:$0xff]
      %v6476 = vld [vmem:[%s6461 + $0x70] sm:$0xff]
      %v6477 = vld [vmem:[%s6461 + $0x78] sm:$0xff]
      %v6478 = vld [vmem:[%s6461 + $0x80] sm:$0xff]
      %v6479 = vld [vmem:[%s6461 + $0x88] sm:$0xff]
      %v6480 = vld [vmem:[%s6461 + $0x90] sm:$0xff]
      %v6481 = vld [vmem:[%s6461 + $0x98] sm:$0xff]
      %v6482 = vld [vmem:[%s6461 + $0xa0] sm:$0xff]
      %v6483 = vld [vmem:[%s6461 + $0xa8] sm:$0xff]
      %v6484 = vld [vmem:[%s6461 + $0xb0] sm:$0xff]
      %v6485 = vld [vmem:[%s6461 + $0xb8] sm:$0xff]
      %v6486 = vld [vmem:[%s6461 + $0xc0] sm:$0xff]
      %v6487 = vld [vmem:[%s6461 + $0xc8] sm:$0xff]
      %v6488 = vld [vmem:[%s6461 + $0xd0] sm:$0xff]
      %v6489 = vld [vmem:[%s6461 + $0xd8] sm:$0xff]
      %v6490 = vld [vmem:[%s6461 + $0xe0] sm:$0xff]
      %v6491 = vld [vmem:[%s6461 + $0xe8] sm:$0xff]
      %v6492 = vld [vmem:[%s6461 + $0xf0] sm:$0xff]
      %v6493 = vld [vmem:[%s6461 + $0xf8] sm:$0xff]
      %v6494 = vld [vmem:[%s6461 + $0x100] sm:$0xff]
      %v6495 = vld [vmem:[%s6461 + $0x108] sm:$0xff]
      %v6496 = vld [vmem:[%s6461 + $0x110] sm:$0xff]
      %v6497 = vld [vmem:[%s6461 + $0x118] sm:$0xff]
      %v6498 = vld [vmem:[%s6461 + $0x120] sm:$0xff]
      %v6499 = vld [vmem:[%s6461 + $0x128] sm:$0xff]
      %v6500 = vld [vmem:[%s6461 + $0x130] sm:$0xff]
      %v6501 = vld [vmem:[%s6461 + $0x138] sm:$0xff]
      %v6502 = vld [vmem:[%s6461 + $0x140] sm:$0xff]
      %v6503 = vld [vmem:[%s6461 + $0x148] sm:$0xff]
      %v6504 = vld [vmem:[%s6461 + $0x150] sm:$0xff]
      %v6505 = vld [vmem:[%s6461 + $0x158] sm:$0xff]
      %v6506 = vld [vmem:[%s6461 + $0x160] sm:$0xff]
      %v6507 = vld [vmem:[%s6461 + $0x168] sm:$0xff]
      %v6508 = vld [vmem:[%s6461 + $0x170] sm:$0xff]
      %v6509 = vld [vmem:[%s6461 + $0x178] sm:$0xff]
      %v6510 = vld [vmem:[%s6461 + $0x180] sm:$0xff]
      %v6511 = vld [vmem:[%s6461 + $0x188] sm:$0xff]
      %v6512 = vld [vmem:[%s6461 + $0x190] sm:$0xff]
      %v6513 = vld [vmem:[%s6461 + $0x198] sm:$0xff]
      %v6514 = vld [vmem:[%s6461 + $0x1a0] sm:$0xff]
      %v6515 = vld [vmem:[%s6461 + $0x1a8] sm:$0xff]
      %v6516 = vld [vmem:[%s6461 + $0x1b0] sm:$0xff]
      %v6517 = vld [vmem:[%s6461 + $0x1b8] sm:$0xff]
      %v6518 = vld [vmem:[%s6461 + $0x1c0] sm:$0xff]
      %v6519 = vld [vmem:[%s6461 + $0x1c8] sm:$0xff]
      %v6520 = vld [vmem:[%s6461 + $0x1d0] sm:$0xff]
      %v6521 = vld [vmem:[%s6461 + $0x1d8] sm:$0xff]
      %v6522 = vld [vmem:[%s6461 + $0x1e0] sm:$0xff]
      %v6523 = vld [vmem:[%s6461 + $0x1e8] sm:$0xff]
      %v6524 = vld [vmem:[%s6461 + $0x1f0] sm:$0xff]
      %v6525 = vld [vmem:[%s6461 + $0x1f8] sm:$0xff]
      %vm6530 = vcmask 1043456
      %v6531 = vrot.slane %v6457, 4
      %v6532 = vrot.slane %v6459, 4
      %v6533 = vsel %vm6530, %v6531, %v6532
      %v6534 = vrot.slane %v6458, 4
      %v6535 = vrot.slane %v6460, 4
      %v6536 = vsel %vm6530, %v6534, %v6535
      %6539 = vmatpush.msra.mxu0 %v6492
      %6540 = vmatpush.msra.mxu0 %v6490
      %6541 = vmatpush.msra.mxu0 %v6488
      %6542 = vmatpush.msra.mxu0 %v6486
      %6543 = vmatpush.msra.mxu0 %v6484
      %6544 = vmatpush.msra.mxu0 %v6482
      %6545 = vmatpush.msra.mxu0 %v6480
      %6546 = vmatpush.msra.mxu0 %v6478
      %6547 = vmatpush.msra.mxu0 %v6476
      %6548 = vmatpush.msra.mxu0 %v6474
      %6549 = vmatpush.msra.mxu0 %v6472
      %6550 = vmatpush.msra.mxu0 %v6470
      %6551 = vmatpush.msra.mxu0 %v6468
      %6552 = vmatpush.msra.mxu0 %v6466
      %6553 = vmatpush.msra.mxu0 %v6464
      %6554 = vmatpush.msra.mxu0 %v6462
      %6555 = vmatmul.f32.gmra.mxu0 %v6533
      %v6556 = vpop.f32.mrf.mxu0
      %v6557 = vadd.f32 0.0, %v6556
      %6558 = vdwg.mxu0
      %6559 = vmatpush.msra.mxu0 %v6524
      %6560 = vmatpush.msra.mxu0 %v6522
      %6561 = vmatpush.msra.mxu0 %v6520
      %6562 = vmatpush.msra.mxu0 %v6518
      %6563 = vmatpush.msra.mxu0 %v6516
      %6564 = vmatpush.msra.mxu0 %v6514
      %6565 = vmatpush.msra.mxu0 %v6512
      %6566 = vmatpush.msra.mxu0 %v6510
      %6567 = vmatpush.msra.mxu0 %v6508
      %6568 = vmatpush.msra.mxu0 %v6506
      %6569 = vmatpush.msra.mxu0 %v6504
      %6570 = vmatpush.msra.mxu0 %v6502
      %6571 = vmatpush.msra.mxu0 %v6500
      %6572 = vmatpush.msra.mxu0 %v6498
      %6573 = vmatpush.msra.mxu0 %v6496
      %6574 = vmatpush.msra.mxu0 %v6494
      %6575 = vmatmul.f32.gmra.mxu0 %v6536
      %v6576 = vpop.f32.mrf.mxu0
      %v6577 = vadd.f32 %v6557, %v6576
      %6578 = vdwg.mxu0
      %6579 = vmatpush.msra.mxu0 %v6493
      %6580 = vmatpush.msra.mxu0 %v6491
      %6581 = vmatpush.msra.mxu0 %v6489
      %6582 = vmatpush.msra.mxu0 %v6487
      %6583 = vmatpush.msra.mxu0 %v6485
      %6584 = vmatpush.msra.mxu0 %v6483
      %6585 = vmatpush.msra.mxu0 %v6481
      %6586 = vmatpush.msra.mxu0 %v6479
      %6587 = vmatpush.msra.mxu0 %v6477
      %6588 = vmatpush.msra.mxu0 %v6475
      %6589 = vmatpush.msra.mxu0 %v6473
      %6590 = vmatpush.msra.mxu0 %v6471
      %6591 = vmatpush.msra.mxu0 %v6469
      %6592 = vmatpush.msra.mxu0 %v6467
      %6593 = vmatpush.msra.mxu0 %v6465
      %6594 = vmatpush.msra.mxu0 %v6463
      %6595 = vmatmul.f32.gmra.mxu0 %v6533
      %v6596 = vpop.f32.mrf.mxu0
      %v6597 = vadd.f32 0.0, %v6596
      %6598 = vdwg.mxu0
      %6599 = vmatpush.msra.mxu0 %v6525
      %6600 = vmatpush.msra.mxu0 %v6523
      %6601 = vmatpush.msra.mxu0 %v6521
      %6602 = vmatpush.msra.mxu0 %v6519
      %6603 = vmatpush.msra.mxu0 %v6517
      %6604 = vmatpush.msra.mxu0 %v6515
      %6605 = vmatpush.msra.mxu0 %v6513
      %6606 = vmatpush.msra.mxu0 %v6511
      %6607 = vmatpush.msra.mxu0 %v6509
      %6608 = vmatpush.msra.mxu0 %v6507
      %6609 = vmatpush.msra.mxu0 %v6505
      %6610 = vmatpush.msra.mxu0 %v6503
      %6611 = vmatpush.msra.mxu0 %v6501
      %6612 = vmatpush.msra.mxu0 %v6499
      %6613 = vmatpush.msra.mxu0 %v6497
      %6614 = vmatpush.msra.mxu0 %v6495
      %6615 = vmatmul.f32.gmra.mxu0 %v6536
      %v6616 = vpop.f32.mrf.mxu0
      %v6617 = vadd.f32 %v6597, %v6616
      %6618 = vdwg.mxu0
      %v6619 = vadd.f32 %v6455, %v6577
      %v6620 = vadd.f32 %v6456, %v6617
      %v6621 = vld [vmem:[#allocation8] sm:$0xe0]
      %v6622 = vld [vmem:[#allocation8 + $0x8] sm:$0xe0]
      %v6623 = vld [vmem:[#allocation8 + $0x10] sm:$0x7]
      %v6624 = vld [vmem:[#allocation8 + $0x18] sm:$0x7]
      %s6625 = scalar_lea.vmem %s13, 2048
      %v6626 = vld [vmem:[%s6625] sm:$0xff]
      %v6627 = vld [vmem:[%s6625 + $0x8] sm:$0xff]
      %v6628 = vld [vmem:[%s6625 + $0x10] sm:$0xff]
      %v6629 = vld [vmem:[%s6625 + $0x18] sm:$0xff]
      %v6630 = vld [vmem:[%s6625 + $0x20] sm:$0xff]
      %v6631 = vld [vmem:[%s6625 + $0x28] sm:$0xff]
      %v6632 = vld [vmem:[%s6625 + $0x30] sm:$0xff]
      %v6633 = vld [vmem:[%s6625 + $0x38] sm:$0xff]
      %v6634 = vld [vmem:[%s6625 + $0x40] sm:$0xff]
      %v6635 = vld [vmem:[%s6625 + $0x48] sm:$0xff]
      %v6636 = vld [vmem:[%s6625 + $0x50] sm:$0xff]
      %v6637 = vld [vmem:[%s6625 + $0x58] sm:$0xff]
      %v6638 = vld [vmem:[%s6625 + $0x60] sm:$0xff]
      %v6639 = vld [vmem:[%s6625 + $0x68] sm:$0xff]
      %v6640 = vld [vmem:[%s6625 + $0x70] sm:$0xff]
      %v6641 = vld [vmem:[%s6625 + $0x78] sm:$0xff]
      %v6642 = vld [vmem:[%s6625 + $0x80] sm:$0xff]
      %v6643 = vld [vmem:[%s6625 + $0x88] sm:$0xff]
      %v6644 = vld [vmem:[%s6625 + $0x90] sm:$0xff]
      %v6645 = vld [vmem:[%s6625 + $0x98] sm:$0xff]
      %v6646 = vld [vmem:[%s6625 + $0xa0] sm:$0xff]
      %v6647 = vld [vmem:[%s6625 + $0xa8] sm:$0xff]
      %v6648 = vld [vmem:[%s6625 + $0xb0] sm:$0xff]
      %v6649 = vld [vmem:[%s6625 + $0xb8] sm:$0xff]
      %v6650 = vld [vmem:[%s6625 + $0xc0] sm:$0xff]
      %v6651 = vld [vmem:[%s6625 + $0xc8] sm:$0xff]
      %v6652 = vld [vmem:[%s6625 + $0xd0] sm:$0xff]
      %v6653 = vld [vmem:[%s6625 + $0xd8] sm:$0xff]
      %v6654 = vld [vmem:[%s6625 + $0xe0] sm:$0xff]
      %v6655 = vld [vmem:[%s6625 + $0xe8] sm:$0xff]
      %v6656 = vld [vmem:[%s6625 + $0xf0] sm:$0xff]
      %v6657 = vld [vmem:[%s6625 + $0xf8] sm:$0xff]
      %v6658 = vld [vmem:[%s6625 + $0x100] sm:$0xff]
      %v6659 = vld [vmem:[%s6625 + $0x108] sm:$0xff]
      %v6660 = vld [vmem:[%s6625 + $0x110] sm:$0xff]
      %v6661 = vld [vmem:[%s6625 + $0x118] sm:$0xff]
      %v6662 = vld [vmem:[%s6625 + $0x120] sm:$0xff]
      %v6663 = vld [vmem:[%s6625 + $0x128] sm:$0xff]
      %v6664 = vld [vmem:[%s6625 + $0x130] sm:$0xff]
      %v6665 = vld [vmem:[%s6625 + $0x138] sm:$0xff]
      %v6666 = vld [vmem:[%s6625 + $0x140] sm:$0xff]
      %v6667 = vld [vmem:[%s6625 + $0x148] sm:$0xff]
      %v6668 = vld [vmem:[%s6625 + $0x150] sm:$0xff]
      %v6669 = vld [vmem:[%s6625 + $0x158] sm:$0xff]
      %v6670 = vld [vmem:[%s6625 + $0x160] sm:$0xff]
      %v6671 = vld [vmem:[%s6625 + $0x168] sm:$0xff]
      %v6672 = vld [vmem:[%s6625 + $0x170] sm:$0xff]
      %v6673 = vld [vmem:[%s6625 + $0x178] sm:$0xff]
      %v6674 = vld [vmem:[%s6625 + $0x180] sm:$0xff]
      %v6675 = vld [vmem:[%s6625 + $0x188] sm:$0xff]
      %v6676 = vld [vmem:[%s6625 + $0x190] sm:$0xff]
      %v6677 = vld [vmem:[%s6625 + $0x198] sm:$0xff]
      %v6678 = vld [vmem:[%s6625 + $0x1a0] sm:$0xff]
      %v6679 = vld [vmem:[%s6625 + $0x1a8] sm:$0xff]
      %v6680 = vld [vmem:[%s6625 + $0x1b0] sm:$0xff]
      %v6681 = vld [vmem:[%s6625 + $0x1b8] sm:$0xff]
      %v6682 = vld [vmem:[%s6625 + $0x1c0] sm:$0xff]
      %v6683 = vld [vmem:[%s6625 + $0x1c8] sm:$0xff]
      %v6684 = vld [vmem:[%s6625 + $0x1d0] sm:$0xff]
      %v6685 = vld [vmem:[%s6625 + $0x1d8] sm:$0xff]
      %v6686 = vld [vmem:[%s6625 + $0x1e0] sm:$0xff]
      %v6687 = vld [vmem:[%s6625 + $0x1e8] sm:$0xff]
      %v6688 = vld [vmem:[%s6625 + $0x1f0] sm:$0xff]
      %v6689 = vld [vmem:[%s6625 + $0x1f8] sm:$0xff]
      %vm6694 = vcmask 1042432
      %v6695 = vrot.slane %v6621, 5
      %v6696 = vrot.slane %v6623, 5
      %v6697 = vsel %vm6694, %v6695, %v6696
      %v6698 = vrot.slane %v6622, 5
      %v6699 = vrot.slane %v6624, 5
      %v6700 = vsel %vm6694, %v6698, %v6699
      %6703 = vmatpush.msra.mxu0 %v6656
      %6704 = vmatpush.msra.mxu0 %v6654
      %6705 = vmatpush.msra.mxu0 %v6652
      %6706 = vmatpush.msra.mxu0 %v6650
      %6707 = vmatpush.msra.mxu0 %v6648
      %6708 = vmatpush.msra.mxu0 %v6646
      %6709 = vmatpush.msra.mxu0 %v6644
      %6710 = vmatpush.msra.mxu0 %v6642
      %6711 = vmatpush.msra.mxu0 %v6640
      %6712 = vmatpush.msra.mxu0 %v6638
      %6713 = vmatpush.msra.mxu0 %v6636
      %6714 = vmatpush.msra.mxu0 %v6634
      %6715 = vmatpush.msra.mxu0 %v6632
      %6716 = vmatpush.msra.mxu0 %v6630
      %6717 = vmatpush.msra.mxu0 %v6628
      %6718 = vmatpush.msra.mxu0 %v6626
      %6719 = vmatmul.f32.gmra.mxu0 %v6697
      %v6720 = vpop.f32.mrf.mxu0
      %v6721 = vadd.f32 0.0, %v6720
      %6722 = vdwg.mxu0
      %6723 = vmatpush.msra.mxu0 %v6688
      %6724 = vmatpush.msra.mxu0 %v6686
      %6725 = vmatpush.msra.mxu0 %v6684
      %6726 = vmatpush.msra.mxu0 %v6682
      %6727 = vmatpush.msra.mxu0 %v6680
      %6728 = vmatpush.msra.mxu0 %v6678
      %6729 = vmatpush.msra.mxu0 %v6676
      %6730 = vmatpush.msra.mxu0 %v6674
      %6731 = vmatpush.msra.mxu0 %v6672
      %6732 = vmatpush.msra.mxu0 %v6670
      %6733 = vmatpush.msra.mxu0 %v6668
      %6734 = vmatpush.msra.mxu0 %v6666
      %6735 = vmatpush.msra.mxu0 %v6664
      %6736 = vmatpush.msra.mxu0 %v6662
      %6737 = vmatpush.msra.mxu0 %v6660
      %6738 = vmatpush.msra.mxu0 %v6658
      %6739 = vmatmul.f32.gmra.mxu0 %v6700
      %v6740 = vpop.f32.mrf.mxu0
      %v6741 = vadd.f32 %v6721, %v6740
      %6742 = vdwg.mxu0
      %6743 = vmatpush.msra.mxu0 %v6657
      %6744 = vmatpush.msra.mxu0 %v6655
      %6745 = vmatpush.msra.mxu0 %v6653
      %6746 = vmatpush.msra.mxu0 %v6651
      %6747 = vmatpush.msra.mxu0 %v6649
      %6748 = vmatpush.msra.mxu0 %v6647
      %6749 = vmatpush.msra.mxu0 %v6645
      %6750 = vmatpush.msra.mxu0 %v6643
      %6751 = vmatpush.msra.mxu0 %v6641
      %6752 = vmatpush.msra.mxu0 %v6639
      %6753 = vmatpush.msra.mxu0 %v6637
      %6754 = vmatpush.msra.mxu0 %v6635
      %6755 = vmatpush.msra.mxu0 %v6633
      %6756 = vmatpush.msra.mxu0 %v6631
      %6757 = vmatpush.msra.mxu0 %v6629
      %6758 = vmatpush.msra.mxu0 %v6627
      %6759 = vmatmul.f32.gmra.mxu0 %v6697
      %v6760 = vpop.f32.mrf.mxu0
      %v6761 = vadd.f32 0.0, %v6760
      %6762 = vdwg.mxu0
      %6763 = vmatpush.msra.mxu0 %v6689
      %6764 = vmatpush.msra.mxu0 %v6687
      %6765 = vmatpush.msra.mxu0 %v6685
      %6766 = vmatpush.msra.mxu0 %v6683
      %6767 = vmatpush.msra.mxu0 %v6681
      %6768 = vmatpush.msra.mxu0 %v6679
      %6769 = vmatpush.msra.mxu0 %v6677
      %6770 = vmatpush.msra.mxu0 %v6675
      %6771 = vmatpush.msra.mxu0 %v6673
      %6772 = vmatpush.msra.mxu0 %v6671
      %6773 = vmatpush.msra.mxu0 %v6669
      %6774 = vmatpush.msra.mxu0 %v6667
      %6775 = vmatpush.msra.mxu0 %v6665
      %6776 = vmatpush.msra.mxu0 %v6663
      %6777 = vmatpush.msra.mxu0 %v6661
      %6778 = vmatpush.msra.mxu0 %v6659
      %6779 = vmatmul.f32.gmra.mxu0 %v6700
      %v6780 = vpop.f32.mrf.mxu0
      %v6781 = vadd.f32 %v6761, %v6780
      %6782 = vdwg.mxu0
      %v6783 = vadd.f32 %v6619, %v6741
      %v6784 = vadd.f32 %v6620, %v6781
      %v6785 = vld [vmem:[#allocation8] sm:$0xc0]
      %v6786 = vld [vmem:[#allocation8 + $0x8] sm:$0xc0]
      %v6787 = vld [vmem:[#allocation8 + $0x10] sm:$0xf]
      %v6788 = vld [vmem:[#allocation8 + $0x18] sm:$0xf]
      %s6789 = scalar_lea.vmem %s13, 2560
      %v6790 = vld [vmem:[%s6789] sm:$0xff]
      %v6791 = vld [vmem:[%s6789 + $0x8] sm:$0xff]
      %v6792 = vld [vmem:[%s6789 + $0x10] sm:$0xff]
      %v6793 = vld [vmem:[%s6789 + $0x18] sm:$0xff]
      %v6794 = vld [vmem:[%s6789 + $0x20] sm:$0xff]
      %v6795 = vld [vmem:[%s6789 + $0x28] sm:$0xff]
      %v6796 = vld [vmem:[%s6789 + $0x30] sm:$0xff]
      %v6797 = vld [vmem:[%s6789 + $0x38] sm:$0xff]
      %v6798 = vld [vmem:[%s6789 + $0x40] sm:$0xff]
      %v6799 = vld [vmem:[%s6789 + $0x48] sm:$0xff]
      %v6800 = vld [vmem:[%s6789 + $0x50] sm:$0xff]
      %v6801 = vld [vmem:[%s6789 + $0x58] sm:$0xff]
      %v6802 = vld [vmem:[%s6789 + $0x60] sm:$0xff]
      %v6803 = vld [vmem:[%s6789 + $0x68] sm:$0xff]
      %v6804 = vld [vmem:[%s6789 + $0x70] sm:$0xff]
      %v6805 = vld [vmem:[%s6789 + $0x78] sm:$0xff]
      %v6806 = vld [vmem:[%s6789 + $0x80] sm:$0xff]
      %v6807 = vld [vmem:[%s6789 + $0x88] sm:$0xff]
      %v6808 = vld [vmem:[%s6789 + $0x90] sm:$0xff]
      %v6809 = vld [vmem:[%s6789 + $0x98] sm:$0xff]
      %v6810 = vld [vmem:[%s6789 + $0xa0] sm:$0xff]
      %v6811 = vld [vmem:[%s6789 + $0xa8] sm:$0xff]
      %v6812 = vld [vmem:[%s6789 + $0xb0] sm:$0xff]
      %v6813 = vld [vmem:[%s6789 + $0xb8] sm:$0xff]
      %v6814 = vld [vmem:[%s6789 + $0xc0] sm:$0xff]
      %v6815 = vld [vmem:[%s6789 + $0xc8] sm:$0xff]
      %v6816 = vld [vmem:[%s6789 + $0xd0] sm:$0xff]
      %v6817 = vld [vmem:[%s6789 + $0xd8] sm:$0xff]
      %v6818 = vld [vmem:[%s6789 + $0xe0] sm:$0xff]
      %v6819 = vld [vmem:[%s6789 + $0xe8] sm:$0xff]
      %v6820 = vld [vmem:[%s6789 + $0xf0] sm:$0xff]
      %v6821 = vld [vmem:[%s6789 + $0xf8] sm:$0xff]
      %v6822 = vld [vmem:[%s6789 + $0x100] sm:$0xff]
      %v6823 = vld [vmem:[%s6789 + $0x108] sm:$0xff]
      %v6824 = vld [vmem:[%s6789 + $0x110] sm:$0xff]
      %v6825 = vld [vmem:[%s6789 + $0x118] sm:$0xff]
      %v6826 = vld [vmem:[%s6789 + $0x120] sm:$0xff]
      %v6827 = vld [vmem:[%s6789 + $0x128] sm:$0xff]
      %v6828 = vld [vmem:[%s6789 + $0x130] sm:$0xff]
      %v6829 = vld [vmem:[%s6789 + $0x138] sm:$0xff]
      %v6830 = vld [vmem:[%s6789 + $0x140] sm:$0xff]
      %v6831 = vld [vmem:[%s6789 + $0x148] sm:$0xff]
      %v6832 = vld [vmem:[%s6789 + $0x150] sm:$0xff]
      %v6833 = vld [vmem:[%s6789 + $0x158] sm:$0xff]
      %v6834 = vld [vmem:[%s6789 + $0x160] sm:$0xff]
      %v6835 = vld [vmem:[%s6789 + $0x168] sm:$0xff]
      %v6836 = vld [vmem:[%s6789 + $0x170] sm:$0xff]
      %v6837 = vld [vmem:[%s6789 + $0x178] sm:$0xff]
      %v6838 = vld [vmem:[%s6789 + $0x180] sm:$0xff]
      %v6839 = vld [vmem:[%s6789 + $0x188] sm:$0xff]
      %v6840 = vld [vmem:[%s6789 + $0x190] sm:$0xff]
      %v6841 = vld [vmem:[%s6789 + $0x198] sm:$0xff]
      %v6842 = vld [vmem:[%s6789 + $0x1a0] sm:$0xff]
      %v6843 = vld [vmem:[%s6789 + $0x1a8] sm:$0xff]
      %v6844 = vld [vmem:[%s6789 + $0x1b0] sm:$0xff]
      %v6845 = vld [vmem:[%s6789 + $0x1b8] sm:$0xff]
      %v6846 = vld [vmem:[%s6789 + $0x1c0] sm:$0xff]
      %v6847 = vld [vmem:[%s6789 + $0x1c8] sm:$0xff]
      %v6848 = vld [vmem:[%s6789 + $0x1d0] sm:$0xff]
      %v6849 = vld [vmem:[%s6789 + $0x1d8] sm:$0xff]
      %v6850 = vld [vmem:[%s6789 + $0x1e0] sm:$0xff]
      %v6851 = vld [vmem:[%s6789 + $0x1e8] sm:$0xff]
      %v6852 = vld [vmem:[%s6789 + $0x1f0] sm:$0xff]
      %v6853 = vld [vmem:[%s6789 + $0x1f8] sm:$0xff]
      %v6858 = vrot.slane %v6785, 6
      %v6859 = vrot.slane %v6787, 6
      %v6860 = vsel %vm4709, %v6858, %v6859
      %v6861 = vrot.slane %v6786, 6
      %v6862 = vrot.slane %v6788, 6
      %v6863 = vsel %vm4709, %v6861, %v6862
      %6866 = vmatpush.msra.mxu0 %v6820
      %6867 = vmatpush.msra.mxu0 %v6818
      %6868 = vmatpush.msra.mxu0 %v6816
      %6869 = vmatpush.msra.mxu0 %v6814
      %6870 = vmatpush.msra.mxu0 %v6812
      %6871 = vmatpush.msra.mxu0 %v6810
      %6872 = vmatpush.msra.mxu0 %v6808
      %6873 = vmatpush.msra.mxu0 %v6806
      %6874 = vmatpush.msra.mxu0 %v6804
      %6875 = vmatpush.msra.mxu0 %v6802
      %6876 = vmatpush.msra.mxu0 %v6800
      %6877 = vmatpush.msra.mxu0 %v6798
      %6878 = vmatpush.msra.mxu0 %v6796
      %6879 = vmatpush.msra.mxu0 %v6794
      %6880 = vmatpush.msra.mxu0 %v6792
      %6881 = vmatpush.msra.mxu0 %v6790
      %6882 = vmatmul.f32.gmra.mxu0 %v6860
      %v6883 = vpop.f32.mrf.mxu0
      %v6884 = vadd.f32 0.0, %v6883
      %6885 = vdwg.mxu0
      %6886 = vmatpush.msra.mxu0 %v6852
      %6887 = vmatpush.msra.mxu0 %v6850
      %6888 = vmatpush.msra.mxu0 %v6848
      %6889 = vmatpush.msra.mxu0 %v6846
      %6890 = vmatpush.msra.mxu0 %v6844
      %6891 = vmatpush.msra.mxu0 %v6842
      %6892 = vmatpush.msra.mxu0 %v6840
      %6893 = vmatpush.msra.mxu0 %v6838
      %6894 = vmatpush.msra.mxu0 %v6836
      %6895 = vmatpush.msra.mxu0 %v6834
      %6896 = vmatpush.msra.mxu0 %v6832
      %6897 = vmatpush.msra.mxu0 %v6830
      %6898 = vmatpush.msra.mxu0 %v6828
      %6899 = vmatpush.msra.mxu0 %v6826
      %6900 = vmatpush.msra.mxu0 %v6824
      %6901 = vmatpush.msra.mxu0 %v6822
      %6902 = vmatmul.f32.gmra.mxu0 %v6863
      %v6903 = vpop.f32.mrf.mxu0
      %v6904 = vadd.f32 %v6884, %v6903
      %6905 = vdwg.mxu0
      %6906 = vmatpush.msra.mxu0 %v6821
      %6907 = vmatpush.msra.mxu0 %v6819
      %6908 = vmatpush.msra.mxu0 %v6817
      %6909 = vmatpush.msra.mxu0 %v6815
      %6910 = vmatpush.msra.mxu0 %v6813
      %6911 = vmatpush.msra.mxu0 %v6811
      %6912 = vmatpush.msra.mxu0 %v6809
      %6913 = vmatpush.msra.mxu0 %v6807
      %6914 = vmatpush.msra.mxu0 %v6805
      %6915 = vmatpush.msra.mxu0 %v6803
      %6916 = vmatpush.msra.mxu0 %v6801
      %6917 = vmatpush.msra.mxu0 %v6799
      %6918 = vmatpush.msra.mxu0 %v6797
      %6919 = vmatpush.msra.mxu0 %v6795
      %6920 = vmatpush.msra.mxu0 %v6793
      %6921 = vmatpush.msra.mxu0 %v6791
      %6922 = vmatmul.f32.gmra.mxu0 %v6860
      %v6923 = vpop.f32.mrf.mxu0
      %v6924 = vadd.f32 0.0, %v6923
      %6925 = vdwg.mxu0
      %6926 = vmatpush.msra.mxu0 %v6853
      %6927 = vmatpush.msra.mxu0 %v6851
      %6928 = vmatpush.msra.mxu0 %v6849
      %6929 = vmatpush.msra.mxu0 %v6847
      %6930 = vmatpush.msra.mxu0 %v6845
      %6931 = vmatpush.msra.mxu0 %v6843
      %6932 = vmatpush.msra.mxu0 %v6841
      %6933 = vmatpush.msra.mxu0 %v6839
      %6934 = vmatpush.msra.mxu0 %v6837
      %6935 = vmatpush.msra.mxu0 %v6835
      %6936 = vmatpush.msra.mxu0 %v6833
      %6937 = vmatpush.msra.mxu0 %v6831
      %6938 = vmatpush.msra.mxu0 %v6829
      %6939 = vmatpush.msra.mxu0 %v6827
      %6940 = vmatpush.msra.mxu0 %v6825
      %6941 = vmatpush.msra.mxu0 %v6823
      %6942 = vmatmul.f32.gmra.mxu0 %v6863
      %v6943 = vpop.f32.mrf.mxu0
      %v6944 = vadd.f32 %v6924, %v6943
      %6945 = vdwg.mxu0
      %v6946 = vadd.f32 %v6783, %v6904
      %v6947 = vadd.f32 %v6784, %v6944
      %v6948 = vld [vmem:[#allocation8 + $0x10] sm:$0x3f]
      %v6949 = vld [vmem:[#allocation8 + $0x18] sm:$0x3f]
      %s6950 = scalar_lea.vmem %s13, 3072
      %v6951 = vld [vmem:[%s6950] sm:$0xff]
      %v6952 = vld [vmem:[%s6950 + $0x8] sm:$0xff]
      %v6953 = vld [vmem:[%s6950 + $0x10] sm:$0xff]
      %v6954 = vld [vmem:[%s6950 + $0x18] sm:$0xff]
      %v6955 = vld [vmem:[%s6950 + $0x20] sm:$0xff]
      %v6956 = vld [vmem:[%s6950 + $0x28] sm:$0xff]
      %v6957 = vld [vmem:[%s6950 + $0x30] sm:$0xff]
      %v6958 = vld [vmem:[%s6950 + $0x38] sm:$0xff]
      %v6959 = vld [vmem:[%s6950 + $0x40] sm:$0xff]
      %v6960 = vld [vmem:[%s6950 + $0x48] sm:$0xff]
      %v6961 = vld [vmem:[%s6950 + $0x50] sm:$0xff]
      %v6962 = vld [vmem:[%s6950 + $0x58] sm:$0xff]
      %v6963 = vld [vmem:[%s6950 + $0x60] sm:$0xff]
      %v6964 = vld [vmem:[%s6950 + $0x68] sm:$0xff]
      %v6965 = vld [vmem:[%s6950 + $0x70] sm:$0xff]
      %v6966 = vld [vmem:[%s6950 + $0x78] sm:$0xff]
      %v6967 = vld [vmem:[%s6950 + $0x80] sm:$0xff]
      %v6968 = vld [vmem:[%s6950 + $0x88] sm:$0xff]
      %v6969 = vld [vmem:[%s6950 + $0x90] sm:$0xff]
      %v6970 = vld [vmem:[%s6950 + $0x98] sm:$0xff]
      %v6971 = vld [vmem:[%s6950 + $0xa0] sm:$0xff]
      %v6972 = vld [vmem:[%s6950 + $0xa8] sm:$0xff]
      %v6973 = vld [vmem:[%s6950 + $0xb0] sm:$0xff]
      %v6974 = vld [vmem:[%s6950 + $0xb8] sm:$0xff]
      %v6975 = vld [vmem:[%s6950 + $0xc0] sm:$0xff]
      %v6976 = vld [vmem:[%s6950 + $0xc8] sm:$0xff]
      %v6977 = vld [vmem:[%s6950 + $0xd0] sm:$0xff]
      %v6978 = vld [vmem:[%s6950 + $0xd8] sm:$0xff]
      %v6979 = vld [vmem:[%s6950 + $0xe0] sm:$0xff]
      %v6980 = vld [vmem:[%s6950 + $0xe8] sm:$0xff]
      %v6981 = vld [vmem:[%s6950 + $0xf0] sm:$0xff]
      %v6982 = vld [vmem:[%s6950 + $0xf8] sm:$0xff]
      %v6983 = vld [vmem:[%s6950 + $0x100] sm:$0xff]
      %v6984 = vld [vmem:[%s6950 + $0x108] sm:$0xff]
      %v6985 = vld [vmem:[%s6950 + $0x110] sm:$0xff]
      %v6986 = vld [vmem:[%s6950 + $0x118] sm:$0xff]
      %v6987 = vld [vmem:[%s6950 + $0x120] sm:$0xff]
      %v6988 = vld [vmem:[%s6950 + $0x128] sm:$0xff]
      %v6989 = vld [vmem:[%s6950 + $0x130] sm:$0xff]
      %v6990 = vld [vmem:[%s6950 + $0x138] sm:$0xff]
      %v6991 = vld [vmem:[%s6950 + $0x140] sm:$0xff]
      %v6992 = vld [vmem:[%s6950 + $0x148] sm:$0xff]
      %v6993 = vld [vmem:[%s6950 + $0x150] sm:$0xff]
      %v6994 = vld [vmem:[%s6950 + $0x158] sm:$0xff]
      %v6995 = vld [vmem:[%s6950 + $0x160] sm:$0xff]
      %v6996 = vld [vmem:[%s6950 + $0x168] sm:$0xff]
      %v6997 = vld [vmem:[%s6950 + $0x170] sm:$0xff]
      %v6998 = vld [vmem:[%s6950 + $0x178] sm:$0xff]
      %v6999 = vld [vmem:[%s6950 + $0x180] sm:$0xff]
      %v7000 = vld [vmem:[%s6950 + $0x188] sm:$0xff]
      %v7001 = vld [vmem:[%s6950 + $0x190] sm:$0xff]
      %v7002 = vld [vmem:[%s6950 + $0x198] sm:$0xff]
      %v7003 = vld [vmem:[%s6950 + $0x1a0] sm:$0xff]
      %v7004 = vld [vmem:[%s6950 + $0x1a8] sm:$0xff]
      %v7005 = vld [vmem:[%s6950 + $0x1b0] sm:$0xff]
      %v7006 = vld [vmem:[%s6950 + $0x1b8] sm:$0xff]
      %v7007 = vld [vmem:[%s6950 + $0x1c0] sm:$0xff]
      %v7008 = vld [vmem:[%s6950 + $0x1c8] sm:$0xff]
      %v7009 = vld [vmem:[%s6950 + $0x1d0] sm:$0xff]
      %v7010 = vld [vmem:[%s6950 + $0x1d8] sm:$0xff]
      %v7011 = vld [vmem:[%s6950 + $0x1e0] sm:$0xff]
      %v7012 = vld [vmem:[%s6950 + $0x1e8] sm:$0xff]
      %v7013 = vld [vmem:[%s6950 + $0x1f0] sm:$0xff]
      %v7014 = vld [vmem:[%s6950 + $0x1f8] sm:$0xff]
      %7015 = vmatpush.msra.mxu0 %v6981
      %7016 = vmatpush.msra.mxu0 %v6979
      %7017 = vmatpush.msra.mxu0 %v6977
      %7018 = vmatpush.msra.mxu0 %v6975
      %7019 = vmatpush.msra.mxu0 %v6973
      %7020 = vmatpush.msra.mxu0 %v6971
      %7021 = vmatpush.msra.mxu0 %v6969
      %7022 = vmatpush.msra.mxu0 %v6967
      %7023 = vmatpush.msra.mxu0 %v6965
      %7024 = vmatpush.msra.mxu0 %v6963
      %7025 = vmatpush.msra.mxu0 %v6961
      %7026 = vmatpush.msra.mxu0 %v6959
      %7027 = vmatpush.msra.mxu0 %v6957
      %7028 = vmatpush.msra.mxu0 %v6955
      %7029 = vmatpush.msra.mxu0 %v6953
      %7030 = vmatpush.msra.mxu0 %v6951
      %7031 = vmatmul.f32.gmra.mxu0 %v6948
      %v7032 = vpop.f32.mrf.mxu0
      %v7033 = vadd.f32 0.0, %v7032
      %7034 = vdwg.mxu0
      %7035 = vmatpush.msra.mxu0 %v7013
      %7036 = vmatpush.msra.mxu0 %v7011
      %7037 = vmatpush.msra.mxu0 %v7009
      %7038 = vmatpush.msra.mxu0 %v7007
      %7039 = vmatpush.msra.mxu0 %v7005
      %7040 = vmatpush.msra.mxu0 %v7003
      %7041 = vmatpush.msra.mxu0 %v7001
      %7042 = vmatpush.msra.mxu0 %v6999
      %7043 = vmatpush.msra.mxu0 %v6997
      %7044 = vmatpush.msra.mxu0 %v6995
      %7045 = vmatpush.msra.mxu0 %v6993
      %7046 = vmatpush.msra.mxu0 %v6991
      %7047 = vmatpush.msra.mxu0 %v6989
      %7048 = vmatpush.msra.mxu0 %v6987
      %7049 = vmatpush.msra.mxu0 %v6985
      %7050 = vmatpush.msra.mxu0 %v6983
      %7051 = vmatmul.f32.gmra.mxu0 %v6949
      %v7052 = vpop.f32.mrf.mxu0
      %v7053 = vadd.f32 %v7033, %v7052
      %7054 = vdwg.mxu0
      %7055 = vmatpush.msra.mxu0 %v6982
      %7056 = vmatpush.msra.mxu0 %v6980
      %7057 = vmatpush.msra.mxu0 %v6978
      %7058 = vmatpush.msra.mxu0 %v6976
      %7059 = vmatpush.msra.mxu0 %v6974
      %7060 = vmatpush.msra.mxu0 %v6972
      %7061 = vmatpush.msra.mxu0 %v6970
      %7062 = vmatpush.msra.mxu0 %v6968
      %7063 = vmatpush.msra.mxu0 %v6966
      %7064 = vmatpush.msra.mxu0 %v6964
      %7065 = vmatpush.msra.mxu0 %v6962
      %7066 = vmatpush.msra.mxu0 %v6960
      %7067 = vmatpush.msra.mxu0 %v6958
      %7068 = vmatpush.msra.mxu0 %v6956
      %7069 = vmatpush.msra.mxu0 %v6954
      %7070 = vmatpush.msra.mxu0 %v6952
      %7071 = vmatmul.f32.gmra.mxu0 %v6948
      %v7072 = vpop.f32.mrf.mxu0
      %v7073 = vadd.f32 0.0, %v7072
      %7074 = vdwg.mxu0
      %7075 = vmatpush.msra.mxu0 %v7014
      %7076 = vmatpush.msra.mxu0 %v7012
      %7077 = vmatpush.msra.mxu0 %v7010
      %7078 = vmatpush.msra.mxu0 %v7008
      %7079 = vmatpush.msra.mxu0 %v7006
      %7080 = vmatpush.msra.mxu0 %v7004
      %7081 = vmatpush.msra.mxu0 %v7002
      %7082 = vmatpush.msra.mxu0 %v7000
      %7083 = vmatpush.msra.mxu0 %v6998
      %7084 = vmatpush.msra.mxu0 %v6996
      %7085 = vmatpush.msra.mxu0 %v6994
      %7086 = vmatpush.msra.mxu0 %v6992
      %7087 = vmatpush.msra.mxu0 %v6990
      %7088 = vmatpush.msra.mxu0 %v6988
      %7089 = vmatpush.msra.mxu0 %v6986
      %7090 = vmatpush.msra.mxu0 %v6984
      %7091 = vmatmul.f32.gmra.mxu0 %v6949
      %v7092 = vpop.f32.mrf.mxu0
      %v7093 = vadd.f32 %v7073, %v7092
      %7094 = vdwg.mxu0
      %v7095 = vadd.f32 %v6946, %v7053
      %v7096 = vadd.f32 %v6947, %v7093
      %v7097 = vld [vmem:[#allocation8 + $0x10] sm:$0x7e]
      %v7098 = vld [vmem:[#allocation8 + $0x18] sm:$0x7e]
      %s7099 = scalar_lea.vmem %s13, 3584
      %v7100 = vld [vmem:[%s7099] sm:$0xff]
      %v7101 = vld [vmem:[%s7099 + $0x8] sm:$0xff]
      %v7102 = vld [vmem:[%s7099 + $0x10] sm:$0xff]
      %v7103 = vld [vmem:[%s7099 + $0x18] sm:$0xff]
      %v7104 = vld [vmem:[%s7099 + $0x20] sm:$0xff]
      %v7105 = vld [vmem:[%s7099 + $0x28] sm:$0xff]
      %v7106 = vld [vmem:[%s7099 + $0x30] sm:$0xff]
      %v7107 = vld [vmem:[%s7099 + $0x38] sm:$0xff]
      %v7108 = vld [vmem:[%s7099 + $0x40] sm:$0xff]
      %v7109 = vld [vmem:[%s7099 + $0x48] sm:$0xff]
      %v7110 = vld [vmem:[%s7099 + $0x50] sm:$0xff]
      %v7111 = vld [vmem:[%s7099 + $0x58] sm:$0xff]
      %v7112 = vld [vmem:[%s7099 + $0x60] sm:$0xff]
      %v7113 = vld [vmem:[%s7099 + $0x68] sm:$0xff]
      %v7114 = vld [vmem:[%s7099 + $0x70] sm:$0xff]
      %v7115 = vld [vmem:[%s7099 + $0x78] sm:$0xff]
      %v7116 = vld [vmem:[%s7099 + $0x80] sm:$0xff]
      %v7117 = vld [vmem:[%s7099 + $0x88] sm:$0xff]
      %v7118 = vld [vmem:[%s7099 + $0x90] sm:$0xff]
      %v7119 = vld [vmem:[%s7099 + $0x98] sm:$0xff]
      %v7120 = vld [vmem:[%s7099 + $0xa0] sm:$0xff]
      %v7121 = vld [vmem:[%s7099 + $0xa8] sm:$0xff]
      %v7122 = vld [vmem:[%s7099 + $0xb0] sm:$0xff]
      %v7123 = vld [vmem:[%s7099 + $0xb8] sm:$0xff]
      %v7124 = vld [vmem:[%s7099 + $0xc0] sm:$0xff]
      %v7125 = vld [vmem:[%s7099 + $0xc8] sm:$0xff]
      %v7126 = vld [vmem:[%s7099 + $0xd0] sm:$0xff]
      %v7127 = vld [vmem:[%s7099 + $0xd8] sm:$0xff]
      %v7128 = vld [vmem:[%s7099 + $0xe0] sm:$0xff]
      %v7129 = vld [vmem:[%s7099 + $0xe8] sm:$0xff]
      %v7130 = vld [vmem:[%s7099 + $0xf0] sm:$0xff]
      %v7131 = vld [vmem:[%s7099 + $0xf8] sm:$0xff]
      %v7132 = vld [vmem:[%s7099 + $0x100] sm:$0xff]
      %v7133 = vld [vmem:[%s7099 + $0x108] sm:$0xff]
      %v7134 = vld [vmem:[%s7099 + $0x110] sm:$0xff]
      %v7135 = vld [vmem:[%s7099 + $0x118] sm:$0xff]
      %v7136 = vld [vmem:[%s7099 + $0x120] sm:$0xff]
      %v7137 = vld [vmem:[%s7099 + $0x128] sm:$0xff]
      %v7138 = vld [vmem:[%s7099 + $0x130] sm:$0xff]
      %v7139 = vld [vmem:[%s7099 + $0x138] sm:$0xff]
      %v7140 = vld [vmem:[%s7099 + $0x140] sm:$0xff]
      %v7141 = vld [vmem:[%s7099 + $0x148] sm:$0xff]
      %v7142 = vld [vmem:[%s7099 + $0x150] sm:$0xff]
      %v7143 = vld [vmem:[%s7099 + $0x158] sm:$0xff]
      %v7144 = vld [vmem:[%s7099 + $0x160] sm:$0xff]
      %v7145 = vld [vmem:[%s7099 + $0x168] sm:$0xff]
      %v7146 = vld [vmem:[%s7099 + $0x170] sm:$0xff]
      %v7147 = vld [vmem:[%s7099 + $0x178] sm:$0xff]
      %v7148 = vld [vmem:[%s7099 + $0x180] sm:$0xff]
      %v7149 = vld [vmem:[%s7099 + $0x188] sm:$0xff]
      %v7150 = vld [vmem:[%s7099 + $0x190] sm:$0xff]
      %v7151 = vld [vmem:[%s7099 + $0x198] sm:$0xff]
      %v7152 = vld [vmem:[%s7099 + $0x1a0] sm:$0xff]
      %v7153 = vld [vmem:[%s7099 + $0x1a8] sm:$0xff]
      %v7154 = vld [vmem:[%s7099 + $0x1b0] sm:$0xff]
      %v7155 = vld [vmem:[%s7099 + $0x1b8] sm:$0xff]
      %v7156 = vld [vmem:[%s7099 + $0x1c0] sm:$0xff]
      %v7157 = vld [vmem:[%s7099 + $0x1c8] sm:$0xff]
      %v7158 = vld [vmem:[%s7099 + $0x1d0] sm:$0xff]
      %v7159 = vld [vmem:[%s7099 + $0x1d8] sm:$0xff]
      %v7160 = vld [vmem:[%s7099 + $0x1e0] sm:$0xff]
      %v7161 = vld [vmem:[%s7099 + $0x1e8] sm:$0xff]
      %v7162 = vld [vmem:[%s7099 + $0x1f0] sm:$0xff]
      %v7163 = vld [vmem:[%s7099 + $0x1f8] sm:$0xff]
      %v7166 = vrot.slane %v7097, 1
      %v7167 = vrot.slane %v7098, 1
      %7170 = vmatpush.msra.mxu0 %v7130
      %7171 = vmatpush.msra.mxu0 %v7128
      %7172 = vmatpush.msra.mxu0 %v7126
      %7173 = vmatpush.msra.mxu0 %v7124
      %7174 = vmatpush.msra.mxu0 %v7122
      %7175 = vmatpush.msra.mxu0 %v7120
      %7176 = vmatpush.msra.mxu0 %v7118
      %7177 = vmatpush.msra.mxu0 %v7116
      %7178 = vmatpush.msra.mxu0 %v7114
      %7179 = vmatpush.msra.mxu0 %v7112
      %7180 = vmatpush.msra.mxu0 %v7110
      %7181 = vmatpush.msra.mxu0 %v7108
      %7182 = vmatpush.msra.mxu0 %v7106
      %7183 = vmatpush.msra.mxu0 %v7104
      %7184 = vmatpush.msra.mxu0 %v7102
      %7185 = vmatpush.msra.mxu0 %v7100
      %7186 = vmatmul.f32.gmra.mxu0 %v7166
      %v7187 = vpop.f32.mrf.mxu0
      %v7188 = vadd.f32 0.0, %v7187
      %7189 = vdwg.mxu0
      %7190 = vmatpush.msra.mxu0 %v7162
      %7191 = vmatpush.msra.mxu0 %v7160
      %7192 = vmatpush.msra.mxu0 %v7158
      %7193 = vmatpush.msra.mxu0 %v7156
      %7194 = vmatpush.msra.mxu0 %v7154
      %7195 = vmatpush.msra.mxu0 %v7152
      %7196 = vmatpush.msra.mxu0 %v7150
      %7197 = vmatpush.msra.mxu0 %v7148
      %7198 = vmatpush.msra.mxu0 %v7146
      %7199 = vmatpush.msra.mxu0 %v7144
      %7200 = vmatpush.msra.mxu0 %v7142
      %7201 = vmatpush.msra.mxu0 %v7140
      %7202 = vmatpush.msra.mxu0 %v7138
      %7203 = vmatpush.msra.mxu0 %v7136
      %7204 = vmatpush.msra.mxu0 %v7134
      %7205 = vmatpush.msra.mxu0 %v7132
      %7206 = vmatmul.f32.gmra.mxu0 %v7167
      %v7207 = vpop.f32.mrf.mxu0
      %v7208 = vadd.f32 %v7188, %v7207
      %7209 = vdwg.mxu0
      %7210 = vmatpush.msra.mxu0 %v7131
      %7211 = vmatpush.msra.mxu0 %v7129
      %7212 = vmatpush.msra.mxu0 %v7127
      %7213 = vmatpush.msra.mxu0 %v7125
      %7214 = vmatpush.msra.mxu0 %v7123
      %7215 = vmatpush.msra.mxu0 %v7121
      %7216 = vmatpush.msra.mxu0 %v7119
      %7217 = vmatpush.msra.mxu0 %v7117
      %7218 = vmatpush.msra.mxu0 %v7115
      %7219 = vmatpush.msra.mxu0 %v7113
      %7220 = vmatpush.msra.mxu0 %v7111
      %7221 = vmatpush.msra.mxu0 %v7109
      %7222 = vmatpush.msra.mxu0 %v7107
      %7223 = vmatpush.msra.mxu0 %v7105
      %7224 = vmatpush.msra.mxu0 %v7103
      %7225 = vmatpush.msra.mxu0 %v7101
      %7226 = vmatmul.f32.gmra.mxu0 %v7166
      %v7227 = vpop.f32.mrf.mxu0
      %v7228 = vadd.f32 0.0, %v7227
      %7229 = vdwg.mxu0
      %7230 = vmatpush.msra.mxu0 %v7163
      %7231 = vmatpush.msra.mxu0 %v7161
      %7232 = vmatpush.msra.mxu0 %v7159
      %7233 = vmatpush.msra.mxu0 %v7157
      %7234 = vmatpush.msra.mxu0 %v7155
      %7235 = vmatpush.msra.mxu0 %v7153
      %7236 = vmatpush.msra.mxu0 %v7151
      %7237 = vmatpush.msra.mxu0 %v7149
      %7238 = vmatpush.msra.mxu0 %v7147
      %7239 = vmatpush.msra.mxu0 %v7145
      %7240 = vmatpush.msra.mxu0 %v7143
      %7241 = vmatpush.msra.mxu0 %v7141
      %7242 = vmatpush.msra.mxu0 %v7139
      %7243 = vmatpush.msra.mxu0 %v7137
      %7244 = vmatpush.msra.mxu0 %v7135
      %7245 = vmatpush.msra.mxu0 %v7133
      %7246 = vmatmul.f32.gmra.mxu0 %v7167
      %v7247 = vpop.f32.mrf.mxu0
      %v7248 = vadd.f32 %v7228, %v7247
      %7249 = vdwg.mxu0
      %v7250 = vadd.f32 %v7095, %v7208
      %v7251 = vadd.f32 %v7096, %v7248
      %v7252 = vld [vmem:[#allocation8 + $0x10] sm:$0xfc]
      %v7253 = vld [vmem:[#allocation8 + $0x18] sm:$0xfc]
      %s7254 = scalar_lea.vmem %s13, 4096
      %v7255 = vld [vmem:[%s7254] sm:$0xff]
      %v7256 = vld [vmem:[%s7254 + $0x8] sm:$0xff]
      %v7257 = vld [vmem:[%s7254 + $0x10] sm:$0xff]
      %v7258 = vld [vmem:[%s7254 + $0x18] sm:$0xff]
      %v7259 = vld [vmem:[%s7254 + $0x20] sm:$0xff]
      %v7260 = vld [vmem:[%s7254 + $0x28] sm:$0xff]
      %v7261 = vld [vmem:[%s7254 + $0x30] sm:$0xff]
      %v7262 = vld [vmem:[%s7254 + $0x38] sm:$0xff]
      %v7263 = vld [vmem:[%s7254 + $0x40] sm:$0xff]
      %v7264 = vld [vmem:[%s7254 + $0x48] sm:$0xff]
      %v7265 = vld [vmem:[%s7254 + $0x50] sm:$0xff]
      %v7266 = vld [vmem:[%s7254 + $0x58] sm:$0xff]
      %v7267 = vld [vmem:[%s7254 + $0x60] sm:$0xff]
      %v7268 = vld [vmem:[%s7254 + $0x68] sm:$0xff]
      %v7269 = vld [vmem:[%s7254 + $0x70] sm:$0xff]
      %v7270 = vld [vmem:[%s7254 + $0x78] sm:$0xff]
      %v7271 = vld [vmem:[%s7254 + $0x80] sm:$0xff]
      %v7272 = vld [vmem:[%s7254 + $0x88] sm:$0xff]
      %v7273 = vld [vmem:[%s7254 + $0x90] sm:$0xff]
      %v7274 = vld [vmem:[%s7254 + $0x98] sm:$0xff]
      %v7275 = vld [vmem:[%s7254 + $0xa0] sm:$0xff]
      %v7276 = vld [vmem:[%s7254 + $0xa8] sm:$0xff]
      %v7277 = vld [vmem:[%s7254 + $0xb0] sm:$0xff]
      %v7278 = vld [vmem:[%s7254 + $0xb8] sm:$0xff]
      %v7279 = vld [vmem:[%s7254 + $0xc0] sm:$0xff]
      %v7280 = vld [vmem:[%s7254 + $0xc8] sm:$0xff]
      %v7281 = vld [vmem:[%s7254 + $0xd0] sm:$0xff]
      %v7282 = vld [vmem:[%s7254 + $0xd8] sm:$0xff]
      %v7283 = vld [vmem:[%s7254 + $0xe0] sm:$0xff]
      %v7284 = vld [vmem:[%s7254 + $0xe8] sm:$0xff]
      %v7285 = vld [vmem:[%s7254 + $0xf0] sm:$0xff]
      %v7286 = vld [vmem:[%s7254 + $0xf8] sm:$0xff]
      %v7287 = vld [vmem:[%s7254 + $0x100] sm:$0xff]
      %v7288 = vld [vmem:[%s7254 + $0x108] sm:$0xff]
      %v7289 = vld [vmem:[%s7254 + $0x110] sm:$0xff]
      %v7290 = vld [vmem:[%s7254 + $0x118] sm:$0xff]
      %v7291 = vld [vmem:[%s7254 + $0x120] sm:$0xff]
      %v7292 = vld [vmem:[%s7254 + $0x128] sm:$0xff]
      %v7293 = vld [vmem:[%s7254 + $0x130] sm:$0xff]
      %v7294 = vld [vmem:[%s7254 + $0x138] sm:$0xff]
      %v7295 = vld [vmem:[%s7254 + $0x140] sm:$0xff]
      %v7296 = vld [vmem:[%s7254 + $0x148] sm:$0xff]
      %v7297 = vld [vmem:[%s7254 + $0x150] sm:$0xff]
      %v7298 = vld [vmem:[%s7254 + $0x158] sm:$0xff]
      %v7299 = vld [vmem:[%s7254 + $0x160] sm:$0xff]
      %v7300 = vld [vmem:[%s7254 + $0x168] sm:$0xff]
      %v7301 = vld [vmem:[%s7254 + $0x170] sm:$0xff]
      %v7302 = vld [vmem:[%s7254 + $0x178] sm:$0xff]
      %v7303 = vld [vmem:[%s7254 + $0x180] sm:$0xff]
      %v7304 = vld [vmem:[%s7254 + $0x188] sm:$0xff]
      %v7305 = vld [vmem:[%s7254 + $0x190] sm:$0xff]
      %v7306 = vld [vmem:[%s7254 + $0x198] sm:$0xff]
      %v7307 = vld [vmem:[%s7254 + $0x1a0] sm:$0xff]
      %v7308 = vld [vmem:[%s7254 + $0x1a8] sm:$0xff]
      %v7309 = vld [vmem:[%s7254 + $0x1b0] sm:$0xff]
      %v7310 = vld [vmem:[%s7254 + $0x1b8] sm:$0xff]
      %v7311 = vld [vmem:[%s7254 + $0x1c0] sm:$0xff]
      %v7312 = vld [vmem:[%s7254 + $0x1c8] sm:$0xff]
      %v7313 = vld [vmem:[%s7254 + $0x1d0] sm:$0xff]
      %v7314 = vld [vmem:[%s7254 + $0x1d8] sm:$0xff]
      %v7315 = vld [vmem:[%s7254 + $0x1e0] sm:$0xff]
      %v7316 = vld [vmem:[%s7254 + $0x1e8] sm:$0xff]
      %v7317 = vld [vmem:[%s7254 + $0x1f0] sm:$0xff]
      %v7318 = vld [vmem:[%s7254 + $0x1f8] sm:$0xff]
      %v7321 = vrot.slane %v7252, 2
      %v7322 = vrot.slane %v7253, 2
      %7325 = vmatpush.msra.mxu0 %v7285
      %7326 = vmatpush.msra.mxu0 %v7283
      %7327 = vmatpush.msra.mxu0 %v7281
      %7328 = vmatpush.msra.mxu0 %v7279
      %7329 = vmatpush.msra.mxu0 %v7277
      %7330 = vmatpush.msra.mxu0 %v7275
      %7331 = vmatpush.msra.mxu0 %v7273
      %7332 = vmatpush.msra.mxu0 %v7271
      %7333 = vmatpush.msra.mxu0 %v7269
      %7334 = vmatpush.msra.mxu0 %v7267
      %7335 = vmatpush.msra.mxu0 %v7265
      %7336 = vmatpush.msra.mxu0 %v7263
      %7337 = vmatpush.msra.mxu0 %v7261
      %7338 = vmatpush.msra.mxu0 %v7259
      %7339 = vmatpush.msra.mxu0 %v7257
      %7340 = vmatpush.msra.mxu0 %v7255
      %7341 = vmatmul.f32.gmra.mxu0 %v7321
      %v7342 = vpop.f32.mrf.mxu0
      %v7343 = vadd.f32 0.0, %v7342
      %7344 = vdwg.mxu0
      %7345 = vmatpush.msra.mxu0 %v7317
      %7346 = vmatpush.msra.mxu0 %v7315
      %7347 = vmatpush.msra.mxu0 %v7313
      %7348 = vmatpush.msra.mxu0 %v7311
      %7349 = vmatpush.msra.mxu0 %v7309
      %7350 = vmatpush.msra.mxu0 %v7307
      %7351 = vmatpush.msra.mxu0 %v7305
      %7352 = vmatpush.msra.mxu0 %v7303
      %7353 = vmatpush.msra.mxu0 %v7301
      %7354 = vmatpush.msra.mxu0 %v7299
      %7355 = vmatpush.msra.mxu0 %v7297
      %7356 = vmatpush.msra.mxu0 %v7295
      %7357 = vmatpush.msra.mxu0 %v7293
      %7358 = vmatpush.msra.mxu0 %v7291
      %7359 = vmatpush.msra.mxu0 %v7289
      %7360 = vmatpush.msra.mxu0 %v7287
      %7361 = vmatmul.f32.gmra.mxu0 %v7322
      %v7362 = vpop.f32.mrf.mxu0
      %v7363 = vadd.f32 %v7343, %v7362
      %7364 = vdwg.mxu0
      %7365 = vmatpush.msra.mxu0 %v7286
      %7366 = vmatpush.msra.mxu0 %v7284
      %7367 = vmatpush.msra.mxu0 %v7282
      %7368 = vmatpush.msra.mxu0 %v7280
      %7369 = vmatpush.msra.mxu0 %v7278
      %7370 = vmatpush.msra.mxu0 %v7276
      %7371 = vmatpush.msra.mxu0 %v7274
      %7372 = vmatpush.msra.mxu0 %v7272
      %7373 = vmatpush.msra.mxu0 %v7270
      %7374 = vmatpush.msra.mxu0 %v7268
      %7375 = vmatpush.msra.mxu0 %v7266
      %7376 = vmatpush.msra.mxu0 %v7264
      %7377 = vmatpush.msra.mxu0 %v7262
      %7378 = vmatpush.msra.mxu0 %v7260
      %7379 = vmatpush.msra.mxu0 %v7258
      %7380 = vmatpush.msra.mxu0 %v7256
      %7381 = vmatmul.f32.gmra.mxu0 %v7321
      %v7382 = vpop.f32.mrf.mxu0
      %v7383 = vadd.f32 0.0, %v7382
      %7384 = vdwg.mxu0
      %7385 = vmatpush.msra.mxu0 %v7318
      %7386 = vmatpush.msra.mxu0 %v7316
      %7387 = vmatpush.msra.mxu0 %v7314
      %7388 = vmatpush.msra.mxu0 %v7312
      %7389 = vmatpush.msra.mxu0 %v7310
      %7390 = vmatpush.msra.mxu0 %v7308
      %7391 = vmatpush.msra.mxu0 %v7306
      %7392 = vmatpush.msra.mxu0 %v7304
      %7393 = vmatpush.msra.mxu0 %v7302
      %7394 = vmatpush.msra.mxu0 %v7300
      %7395 = vmatpush.msra.mxu0 %v7298
      %7396 = vmatpush.msra.mxu0 %v7296
      %7397 = vmatpush.msra.mxu0 %v7294
      %7398 = vmatpush.msra.mxu0 %v7292
      %7399 = vmatpush.msra.mxu0 %v7290
      %7400 = vmatpush.msra.mxu0 %v7288
      %7401 = vmatmul.f32.gmra.mxu0 %v7322
      %v7402 = vpop.f32.mrf.mxu0
      %v7403 = vadd.f32 %v7383, %v7402
      %7404 = vdwg.mxu0
      %v7405 = vadd.f32 %v7250, %v7363
      %v7406 = vadd.f32 %v7251, %v7403
      %v7407 = vld [vmem:[%s14] sm:$0x3]
      %v7409 = vperm.slane %v7407, 0
      %v7410 = vperm.slane %v7407, 1
      %v7413 = vadd.f32 %v7405, %v7409
      %v7414 = vadd.f32 %v7406, %v7410
      %v7415 = vmax.f32 %v7413, 0.0
      %v7416 = vmax.f32 %v7414, 0.0
      %v7417 = vld [vmem:[%s22] sm:$0xf]
      %v7419 = vsel %vm1759, %v7417, 0
      %v7422 = vsel %vm1799, %v7415, 0
      %v7425 = vsel %vm1799, %v7416, 0
      %7427 = vmatpush.msra.mxu0 0.0
      %7428 = vmatpush.msra.mxu0 0.0
      %7429 = vmatpush.msra.mxu0 0.0
      %7430 = vmatpush.msra.mxu0 0.0
      %7431 = vmatpush.msra.mxu0 0.0
      %7432 = vmatpush.msra.mxu0 0.0
      %7433 = vmatpush.msra.mxu0 0.0
      %7434 = vmatpush.msra.mxu0 0.0
      %7435 = vmatpush.msra.mxu0 0.0
      %7436 = vmatpush.msra.mxu0 0.0
      %7437 = vmatpush.msra.mxu0 0.0
      %7438 = vmatpush.msra.mxu0 0.0
      %7439 = vmatpush.msra.mxu0 0.0
      %7440 = vmatpush.msra.mxu0 0.0
      %7441 = vmatpush.msra.mxu0 0.0
      %7442 = vmatpush.msra.mxu0 %v7422
      %7443 = vmatmul.f32.gmra.mxu0 %v7419
      %v7444 = vpop.f32.mrf.mxu0
      %v7445 = vadd.f32 0.0, %v7444
      %7446 = vdwg.mxu0
      %7447 = vmatpush.msra.mxu0 0.0
      %7448 = vmatpush.msra.mxu0 0.0
      %7449 = vmatpush.msra.mxu0 0.0
      %7450 = vmatpush.msra.mxu0 0.0
      %7451 = vmatpush.msra.mxu0 0.0
      %7452 = vmatpush.msra.mxu0 0.0
      %7453 = vmatpush.msra.mxu0 0.0
      %7454 = vmatpush.msra.mxu0 0.0
      %7455 = vmatpush.msra.mxu0 0.0
      %7456 = vmatpush.msra.mxu0 0.0
      %7457 = vmatpush.msra.mxu0 0.0
      %7458 = vmatpush.msra.mxu0 0.0
      %7459 = vmatpush.msra.mxu0 0.0
      %7460 = vmatpush.msra.mxu0 0.0
      %7461 = vmatpush.msra.mxu0 0.0
      %7462 = vmatpush.msra.mxu0 %v7425
      %7463 = vmatmul.f32.gmra.mxu0 %v7419
      %v7464 = vpop.f32.mrf.mxu0
      %v7465 = vadd.f32 0.0, %v7464
      %7466 = vdwg.mxu0
      %v7469 = vrot.slane %v7465, 4
      %v7470 = vsel %vm6530, %v7445, %v7469
      %7472 = vst [vmem:[%s710] sm:$0xff] %v7470
      %p7473 = scmp.lt.s32.totalorder %s34, 1
      %s7474 = scalar_select %p7473, %s34, 1
      %s7475 = smul.addr %s7474, 2
      %s7476 = smul.addr %s7475, 4
      %s7477 = scalar_lea.vmem %s23, %s7476
      // Predicated region
      $region113: #{canvas_feature_extractor.1} parent=111 // pred_check
        %p7478 = pneg %p540
      $region114: #{canvas_feature_extractor.1} parent=111 // pred_check_branch
        %7480 = sbr.rel (%p7478) target = $region116
      $region115: #{canvas_feature_extractor.1} parent=111 // pred_region
        _
      $region116: #{canvas_feature_extractor.1} parent=111 // pred_fallthru
        _
    $region112: #{canvas_feature_extractor.1} parent=5 // pred_fallthru
      _
    %p7481 = scmp.le.s32.totalorder 2, %s29
    // Predicated region
    $region117: #{canvas_feature_extractor.1} parent=5 // pred_check
      %p7482 = pneg %p7481
    $region118: #{canvas_feature_extractor.1} parent=5 // pred_check_branch
      %7484 = sbr.rel (%p7482) target = $region120
    $region119: #{canvas_feature_extractor.1} parent=5 // pred_region
      %s7485 = ssub.s32 %s29, 2
      // Predicated region
      $region121: #{canvas_feature_extractor.1} parent=119 // pred_check
        %p7486 = pneg %p546
      $region122: #{canvas_feature_extractor.1} parent=119 // pred_check_branch
        %7488 = sbr.rel (%p7486) target = $region124
      $region123: #{canvas_feature_extractor.1} parent=119 // pred_region
        %p7489 = scmp.lt.s32.totalorder %s35, 1
        %s7490 = scalar_select %p7489, %s35, 1
        %s7491 = smul.addr %s7490, 2
        %s7492 = smul.addr %s7491, 4
        %s7493 = scalar_lea.vmem %s23, %s7492
      $region124: #{canvas_feature_extractor.1} parent=119 // pred_fallthru
        _
    $region120: #{canvas_feature_extractor.1} parent=5 // pred_fallthru
      _
  $region6: #{canvas_feature_extractor.1} parent=0 // loop_footer
    %s33 = sadd.s32 1, %s29
  $region7: #{canvas_feature_extractor.1} parent=0 // loop_footer_branch
    %28 = sbr.rel target = $region3
  $region8: #{canvas_feature_extractor.1} parent=0 // loop_exit
    _

</llo_original>
